<compile_context>
chip_gen: v7x
topology: tpu7x:2x2x1
jax: 0.10.0
libtpu: 0.0.40
codegen_flags: <defaults>
</compile_context>

<pallas_src>
import jax
import jax.numpy as jnp
from jax.experimental import pallas as pl
from jax.experimental.pallas import tpu as pltpu

# ---------------- small config ----------------
B = 2             # batch
S = 8             # seq len per argument
VOCAB = 50
ENC_DIM = 32      # encoder output dim (stand-in for RoBERTa hidden)
P = 4             # num_perspectives (== num attention heads)
ATT_D = 16        # GatedMultiHeadAttn per-head hidden_dim
ATT_TOT = P * ATT_D
HID = 16          # model hidden_dim (conv output / fc hidden)
NF = 8            # num_filters per conv width
NUM_RELS = 4

BIMPM_DIM = 2 + 2 * P             # cosine max/mean + P-perspective maxpool max/mean
DQ = ENC_DIM + BIMPM_DIM          # logical gated-attn feature dim (42)

# padded lane-dense layout
VOCAB_PAD = 128
E_PAD = 128                       # encoder features padded to one 128-lane tile
DQ_PAD = 2 * E_PAD                # [enc(128) | bimpm(128)] padded feature slab
OUT_PAD = 128                     # per-branch pooled conv features, lane-dense output

NEG = -1e30
EPS = 1e-8


# ---------------- weight padding helpers (zero padding => same math) ----------------
def _pad_to(x, shape):
    return jnp.pad(x, [(0, t - s) for s, t in zip(x.shape, shape)])


def _pad_dq_rows(w):
    # logical (DQ, n) -> padded (DQ_PAD, n): rows [0:32]=enc part, [128:138]=bimpm part
    n = w.shape[1]
    return jnp.concatenate([
        w[:ENC_DIM],
        jnp.zeros((E_PAD - ENC_DIM, n), jnp.float32),
        w[ENC_DIM:],
        jnp.zeros((E_PAD - BIMPM_DIM, n), jnp.float32)], axis=0)


def _pad_dq_cols(w):
    # logical (m, DQ) -> padded (m, DQ_PAD) with the same column layout
    m = w.shape[0]
    return jnp.concatenate([
        w[:, :ENC_DIM],
        jnp.zeros((m, E_PAD - ENC_DIM), jnp.float32),
        w[:, ENC_DIM:],
        jnp.zeros((m, E_PAD - BIMPM_DIM), jnp.float32)], axis=1)


# ---------------- fused per-branch kernel ----------------
def _branch_kernel(ids_s_ref, ids_o_ref, mc_s_ref, mc_o_ref, mr_s_ref, mr_o_ref,
                   pm_s_ref,
                   emb_ref, encw_ref, encb_ref, mpw_ref,
                   wqkv_ref, wo_ref, wgx_ref, wga_ref,
                   c1w_ref, c1b_ref, c2wa_ref, c2wb_ref, c2b_ref,
                   hww_ref, hwb_ref, cpw_ref, cpb_ref,
                   o_ref):
    # ---- inputs for this branch ("self") and the opposite branch ("other") ----
    ids_s = ids_s_ref[0]          # (B, S, 1) int32 token ids
    ids_o = ids_o_ref[0]
    mc_s = mc_s_ref[0]            # (B, S, 1) token mask, column layout
    mc_o = mc_o_ref[0]
    mr_s = mr_s_ref[0]            # (B, 1, S) token mask, row layout
    mr_o = mr_o_ref[0]
    pm_s = pm_s_ref[0]            # (B, S, 1) valid (t, t+1) pair mask

    emb = emb_ref[...]
    encw = encw_ref[...]
    encb = encb_ref[...]

    # ---- encoder stand-in: one-hot @ embedding, dense + relu ----
    def encode(ids):
        oh = (ids == jax.lax.broadcasted_iota(jnp.int32, (B, S, VOCAB_PAD), 2))
        oh = oh.astype(jnp.float32).reshape(B * S, VOCAB_PAD)
        x = jnp.dot(oh, emb, preferred_element_type=jnp.float32)
        h = jnp.dot(x, encw, preferred_element_type=jnp.float32) + encb
        return jnp.maximum(h, 0.0).reshape(B, S, E_PAD)

    enc_s = encode(ids_s)
    enc_o = encode(ids_o)

    # ---- BiMPM matching: cosine + multi-perspective maxpool (max & mean) ----
    # Only the self->other direction is computed here; the other branch's grid
    # step computes its own direction, so no redundant transposed matmuls.
    c_s = enc_s * mc_s
    c_o = enc_o * mc_o
    cnt_o = jnp.maximum(jnp.sum(mc_o, axis=1, keepdims=True), 1.0)      # (B,1,1)
    has_o = jnp.sum(mc_o, axis=1, keepdims=True) > 0.0                  # (B,1,1)

    def normalize(v):
        n = jnp.sqrt(jnp.sum(v * v, axis=-1, keepdims=True))
        return v / jnp.maximum(n, EPS)

    sim = jnp.einsum('bid,bjd->bij', normalize(c_s), normalize(c_o),
                     preferred_element_type=jnp.float32)                # (B,S,S)
    # clamp to 0 for a fully-masked other argument (avoids NEG leaking downstream)
    cmax = jnp.where(has_o,
                     jnp.max(jnp.where(mr_o > 0, sim, NEG), axis=2, keepdims=True),
                     0.0)
    cmean = jnp.sum(sim * mr_o, axis=2, keepdims=True) / cnt_o

    w = mpw_ref[...]                                                    # (P, E_PAD)
    a_s = normalize(c_s[:, None, :, :] * w[None, :, None, :])           # (B,P,S,E)
    a_o = normalize(c_o[:, None, :, :] * w[None, :, None, :])
    simp = jnp.einsum('xid,xjd->xij',
                      a_s.reshape(B * P, S, E_PAD),
                      a_o.reshape(B * P, S, E_PAD),
                      preferred_element_type=jnp.float32).reshape(B, P, S, S)
    pmax_cols, pmean_cols = [], []
    for pi in range(P):
        sp = simp[:, pi]                                                # (B,S,S)
        pmax_cols.append(jnp.where(
            has_o,
            jnp.max(jnp.where(mr_o > 0, sp, NEG), axis=2, keepdims=True),
            0.0))
        pmean_cols.append(jnp.sum(sp * mr_o, axis=2, keepdims=True) / cnt_o)

    # concat [enc | bimpm] directly into the padded 256-lane feature slab
    f = jnp.concatenate(
        [enc_s, cmax, cmean] + pmax_cols + pmean_cols +
        [jnp.zeros((B, S, E_PAD - BIMPM_DIM), jnp.float32)], axis=-1)   # (B,S,DQ_PAD)

    # ---- gated multi-head self-attention (fused QKV / wo / gate) ----
    f2 = f.reshape(B * S, DQ_PAD)
    qkv = jnp.dot(f2, wqkv_ref[...], preferred_element_type=jnp.float32)
    qkv = qkv.reshape(B, S, 3 * ATT_TOT)
    q = qkv[..., 0:ATT_TOT]
    k = qkv[..., ATT_TOT:2 * ATT_TOT]
    v = qkv[..., 2 * ATT_TOT:3 * ATT_TOT]
    scale = 1.0 / (ATT_D ** 0.5)
    heads = []
    for h in range(P):
        lo, hi = h * ATT_D, (h + 1) * ATT_D
        sc = jnp.einsum('bid,bjd->bij', q[..., lo:hi], k[..., lo:hi],
                        preferred_element_type=jnp.float32) * scale
        sc = jnp.where(mr_s > 0, sc, NEG)
        sc = sc - jnp.max(sc, axis=-1, keepdims=True)
        prob = jnp.exp(sc)
        prob = prob * pl.reciprocal(jnp.sum(prob, axis=-1, keepdims=True), approx=True)
        heads.append(jnp.einsum('bij,bjd->bid', prob, v[..., lo:hi],
                                preferred_element_type=jnp.float32))
    attn = jnp.concatenate(heads, axis=-1).reshape(B * S, ATT_TOT)
    a2 = jnp.dot(attn, wo_ref[...], preferred_element_type=jnp.float32)  # (B*S, DQ_PAD)
    gate = jax.nn.sigmoid(
        jnp.dot(f2, wgx_ref[...], preferred_element_type=jnp.float32) +
        jnp.dot(a2, wga_ref[...], preferred_element_type=jnp.float32))
    # TODO(synk): gating direction g*query + (1-g)*attn matches the previous
    #             synthetic version; some GatedMultiHeadAttn impls gate the
    #             attention output instead (g*attn + (1-g)*query).
    gout = (gate * f2 + (1.0 - gate) * a2).reshape(B, S, DQ_PAD)

    # ---- CNN (widths 1 & 2) + masked max-pool + highway + projection ----
    xm = gout * mc_s
    x2 = xm.reshape(B * S, DQ_PAD)
    ok_tok = jnp.sum(mc_s, axis=1) > 0.0        # (B,1) any valid token
    ok_pair = jnp.sum(pm_s, axis=1) > 0.0       # (B,1) any valid adjacent pair

    y1 = jnp.maximum(jnp.dot(x2, c1w_ref[...], preferred_element_type=jnp.float32)
                     + c1b_ref[...], 0.0).reshape(B, S, NF)
    y1 = jnp.where(mc_s > 0, y1, NEG)
    p1 = jnp.where(ok_tok, jnp.max(y1, axis=1), 0.0)                    # (B,NF)

    # width-2 conv: the "next token" operand comes from an XLU sublane roll of the
    # flattened slab (wrap-around rows fall on t=S-1, which the pair mask removes).
    xn2 = pltpu.roll(x2, shift=B * S - 1, axis=0)                       # row r -> row r+1
    y2 = jnp.maximum(jnp.dot(x2, c2wa_ref[...], preferred_element_type=jnp.float32)
                     + jnp.dot(xn2, c2wb_ref[...], preferred_element_type=jnp.float32)
                     + c2b_ref[...], 0.0).reshape(B, S, NF)
    y2 = jnp.where(pm_s > 0, y2, NEG)
    p2 = jnp.where(ok_pair, jnp.max(y2, axis=1), 0.0)                   # (B,NF)

    hcat = jnp.concatenate([p1, p2], axis=-1)                           # (B, 2*NF)
    proj = jnp.dot(hcat, hww_ref[...], preferred_element_type=jnp.float32) + hwb_ref[...]
    nonlin = jnp.maximum(proj[:, :2 * NF], 0.0)
    hg = jax.nn.sigmoid(proj[:, 2 * NF:])
    hw = hg * hcat + (1.0 - hg) * nonlin
    conv_out = jnp.dot(hw, cpw_ref[...], preferred_element_type=jnp.float32) + cpb_ref[...]

    # lane-dense (B, 128) output store (only the first HID columns are meaningful)
    o_ref[0] = jnp.concatenate(
        [conv_out, jnp.zeros((B, OUT_PAD - HID), jnp.float32)], axis=-1)


# ---------------- FC head kernel (fc1 + relu + fc2) ----------------
def _head_kernel(conv_ref, w1a_ref, w1b_ref, b1_ref, w2_ref, b2_ref, o_ref):
    c1 = conv_ref[0]              # (B, OUT_PAD) branch-1 pooled features
    c2 = conv_ref[1]              # (B, OUT_PAD) branch-2 pooled features
    h = jnp.maximum(
        jnp.dot(c1, w1a_ref[...], preferred_element_type=jnp.float32) +
        jnp.dot(c2, w1b_ref[...], preferred_element_type=jnp.float32) +
        b1_ref[...], 0.0)
    o_ref[...] = jnp.dot(h, w2_ref[...], preferred_element_type=jnp.float32) + b2_ref[...]


# ---------------- BlockSpec helpers ----------------
def _full_spec(arr):
    nd = arr.ndim
    return pl.BlockSpec(tuple(arr.shape), lambda i, _nd=nd: (0,) * _nd)


def _self_spec(arr):
    nd = arr.ndim
    return pl.BlockSpec((1,) + tuple(arr.shape[1:]),
                        lambda i, _nd=nd: (i,) + (0,) * (_nd - 1))


def _other_spec(arr):
    nd = arr.ndim
    return pl.BlockSpec((1,) + tuple(arr.shape[1:]),
                        lambda i, _nd=nd: (1 - i,) + (0,) * (_nd - 1))


# ---------------- pallas_call wrappers ----------------
def _branch_call(p, ids, mc, mr, pm):
    weights = [p['emb'], p['enc_w'], p['enc_b'], p['mp_w'],
               p['wqkv'], p['wo'], p['wgx'], p['wga'],
               p['c1w'], p['c1b'], p['c2wa'], p['c2wb'], p['c2b'],
               p['hw_w'], p['hw_b'], p['cp_w'], p['cp_b']]
    in_specs = ([_self_spec(ids), _other_spec(ids),
                 _self_spec(mc), _other_spec(mc),
                 _self_spec(mr), _other_spec(mr),
                 _self_spec(pm)]
                + [_full_spec(w) for w in weights])
    return pl.pallas_call(
        _branch_kernel,
        out_shape=jax.ShapeDtypeStruct((2, B, OUT_PAD), jnp.float32),
        grid=(2,),
        in_specs=in_specs,
        out_specs=pl.BlockSpec((1, B, OUT_PAD), lambda i: (i, 0, 0)),
        compiler_params=pltpu.CompilerParams(dimension_semantics=("parallel",)),
    )(ids, ids, mc, mc, mr, mr, pm, *weights)


def _head_call(p, conv):
    return pl.pallas_call(
        _head_kernel,
        out_shape=jax.ShapeDtypeStruct((B, NUM_RELS), jnp.float32),
        grid=(1,),
        in_specs=[_full_spec(conv), _full_spec(p['fc1_a']), _full_spec(p['fc1_b']),
                  _full_spec(p['fc1_bias']), _full_spec(p['fc2_w']),
                  _full_spec(p['fc2_b'])],
        out_specs=pl.BlockSpec((B, NUM_RELS), lambda i: (0, 0)),
    )(conv, p['fc1_a'], p['fc1_b'], p['fc1_bias'], p['fc2_w'], p['fc2_b'])


# ---------------- full forward ----------------
def forward(params, arg1, arg2, arg1_mask, arg2_mask):
    ids = jnp.stack([arg1, arg2], axis=0).astype(jnp.int32)[..., None]    # (2,B,S,1)
    m = jnp.stack([arg1_mask, arg2_mask], axis=0).astype(jnp.float32)     # (2,B,S)
    mc = m[..., None]                                                     # (2,B,S,1)
    mr = m[:, :, None, :]                                                 # (2,B,1,S)
    # pair mask: positions t where tokens t and t+1 are both valid (and t < S-1)
    pm = jnp.concatenate([m[..., :-1] * m[..., 1:],
                          jnp.zeros_like(m[..., :1])], axis=-1)[..., None]
    conv = _branch_call(params, ids, mc, mr, pm)      # (2, B, OUT_PAD)
    return _head_call(params, conv)                   # (B, NUM_RELS) logits


# ---------------- deterministic parameter init (pre-padded, kernel-ready) ----------------
def init_params(key):
    ks = jax.random.split(key, 16)

    def nrm(k, shape, scale=0.1):
        return jax.random.normal(k, shape, jnp.float32) * scale

    emb = nrm(ks[0], (VOCAB, ENC_DIM), 0.5)
    enc_w = nrm(ks[1], (ENC_DIM, ENC_DIM))
    mp_w = nrm(ks[2], (P, ENC_DIM), 1.0)
    wq = nrm(ks[3], (DQ, ATT_TOT))
    wk = nrm(ks[4], (DQ, ATT_TOT))
    wv = nrm(ks[5], (DQ, ATT_TOT))
    wo = nrm(ks[6], (ATT_TOT, DQ))
    wg = nrm(ks[7], (2 * DQ, DQ))
    c1w = nrm(ks[8], (DQ, NF))
    c2w = nrm(ks[9], (2 * DQ, NF))
    hw_w = nrm(ks[10], (2 * NF, 4 * NF))
    cp_w = nrm(ks[11], (2 * NF, HID))
    fc1_w = nrm(ks[12], (2 * HID, HID))
    fc2_w = nrm(ks[13], (HID, NUM_RELS))

    return {
        'emb': _pad_to(emb, (VOCAB_PAD, E_PAD)),
        'enc_w': _pad_to(enc_w, (E_PAD, E_PAD)),
        'enc_b': jnp.zeros((1, E_PAD), jnp.float32),
        'mp_w': _pad_to(mp_w, (P, E_PAD)),
        'wqkv': jnp.concatenate([_pad_dq_rows(wq), _pad_dq_rows(wk), _pad_dq_rows(wv)],
                                axis=1),
        'wo': _pad_dq_cols(wo),
        'wgx': _pad_dq_cols(_pad_dq_rows(wg[:DQ])),
        'wga': _pad_dq_cols(_pad_dq_rows(wg[DQ:])),
        'c1w': _pad_dq_rows(c1w),
        'c1b': jnp.zeros((1, NF), jnp.float32),
        'c2wa': _pad_dq_rows(c2w[:DQ]),
        'c2wb': _pad_dq_rows(c2w[DQ:]),
        'c2b': jnp.zeros((1, NF), jnp.float32),
        'hw_w': hw_w,
        'hw_b': jnp.zeros((1, 4 * NF), jnp.float32),
        'cp_w': cp_w,
        'cp_b': jnp.zeros((1, HID), jnp.float32),
        'fc1_a': _pad_to(fc1_w[:HID], (OUT_PAD, HID)),
        'fc1_b': _pad_to(fc1_w[HID:], (OUT_PAD, HID)),
        'fc1_bias': jnp.zeros((1, HID), jnp.float32),
        'fc2_w': fc2_w,
        'fc2_b': jnp.zeros((1, NUM_RELS), jnp.float32),
    }


if __name__ == "__main__":
    key = jax.random.PRNGKey(0)
    pkey, dkey = jax.random.split(key)
    params = init_params(pkey)
    k1, k2 = jax.random.split(dkey)
    arg1 = jax.random.randint(k1, (B, S), 0, VOCAB)
    arg2 = jax.random.randint(k2, (B, S), 0, VOCAB)
    arg1_mask = jnp.ones((B, S), jnp.float32).at[0, -2:].set(0.0)
    arg2_mask = jnp.ones((B, S), jnp.float32).at[1, -1:].set(0.0)

    out = jax.jit(forward)(params, arg1, arg2, arg1_mask, arg2_mask)
    out = jax.block_until_ready(out)
    assert out.shape == (B, NUM_RELS) and out.dtype == jnp.float32
    print("KERNEL_OK")
</pallas_src>

<mosaic_0001>
module attributes {stable_mosaic.version = 11 : i64} {
  func.func @_head_kernel(%arg0: i32, %arg1: memref<2x2x128xf32, #tpu.memory_space<vmem>>, %arg2: memref<128x16xf32, #tpu.memory_space<vmem>>, %arg3: memref<128x16xf32, #tpu.memory_space<vmem>>, %arg4: memref<1x16xf32, #tpu.memory_space<vmem>>, %arg5: memref<16x4xf32, #tpu.memory_space<vmem>>, %arg6: memref<1x4xf32, #tpu.memory_space<vmem>>, %arg7: memref<2x4xf32, #tpu.memory_space<vmem>>) attributes {dimension_semantics = [#tpu.dimension_semantics<arbitrary>], iteration_bounds = array<i64: 1>, scalar_prefetch = 0 : i64, scratch_operands = 0 : i64, tpu.core_type = #tpu.core_type<tc>, window_params = [{pipeline_mode = #tpu.pipeline_mode<synchronous>, transform_indices = @transform_0, window_bounds = array<i64: 2, 2, 128>}, {pipeline_mode = #tpu.pipeline_mode<synchronous>, transform_indices = @transform_1, window_bounds = array<i64: 128, 16>}, {pipeline_mode = #tpu.pipeline_mode<synchronous>, transform_indices = @transform_2, window_bounds = array<i64: 128, 16>}, {pipeline_mode = #tpu.pipeline_mode<synchronous>, transform_indices = @transform_3, window_bounds = array<i64: 1, 16>}, {pipeline_mode = #tpu.pipeline_mode<synchronous>, transform_indices = @transform_4, window_bounds = array<i64: 16, 4>}, {pipeline_mode = #tpu.pipeline_mode<synchronous>, transform_indices = @transform_5, window_bounds = array<i64: 1, 4>}, {pipeline_mode = #tpu.pipeline_mode<synchronous>, transform_indices = @transform_6, window_bounds = array<i64: 2, 4>}]} {
    %c0 = arith.constant 0 : index
    %c0_0 = arith.constant 0 : index
    %c0_1 = arith.constant 0 : index
    %0 = vector.load %arg1[%c0, %c0_0, %c0_1] : memref<2x2x128xf32, #tpu.memory_space<vmem>>, vector<1x2x128xf32>
    %1 = vector.shape_cast %0 : vector<1x2x128xf32> to vector<2x128xf32>
    %c1 = arith.constant 1 : index
    %c0_2 = arith.constant 0 : index
    %c0_3 = arith.constant 0 : index
    %2 = vector.load %arg1[%c1, %c0_2, %c0_3] : memref<2x2x128xf32, #tpu.memory_space<vmem>>, vector<1x2x128xf32>
    %3 = vector.shape_cast %2 : vector<1x2x128xf32> to vector<2x128xf32>
    %c0_4 = arith.constant 0 : index
    %c0_5 = arith.constant 0 : index
    %4 = vector.load %arg2[%c0_4, %c0_5] : memref<128x16xf32, #tpu.memory_space<vmem>>, vector<128x16xf32>
    %cst = arith.constant dense<0.000000e+00> : vector<2x16xf32>
    %5 = tpu.matmul %1, %4, %cst {dimension_numbers = #tpu.dot_dimension_numbers<[1], [0], [0], [1], [0, 0, 1, 1], [], []>} : vector<2x128xf32>, vector<128x16xf32>, vector<2x16xf32> -> vector<2x16xf32>
    %c0_6 = arith.constant 0 : index
    %c0_7 = arith.constant 0 : index
    %6 = vector.load %arg3[%c0_6, %c0_7] : memref<128x16xf32, #tpu.memory_space<vmem>>, vector<128x16xf32>
    %cst_8 = arith.constant dense<0.000000e+00> : vector<2x16xf32>
    %7 = tpu.matmul %3, %6, %cst_8 {dimension_numbers = #tpu.dot_dimension_numbers<[1], [0], [0], [1], [0, 0, 1, 1], [], []>} : vector<2x128xf32>, vector<128x16xf32>, vector<2x16xf32> -> vector<2x16xf32>
    %8 = arith.addf %5, %7 : vector<2x16xf32>
    %c0_9 = arith.constant 0 : index
    %c0_10 = arith.constant 0 : index
    %9 = vector.load %arg4[%c0_9, %c0_10] : memref<1x16xf32, #tpu.memory_space<vmem>>, vector<1x16xf32>
    %10 = vector.broadcast %9 : vector<1x16xf32> to vector<2x16xf32>
    %11 = arith.addf %8, %10 : vector<2x16xf32>
    %cst_11 = arith.constant 0.000000e+00 : f32
    %12 = vector.broadcast %cst_11 : f32 to vector<2x16xf32>
    %13 = arith.maximumf %11, %12 : vector<2x16xf32>
    %c0_12 = arith.constant 0 : index
    %c0_13 = arith.constant 0 : index
    %14 = vector.load %arg5[%c0_12, %c0_13] : memref<16x4xf32, #tpu.memory_space<vmem>>, vector<16x4xf32>
    %cst_14 = arith.constant dense<0.000000e+00> : vector<2x4xf32>
    %15 = tpu.matmul %13, %14, %cst_14 {dimension_numbers = #tpu.dot_dimension_numbers<[1], [0], [0], [1], [0, 0, 1, 1], [], []>} : vector<2x16xf32>, vector<16x4xf32>, vector<2x4xf32> -> vector<2x4xf32>
    %c0_15 = arith.constant 0 : index
    %c0_16 = arith.constant 0 : index
    %16 = vector.load %arg6[%c0_15, %c0_16] : memref<1x4xf32, #tpu.memory_space<vmem>>, vector<1x4xf32>
    %17 = vector.broadcast %16 : vector<1x4xf32> to vector<2x4xf32>
    %18 = arith.addf %15, %17 : vector<2x4xf32>
    %c0_17 = arith.constant 0 : index
    %c0_18 = arith.constant 0 : index
    %19 = vector.load %arg7[%c0_17, %c0_18] : memref<2x4xf32, #tpu.memory_space<vmem>>, vector<2x4xf32>
    tpu.vector_store %arg7[%c0_17, %c0_18], %18 {strides = array<i32>} : memref<2x4xf32, #tpu.memory_space<vmem>>, vector<2x4xf32>,
    return
  }
  func.func @transform_0(%arg0: i32) -> (i32, i32, i32) {
    %c0_i32 = arith.constant 0 : i32
    %c0_i32_0 = arith.constant 0 : i32
    %c0_i32_1 = arith.constant 0 : i32
    %c0_i32_2 = arith.constant 0 : i32
    return %c0_i32, %c0_i32_0, %c0_i32_1 : i32, i32, i32
  }
  func.func @transform_1(%arg0: i32) -> (i32, i32) {
    %c0_i32 = arith.constant 0 : i32
    %c0_i32_0 = arith.constant 0 : i32
    %c0_i32_1 = arith.constant 0 : i32
    return %c0_i32, %c0_i32_0 : i32, i32
  }
  func.func @transform_2(%arg0: i32) -> (i32, i32) {
    %c0_i32 = arith.constant 0 : i32
    %c0_i32_0 = arith.constant 0 : i32
    %c0_i32_1 = arith.constant 0 : i32
    return %c0_i32, %c0_i32_0 : i32, i32
  }
  func.func @transform_3(%arg0: i32) -> (i32, i32) {
    %c0_i32 = arith.constant 0 : i32
    %c0_i32_0 = arith.constant 0 : i32
    %c0_i32_1 = arith.constant 0 : i32
    return %c0_i32, %c0_i32_0 : i32, i32
  }
  func.func @transform_4(%arg0: i32) -> (i32, i32) {
    %c0_i32 = arith.constant 0 : i32
    %c0_i32_0 = arith.constant 0 : i32
    %c0_i32_1 = arith.constant 0 : i32
    return %c0_i32, %c0_i32_0 : i32, i32
  }
  func.func @transform_5(%arg0: i32) -> (i32, i32) {
    %c0_i32 = arith.constant 0 : i32
    %c0_i32_0 = arith.constant 0 : i32
    %c0_i32_1 = arith.constant 0 : i32
    return %c0_i32, %c0_i32_0 : i32, i32
  }
  func.func @transform_6(%arg0: i32) -> (i32, i32) {
    %c0_i32 = arith.constant 0 : i32
    %c0_i32_0 = arith.constant 0 : i32
    %c0_i32_1 = arith.constant 0 : i32
    return %c0_i32, %c0_i32_0 : i32, i32
  }
}

module attributes {stable_mosaic.version = 11 : i64} {
  func.func @_branch_kernel(%arg0: i32, %arg1: memref<1x2x8x1xi32, #tpu.memory_space<vmem>>, %arg2: memref<1x2x8x1xi32, #tpu.memory_space<vmem>>, %arg3: memref<1x2x8x1xf32, #tpu.memory_space<vmem>>, %arg4: memref<1x2x8x1xf32, #tpu.memory_space<vmem>>, %arg5: memref<1x2x1x8xf32, #tpu.memory_space<vmem>>, %arg6: memref<1x2x1x8xf32, #tpu.memory_space<vmem>>, %arg7: memref<1x2x8x1xf32, #tpu.memory_space<vmem>>, %arg8: memref<128x128xf32, #tpu.memory_space<vmem>>, %arg9: memref<128x128xf32, #tpu.memory_space<vmem>>, %arg10: memref<1x128xf32, #tpu.memory_space<vmem>>, %arg11: memref<4x128xf32, #tpu.memory_space<vmem>>, %arg12: memref<256x192xf32, #tpu.memory_space<vmem>>, %arg13: memref<64x256xf32, #tpu.memory_space<vmem>>, %arg14: memref<256x256xf32, #tpu.memory_space<vmem>>, %arg15: memref<256x256xf32, #tpu.memory_space<vmem>>, %arg16: memref<256x8xf32, #tpu.memory_space<vmem>>, %arg17: memref<1x8xf32, #tpu.memory_space<vmem>>, %arg18: memref<256x8xf32, #tpu.memory_space<vmem>>, %arg19: memref<256x8xf32, #tpu.memory_space<vmem>>, %arg20: memref<1x8xf32, #tpu.memory_space<vmem>>, %arg21: memref<16x32xf32, #tpu.memory_space<vmem>>, %arg22: memref<1x32xf32, #tpu.memory_space<vmem>>, %arg23: memref<16x16xf32, #tpu.memory_space<vmem>>, %arg24: memref<1x16xf32, #tpu.memory_space<vmem>>, %arg25: memref<1x2x128xf32, #tpu.memory_space<vmem>>) attributes {dimension_semantics = [#tpu.dimension_semantics<parallel>], iteration_bounds = array<i64: 2>, scalar_prefetch = 0 : i64, scratch_operands = 0 : i64, tpu.core_type = #tpu.core_type<tc>, window_params = [{transform_indices = @transform_0, window_bounds = array<i64: 1, 2, 8, 1>}, {transform_indices = @transform_1, window_bounds = array<i64: 1, 2, 8, 1>}, {transform_indices = @transform_2, window_bounds = array<i64: 1, 2, 8, 1>}, {transform_indices = @transform_3, window_bounds = array<i64: 1, 2, 8, 1>}, {transform_indices = @transform_4, window_bounds = array<i64: 1, 2, 1, 8>}, {transform_indices = @transform_5, window_bounds = array<i64: 1, 2, 1, 8>}, {transform_indices = @transform_6, window_bounds = array<i64: 1, 2, 8, 1>}, {pipeline_mode = #tpu.pipeline_mode<synchronous>, transform_indices = @transform_7, window_bounds = array<i64: 128, 128>}, {pipeline_mode = #tpu.pipeline_mode<synchronous>, transform_indices = @transform_8, window_bounds = array<i64: 128, 128>}, {pipeline_mode = #tpu.pipeline_mode<synchronous>, transform_indices = @transform_9, window_bounds = array<i64: 1, 128>}, {pipeline_mode = #tpu.pipeline_mode<synchronous>, transform_indices = @transform_10, window_bounds = array<i64: 4, 128>}, {pipeline_mode = #tpu.pipeline_mode<synchronous>, transform_indices = @transform_11, window_bounds = array<i64: 256, 192>}, {pipeline_mode = #tpu.pipeline_mode<synchronous>, transform_indices = @transform_12, window_bounds = array<i64: 64, 256>}, {pipeline_mode = #tpu.pipeline_mode<synchronous>, transform_indices = @transform_13, window_bounds = array<i64: 256, 256>}, {pipeline_mode = #tpu.pipeline_mode<synchronous>, transform_indices = @transform_14, window_bounds = array<i64: 256, 256>}, {pipeline_mode = #tpu.pipeline_mode<synchronous>, transform_indices = @transform_15, window_bounds = array<i64: 256, 8>}, {pipeline_mode = #tpu.pipeline_mode<synchronous>, transform_indices = @transform_16, window_bounds = array<i64: 1, 8>}, {pipeline_mode = #tpu.pipeline_mode<synchronous>, transform_indices = @transform_17, window_bounds = array<i64: 256, 8>}, {pipeline_mode = #tpu.pipeline_mode<synchronous>, transform_indices = @transform_18, window_bounds = array<i64: 256, 8>}, {pipeline_mode = #tpu.pipeline_mode<synchronous>, transform_indices = @transform_19, window_bounds = array<i64: 1, 8>}, {pipeline_mode = #tpu.pipeline_mode<synchronous>, transform_indices = @transform_20, window_bounds = array<i64: 16, 32>}, {pipeline_mode = #tpu.pipeline_mode<synchronous>, transform_indices = @transform_21, window_bounds = array<i64: 1, 32>}, {pipeline_mode = #tpu.pipeline_mode<synchronous>, transform_indices = @transform_22, window_bounds = array<i64: 16, 16>}, {pipeline_mode = #tpu.pipeline_mode<synchronous>, transform_indices = @transform_23, window_bounds = array<i64: 1, 16>}, {transform_indices = @transform_24, window_bounds = array<i64: 1, 2, 128>}]} {
    %c0 = arith.constant 0 : index
    %c0_0 = arith.constant 0 : index
    %c0_1 = arith.constant 0 : index
    %c0_2 = arith.constant 0 : index
    %0 = vector.load %arg1[%c0, %c0_0, %c0_1, %c0_2] : memref<1x2x8x1xi32, #tpu.memory_space<vmem>>, vector<1x2x8x1xi32>
    %1 = vector.shape_cast %0 : vector<1x2x8x1xi32> to vector<2x8x1xi32>
    %c0_3 = arith.constant 0 : index
    %c0_4 = arith.constant 0 : index
    %c0_5 = arith.constant 0 : index
    %c0_6 = arith.constant 0 : index
    %2 = vector.load %arg2[%c0_3, %c0_4, %c0_5, %c0_6] : memref<1x2x8x1xi32, #tpu.memory_space<vmem>>, vector<1x2x8x1xi32>
    %3 = vector.shape_cast %2 : vector<1x2x8x1xi32> to vector<2x8x1xi32>
    %c0_7 = arith.constant 0 : index
    %c0_8 = arith.constant 0 : index
    %c0_9 = arith.constant 0 : index
    %c0_10 = arith.constant 0 : index
    %4 = vector.load %arg3[%c0_7, %c0_8, %c0_9, %c0_10] : memref<1x2x8x1xf32, #tpu.memory_space<vmem>>, vector<1x2x8x1xf32>
    %5 = vector.shape_cast %4 : vector<1x2x8x1xf32> to vector<2x8x1xf32>
    %c0_11 = arith.constant 0 : index
    %c0_12 = arith.constant 0 : index
    %c0_13 = arith.constant 0 : index
    %c0_14 = arith.constant 0 : index
    %6 = vector.load %arg4[%c0_11, %c0_12, %c0_13, %c0_14] : memref<1x2x8x1xf32, #tpu.memory_space<vmem>>, vector<1x2x8x1xf32>
    %7 = vector.shape_cast %6 : vector<1x2x8x1xf32> to vector<2x8x1xf32>
    %c0_15 = arith.constant 0 : index
    %c0_16 = arith.constant 0 : index
    %c0_17 = arith.constant 0 : index
    %c0_18 = arith.constant 0 : index
    %8 = vector.load %arg5[%c0_15, %c0_16, %c0_17, %c0_18] : memref<1x2x1x8xf32, #tpu.memory_space<vmem>>, vector<1x2x1x8xf32>
    %9 = vector.shape_cast %8 : vector<1x2x1x8xf32> to vector<2x1x8xf32>
    %c0_19 = arith.constant 0 : index
    %c0_20 = arith.constant 0 : index
    %c0_21 = arith.constant 0 : index
    %c0_22 = arith.constant 0 : index
    %10 = vector.load %arg6[%c0_19, %c0_20, %c0_21, %c0_22] : memref<1x2x1x8xf32, #tpu.memory_space<vmem>>, vector<1x2x1x8xf32>
    %11 = vector.shape_cast %10 : vector<1x2x1x8xf32> to vector<2x1x8xf32>
    %c0_23 = arith.constant 0 : index
    %c0_24 = arith.constant 0 : index
    %c0_25 = arith.constant 0 : index
    %c0_26 = arith.constant 0 : index
    %12 = vector.load %arg7[%c0_23, %c0_24, %c0_25, %c0_26] : memref<1x2x8x1xf32, #tpu.memory_space<vmem>>, vector<1x2x8x1xf32>
    %13 = vector.shape_cast %12 : vector<1x2x8x1xf32> to vector<2x8x1xf32>
    %c0_27 = arith.constant 0 : index
    %c0_28 = arith.constant 0 : index
    %14 = vector.load %arg8[%c0_27, %c0_28] : memref<128x128xf32, #tpu.memory_space<vmem>>, vector<128x128xf32>
    %c0_29 = arith.constant 0 : index
    %c0_30 = arith.constant 0 : index
    %15 = vector.load %arg9[%c0_29, %c0_30] : memref<128x128xf32, #tpu.memory_space<vmem>>, vector<128x128xf32>
    %c0_31 = arith.constant 0 : index
    %c0_32 = arith.constant 0 : index
    %16 = vector.load %arg10[%c0_31, %c0_32] : memref<1x128xf32, #tpu.memory_space<vmem>>, vector<1x128xf32>
    %17 = tpu.iota {dimensions = array<i32: 2>} : vector<2x8x128xi32>
    %18 = vector.broadcast %1 : vector<2x8x1xi32> to vector<2x8x128xi32>
    %19 = arith.cmpi eq, %18, %17 : vector<2x8x128xi32>
    %20 = arith.extui %19 : vector<2x8x128xi1> to vector<2x8x128xi32>
    %21 = arith.sitofp %20 : vector<2x8x128xi32> to vector<2x8x128xf32>
    %22 = vector.shape_cast %21 : vector<2x8x128xf32> to vector<16x128xf32>
    %cst = arith.constant dense<0.000000e+00> : vector<16x128xf32>
    %23 = tpu.matmul %22, %14, %cst {dimension_numbers = #tpu.dot_dimension_numbers<[1], [0], [0], [1], [0, 0, 1, 1], [], []>} : vector<16x128xf32>, vector<128x128xf32>, vector<16x128xf32> -> vector<16x128xf32>
    %cst_33 = arith.constant dense<0.000000e+00> : vector<16x128xf32>
    %24 = tpu.matmul %23, %15, %cst_33 {dimension_numbers = #tpu.dot_dimension_numbers<[1], [0], [0], [1], [0, 0, 1, 1], [], []>} : vector<16x128xf32>, vector<128x128xf32>, vector<16x128xf32> -> vector<16x128xf32>
    %25 = vector.broadcast %16 : vector<1x128xf32> to vector<16x128xf32>
    %26 = arith.addf %24, %25 : vector<16x128xf32>
    %cst_34 = arith.constant 0.000000e+00 : f32
    %27 = vector.broadcast %cst_34 : f32 to vector<16x128xf32>
    %28 = arith.maximumf %26, %27 : vector<16x128xf32>
    %29 = vector.shape_cast %28 : vector<16x128xf32> to vector<2x8x128xf32>
    %30 = tpu.iota {dimensions = array<i32: 2>} : vector<2x8x128xi32>
    %31 = vector.broadcast %3 : vector<2x8x1xi32> to vector<2x8x128xi32>
    %32 = arith.cmpi eq, %31, %30 : vector<2x8x128xi32>
    %33 = arith.extui %32 : vector<2x8x128xi1> to vector<2x8x128xi32>
    %34 = arith.sitofp %33 : vector<2x8x128xi32> to vector<2x8x128xf32>
    %35 = vector.shape_cast %34 : vector<2x8x128xf32> to vector<16x128xf32>
    %cst_35 = arith.constant dense<0.000000e+00> : vector<16x128xf32>
    %36 = tpu.matmul %35, %14, %cst_35 {dimension_numbers = #tpu.dot_dimension_numbers<[1], [0], [0], [1], [0, 0, 1, 1], [], []>} : vector<16x128xf32>, vector<128x128xf32>, vector<16x128xf32> -> vector<16x128xf32>
    %cst_36 = arith.constant dense<0.000000e+00> : vector<16x128xf32>
    %37 = tpu.matmul %36, %15, %cst_36 {dimension_numbers = #tpu.dot_dimension_numbers<[1], [0], [0], [1], [0, 0, 1, 1], [], []>} : vector<16x128xf32>, vector<128x128xf32>, vector<16x128xf32> -> vector<16x128xf32>
    %38 = vector.broadcast %16 : vector<1x128xf32> to vector<16x128xf32>
    %39 = arith.addf %37, %38 : vector<16x128xf32>
    %cst_37 = arith.constant 0.000000e+00 : f32
    %40 = vector.broadcast %cst_37 : f32 to vector<16x128xf32>
    %41 = arith.maximumf %39, %40 : vector<16x128xf32>
    %42 = vector.shape_cast %41 : vector<16x128xf32> to vector<2x8x128xf32>
    %43 = vector.broadcast %5 : vector<2x8x1xf32> to vector<2x8x128xf32>
    %44 = arith.mulf %29, %43 : vector<2x8x128xf32>
    %45 = vector.broadcast %7 : vector<2x8x1xf32> to vector<2x8x128xf32>
    %46 = arith.mulf %42, %45 : vector<2x8x128xf32>
    %cst_38 = arith.constant dense<0.000000e+00> : vector<2x1xf32>
    %47 = vector.multi_reduction <add>, %7, %cst_38 [1] : vector<2x8x1xf32> to vector<2x1xf32>
    %48 = vector.shape_cast %47 : vector<2x1xf32> to vector<2x1x1xf32>
    %cst_39 = arith.constant 1.000000e+00 : f32
    %49 = vector.broadcast %cst_39 : f32 to vector<2x1x1xf32>
    %50 = arith.maximumf %48, %49 : vector<2x1x1xf32>
    %cst_40 = arith.constant dense<0.000000e+00> : vector<2x1xf32>
    %51 = vector.multi_reduction <add>, %7, %cst_40 [1] : vector<2x8x1xf32> to vector<2x1xf32>
    %52 = vector.shape_cast %51 : vector<2x1xf32> to vector<2x1x1xf32>
    %cst_41 = arith.constant 0.000000e+00 : f32
    %53 = vector.broadcast %cst_41 : f32 to vector<2x1x1xf32>
    %54 = arith.cmpf ogt, %52, %53 : vector<2x1x1xf32>
    %55 = arith.mulf %44, %44 : vector<2x8x128xf32>
    %cst_42 = arith.constant dense<0.000000e+00> : vector<2x8xf32>
    %56 = vector.multi_reduction <add>, %55, %cst_42 [2] : vector<2x8x128xf32> to vector<2x8xf32>
    %57 = vector.shape_cast %56 : vector<2x8xf32> to vector<2x8x1xf32>
    %58 = math.sqrt %57 : vector<2x8x1xf32>
    %cst_43 = arith.constant 9.99999993E-9 : f32
    %59 = vector.broadcast %cst_43 : f32 to vector<2x8x1xf32>
    %60 = arith.maximumf %58, %59 : vector<2x8x1xf32>
    %61 = vector.broadcast %60 : vector<2x8x1xf32> to vector<2x8x128xf32>
    %62 = arith.divf %44, %61 : vector<2x8x128xf32>
    %63 = arith.mulf %46, %46 : vector<2x8x128xf32>
    %cst_44 = arith.constant dense<0.000000e+00> : vector<2x8xf32>
    %64 = vector.multi_reduction <add>, %63, %cst_44 [2] : vector<2x8x128xf32> to vector<2x8xf32>
    %65 = vector.shape_cast %64 : vector<2x8xf32> to vector<2x8x1xf32>
    %66 = math.sqrt %65 : vector<2x8x1xf32>
    %cst_45 = arith.constant 9.99999993E-9 : f32
    %67 = vector.broadcast %cst_45 : f32 to vector<2x8x1xf32>
    %68 = arith.maximumf %66, %67 : vector<2x8x1xf32>
    %69 = vector.broadcast %68 : vector<2x8x1xf32> to vector<2x8x128xf32>
    %70 = arith.divf %46, %69 : vector<2x8x128xf32>
    "tpu.trace_start"() <{level = 10 : i32, message = "bid,bjd->bij"}> : () -> ()
    %cst_46 = arith.constant dense<0.000000e+00> : vector<2x8x8xf32>
    %71 = tpu.matmul %62, %70, %cst_46 {dimension_numbers = #tpu.dot_dimension_numbers<[2], [2], [1], [1], [0, 0, 0, 1, 1, 1], [0], [0]>} : vector<2x8x128xf32>, vector<2x8x128xf32>, vector<2x8x8xf32> -> vector<2x8x8xf32>
    %cst_47 = arith.constant 0.000000e+00 : f32
    "tpu.trace_stop"() : () -> ()
    %72 = vector.broadcast %cst_47 : f32 to vector<2x1x8xf32>
    %73 = arith.cmpf ogt, %11, %72 : vector<2x1x8xf32>
    %cst_48 = arith.constant -1.000000e+30 : f32
    %74 = vector.shape_cast %73 : vector<2x1x8xi1> to vector<2x1x8xi1>
    %75 = vector.broadcast %74 : vector<2x1x8xi1> to vector<2x8x8xi1>
    %76 = vector.broadcast %cst_48 : f32 to vector<2x8x8xf32>
    %77 = arith.select %75, %71, %76 : vector<2x8x8xi1>, vector<2x8x8xf32>
    %cst_49 = arith.constant dense<0xFF800000> : vector<2x8xf32>
    %78 = vector.multi_reduction <maximumf>, %77, %cst_49 [2] : vector<2x8x8xf32> to vector<2x8xf32>
    %79 = vector.shape_cast %78 : vector<2x8xf32> to vector<2x8x1xf32>
    %cst_50 = arith.constant 0.000000e+00 : f32
    %80 = vector.shape_cast %54 : vector<2x1x1xi1> to vector<2x1x1xi1>
    %81 = vector.broadcast %80 : vector<2x1x1xi1> to vector<2x8x1xi1>
    %82 = vector.broadcast %cst_50 : f32 to vector<2x8x1xf32>
    %83 = arith.select %81, %79, %82 : vector<2x8x1xi1>, vector<2x8x1xf32>
    %84 = vector.broadcast %11 : vector<2x1x8xf32> to vector<2x8x8xf32>
    %85 = arith.mulf %71, %84 : vector<2x8x8xf32>
    %cst_51 = arith.constant dense<0.000000e+00> : vector<2x8xf32>
    %86 = vector.multi_reduction <add>, %85, %cst_51 [2] : vector<2x8x8xf32> to vector<2x8xf32>
    %87 = vector.shape_cast %86 : vector<2x8xf32> to vector<2x8x1xf32>
    %88 = vector.broadcast %50 : vector<2x1x1xf32> to vector<2x8x1xf32>
    %89 = arith.divf %87, %88 : vector<2x8x1xf32>
    %c0_52 = arith.constant 0 : index
    %c0_53 = arith.constant 0 : index
    %90 = vector.load %arg11[%c0_52, %c0_53] : memref<4x128xf32, #tpu.memory_space<vmem>>, vector<4x128xf32>
    %91 = vector.shape_cast %44 : vector<2x8x128xf32> to vector<2x1x8x128xf32>
    %92 = vector.shape_cast %90 : vector<4x128xf32> to vector<1x4x1x128xf32>
    %93 = vector.broadcast %91 : vector<2x1x8x128xf32> to vector<2x4x8x128xf32>
    %94 = vector.broadcast %92 : vector<1x4x1x128xf32> to vector<2x4x8x128xf32>
    %95 = arith.mulf %93, %94 : vector<2x4x8x128xf32>
    %96 = arith.mulf %95, %95 : vector<2x4x8x128xf32>
    %cst_54 = arith.constant dense<0.000000e+00> : vector<2x4x8xf32>
    %97 = vector.multi_reduction <add>, %96, %cst_54 [3] : vector<2x4x8x128xf32> to vector<2x4x8xf32>
    %98 = vector.shape_cast %97 : vector<2x4x8xf32> to vector<2x4x8x1xf32>
    %99 = math.sqrt %98 : vector<2x4x8x1xf32>
    %cst_55 = arith.constant 9.99999993E-9 : f32
    %100 = vector.broadcast %cst_55 : f32 to vector<2x4x8x1xf32>
    %101 = arith.maximumf %99, %100 : vector<2x4x8x1xf32>
    %102 = vector.broadcast %101 : vector<2x4x8x1xf32> to vector<2x4x8x128xf32>
    %103 = arith.divf %95, %102 : vector<2x4x8x128xf32>
    %104 = vector.shape_cast %46 : vector<2x8x128xf32> to vector<2x1x8x128xf32>
    %105 = vector.shape_cast %90 : vector<4x128xf32> to vector<1x4x1x128xf32>
    %106 = vector.broadcast %104 : vector<2x1x8x128xf32> to vector<2x4x8x128xf32>
    %107 = vector.broadcast %105 : vector<1x4x1x128xf32> to vector<2x4x8x128xf32>
    %108 = arith.mulf %106, %107 : vector<2x4x8x128xf32>
    %109 = arith.mulf %108, %108 : vector<2x4x8x128xf32>
    %cst_56 = arith.constant dense<0.000000e+00> : vector<2x4x8xf32>
    %110 = vector.multi_reduction <add>, %109, %cst_56 [3] : vector<2x4x8x128xf32> to vector<2x4x8xf32>
    %111 = vector.shape_cast %110 : vector<2x4x8xf32> to vector<2x4x8x1xf32>
    %112 = math.sqrt %111 : vector<2x4x8x1xf32>
    %cst_57 = arith.constant 9.99999993E-9 : f32
    %113 = vector.broadcast %cst_57 : f32 to vector<2x4x8x1xf32>
    %114 = arith.maximumf %112, %113 : vector<2x4x8x1xf32>
    %115 = vector.broadcast %114 : vector<2x4x8x1xf32> to vector<2x4x8x128xf32>
    %116 = arith.divf %108, %115 : vector<2x4x8x128xf32>
    %117 = vector.shape_cast %103 : vector<2x4x8x128xf32> to vector<8x8x128xf32>
    %118 = vector.shape_cast %116 : vector<2x4x8x128xf32> to vector<8x8x128xf32>
    "tpu.trace_start"() <{level = 10 : i32, message = "xid,xjd->xij"}> : () -> ()
    %cst_58 = arith.constant dense<0.000000e+00> : vector<8x8x8xf32>
    %119 = tpu.matmul %117, %118, %cst_58 {dimension_numbers = #tpu.dot_dimension_numbers<[2], [2], [1], [1], [0, 0, 0, 1, 1, 1], [0], [0]>} : vector<8x8x128xf32>, vector<8x8x128xf32>, vector<8x8x8xf32> -> vector<8x8x8xf32>
    "tpu.trace_stop"() : () -> ()
    %120 = vector.shape_cast %119 : vector<8x8x8xf32> to vector<2x4x8x8xf32>
    %121 = vector.extract_strided_slice %120 {offsets = [0, 0, 0, 0], sizes = [2, 1, 8, 8], strides = [1, 1, 1, 1]} : vector<2x4x8x8xf32> to vector<2x1x8x8xf32>
    %122 = vector.shape_cast %121 : vector<2x1x8x8xf32> to vector<2x8x8xf32>
    %cst_59 = arith.constant 0.000000e+00 : f32
    %123 = vector.broadcast %cst_59 : f32 to vector<2x1x8xf32>
    %124 = arith.cmpf ogt, %11, %123 : vector<2x1x8xf32>
    %cst_60 = arith.constant -1.000000e+30 : f32
    %125 = vector.shape_cast %124 : vector<2x1x8xi1> to vector<2x1x8xi1>
    %126 = vector.broadcast %125 : vector<2x1x8xi1> to vector<2x8x8xi1>
    %127 = vector.broadcast %cst_60 : f32 to vector<2x8x8xf32>
    %128 = arith.select %126, %122, %127 : vector<2x8x8xi1>, vector<2x8x8xf32>
    %cst_61 = arith.constant dense<0xFF800000> : vector<2x8xf32>
    %129 = vector.multi_reduction <maximumf>, %128, %cst_61 [2] : vector<2x8x8xf32> to vector<2x8xf32>
    %130 = vector.shape_cast %129 : vector<2x8xf32> to vector<2x8x1xf32>
    %cst_62 = arith.constant 0.000000e+00 : f32
    %131 = vector.shape_cast %54 : vector<2x1x1xi1> to vector<2x1x1xi1>
    %132 = vector.broadcast %131 : vector<2x1x1xi1> to vector<2x8x1xi1>
    %133 = vector.broadcast %cst_62 : f32 to vector<2x8x1xf32>
    %134 = arith.select %132, %130, %133 : vector<2x8x1xi1>, vector<2x8x1xf32>
    %135 = vector.broadcast %11 : vector<2x1x8xf32> to vector<2x8x8xf32>
    %136 = arith.mulf %122, %135 : vector<2x8x8xf32>
    %cst_63 = arith.constant dense<0.000000e+00> : vector<2x8xf32>
    %137 = vector.multi_reduction <add>, %136, %cst_63 [2] : vector<2x8x8xf32> to vector<2x8xf32>
    %138 = vector.shape_cast %137 : vector<2x8xf32> to vector<2x8x1xf32>
    %139 = vector.broadcast %50 : vector<2x1x1xf32> to vector<2x8x1xf32>
    %140 = arith.divf %138, %139 : vector<2x8x1xf32>
    %141 = vector.extract_strided_slice %120 {offsets = [0, 1, 0, 0], sizes = [2, 1, 8, 8], strides = [1, 1, 1, 1]} : vector<2x4x8x8xf32> to vector<2x1x8x8xf32>
    %142 = vector.shape_cast %141 : vector<2x1x8x8xf32> to vector<2x8x8xf32>
    %cst_64 = arith.constant 0.000000e+00 : f32
    %143 = vector.broadcast %cst_64 : f32 to vector<2x1x8xf32>
    %144 = arith.cmpf ogt, %11, %143 : vector<2x1x8xf32>
    %cst_65 = arith.constant -1.000000e+30 : f32
    %145 = vector.shape_cast %144 : vector<2x1x8xi1> to vector<2x1x8xi1>
    %146 = vector.broadcast %145 : vector<2x1x8xi1> to vector<2x8x8xi1>
    %147 = vector.broadcast %cst_65 : f32 to vector<2x8x8xf32>
    %148 = arith.select %146, %142, %147 : vector<2x8x8xi1>, vector<2x8x8xf32>
    %cst_66 = arith.constant dense<0xFF800000> : vector<2x8xf32>
    %149 = vector.multi_reduction <maximumf>, %148, %cst_66 [2] : vector<2x8x8xf32> to vector<2x8xf32>
    %150 = vector.shape_cast %149 : vector<2x8xf32> to vector<2x8x1xf32>
    %cst_67 = arith.constant 0.000000e+00 : f32
    %151 = vector.shape_cast %54 : vector<2x1x1xi1> to vector<2x1x1xi1>
    %152 = vector.broadcast %151 : vector<2x1x1xi1> to vector<2x8x1xi1>
    %153 = vector.broadcast %cst_67 : f32 to vector<2x8x1xf32>
    %154 = arith.select %152, %150, %153 : vector<2x8x1xi1>, vector<2x8x1xf32>
    %155 = vector.broadcast %11 : vector<2x1x8xf32> to vector<2x8x8xf32>
    %156 = arith.mulf %142, %155 : vector<2x8x8xf32>
    %cst_68 = arith.constant dense<0.000000e+00> : vector<2x8xf32>
    %157 = vector.multi_reduction <add>, %156, %cst_68 [2] : vector<2x8x8xf32> to vector<2x8xf32>
    %158 = vector.shape_cast %157 : vector<2x8xf32> to vector<2x8x1xf32>
    %159 = vector.broadcast %50 : vector<2x1x1xf32> to vector<2x8x1xf32>
    %160 = arith.divf %158, %159 : vector<2x8x1xf32>
    %161 = vector.extract_strided_slice %120 {offsets = [0, 2, 0, 0], sizes = [2, 1, 8, 8], strides = [1, 1, 1, 1]} : vector<2x4x8x8xf32> to vector<2x1x8x8xf32>
    %162 = vector.shape_cast %161 : vector<2x1x8x8xf32> to vector<2x8x8xf32>
    %cst_69 = arith.constant 0.000000e+00 : f32
    %163 = vector.broadcast %cst_69 : f32 to vector<2x1x8xf32>
    %164 = arith.cmpf ogt, %11, %163 : vector<2x1x8xf32>
    %cst_70 = arith.constant -1.000000e+30 : f32
    %165 = vector.shape_cast %164 : vector<2x1x8xi1> to vector<2x1x8xi1>
    %166 = vector.broadcast %165 : vector<2x1x8xi1> to vector<2x8x8xi1>
    %167 = vector.broadcast %cst_70 : f32 to vector<2x8x8xf32>
    %168 = arith.select %166, %162, %167 : vector<2x8x8xi1>, vector<2x8x8xf32>
    %cst_71 = arith.constant dense<0xFF800000> : vector<2x8xf32>
    %169 = vector.multi_reduction <maximumf>, %168, %cst_71 [2] : vector<2x8x8xf32> to vector<2x8xf32>
    %170 = vector.shape_cast %169 : vector<2x8xf32> to vector<2x8x1xf32>
    %cst_72 = arith.constant 0.000000e+00 : f32
    %171 = vector.shape_cast %54 : vector<2x1x1xi1> to vector<2x1x1xi1>
    %172 = vector.broadcast %171 : vector<2x1x1xi1> to vector<2x8x1xi1>
    %173 = vector.broadcast %cst_72 : f32 to vector<2x8x1xf32>
    %174 = arith.select %172, %170, %173 : vector<2x8x1xi1>, vector<2x8x1xf32>
    %175 = vector.broadcast %11 : vector<2x1x8xf32> to vector<2x8x8xf32>
    %176 = arith.mulf %162, %175 : vector<2x8x8xf32>
    %cst_73 = arith.constant dense<0.000000e+00> : vector<2x8xf32>
    %177 = vector.multi_reduction <add>, %176, %cst_73 [2] : vector<2x8x8xf32> to vector<2x8xf32>
    %178 = vector.shape_cast %177 : vector<2x8xf32> to vector<2x8x1xf32>
    %179 = vector.broadcast %50 : vector<2x1x1xf32> to vector<2x8x1xf32>
    %180 = arith.divf %178, %179 : vector<2x8x1xf32>
    %181 = vector.extract_strided_slice %120 {offsets = [0, 3, 0, 0], sizes = [2, 1, 8, 8], strides = [1, 1, 1, 1]} : vector<2x4x8x8xf32> to vector<2x1x8x8xf32>
    %182 = vector.shape_cast %181 : vector<2x1x8x8xf32> to vector<2x8x8xf32>
    %cst_74 = arith.constant 0.000000e+00 : f32
    %183 = vector.broadcast %cst_74 : f32 to vector<2x1x8xf32>
    %184 = arith.cmpf ogt, %11, %183 : vector<2x1x8xf32>
    %cst_75 = arith.constant -1.000000e+30 : f32
    %185 = vector.shape_cast %184 : vector<2x1x8xi1> to vector<2x1x8xi1>
    %186 = vector.broadcast %185 : vector<2x1x8xi1> to vector<2x8x8xi1>
    %187 = vector.broadcast %cst_75 : f32 to vector<2x8x8xf32>
    %188 = arith.select %186, %182, %187 : vector<2x8x8xi1>, vector<2x8x8xf32>
    %cst_76 = arith.constant dense<0xFF800000> : vector<2x8xf32>
    %189 = vector.multi_reduction <maximumf>, %188, %cst_76 [2] : vector<2x8x8xf32> to vector<2x8xf32>
    %190 = vector.shape_cast %189 : vector<2x8xf32> to vector<2x8x1xf32>
    %cst_77 = arith.constant 0.000000e+00 : f32
    %191 = vector.shape_cast %54 : vector<2x1x1xi1> to vector<2x1x1xi1>
    %192 = vector.broadcast %191 : vector<2x1x1xi1> to vector<2x8x1xi1>
    %193 = vector.broadcast %cst_77 : f32 to vector<2x8x1xf32>
    %194 = arith.select %192, %190, %193 : vector<2x8x1xi1>, vector<2x8x1xf32>
    %195 = vector.broadcast %11 : vector<2x1x8xf32> to vector<2x8x8xf32>
    %196 = arith.mulf %182, %195 : vector<2x8x8xf32>
    %cst_78 = arith.constant dense<0.000000e+00> : vector<2x8xf32>
    %197 = vector.multi_reduction <add>, %196, %cst_78 [2] : vector<2x8x8xf32> to vector<2x8xf32>
    %198 = vector.shape_cast %197 : vector<2x8xf32> to vector<2x8x1xf32>
    %199 = vector.broadcast %50 : vector<2x1x1xf32> to vector<2x8x1xf32>
    %200 = arith.divf %198, %199 : vector<2x8x1xf32>
    %cst_79 = arith.constant 0.000000e+00 : f32
    %201 = vector.broadcast %cst_79 : f32 to vector<2x8x118xf32>
    %202 = tpu.concatenate %29, %83, %89, %134, %154, %174, %194, %140, %160, %180, %200, %201 in 2 : vector<2x8x128xf32>, vector<2x8x1xf32>, vector<2x8x1xf32>, vector<2x8x1xf32>, vector<2x8x1xf32>, vector<2x8x1xf32>, vector<2x8x1xf32>, vector<2x8x1xf32>, vector<2x8x1xf32>, vector<2x8x1xf32>, vector<2x8x1xf32>, vector<2x8x118xf32> -> vector<2x8x256xf32>
    %203 = vector.shape_cast %202 : vector<2x8x256xf32> to vector<16x256xf32>
    %c0_80 = arith.constant 0 : index
    %c0_81 = arith.constant 0 : index
    %204 = vector.load %arg12[%c0_80, %c0_81] : memref<256x192xf32, #tpu.memory_space<vmem>>, vector<256x192xf32>
    %cst_82 = arith.constant dense<0.000000e+00> : vector<16x192xf32>
    %205 = tpu.matmul %203, %204, %cst_82 {dimension_numbers = #tpu.dot_dimension_numbers<[1], [0], [0], [1], [0, 0, 1, 1], [], []>} : vector<16x256xf32>, vector<256x192xf32>, vector<16x192xf32> -> vector<16x192xf32>
    %206 = vector.shape_cast %205 : vector<16x192xf32> to vector<2x8x192xf32>
    %207 = vector.extract_strided_slice %206 {offsets = [0, 0, 0], sizes = [2, 8, 64], strides = [1, 1, 1]} : vector<2x8x192xf32> to vector<2x8x64xf32>
    %208 = vector.extract_strided_slice %206 {offsets = [0, 0, 64], sizes = [2, 8, 64], strides = [1, 1, 1]} : vector<2x8x192xf32> to vector<2x8x64xf32>
    %209 = vector.extract_strided_slice %206 {offsets = [0, 0, 128], sizes = [2, 8, 64], strides = [1, 1, 1]} : vector<2x8x192xf32> to vector<2x8x64xf32>
    %210 = vector.extract_strided_slice %207 {offsets = [0, 0, 0], sizes = [2, 8, 16], strides = [1, 1, 1]} : vector<2x8x64xf32> to vector<2x8x16xf32>
    %211 = vector.extract_strided_slice %208 {offsets = [0, 0, 0], sizes = [2, 8, 16], strides = [1, 1, 1]} : vector<2x8x64xf32> to vector<2x8x16xf32>
    "tpu.trace_start"() <{level = 10 : i32, message = "bid,bjd->bij"}> : () -> ()
    %cst_83 = arith.constant dense<0.000000e+00> : vector<2x8x8xf32>
    %212 = tpu.matmul %210, %211, %cst_83 {dimension_numbers = #tpu.dot_dimension_numbers<[2], [2], [1], [1], [0, 0, 0, 1, 1, 1], [0], [0]>} : vector<2x8x16xf32>, vector<2x8x16xf32>, vector<2x8x8xf32> -> vector<2x8x8xf32>
    "tpu.trace_stop"() : () -> ()
    %cst_84 = arith.constant 2.500000e-01 : f32
    %213 = vector.broadcast %cst_84 : f32 to vector<2x8x8xf32>
    %214 = arith.mulf %212, %213 : vector<2x8x8xf32>
    %cst_85 = arith.constant 0.000000e+00 : f32
    %215 = vector.broadcast %cst_85 : f32 to vector<2x1x8xf32>
    %216 = arith.cmpf ogt, %9, %215 : vector<2x1x8xf32>
    %cst_86 = arith.constant -1.000000e+30 : f32
    %217 = vector.shape_cast %216 : vector<2x1x8xi1> to vector<2x1x8xi1>
    %218 = vector.broadcast %217 : vector<2x1x8xi1> to vector<2x8x8xi1>
    %219 = vector.broadcast %cst_86 : f32 to vector<2x8x8xf32>
    %220 = arith.select %218, %214, %219 : vector<2x8x8xi1>, vector<2x8x8xf32>
    %cst_87 = arith.constant dense<0xFF800000> : vector<2x8xf32>
    %221 = vector.multi_reduction <maximumf>, %220, %cst_87 [2] : vector<2x8x8xf32> to vector<2x8xf32>
    %222 = vector.shape_cast %221 : vector<2x8xf32> to vector<2x8x1xf32>
    %223 = vector.broadcast %222 : vector<2x8x1xf32> to vector<2x8x8xf32>
    %224 = arith.subf %220, %223 : vector<2x8x8xf32>
    %225 = math.exp %224 : vector<2x8x8xf32>
    %cst_88 = arith.constant dense<0.000000e+00> : vector<2x8xf32>
    %226 = vector.multi_reduction <add>, %225, %cst_88 [2] : vector<2x8x8xf32> to vector<2x8xf32>
    %227 = vector.shape_cast %226 : vector<2x8xf32> to vector<2x8x1xf32>
    %228 = tpu.reciprocal %227 {approx = true} : vector<2x8x1xf32> -> vector<2x8x1xf32>
    %229 = vector.broadcast %228 : vector<2x8x1xf32> to vector<2x8x8xf32>
    %230 = arith.mulf %225, %229 : vector<2x8x8xf32>
    %231 = vector.extract_strided_slice %209 {offsets = [0, 0, 0], sizes = [2, 8, 16], strides = [1, 1, 1]} : vector<2x8x64xf32> to vector<2x8x16xf32>
    "tpu.trace_start"() <{level = 10 : i32, message = "bij,bjd->bid"}> : () -> ()
    %cst_89 = arith.constant dense<0.000000e+00> : vector<2x8x16xf32>
    %232 = tpu.matmul %230, %231, %cst_89 {dimension_numbers = #tpu.dot_dimension_numbers<[2], [1], [1], [2], [0, 0, 0, 1, 1, 2], [0], [0]>} : vector<2x8x8xf32>, vector<2x8x16xf32>, vector<2x8x16xf32> -> vector<2x8x16xf32>
    "tpu.trace_stop"() : () -> ()
    %233 = vector.extract_strided_slice %207 {offsets = [0, 0, 16], sizes = [2, 8, 16], strides = [1, 1, 1]} : vector<2x8x64xf32> to vector<2x8x16xf32>
    %234 = vector.extract_strided_slice %208 {offsets = [0, 0, 16], sizes = [2, 8, 16], strides = [1, 1, 1]} : vector<2x8x64xf32> to vector<2x8x16xf32>
    "tpu.trace_start"() <{level = 10 : i32, message = "bid,bjd->bij"}> : () -> ()
    %cst_90 = arith.constant dense<0.000000e+00> : vector<2x8x8xf32>
    %235 = tpu.matmul %233, %234, %cst_90 {dimension_numbers = #tpu.dot_dimension_numbers<[2], [2], [1], [1], [0, 0, 0, 1, 1, 1], [0], [0]>} : vector<2x8x16xf32>, vector<2x8x16xf32>, vector<2x8x8xf32> -> vector<2x8x8xf32>
    "tpu.trace_stop"() : () -> ()
    %cst_91 = arith.constant 2.500000e-01 : f32
    %236 = vector.broadcast %cst_91 : f32 to vector<2x8x8xf32>
    %237 = arith.mulf %235, %236 : vector<2x8x8xf32>
    %cst_92 = arith.constant 0.000000e+00 : f32
    %238 = vector.broadcast %cst_92 : f32 to vector<2x1x8xf32>
    %239 = arith.cmpf ogt, %9, %238 : vector<2x1x8xf32>
    %cst_93 = arith.constant -1.000000e+30 : f32
    %240 = vector.shape_cast %239 : vector<2x1x8xi1> to vector<2x1x8xi1>
    %241 = vector.broadcast %240 : vector<2x1x8xi1> to vector<2x8x8xi1>
    %242 = vector.broadcast %cst_93 : f32 to vector<2x8x8xf32>
    %243 = arith.select %241, %237, %242 : vector<2x8x8xi1>, vector<2x8x8xf32>
    %cst_94 = arith.constant dense<0xFF800000> : vector<2x8xf32>
    %244 = vector.multi_reduction <maximumf>, %243, %cst_94 [2] : vector<2x8x8xf32> to vector<2x8xf32>
    %245 = vector.shape_cast %244 : vector<2x8xf32> to vector<2x8x1xf32>
    %246 = vector.broadcast %245 : vector<2x8x1xf32> to vector<2x8x8xf32>
    %247 = arith.subf %243, %246 : vector<2x8x8xf32>
    %248 = math.exp %247 : vector<2x8x8xf32>
    %cst_95 = arith.constant dense<0.000000e+00> : vector<2x8xf32>
    %249 = vector.multi_reduction <add>, %248, %cst_95 [2] : vector<2x8x8xf32> to vector<2x8xf32>
    %250 = vector.shape_cast %249 : vector<2x8xf32> to vector<2x8x1xf32>
    %251 = tpu.reciprocal %250 {approx = true} : vector<2x8x1xf32> -> vector<2x8x1xf32>
    %252 = vector.broadcast %251 : vector<2x8x1xf32> to vector<2x8x8xf32>
    %253 = arith.mulf %248, %252 : vector<2x8x8xf32>
    %254 = vector.extract_strided_slice %209 {offsets = [0, 0, 16], sizes = [2, 8, 16], strides = [1, 1, 1]} : vector<2x8x64xf32> to vector<2x8x16xf32>
    "tpu.trace_start"() <{level = 10 : i32, message = "bij,bjd->bid"}> : () -> ()
    %cst_96 = arith.constant dense<0.000000e+00> : vector<2x8x16xf32>
    %255 = tpu.matmul %253, %254, %cst_96 {dimension_numbers = #tpu.dot_dimension_numbers<[2], [1], [1], [2], [0, 0, 0, 1, 1, 2], [0], [0]>} : vector<2x8x8xf32>, vector<2x8x16xf32>, vector<2x8x16xf32> -> vector<2x8x16xf32>
    "tpu.trace_stop"() : () -> ()
    %256 = vector.extract_strided_slice %207 {offsets = [0, 0, 32], sizes = [2, 8, 16], strides = [1, 1, 1]} : vector<2x8x64xf32> to vector<2x8x16xf32>
    %257 = vector.extract_strided_slice %208 {offsets = [0, 0, 32], sizes = [2, 8, 16], strides = [1, 1, 1]} : vector<2x8x64xf32> to vector<2x8x16xf32>
    "tpu.trace_start"() <{level = 10 : i32, message = "bid,bjd->bij"}> : () -> ()
    %cst_97 = arith.constant dense<0.000000e+00> : vector<2x8x8xf32>
    %258 = tpu.matmul %256, %257, %cst_97 {dimension_numbers = #tpu.dot_dimension_numbers<[2], [2], [1], [1], [0, 0, 0, 1, 1, 1], [0], [0]>} : vector<2x8x16xf32>, vector<2x8x16xf32>, vector<2x8x8xf32> -> vector<2x8x8xf32>
    "tpu.trace_stop"() : () -> ()
    %cst_98 = arith.constant 2.500000e-01 : f32
    %259 = vector.broadcast %cst_98 : f32 to vector<2x8x8xf32>
    %260 = arith.mulf %258, %259 : vector<2x8x8xf32>
    %cst_99 = arith.constant 0.000000e+00 : f32
    %261 = vector.broadcast %cst_99 : f32 to vector<2x1x8xf32>
    %262 = arith.cmpf ogt, %9, %261 : vector<2x1x8xf32>
    %cst_100 = arith.constant -1.000000e+30 : f32
    %263 = vector.shape_cast %262 : vector<2x1x8xi1> to vector<2x1x8xi1>
    %264 = vector.broadcast %263 : vector<2x1x8xi1> to vector<2x8x8xi1>
    %265 = vector.broadcast %cst_100 : f32 to vector<2x8x8xf32>
    %266 = arith.select %264, %260, %265 : vector<2x8x8xi1>, vector<2x8x8xf32>
    %cst_101 = arith.constant dense<0xFF800000> : vector<2x8xf32>
    %267 = vector.multi_reduction <maximumf>, %266, %cst_101 [2] : vector<2x8x8xf32> to vector<2x8xf32>
    %268 = vector.shape_cast %267 : vector<2x8xf32> to vector<2x8x1xf32>
    %269 = vector.broadcast %268 : vector<2x8x1xf32> to vector<2x8x8xf32>
    %270 = arith.subf %266, %269 : vector<2x8x8xf32>
    %271 = math.exp %270 : vector<2x8x8xf32>
    %cst_102 = arith.constant dense<0.000000e+00> : vector<2x8xf32>
    %272 = vector.multi_reduction <add>, %271, %cst_102 [2] : vector<2x8x8xf32> to vector<2x8xf32>
    %273 = vector.shape_cast %272 : vector<2x8xf32> to vector<2x8x1xf32>
    %274 = tpu.reciprocal %273 {approx = true} : vector<2x8x1xf32> -> vector<2x8x1xf32>
    %275 = vector.broadcast %274 : vector<2x8x1xf32> to vector<2x8x8xf32>
    %276 = arith.mulf %271, %275 : vector<2x8x8xf32>
    %277 = vector.extract_strided_slice %209 {offsets = [0, 0, 32], sizes = [2, 8, 16], strides = [1, 1, 1]} : vector<2x8x64xf32> to vector<2x8x16xf32>
    "tpu.trace_start"() <{level = 10 : i32, message = "bij,bjd->bid"}> : () -> ()
    %cst_103 = arith.constant dense<0.000000e+00> : vector<2x8x16xf32>
    %278 = tpu.matmul %276, %277, %cst_103 {dimension_numbers = #tpu.dot_dimension_numbers<[2], [1], [1], [2], [0, 0, 0, 1, 1, 2], [0], [0]>} : vector<2x8x8xf32>, vector<2x8x16xf32>, vector<2x8x16xf32> -> vector<2x8x16xf32>
    "tpu.trace_stop"() : () -> ()
    %279 = vector.extract_strided_slice %207 {offsets = [0, 0, 48], sizes = [2, 8, 16], strides = [1, 1, 1]} : vector<2x8x64xf32> to vector<2x8x16xf32>
    %280 = vector.extract_strided_slice %208 {offsets = [0, 0, 48], sizes = [2, 8, 16], strides = [1, 1, 1]} : vector<2x8x64xf32> to vector<2x8x16xf32>
    "tpu.trace_start"() <{level = 10 : i32, message = "bid,bjd->bij"}> : () -> ()
    %cst_104 = arith.constant dense<0.000000e+00> : vector<2x8x8xf32>
    %281 = tpu.matmul %279, %280, %cst_104 {dimension_numbers = #tpu.dot_dimension_numbers<[2], [2], [1], [1], [0, 0, 0, 1, 1, 1], [0], [0]>} : vector<2x8x16xf32>, vector<2x8x16xf32>, vector<2x8x8xf32> -> vector<2x8x8xf32>
    "tpu.trace_stop"() : () -> ()
    %cst_105 = arith.constant 2.500000e-01 : f32
    %282 = vector.broadcast %cst_105 : f32 to vector<2x8x8xf32>
    %283 = arith.mulf %281, %282 : vector<2x8x8xf32>
    %cst_106 = arith.constant 0.000000e+00 : f32
    %284 = vector.broadcast %cst_106 : f32 to vector<2x1x8xf32>
    %285 = arith.cmpf ogt, %9, %284 : vector<2x1x8xf32>
    %cst_107 = arith.constant -1.000000e+30 : f32
    %286 = vector.shape_cast %285 : vector<2x1x8xi1> to vector<2x1x8xi1>
    %287 = vector.broadcast %286 : vector<2x1x8xi1> to vector<2x8x8xi1>
    %288 = vector.broadcast %cst_107 : f32 to vector<2x8x8xf32>
    %289 = arith.select %287, %283, %288 : vector<2x8x8xi1>, vector<2x8x8xf32>
    %cst_108 = arith.constant dense<0xFF800000> : vector<2x8xf32>
    %290 = vector.multi_reduction <maximumf>, %289, %cst_108 [2] : vector<2x8x8xf32> to vector<2x8xf32>
    %291 = vector.shape_cast %290 : vector<2x8xf32> to vector<2x8x1xf32>
    %292 = vector.broadcast %291 : vector<2x8x1xf32> to vector<2x8x8xf32>
    %293 = arith.subf %289, %292 : vector<2x8x8xf32>
    %294 = math.exp %293 : vector<2x8x8xf32>
    %cst_109 = arith.constant dense<0.000000e+00> : vector<2x8xf32>
    %295 = vector.multi_reduction <add>, %294, %cst_109 [2] : vector<2x8x8xf32> to vector<2x8xf32>
    %296 = vector.shape_cast %295 : vector<2x8xf32> to vector<2x8x1xf32>
    %297 = tpu.reciprocal %296 {approx = true} : vector<2x8x1xf32> -> vector<2x8x1xf32>
    %298 = vector.broadcast %297 : vector<2x8x1xf32> to vector<2x8x8xf32>
    %299 = arith.mulf %294, %298 : vector<2x8x8xf32>
    %300 = vector.extract_strided_slice %209 {offsets = [0, 0, 48], sizes = [2, 8, 16], strides = [1, 1, 1]} : vector<2x8x64xf32> to vector<2x8x16xf32>
    "tpu.trace_start"() <{level = 10 : i32, message = "bij,bjd->bid"}> : () -> ()
    %cst_110 = arith.constant dense<0.000000e+00> : vector<2x8x16xf32>
    %301 = tpu.matmul %299, %300, %cst_110 {dimension_numbers = #tpu.dot_dimension_numbers<[2], [1], [1], [2], [0, 0, 0, 1, 1, 2], [0], [0]>} : vector<2x8x8xf32>, vector<2x8x16xf32>, vector<2x8x16xf32> -> vector<2x8x16xf32>
    "tpu.trace_stop"() : () -> ()
    %302 = tpu.concatenate %232, %255, %278, %301 in 2 : vector<2x8x16xf32>, vector<2x8x16xf32>, vector<2x8x16xf32>, vector<2x8x16xf32> -> vector<2x8x64xf32>
    %303 = vector.shape_cast %302 : vector<2x8x64xf32> to vector<16x64xf32>
    %c0_111 = arith.constant 0 : index
    %c0_112 = arith.constant 0 : index
    %304 = vector.load %arg13[%c0_111, %c0_112] : memref<64x256xf32, #tpu.memory_space<vmem>>, vector<64x256xf32>
    %cst_113 = arith.constant dense<0.000000e+00> : vector<16x256xf32>
    %305 = tpu.matmul %303, %304, %cst_113 {dimension_numbers = #tpu.dot_dimension_numbers<[1], [0], [0], [1], [0, 0, 1, 1], [], []>} : vector<16x64xf32>, vector<64x256xf32>, vector<16x256xf32> -> vector<16x256xf32>
    %c0_114 = arith.constant 0 : index
    %c0_115 = arith.constant 0 : index
    %306 = vector.load %arg14[%c0_114, %c0_115] : memref<256x256xf32, #tpu.memory_space<vmem>>, vector<256x256xf32>
    %cst_116 = arith.constant dense<0.000000e+00> : vector<16x256xf32>
    %307 = tpu.matmul %203, %306, %cst_116 {dimension_numbers = #tpu.dot_dimension_numbers<[1], [0], [0], [1], [0, 0, 1, 1], [], []>} : vector<16x256xf32>, vector<256x256xf32>, vector<16x256xf32> -> vector<16x256xf32>
    %c0_117 = arith.constant 0 : index
    %c0_118 = arith.constant 0 : index
    %308 = vector.load %arg15[%c0_117, %c0_118] : memref<256x256xf32, #tpu.memory_space<vmem>>, vector<256x256xf32>
    %cst_119 = arith.constant dense<0.000000e+00> : vector<16x256xf32>
    %309 = tpu.matmul %305, %308, %cst_119 {dimension_numbers = #tpu.dot_dimension_numbers<[1], [0], [0], [1], [0, 0, 1, 1], [], []>} : vector<16x256xf32>, vector<256x256xf32>, vector<16x256xf32> -> vector<16x256xf32>
    %310 = arith.addf %307, %309 : vector<16x256xf32>
    %311 = arith.negf %310 : vector<16x256xf32>
    %312 = math.exp %311 : vector<16x256xf32>
    %cst_120 = arith.constant 1.000000e+00 : f32
    %313 = vector.broadcast %cst_120 : f32 to vector<16x256xf32>
    %314 = arith.addf %313, %312 : vector<16x256xf32>
    %315 = arith.divf %313, %314 : vector<16x256xf32>
    %316 = arith.mulf %315, %203 : vector<16x256xf32>
    %cst_121 = arith.constant 1.000000e+00 : f32
    %317 = vector.broadcast %cst_121 : f32 to vector<16x256xf32>
    %318 = arith.subf %317, %315 : vector<16x256xf32>
    %319 = arith.mulf %318, %305 : vector<16x256xf32>
    %320 = arith.addf %316, %319 : vector<16x256xf32>
    %321 = vector.shape_cast %320 : vector<16x256xf32> to vector<2x8x256xf32>
    %322 = vector.broadcast %5 : vector<2x8x1xf32> to vector<2x8x256xf32>
    %323 = arith.mulf %321, %322 : vector<2x8x256xf32>
    %324 = vector.shape_cast %323 : vector<2x8x256xf32> to vector<16x256xf32>
    %cst_122 = arith.constant dense<0.000000e+00> : vector<2x1xf32>
    %325 = vector.multi_reduction <add>, %5, %cst_122 [1] : vector<2x8x1xf32> to vector<2x1xf32>
    %cst_123 = arith.constant 0.000000e+00 : f32
    %326 = vector.broadcast %cst_123 : f32 to vector<2x1xf32>
    %327 = arith.cmpf ogt, %325, %326 : vector<2x1xf32>
    %cst_124 = arith.constant dense<0.000000e+00> : vector<2x1xf32>
    %328 = vector.multi_reduction <add>, %13, %cst_124 [1] : vector<2x8x1xf32> to vector<2x1xf32>
    %cst_125 = arith.constant 0.000000e+00 : f32
    %329 = vector.broadcast %cst_125 : f32 to vector<2x1xf32>
    %330 = arith.cmpf ogt, %328, %329 : vector<2x1xf32>
    %c0_126 = arith.constant 0 : index
    %c0_127 = arith.constant 0 : index
    %331 = vector.load %arg16[%c0_126, %c0_127] : memref<256x8xf32, #tpu.memory_space<vmem>>, vector<256x8xf32>
    %cst_128 = arith.constant dense<0.000000e+00> : vector<16x8xf32>
    %332 = tpu.matmul %324, %331, %cst_128 {dimension_numbers = #tpu.dot_dimension_numbers<[1], [0], [0], [1], [0, 0, 1, 1], [], []>} : vector<16x256xf32>, vector<256x8xf32>, vector<16x8xf32> -> vector<16x8xf32>
    %c0_129 = arith.constant 0 : index
    %c0_130 = arith.constant 0 : index
    %333 = vector.load %arg17[%c0_129, %c0_130] : memref<1x8xf32, #tpu.memory_space<vmem>>, vector<1x8xf32>
    %334 = vector.broadcast %333 : vector<1x8xf32> to vector<16x8xf32>
    %335 = arith.addf %332, %334 : vector<16x8xf32>
    %cst_131 = arith.constant 0.000000e+00 : f32
    %336 = vector.broadcast %cst_131 : f32 to vector<16x8xf32>
    %337 = arith.maximumf %335, %336 : vector<16x8xf32>
    %338 = vector.shape_cast %337 : vector<16x8xf32> to vector<2x8x8xf32>
    %cst_132 = arith.constant 0.000000e+00 : f32
    %339 = vector.broadcast %cst_132 : f32 to vector<2x8x1xf32>
    %340 = arith.cmpf ogt, %5, %339 : vector<2x8x1xf32>
    %cst_133 = arith.constant -1.000000e+30 : f32
    %341 = vector.shape_cast %340 : vector<2x8x1xi1> to vector<2x8x1xi1>
    %342 = vector.broadcast %341 : vector<2x8x1xi1> to vector<2x8x8xi1>
    %343 = vector.broadcast %cst_133 : f32 to vector<2x8x8xf32>
    %344 = arith.select %342, %338, %343 : vector<2x8x8xi1>, vector<2x8x8xf32>
    %cst_134 = arith.constant dense<0xFF800000> : vector<2x8xf32>
    %345 = vector.multi_reduction <maximumf>, %344, %cst_134 [1] : vector<2x8x8xf32> to vector<2x8xf32>
    %cst_135 = arith.constant 0.000000e+00 : f32
    %346 = vector.shape_cast %327 : vector<2x1xi1> to vector<2x1xi1>
    %347 = vector.broadcast %346 : vector<2x1xi1> to vector<2x8xi1>
    %348 = vector.broadcast %cst_135 : f32 to vector<2x8xf32>
    %349 = arith.select %347, %345, %348 : vector<2x8xi1>, vector<2x8xf32>
    %c15_i32 = arith.constant 15 : i32
    %350 = tpu.dynamic_rotate %324 by %c15_i32 dim 0 : vector<16x256xf32>, i32 -> vector<16x256xf32>
    %c0_136 = arith.constant 0 : index
    %c0_137 = arith.constant 0 : index
    %351 = vector.load %arg18[%c0_136, %c0_137] : memref<256x8xf32, #tpu.memory_space<vmem>>, vector<256x8xf32>
    %cst_138 = arith.constant dense<0.000000e+00> : vector<16x8xf32>
    %352 = tpu.matmul %324, %351, %cst_138 {dimension_numbers = #tpu.dot_dimension_numbers<[1], [0], [0], [1], [0, 0, 1, 1], [], []>} : vector<16x256xf32>, vector<256x8xf32>, vector<16x8xf32> -> vector<16x8xf32>
    %c0_139 = arith.constant 0 : index
    %c0_140 = arith.constant 0 : index
    %353 = vector.load %arg19[%c0_139, %c0_140] : memref<256x8xf32, #tpu.memory_space<vmem>>, vector<256x8xf32>
    %cst_141 = arith.constant dense<0.000000e+00> : vector<16x8xf32>
    %354 = tpu.matmul %350, %353, %cst_141 {dimension_numbers = #tpu.dot_dimension_numbers<[1], [0], [0], [1], [0, 0, 1, 1], [], []>} : vector<16x256xf32>, vector<256x8xf32>, vector<16x8xf32> -> vector<16x8xf32>
    %355 = arith.addf %352, %354 : vector<16x8xf32>
    %c0_142 = arith.constant 0 : index
    %c0_143 = arith.constant 0 : index
    %356 = vector.load %arg20[%c0_142, %c0_143] : memref<1x8xf32, #tpu.memory_space<vmem>>, vector<1x8xf32>
    %357 = vector.broadcast %356 : vector<1x8xf32> to vector<16x8xf32>
    %358 = arith.addf %355, %357 : vector<16x8xf32>
    %cst_144 = arith.constant 0.000000e+00 : f32
    %359 = vector.broadcast %cst_144 : f32 to vector<16x8xf32>
    %360 = arith.maximumf %358, %359 : vector<16x8xf32>
    %361 = vector.shape_cast %360 : vector<16x8xf32> to vector<2x8x8xf32>
    %cst_145 = arith.constant 0.000000e+00 : f32
    %362 = vector.broadcast %cst_145 : f32 to vector<2x8x1xf32>
    %363 = arith.cmpf ogt, %13, %362 : vector<2x8x1xf32>
    %cst_146 = arith.constant -1.000000e+30 : f32
    %364 = vector.shape_cast %363 : vector<2x8x1xi1> to vector<2x8x1xi1>
    %365 = vector.broadcast %364 : vector<2x8x1xi1> to vector<2x8x8xi1>
    %366 = vector.broadcast %cst_146 : f32 to vector<2x8x8xf32>
    %367 = arith.select %365, %361, %366 : vector<2x8x8xi1>, vector<2x8x8xf32>
    %cst_147 = arith.constant dense<0xFF800000> : vector<2x8xf32>
    %368 = vector.multi_reduction <maximumf>, %367, %cst_147 [1] : vector<2x8x8xf32> to vector<2x8xf32>
    %cst_148 = arith.constant 0.000000e+00 : f32
    %369 = vector.shape_cast %330 : vector<2x1xi1> to vector<2x1xi1>
    %370 = vector.broadcast %369 : vector<2x1xi1> to vector<2x8xi1>
    %371 = vector.broadcast %cst_148 : f32 to vector<2x8xf32>
    %372 = arith.select %370, %368, %371 : vector<2x8xi1>, vector<2x8xf32>
    %373 = tpu.concatenate %349, %372 in 1 : vector<2x8xf32>, vector<2x8xf32> -> vector<2x16xf32>
    %c0_149 = arith.constant 0 : index
    %c0_150 = arith.constant 0 : index
    %374 = vector.load %arg21[%c0_149, %c0_150] : memref<16x32xf32, #tpu.memory_space<vmem>>, vector<16x32xf32>
    %cst_151 = arith.constant dense<0.000000e+00> : vector<2x32xf32>
    %375 = tpu.matmul %373, %374, %cst_151 {dimension_numbers = #tpu.dot_dimension_numbers<[1], [0], [0], [1], [0, 0, 1, 1], [], []>} : vector<2x16xf32>, vector<16x32xf32>, vector<2x32xf32> -> vector<2x32xf32>
    %c0_152 = arith.constant 0 : index
    %c0_153 = arith.constant 0 : index
    %376 = vector.load %arg22[%c0_152, %c0_153] : memref<1x32xf32, #tpu.memory_space<vmem>>, vector<1x32xf32>
    %377 = vector.broadcast %376 : vector<1x32xf32> to vector<2x32xf32>
    %378 = arith.addf %375, %377 : vector<2x32xf32>
    %379 = vector.extract_strided_slice %378 {offsets = [0, 0], sizes = [2, 16], strides = [1, 1]} : vector<2x32xf32> to vector<2x16xf32>
    %cst_154 = arith.constant 0.000000e+00 : f32
    %380 = vector.broadcast %cst_154 : f32 to vector<2x16xf32>
    %381 = arith.maximumf %379, %380 : vector<2x16xf32>
    %382 = vector.extract_strided_slice %378 {offsets = [0, 16], sizes = [2, 16], strides = [1, 1]} : vector<2x32xf32> to vector<2x16xf32>
    %383 = arith.negf %382 : vector<2x16xf32>
    %384 = math.exp %383 : vector<2x16xf32>
    %cst_155 = arith.constant 1.000000e+00 : f32
    %385 = vector.broadcast %cst_155 : f32 to vector<2x16xf32>
    %386 = arith.addf %385, %384 : vector<2x16xf32>
    %387 = arith.divf %385, %386 : vector<2x16xf32>
    %388 = arith.mulf %387, %373 : vector<2x16xf32>
    %cst_156 = arith.constant 1.000000e+00 : f32
    %389 = vector.broadcast %cst_156 : f32 to vector<2x16xf32>
    %390 = arith.subf %389, %387 : vector<2x16xf32>
    %391 = arith.mulf %390, %381 : vector<2x16xf32>
    %392 = arith.addf %388, %391 : vector<2x16xf32>
    %c0_157 = arith.constant 0 : index
    %c0_158 = arith.constant 0 : index
    %393 = vector.load %arg23[%c0_157, %c0_158] : memref<16x16xf32, #tpu.memory_space<vmem>>, vector<16x16xf32>
    %cst_159 = arith.constant dense<0.000000e+00> : vector<2x16xf32>
    %394 = tpu.matmul %392, %393, %cst_159 {dimension_numbers = #tpu.dot_dimension_numbers<[1], [0], [0], [1], [0, 0, 1, 1], [], []>} : vector<2x16xf32>, vector<16x16xf32>, vector<2x16xf32> -> vector<2x16xf32>
    %c0_160 = arith.constant 0 : index
    %c0_161 = arith.constant 0 : index
    %395 = vector.load %arg24[%c0_160, %c0_161] : memref<1x16xf32, #tpu.memory_space<vmem>>, vector<1x16xf32>
    %396 = vector.broadcast %395 : vector<1x16xf32> to vector<2x16xf32>
    %397 = arith.addf %394, %396 : vector<2x16xf32>
    %cst_162 = arith.constant 0.000000e+00 : f32
    %398 = vector.broadcast %cst_162 : f32 to vector<2x112xf32>
    %399 = tpu.concatenate %397, %398 in 1 : vector<2x16xf32>, vector<2x112xf32> -> vector<2x128xf32>
    %c0_163 = arith.constant 0 : index
    %c0_164 = arith.constant 0 : index
    %c0_165 = arith.constant 0 : index
    %400 = vector.load %arg25[%c0_163, %c0_164, %c0_165] : memref<1x2x128xf32, #tpu.memory_space<vmem>>, vector<1x2x128xf32>
    %401 = vector.shape_cast %400 : vector<1x2x128xf32> to vector<2x128xf32>
    %402 = vector.shape_cast %399 : vector<2x128xf32> to vector<1x2x128xf32>
    tpu.vector_store %arg25[%c0_163, %c0_164, %c0_165], %402 {strides = array<i32>} : memref<1x2x128xf32, #tpu.memory_space<vmem>>, vector<1x2x128xf32>,
    return
  }
  func.func @transform_0(%arg0: i32) -> (i32, i32, i32, i32) {
    %c0_i32 = arith.constant 0 : i32
    %c0_i32_0 = arith.constant 0 : i32
    %c0_i32_1 = arith.constant 0 : i32
    %c0_i32_2 = arith.constant 0 : i32
    return %arg0, %c0_i32, %c0_i32_0, %c0_i32_1 : i32, i32, i32, i32
  }
  func.func @transform_1(%arg0: i32) -> (i32, i32, i32, i32) {
    %c1_i32 = arith.constant 1 : i32
    %0 = arith.subi %c1_i32, %arg0 : i32
    %c0_i32 = arith.constant 0 : i32
    %c0_i32_0 = arith.constant 0 : i32
    %c0_i32_1 = arith.constant 0 : i32
    %c0_i32_2 = arith.constant 0 : i32
    return %0, %c0_i32, %c0_i32_0, %c0_i32_1 : i32, i32, i32, i32
  }
  func.func @transform_2(%arg0: i32) -> (i32, i32, i32, i32) {
    %c0_i32 = arith.constant 0 : i32
    %c0_i32_0 = arith.constant 0 : i32
    %c0_i32_1 = arith.constant 0 : i32
    %c0_i32_2 = arith.constant 0 : i32
    return %arg0, %c0_i32, %c0_i32_0, %c0_i32_1 : i32, i32, i32, i32
  }
  func.func @transform_3(%arg0: i32) -> (i32, i32, i32, i32) {
    %c1_i32 = arith.constant 1 : i32
    %0 = arith.subi %c1_i32, %arg0 : i32
    %c0_i32 = arith.constant 0 : i32
    %c0_i32_0 = arith.constant 0 : i32
    %c0_i32_1 = arith.constant 0 : i32
    %c0_i32_2 = arith.constant 0 : i32
    return %0, %c0_i32, %c0_i32_0, %c0_i32_1 : i32, i32, i32, i32
  }
  func.func @transform_4(%arg0: i32) -> (i32, i32, i32, i32) {
    %c0_i32 = arith.constant 0 : i32
    %c0_i32_0 = arith.constant 0 : i32
    %c0_i32_1 = arith.constant 0 : i32
    %c0_i32_2 = arith.constant 0 : i32
    return %arg0, %c0_i32, %c0_i32_0, %c0_i32_1 : i32, i32, i32, i32
  }
  func.func @transform_5(%arg0: i32) -> (i32, i32, i32, i32) {
    %c1_i32 = arith.constant 1 : i32
    %0 = arith.subi %c1_i32, %arg0 : i32
    %c0_i32 = arith.constant 0 : i32
    %c0_i32_0 = arith.constant 0 : i32
    %c0_i32_1 = arith.constant 0 : i32
    %c0_i32_2 = arith.constant 0 : i32
    return %0, %c0_i32, %c0_i32_0, %c0_i32_1 : i32, i32, i32, i32
  }
  func.func @transform_6(%arg0: i32) -> (i32, i32, i32, i32) {
    %c0_i32 = arith.constant 0 : i32
    %c0_i32_0 = arith.constant 0 : i32
    %c0_i32_1 = arith.constant 0 : i32
    %c0_i32_2 = arith.constant 0 : i32
    return %arg0, %c0_i32, %c0_i32_0, %c0_i32_1 : i32, i32, i32, i32
  }
  func.func @transform_7(%arg0: i32) -> (i32, i32) {
    %c0_i32 = arith.constant 0 : i32
    %c0_i32_0 = arith.constant 0 : i32
    %c0_i32_1 = arith.constant 0 : i32
    return %c0_i32, %c0_i32_0 : i32, i32
  }
  func.func @transform_8(%arg0: i32) -> (i32, i32) {
    %c0_i32 = arith.constant 0 : i32
    %c0_i32_0 = arith.constant 0 : i32
    %c0_i32_1 = arith.constant 0 : i32
    return %c0_i32, %c0_i32_0 : i32, i32
  }
  func.func @transform_9(%arg0: i32) -> (i32, i32) {
    %c0_i32 = arith.constant 0 : i32
    %c0_i32_0 = arith.constant 0 : i32
    %c0_i32_1 = arith.constant 0 : i32
    return %c0_i32, %c0_i32_0 : i32, i32
  }
  func.func @transform_10(%arg0: i32) -> (i32, i32) {
    %c0_i32 = arith.constant 0 : i32
    %c0_i32_0 = arith.constant 0 : i32
    %c0_i32_1 = arith.constant 0 : i32
    return %c0_i32, %c0_i32_0 : i32, i32
  }
  func.func @transform_11(%arg0: i32) -> (i32, i32) {
    %c0_i32 = arith.constant 0 : i32
    %c0_i32_0 = arith.constant 0 : i32
    %c0_i32_1 = arith.constant 0 : i32
    return %c0_i32, %c0_i32_0 : i32, i32
  }
  func.func @transform_12(%arg0: i32) -> (i32, i32) {
    %c0_i32 = arith.constant 0 : i32
    %c0_i32_0 = arith.constant 0 : i32
    %c0_i32_1 = arith.constant 0 : i32
    return %c0_i32, %c0_i32_0 : i32, i32
  }
  func.func @transform_13(%arg0: i32) -> (i32, i32) {
    %c0_i32 = arith.constant 0 : i32
    %c0_i32_0 = arith.constant 0 : i32
    %c0_i32_1 = arith.constant 0 : i32
    return %c0_i32, %c0_i32_0 : i32, i32
  }
  func.func @transform_14(%arg0: i32) -> (i32, i32) {
    %c0_i32 = arith.constant 0 : i32
    %c0_i32_0 = arith.constant 0 : i32
    %c0_i32_1 = arith.constant 0 : i32
    return %c0_i32, %c0_i32_0 : i32, i32
  }
  func.func @transform_15(%arg0: i32) -> (i32, i32) {
    %c0_i32 = arith.constant 0 : i32
    %c0_i32_0 = arith.constant 0 : i32
    %c0_i32_1 = arith.constant 0 : i32
    return %c0_i32, %c0_i32_0 : i32, i32
  }
  func.func @transform_16(%arg0: i32) -> (i32, i32) {
    %c0_i32 = arith.constant 0 : i32
    %c0_i32_0 = arith.constant 0 : i32
    %c0_i32_1 = arith.constant 0 : i32
    return %c0_i32, %c0_i32_0 : i32, i32
  }
  func.func @transform_17(%arg0: i32) -> (i32, i32) {
    %c0_i32 = arith.constant 0 : i32
    %c0_i32_0 = arith.constant 0 : i32
    %c0_i32_1 = arith.constant 0 : i32
    return %c0_i32, %c0_i32_0 : i32, i32
  }
  func.func @transform_18(%arg0: i32) -> (i32, i32) {
    %c0_i32 = arith.constant 0 : i32
    %c0_i32_0 = arith.constant 0 : i32
    %c0_i32_1 = arith.constant 0 : i32
    return %c0_i32, %c0_i32_0 : i32, i32
  }
  func.func @transform_19(%arg0: i32) -> (i32, i32) {
    %c0_i32 = arith.constant 0 : i32
    %c0_i32_0 = arith.constant 0 : i32
    %c0_i32_1 = arith.constant 0 : i32
    return %c0_i32, %c0_i32_0 : i32, i32
  }
  func.func @transform_20(%arg0: i32) -> (i32, i32) {
    %c0_i32 = arith.constant 0 : i32
    %c0_i32_0 = arith.constant 0 : i32
    %c0_i32_1 = arith.constant 0 : i32
    return %c0_i32, %c0_i32_0 : i32, i32
  }
  func.func @transform_21(%arg0: i32) -> (i32, i32) {
    %c0_i32 = arith.constant 0 : i32
    %c0_i32_0 = arith.constant 0 : i32
    %c0_i32_1 = arith.constant 0 : i32
    return %c0_i32, %c0_i32_0 : i32, i32
  }
  func.func @transform_22(%arg0: i32) -> (i32, i32) {
    %c0_i32 = arith.constant 0 : i32
    %c0_i32_0 = arith.constant 0 : i32
    %c0_i32_1 = arith.constant 0 : i32
    return %c0_i32, %c0_i32_0 : i32, i32
  }
  func.func @transform_23(%arg0: i32) -> (i32, i32) {
    %c0_i32 = arith.constant 0 : i32
    %c0_i32_0 = arith.constant 0 : i32
    %c0_i32_1 = arith.constant 0 : i32
    return %c0_i32, %c0_i32_0 : i32, i32
  }
  func.func @transform_24(%arg0: i32) -> (i32, i32, i32) {
    %c0_i32 = arith.constant 0 : i32
    %c0_i32_0 = arith.constant 0 : i32
    %c0_i32_1 = arith.constant 0 : i32
    return %arg0, %c0_i32, %c0_i32_0 : i32, i32, i32
  }
}

</mosaic_0001>

<llo_original>
// kernel: forward.3
$region0: #{forward.3}
  #allocation0 [shape = 'u32[]', space=smem, size = 0x4, offset = 0x4, fixed_abs, tag = 'smem constant byte address 0x4 - core index']
  #allocation1 [shape = 'u32[144,128]{1,0:T(1,128)}', space=vmem, size = 0x12000, scoped, tag = 'internal scratch']
  %s0 = inlined_call_operand.vmem [shape: f32[2,2,128], index: 0, kind: input, shape index: {}]
  %s1 = inlined_call_operand.vmem [shape: f32[128,16], index: 1, kind: input, shape index: {}]
  %s2 = inlined_call_operand.vmem [shape: f32[128,16], index: 2, kind: input, shape index: {}]
  %s3 = inlined_call_operand.vmem [shape: f32[1,16], index: 3, kind: input, shape index: {}]
  %s4 = inlined_call_operand.vmem [shape: f32[16,4], index: 4, kind: input, shape index: {}]
  %s5 = inlined_call_operand.vmem [shape: f32[1,4], index: 5, kind: input, shape index: {}]
  %s6 = inlined_call_operand.hbm [shape: f32[2,4], index: 6, kind: output, shape index: {}]
  %s7 = sld [smem:[#allocation0]]
  $region34: #{forward.3} parent=0
    _
  %s9 = ssub.s32 1, %s7
  %s10 = scalar_select 0, %s9, %s7
  $region1: #{forward.3} parent=0
    #allocation2 [shape = 'u8[1024]{0}', space=vmem, size = 0x400, scoped, tag = 'output window, operand 0, single buffered']
    #allocation3 [shape = 's32[1]{0}', space=sflag, size = 0x4, scoped, tag = 'scoped memory for forward.3']
    %11 = vsyncpa [#allocation3], 0
    // Predicated region
    $region2: #{forward.3} parent=1 // pred_check
      _
    $region3: #{forward.3} parent=1 // pred_check_branch
      %13 = sbr.rel (0) target = $region5
    $region4: #{forward.3} parent=1 // pred_region
      _
    $region5: #{forward.3} parent=1 // pred_fallthru
      _
    // Predicated region
    $region6: #{forward.3} parent=1 // pred_check
      _
    $region7: #{forward.3} parent=1 // pred_check_branch
      %15 = sbr.rel (0) target = $region9
    $region8: #{forward.3} parent=1 // pred_region
      _
    $region9: #{forward.3} parent=1 // pred_fallthru
      _
    // Predicated region
    $region10: #{forward.3} parent=1 // pred_check
      _
    $region11: #{forward.3} parent=1 // pred_check_branch
      %17 = sbr.rel (0) target = $region13
    $region12: #{forward.3} parent=1 // pred_region
      _
    $region13: #{forward.3} parent=1 // pred_fallthru
      _
    // Predicated region
    $region14: #{forward.3} parent=1 // pred_check
      _
    $region15: #{forward.3} parent=1 // pred_check_branch
      %19 = sbr.rel (0) target = $region17
    $region16: #{forward.3} parent=1 // pred_region
      _
    $region17: #{forward.3} parent=1 // pred_fallthru
      _
    // Predicated region
    $region18: #{forward.3} parent=1 // pred_check
      _
    $region19: #{forward.3} parent=1 // pred_check_branch
      %21 = sbr.rel (0) target = $region21
    $region20: #{forward.3} parent=1 // pred_region
      _
    $region21: #{forward.3} parent=1 // pred_fallthru
      _
    // Predicated region
    $region22: #{forward.3} parent=1 // pred_check
      _
    $region23: #{forward.3} parent=1 // pred_check_branch
      %23 = sbr.rel (0) target = $region25
    $region24: #{forward.3} parent=1 // pred_region
      _
    $region25: #{forward.3} parent=1 // pred_fallthru
      _
    %v24 = vld [vmem:[%s0] sm:$0x3]
    %s25 = scalar_lea.vmem %s0, 2
    %v26 = vld [vmem:[%s25] sm:$0x3]
    %v27 = vld [vmem:[%s1] sm:$0xff]
    %v28 = vld [vmem:[%s1 + $0x8] sm:$0xff]
    %v29 = vld [vmem:[%s1 + $0x10] sm:$0xff]
    %v30 = vld [vmem:[%s1 + $0x18] sm:$0xff]
    %v31 = vld [vmem:[%s1 + $0x20] sm:$0xff]
    %v32 = vld [vmem:[%s1 + $0x28] sm:$0xff]
    %v33 = vld [vmem:[%s1 + $0x30] sm:$0xff]
    %v34 = vld [vmem:[%s1 + $0x38] sm:$0xff]
    %v35 = vld [vmem:[%s1 + $0x40] sm:$0xff]
    %v36 = vld [vmem:[%s1 + $0x48] sm:$0xff]
    %v37 = vld [vmem:[%s1 + $0x50] sm:$0xff]
    %v38 = vld [vmem:[%s1 + $0x58] sm:$0xff]
    %v39 = vld [vmem:[%s1 + $0x60] sm:$0xff]
    %v40 = vld [vmem:[%s1 + $0x68] sm:$0xff]
    %v41 = vld [vmem:[%s1 + $0x70] sm:$0xff]
    %v42 = vld [vmem:[%s1 + $0x78] sm:$0xff]
    %v43 = vld [vmem:[%s2] sm:$0xff]
    %v44 = vld [vmem:[%s2 + $0x8] sm:$0xff]
    %v45 = vld [vmem:[%s2 + $0x10] sm:$0xff]
    %v46 = vld [vmem:[%s2 + $0x18] sm:$0xff]
    %v47 = vld [vmem:[%s2 + $0x20] sm:$0xff]
    %v48 = vld [vmem:[%s2 + $0x28] sm:$0xff]
    %v49 = vld [vmem:[%s2 + $0x30] sm:$0xff]
    %v50 = vld [vmem:[%s2 + $0x38] sm:$0xff]
    %v51 = vld [vmem:[%s2 + $0x40] sm:$0xff]
    %v52 = vld [vmem:[%s2 + $0x48] sm:$0xff]
    %v53 = vld [vmem:[%s2 + $0x50] sm:$0xff]
    %v54 = vld [vmem:[%s2 + $0x58] sm:$0xff]
    %v55 = vld [vmem:[%s2 + $0x60] sm:$0xff]
    %v56 = vld [vmem:[%s2 + $0x68] sm:$0xff]
    %v57 = vld [vmem:[%s2 + $0x70] sm:$0xff]
    %v58 = vld [vmem:[%s2 + $0x78] sm:$0xff]
    %59 = vmatprep.subr.mxu0 0.0
    %60 = vmatpush1.msra.mxu0 %v43
    %61 = vmatprep.subr.mxu0 0.0
    %62 = vmatpush1.msra.mxu0 %v44
    %63 = vmatprep.subr.mxu0 0.0
    %64 = vmatpush1.msra.mxu0 %v45
    %65 = vmatprep.subr.mxu0 0.0
    %66 = vmatpush1.msra.mxu0 %v46
    %67 = vmatprep.subr.mxu0 0.0
    %68 = vmatpush1.msra.mxu0 %v47
    %69 = vmatprep.subr.mxu0 0.0
    %70 = vmatpush1.msra.mxu0 %v48
    %71 = vmatprep.subr.mxu0 0.0
    %72 = vmatpush1.msra.mxu0 %v49
    %73 = vmatprep.subr.mxu0 0.0
    %74 = vmatpush1.msra.mxu0 %v50
    %75 = vmatprep.subr.mxu0 0.0
    %76 = vmatpush1.msra.mxu0 %v51
    %77 = vmatprep.subr.mxu0 0.0
    %78 = vmatpush1.msra.mxu0 %v52
    %79 = vmatprep.subr.mxu0 0.0
    %80 = vmatpush1.msra.mxu0 %v53
    %81 = vmatprep.subr.mxu0 0.0
    %82 = vmatpush1.msra.mxu0 %v54
    %83 = vmatprep.subr.mxu0 0.0
    %84 = vmatpush1.msra.mxu0 %v55
    %85 = vmatprep.subr.mxu0 0.0
    %86 = vmatpush1.msra.mxu0 %v56
    %87 = vmatprep.subr.mxu0 0.0
    %88 = vmatpush1.msra.mxu0 %v57
    %89 = vmatprep.subr.mxu0 0.0
    %90 = vmatpush1.msra.mxu0 %v58
    %91 = vmatprep.subr.mxu0 0.0
    %92 = vmatpush1.msra.mxu0 0.0
    %93 = vmatprep.subr.mxu0 0.0
    %94 = vmatpush1.msra.mxu0 0.0
    %95 = vmatprep.subr.mxu0 0.0
    %96 = vmatpush1.msra.mxu0 0.0
    %97 = vmatprep.subr.mxu0 0.0
    %98 = vmatpush1.msra.mxu0 0.0
    %99 = vmatprep.subr.mxu0 0.0
    %100 = vmatpush1.msra.mxu0 0.0
    %101 = vmatprep.subr.mxu0 0.0
    %102 = vmatpush1.msra.mxu0 0.0
    %103 = vmatprep.subr.mxu0 0.0
    %104 = vmatpush1.msra.mxu0 0.0
    %105 = vmatprep.subr.mxu0 0.0
    %106 = vmatpush1.msra.mxu0 0.0
    %107 = vmatprep.subr.mxu0 0.0
    %108 = vmatpush1.msra.mxu0 0.0
    %109 = vmatprep.subr.mxu0 0.0
    %110 = vmatpush1.msra.mxu0 0.0
    %111 = vmatprep.subr.mxu0 0.0
    %112 = vmatpush1.msra.mxu0 0.0
    %113 = vmatprep.subr.mxu0 0.0
    %114 = vmatpush1.msra.mxu0 0.0
    %115 = vmatprep.subr.mxu0 0.0
    %116 = vmatpush1.msra.mxu0 0.0
    %117 = vmatprep.subr.mxu0 0.0
    %118 = vmatpush1.msra.mxu0 0.0
    %119 = vmatprep.subr.mxu0 0.0
    %120 = vmatpush1.msra.mxu0 0.0
    %121 = vmatprep.subr.mxu0 0.0
    %122 = vmatpush1.msra.mxu0 0.0
    %123 = vmatprep.mubr.f32.mxu0 0.0
    %124 = vmatmul.mubr.f32.gmra.mrb[0].mxu0 %v26
    %v125 = vpop.f32.mrb[0].mxu0
    %v126 = vadd.f32 0.0, %v125
    %v127 = vpop.f32.mrb[0].mxu0
    %128 = vdwg.mxu0
    %129 = vmatprep.subr.mxu0 0.0
    %130 = vmatpush1.msra.mxu0 %v27
    %131 = vmatprep.subr.mxu0 0.0
    %132 = vmatpush1.msra.mxu0 %v28
    %133 = vmatprep.subr.mxu0 0.0
    %134 = vmatpush1.msra.mxu0 %v29
    %135 = vmatprep.subr.mxu0 0.0
    %136 = vmatpush1.msra.mxu0 %v30
    %137 = vmatprep.subr.mxu0 0.0
    %138 = vmatpush1.msra.mxu0 %v31
    %139 = vmatprep.subr.mxu0 0.0
    %140 = vmatpush1.msra.mxu0 %v32
    %141 = vmatprep.subr.mxu0 0.0
    %142 = vmatpush1.msra.mxu0 %v33
    %143 = vmatprep.subr.mxu0 0.0
    %144 = vmatpush1.msra.mxu0 %v34
    %145 = vmatprep.subr.mxu0 0.0
    %146 = vmatpush1.msra.mxu0 %v35
    %147 = vmatprep.subr.mxu0 0.0
    %148 = vmatpush1.msra.mxu0 %v36
    %149 = vmatprep.subr.mxu0 0.0
    %150 = vmatpush1.msra.mxu0 %v37
    %151 = vmatprep.subr.mxu0 0.0
    %152 = vmatpush1.msra.mxu0 %v38
    %153 = vmatprep.subr.mxu0 0.0
    %154 = vmatpush1.msra.mxu0 %v39
    %155 = vmatprep.subr.mxu0 0.0
    %156 = vmatpush1.msra.mxu0 %v40
    %157 = vmatprep.subr.mxu0 0.0
    %158 = vmatpush1.msra.mxu0 %v41
    %159 = vmatprep.subr.mxu0 0.0
    %160 = vmatpush1.msra.mxu0 %v42
    %161 = vmatprep.subr.mxu0 0.0
    %162 = vmatpush1.msra.mxu0 0.0
    %163 = vmatprep.subr.mxu0 0.0
    %164 = vmatpush1.msra.mxu0 0.0
    %165 = vmatprep.subr.mxu0 0.0
    %166 = vmatpush1.msra.mxu0 0.0
    %167 = vmatprep.subr.mxu0 0.0
    %168 = vmatpush1.msra.mxu0 0.0
    %169 = vmatprep.subr.mxu0 0.0
    %170 = vmatpush1.msra.mxu0 0.0
    %171 = vmatprep.subr.mxu0 0.0
    %172 = vmatpush1.msra.mxu0 0.0
    %173 = vmatprep.subr.mxu0 0.0
    %174 = vmatpush1.msra.mxu0 0.0
    %175 = vmatprep.subr.mxu0 0.0
    %176 = vmatpush1.msra.mxu0 0.0
    %177 = vmatprep.subr.mxu0 0.0
    %178 = vmatpush1.msra.mxu0 0.0
    %179 = vmatprep.subr.mxu0 0.0
    %180 = vmatpush1.msra.mxu0 0.0
    %181 = vmatprep.subr.mxu0 0.0
    %182 = vmatpush1.msra.mxu0 0.0
    %183 = vmatprep.subr.mxu0 0.0
    %184 = vmatpush1.msra.mxu0 0.0
    %185 = vmatprep.subr.mxu0 0.0
    %186 = vmatpush1.msra.mxu0 0.0
    %187 = vmatprep.subr.mxu0 0.0
    %188 = vmatpush1.msra.mxu0 0.0
    %189 = vmatprep.subr.mxu0 0.0
    %190 = vmatpush1.msra.mxu0 0.0
    %191 = vmatprep.subr.mxu0 0.0
    %192 = vmatpush1.msra.mxu0 0.0
    %193 = vmatprep.mubr.f32.mxu0 0.0
    %194 = vmatmul.mubr.f32.gmra.mrb[0].mxu0 %v24
    %v195 = vpop.f32.mrb[0].mxu0
    %v196 = vadd.f32 %v126, %v195
    %v197 = vpop.f32.mrb[0].mxu0
    %198 = vdwg.mxu0
    %v199 = vld [vmem:[%s3] sm:$0x1]
    %v201 = vlaneseq
    %v202 = vshrl.u32 %v201, 7
    %v203 = vsub.s32 0, %v202
    %v204 = vrot.slane %v199, %v203
    %v206 = vadd.f32 %v196, %v204
    %v207 = vmax.f32 %v206, 0.0
    %v208 = vld [vmem:[%s4] sm:$0xff]
    %v209 = vld [vmem:[%s4 + $0x8] sm:$0xff]
    %v210 = vld [vmem:[%s5] sm:$0x1]
    %v212 = vlaneseq
    %v213 = vshrl.u32 %v212, 7
    %v214 = vsub.s32 0, %v213
    %v215 = vrot.slane %v210, %v214
    %vm217 = vcmask 130048
    %v219 = vsel %vm217, %v207, 0
    %221 = vmatprep.subr.mxu0 0.0
    %222 = vmatpush1.msra.mxu0 %v208
    %223 = vmatprep.subr.mxu0 0.0
    %224 = vmatpush1.msra.mxu0 %v209
    %225 = vmatprep.subr.mxu0 0.0
    %226 = vmatpush1.msra.mxu0 0.0
    %227 = vmatprep.subr.mxu0 0.0
    %228 = vmatpush1.msra.mxu0 0.0
    %229 = vmatprep.subr.mxu0 0.0
    %230 = vmatpush1.msra.mxu0 0.0
    %231 = vmatprep.subr.mxu0 0.0
    %232 = vmatpush1.msra.mxu0 0.0
    %233 = vmatprep.subr.mxu0 0.0
    %234 = vmatpush1.msra.mxu0 0.0
    %235 = vmatprep.subr.mxu0 0.0
    %236 = vmatpush1.msra.mxu0 0.0
    %237 = vmatprep.subr.mxu0 0.0
    %238 = vmatpush1.msra.mxu0 0.0
    %239 = vmatprep.subr.mxu0 0.0
    %240 = vmatpush1.msra.mxu0 0.0
    %241 = vmatprep.subr.mxu0 0.0
    %242 = vmatpush1.msra.mxu0 0.0
    %243 = vmatprep.subr.mxu0 0.0
    %244 = vmatpush1.msra.mxu0 0.0
    %245 = vmatprep.subr.mxu0 0.0
    %246 = vmatpush1.msra.mxu0 0.0
    %247 = vmatprep.subr.mxu0 0.0
    %248 = vmatpush1.msra.mxu0 0.0
    %249 = vmatprep.subr.mxu0 0.0
    %250 = vmatpush1.msra.mxu0 0.0
    %251 = vmatprep.subr.mxu0 0.0
    %252 = vmatpush1.msra.mxu0 0.0
    %253 = vmatprep.subr.mxu0 0.0
    %254 = vmatpush1.msra.mxu0 0.0
    %255 = vmatprep.subr.mxu0 0.0
    %256 = vmatpush1.msra.mxu0 0.0
    %257 = vmatprep.subr.mxu0 0.0
    %258 = vmatpush1.msra.mxu0 0.0
    %259 = vmatprep.subr.mxu0 0.0
    %260 = vmatpush1.msra.mxu0 0.0
    %261 = vmatprep.subr.mxu0 0.0
    %262 = vmatpush1.msra.mxu0 0.0
    %263 = vmatprep.subr.mxu0 0.0
    %264 = vmatpush1.msra.mxu0 0.0
    %265 = vmatprep.subr.mxu0 0.0
    %266 = vmatpush1.msra.mxu0 0.0
    %267 = vmatprep.subr.mxu0 0.0
    %268 = vmatpush1.msra.mxu0 0.0
    %269 = vmatprep.subr.mxu0 0.0
    %270 = vmatpush1.msra.mxu0 0.0
    %271 = vmatprep.subr.mxu0 0.0
    %272 = vmatpush1.msra.mxu0 0.0
    %273 = vmatprep.subr.mxu0 0.0
    %274 = vmatpush1.msra.mxu0 0.0
    %275 = vmatprep.subr.mxu0 0.0
    %276 = vmatpush1.msra.mxu0 0.0
    %277 = vmatprep.subr.mxu0 0.0
    %278 = vmatpush1.msra.mxu0 0.0
    %279 = vmatprep.subr.mxu0 0.0
    %280 = vmatpush1.msra.mxu0 0.0
    %281 = vmatprep.subr.mxu0 0.0
    %282 = vmatpush1.msra.mxu0 0.0
    %283 = vmatprep.subr.mxu0 0.0
    %284 = vmatpush1.msra.mxu0 0.0
    %285 = vmatprep.mubr.f32.mxu0 0.0
    %286 = vmatmul.mubr.f32.gmra.mrb[0].mxu0 %v219
    %v287 = vpop.f32.mrb[0].mxu0
    %v288 = vadd.f32 %v215, %v287
    %v289 = vpop.f32.mrb[0].mxu0
    %290 = vdwg.mxu0
    %vm291 = vcmask 25600
    %292 = vst.msk [vmem:[#allocation2] sm:$0x3] %vm291, %v288
    // Predicated region
    $region26: #{forward.3} parent=1 // pred_check
      _
    $region27: #{forward.3} parent=1 // pred_check_branch
      %294 = sbr.rel (0) target = $region29
    $region28: #{forward.3} parent=1 // pred_region
      %s296 = ssub.s32 32, 32
      %297 = vsyncadd [#allocation3], %s296
      %s299 = sshll.u32 [#allocation2], 4
      %s300 = int_to_ptr.vmem [resolvable:$true] %s299
      %302 = dma.vmem_to_hbm [thread:$0]  %s300, 32, %s6, [#allocation3]
    $region29: #{forward.3} parent=1 // pred_fallthru
      _
    // Predicated region
    $region30: #{forward.3} parent=1 // pred_check
      _
    $region31: #{forward.3} parent=1 // pred_check_branch
      %304 = sbr.rel (0) target = $region33
    $region32: #{forward.3} parent=1 // pred_region
      %305 = dma.done [#allocation3], 32
    $region33: #{forward.3} parent=1 // pred_fallthru
      _
    %306 = vsyncpa [#allocation3], 1

// kernel: forward.2
$region0: #{forward.2}
  #allocation0 [shape = 'u32[]', space=smem, size = 0x4, offset = 0x4, fixed_abs, tag = 'smem constant byte address 0x4 - core index']
  #allocation1 [shape = 'u32[144,128]{1,0:T(1,128)}', space=vmem, size = 0x12000, scoped, tag = 'internal scratch']
  %s0 = inlined_call_operand.vmem [shape: s32[2,2,8,1], index: 0, kind: input, shape index: {}, may-alias: {0,1}]
  %s1 = inlined_call_operand.vmem [shape: s32[2,2,8,1], index: 1, kind: input, shape index: {}, may-alias: {0,1}]
  %s2 = inlined_call_operand.vmem [shape: f32[2,2,8,1], index: 2, kind: input, shape index: {}, may-alias: {2,3}]
  %s3 = inlined_call_operand.vmem [shape: f32[2,2,8,1], index: 3, kind: input, shape index: {}, may-alias: {2,3}]
  %s4 = inlined_call_operand.vmem [shape: f32[2,2,1,8], index: 4, kind: input, shape index: {}, may-alias: {4,5}]
  %s5 = inlined_call_operand.vmem [shape: f32[2,2,1,8], index: 5, kind: input, shape index: {}, may-alias: {4,5}]
  %s6 = inlined_call_operand.vmem [shape: f32[2,2,8,1], index: 6, kind: input, shape index: {}]
  %s7 = inlined_call_operand.vmem [shape: f32[128,128], index: 7, kind: input, shape index: {}]
  %s8 = inlined_call_operand.vmem [shape: f32[128,128], index: 8, kind: input, shape index: {}]
  %s9 = inlined_call_operand.vmem [shape: f32[1,128], index: 9, kind: input, shape index: {}]
  %s10 = inlined_call_operand.vmem [shape: f32[4,128], index: 10, kind: input, shape index: {}]
  %s11 = inlined_call_operand.vmem [shape: f32[256,192], index: 11, kind: input, shape index: {}]
  %s12 = inlined_call_operand.vmem [shape: f32[64,256], index: 12, kind: input, shape index: {}]
  %s13 = inlined_call_operand.vmem [shape: f32[256,256], index: 13, kind: input, shape index: {}]
  %s14 = inlined_call_operand.vmem [shape: f32[256,256], index: 14, kind: input, shape index: {}]
  %s15 = inlined_call_operand.vmem [shape: f32[256,8], index: 15, kind: input, shape index: {}]
  %s16 = inlined_call_operand.vmem [shape: f32[1,8], index: 16, kind: input, shape index: {}]
  %s17 = inlined_call_operand.vmem [shape: f32[256,8], index: 17, kind: input, shape index: {}]
  %s18 = inlined_call_operand.vmem [shape: f32[256,8], index: 18, kind: input, shape index: {}]
  %s19 = inlined_call_operand.vmem [shape: f32[1,8], index: 19, kind: input, shape index: {}]
  %s20 = inlined_call_operand.vmem [shape: f32[16,32], index: 20, kind: input, shape index: {}]
  %s21 = inlined_call_operand.vmem [shape: f32[1,32], index: 21, kind: input, shape index: {}]
  %s22 = inlined_call_operand.vmem [shape: f32[16,16], index: 22, kind: input, shape index: {}]
  %s23 = inlined_call_operand.vmem [shape: f32[1,16], index: 23, kind: input, shape index: {}]
  %s24 = inlined_call_operand.vmem [shape: f32[2,2,128], index: 24, kind: output, shape index: {}]
  %s25 = sld [smem:[#allocation0]]
  $region129: #{forward.2} parent=0
    _
  %s27 = ssub.s32 1, %s25
  %s28 = scalar_select 0, %s27, %s25
  loop: start=0, step=1, limit=4
  $region2: #{forward.2} parent=0 // loop_pre_header
    _
  $region3: #{forward.2} parent=0 // loop_header
    %s30 = sphi 0, %s34
    %p31 = scmp.ge.s32.totalorder %s30, 4
    %s40 = sphi 0, %s42
    %s43 = sphi 0, %s40
    %s44 = sphi 0, %s43
    %s60 = sphi 0, %s44
    %s68 = sphi 0, %s70
    %s71 = sphi 0, %s68
    %s72 = sphi 0, %s71
    %s88 = sphi 0, %s72
    %s94 = sphi 0, %s96
    %s97 = sphi 0, %s94
    %s98 = sphi 0, %s97
    %s114 = sphi 0, %s98
    %s122 = sphi 0, %s124
    %s125 = sphi 0, %s122
    %s126 = sphi 0, %s125
    %s142 = sphi 0, %s126
    %s148 = sphi 0, %s150
    %s151 = sphi 0, %s148
    %s152 = sphi 0, %s151
    %s168 = sphi 0, %s152
    %s176 = sphi 0, %s178
    %s179 = sphi 0, %s176
    %s180 = sphi 0, %s179
    %s196 = sphi 0, %s180
    %s202 = sphi 0, %s204
    %s205 = sphi 0, %s202
    %s206 = sphi 0, %s205
    %s222 = sphi 0, %s206
    %s226 = sphi 0, %s226
    %s228 = sphi 0, %s226
    %s229 = sphi 0, %s228
    %s243 = sphi 0, %s229
    %s247 = sphi 0, %s247
    %s249 = sphi 0, %s247
    %s250 = sphi 0, %s249
    %s264 = sphi 0, %s250
    %s268 = sphi 0, %s268
    %s270 = sphi 0, %s268
    %s271 = sphi 0, %s270
    %s285 = sphi 0, %s271
    %s289 = sphi 0, %s289
    %s291 = sphi 0, %s289
    %s292 = sphi 0, %s291
    %s306 = sphi 0, %s292
    %s310 = sphi 0, %s310
    %s312 = sphi 0, %s310
    %s313 = sphi 0, %s312
    %s327 = sphi 0, %s313
    %s331 = sphi 0, %s331
    %s333 = sphi 0, %s331
    %s334 = sphi 0, %s333
    %s348 = sphi 0, %s334
    %s352 = sphi 0, %s352
    %s354 = sphi 0, %s352
    %s355 = sphi 0, %s354
    %s369 = sphi 0, %s355
    %s373 = sphi 0, %s373
    %s375 = sphi 0, %s373
    %s376 = sphi 0, %s375
    %s390 = sphi 0, %s376
    %s394 = sphi 0, %s394
    %s396 = sphi 0, %s394
    %s397 = sphi 0, %s396
    %s411 = sphi 0, %s397
    %s415 = sphi 0, %s415
    %s417 = sphi 0, %s415
    %s418 = sphi 0, %s417
    %s432 = sphi 0, %s418
    %s436 = sphi 0, %s436
    %s438 = sphi 0, %s436
    %s439 = sphi 0, %s438
    %s453 = sphi 0, %s439
    %s457 = sphi 0, %s457
    %s459 = sphi 0, %s457
    %s460 = sphi 0, %s459
    %s474 = sphi 0, %s460
    %s478 = sphi 0, %s478
    %s480 = sphi 0, %s478
    %s481 = sphi 0, %s480
    %s495 = sphi 0, %s481
    %s499 = sphi 0, %s499
    %s501 = sphi 0, %s499
    %s502 = sphi 0, %s501
    %s516 = sphi 0, %s502
    %s520 = sphi 0, %s520
    %s522 = sphi 0, %s520
    %s523 = sphi 0, %s522
    %s537 = sphi 0, %s523
    %s541 = sphi 0, %s541
    %s543 = sphi 0, %s541
    %s544 = sphi 0, %s543
    %s558 = sphi 0, %s544
    %s562 = sphi 0, %s562
    %s564 = sphi 0, %s562
    %s565 = sphi 0, %s564
    %s579 = sphi 0, %s565
    %s585 = sphi 0, %s587
    %s588 = sphi 0, %s585
    %s589 = sphi 0, %s588
    %s605 = sphi 0, %s589
  $region4: #{forward.2} parent=0 // loop_header_branch
    %33 = sbr.rel (%p31) target = $region8
  $region5: #{forward.2} parent=0 // loop_body
    %s35 = ssub.s32 %s30, 1
    %s36 = ssub.s32 %s30, 2
    %s37 = sadd.s32 %s30, 1
    %s38 = ssub.s32 %s30, %s37
    %p39 = scmp.eq.s32.totalorder %s38, 0
    %s41 = sadd.s32 %s40, 1
    %s42 = scalar_select %p39, %s40, %s41
    %p45 = pneg %p39
    %p46 = scmp.eq.s32.totalorder %s30, 1
    %p47 = por %p45, %p46
    %p48 = scmp.ne.s32.totalorder %s40, %s43
    %p49 = scmp.eq.s32.totalorder %s30, 0
    %p50 = por %p48, %p49
    %p51 = scmp.ne.s32.totalorder %s40, %s43
    %p52 = scmp.eq.s32.totalorder %s35, 1
    %p53 = por %p51, %p52
    %p54 = scmp.ne.s32.totalorder %s43, %s44
    %p55 = scmp.eq.s32.totalorder %s35, 0
    %p56 = por %p54, %p55
    %p57 = scmp.ne.s32.totalorder %s43, %s44
    %p58 = scmp.eq.s32.totalorder %s36, 1
    %p59 = por %p57, %p58
    %p61 = scmp.ne.s32.totalorder %s44, %s60
    %p62 = scmp.eq.s32.totalorder %s36, 0
    %p63 = por %p61, %p62
    %s64 = ssub.s32 1, %s30
    %s65 = ssub.s32 1, %s37
    %s66 = ssub.s32 %s64, %s65
    %p67 = scmp.eq.s32.totalorder %s66, 0
    %s69 = sadd.s32 %s68, 1
    %s70 = scalar_select %p67, %s68, %s69
    %p73 = pneg %p67
    %p74 = scmp.eq.s32.totalorder %s30, 1
    %p75 = por %p73, %p74
    %p76 = scmp.ne.s32.totalorder %s68, %s71
    %p77 = scmp.eq.s32.totalorder %s30, 0
    %p78 = por %p76, %p77
    %p79 = scmp.ne.s32.totalorder %s68, %s71
    %p80 = scmp.eq.s32.totalorder %s35, 1
    %p81 = por %p79, %p80
    %p82 = scmp.ne.s32.totalorder %s71, %s72
    %p83 = scmp.eq.s32.totalorder %s35, 0
    %p84 = por %p82, %p83
    %p85 = scmp.ne.s32.totalorder %s71, %s72
    %p86 = scmp.eq.s32.totalorder %s36, 1
    %p87 = por %p85, %p86
    %p89 = scmp.ne.s32.totalorder %s72, %s88
    %p90 = scmp.eq.s32.totalorder %s36, 0
    %p91 = por %p89, %p90
    %s92 = ssub.s32 %s30, %s37
    %p93 = scmp.eq.s32.totalorder %s92, 0
    %s95 = sadd.s32 %s94, 1
    %s96 = scalar_select %p93, %s94, %s95
    %p99 = pneg %p93
    %p100 = scmp.eq.s32.totalorder %s30, 1
    %p101 = por %p99, %p100
    %p102 = scmp.ne.s32.totalorder %s94, %s97
    %p103 = scmp.eq.s32.totalorder %s30, 0
    %p104 = por %p102, %p103
    %p105 = scmp.ne.s32.totalorder %s94, %s97
    %p106 = scmp.eq.s32.totalorder %s35, 1
    %p107 = por %p105, %p106
    %p108 = scmp.ne.s32.totalorder %s97, %s98
    %p109 = scmp.eq.s32.totalorder %s35, 0
    %p110 = por %p108, %p109
    %p111 = scmp.ne.s32.totalorder %s97, %s98
    %p112 = scmp.eq.s32.totalorder %s36, 1
    %p113 = por %p111, %p112
    %p115 = scmp.ne.s32.totalorder %s98, %s114
    %p116 = scmp.eq.s32.totalorder %s36, 0
    %p117 = por %p115, %p116
    %s118 = ssub.s32 1, %s30
    %s119 = ssub.s32 1, %s37
    %s120 = ssub.s32 %s118, %s119
    %p121 = scmp.eq.s32.totalorder %s120, 0
    %s123 = sadd.s32 %s122, 1
    %s124 = scalar_select %p121, %s122, %s123
    %p127 = pneg %p121
    %p128 = scmp.eq.s32.totalorder %s30, 1
    %p129 = por %p127, %p128
    %p130 = scmp.ne.s32.totalorder %s122, %s125
    %p131 = scmp.eq.s32.totalorder %s30, 0
    %p132 = por %p130, %p131
    %p133 = scmp.ne.s32.totalorder %s122, %s125
    %p134 = scmp.eq.s32.totalorder %s35, 1
    %p135 = por %p133, %p134
    %p136 = scmp.ne.s32.totalorder %s125, %s126
    %p137 = scmp.eq.s32.totalorder %s35, 0
    %p138 = por %p136, %p137
    %p139 = scmp.ne.s32.totalorder %s125, %s126
    %p140 = scmp.eq.s32.totalorder %s36, 1
    %p141 = por %p139, %p140
    %p143 = scmp.ne.s32.totalorder %s126, %s142
    %p144 = scmp.eq.s32.totalorder %s36, 0
    %p145 = por %p143, %p144
    %s146 = ssub.s32 %s30, %s37
    %p147 = scmp.eq.s32.totalorder %s146, 0
    %s149 = sadd.s32 %s148, 1
    %s150 = scalar_select %p147, %s148, %s149
    %p153 = pneg %p147
    %p154 = scmp.eq.s32.totalorder %s30, 1
    %p155 = por %p153, %p154
    %p156 = scmp.ne.s32.totalorder %s148, %s151
    %p157 = scmp.eq.s32.totalorder %s30, 0
    %p158 = por %p156, %p157
    %p159 = scmp.ne.s32.totalorder %s148, %s151
    %p160 = scmp.eq.s32.totalorder %s35, 1
    %p161 = por %p159, %p160
    %p162 = scmp.ne.s32.totalorder %s151, %s152
    %p163 = scmp.eq.s32.totalorder %s35, 0
    %p164 = por %p162, %p163
    %p165 = scmp.ne.s32.totalorder %s151, %s152
    %p166 = scmp.eq.s32.totalorder %s36, 1
    %p167 = por %p165, %p166
    %p169 = scmp.ne.s32.totalorder %s152, %s168
    %p170 = scmp.eq.s32.totalorder %s36, 0
    %p171 = por %p169, %p170
    %s172 = ssub.s32 1, %s30
    %s173 = ssub.s32 1, %s37
    %s174 = ssub.s32 %s172, %s173
    %p175 = scmp.eq.s32.totalorder %s174, 0
    %s177 = sadd.s32 %s176, 1
    %s178 = scalar_select %p175, %s176, %s177
    %p181 = pneg %p175
    %p182 = scmp.eq.s32.totalorder %s30, 1
    %p183 = por %p181, %p182
    %p184 = scmp.ne.s32.totalorder %s176, %s179
    %p185 = scmp.eq.s32.totalorder %s30, 0
    %p186 = por %p184, %p185
    %p187 = scmp.ne.s32.totalorder %s176, %s179
    %p188 = scmp.eq.s32.totalorder %s35, 1
    %p189 = por %p187, %p188
    %p190 = scmp.ne.s32.totalorder %s179, %s180
    %p191 = scmp.eq.s32.totalorder %s35, 0
    %p192 = por %p190, %p191
    %p193 = scmp.ne.s32.totalorder %s179, %s180
    %p194 = scmp.eq.s32.totalorder %s36, 1
    %p195 = por %p193, %p194
    %p197 = scmp.ne.s32.totalorder %s180, %s196
    %p198 = scmp.eq.s32.totalorder %s36, 0
    %p199 = por %p197, %p198
    %s200 = ssub.s32 %s30, %s37
    %p201 = scmp.eq.s32.totalorder %s200, 0
    %s203 = sadd.s32 %s202, 1
    %s204 = scalar_select %p201, %s202, %s203
    %p207 = pneg %p201
    %p208 = scmp.eq.s32.totalorder %s30, 1
    %p209 = por %p207, %p208
    %p210 = scmp.ne.s32.totalorder %s202, %s205
    %p211 = scmp.eq.s32.totalorder %s30, 0
    %p212 = por %p210, %p211
    %p213 = scmp.ne.s32.totalorder %s202, %s205
    %p214 = scmp.eq.s32.totalorder %s35, 1
    %p215 = por %p213, %p214
    %p216 = scmp.ne.s32.totalorder %s205, %s206
    %p217 = scmp.eq.s32.totalorder %s35, 0
    %p218 = por %p216, %p217
    %p219 = scmp.ne.s32.totalorder %s205, %s206
    %p220 = scmp.eq.s32.totalorder %s36, 1
    %p221 = por %p219, %p220
    %p223 = scmp.ne.s32.totalorder %s206, %s222
    %p224 = scmp.eq.s32.totalorder %s36, 0
    %p225 = por %p223, %p224
    %s227 = sadd.s32 %s226, 1
    %p230 = scmp.eq.s32.totalorder %s30, 1
    %p231 = scmp.ne.s32.totalorder %s226, %s228
    %p232 = scmp.eq.s32.totalorder %s30, 0
    %p233 = por %p231, %p232
    %p234 = scmp.ne.s32.totalorder %s226, %s228
    %p235 = scmp.eq.s32.totalorder %s35, 1
    %p236 = por %p234, %p235
    %p237 = scmp.ne.s32.totalorder %s228, %s229
    %p238 = scmp.eq.s32.totalorder %s35, 0
    %p239 = por %p237, %p238
    %p240 = scmp.ne.s32.totalorder %s228, %s229
    %p241 = scmp.eq.s32.totalorder %s36, 1
    %p242 = por %p240, %p241
    %p244 = scmp.ne.s32.totalorder %s229, %s243
    %p245 = scmp.eq.s32.totalorder %s36, 0
    %p246 = por %p244, %p245
    %s248 = sadd.s32 %s247, 1
    %p251 = scmp.eq.s32.totalorder %s30, 1
    %p252 = scmp.ne.s32.totalorder %s247, %s249
    %p253 = scmp.eq.s32.totalorder %s30, 0
    %p254 = por %p252, %p253
    %p255 = scmp.ne.s32.totalorder %s247, %s249
    %p256 = scmp.eq.s32.totalorder %s35, 1
    %p257 = por %p255, %p256
    %p258 = scmp.ne.s32.totalorder %s249, %s250
    %p259 = scmp.eq.s32.totalorder %s35, 0
    %p260 = por %p258, %p259
    %p261 = scmp.ne.s32.totalorder %s249, %s250
    %p262 = scmp.eq.s32.totalorder %s36, 1
    %p263 = por %p261, %p262
    %p265 = scmp.ne.s32.totalorder %s250, %s264
    %p266 = scmp.eq.s32.totalorder %s36, 0
    %p267 = por %p265, %p266
    %s269 = sadd.s32 %s268, 1
    %p272 = scmp.eq.s32.totalorder %s30, 1
    %p273 = scmp.ne.s32.totalorder %s268, %s270
    %p274 = scmp.eq.s32.totalorder %s30, 0
    %p275 = por %p273, %p274
    %p276 = scmp.ne.s32.totalorder %s268, %s270
    %p277 = scmp.eq.s32.totalorder %s35, 1
    %p278 = por %p276, %p277
    %p279 = scmp.ne.s32.totalorder %s270, %s271
    %p280 = scmp.eq.s32.totalorder %s35, 0
    %p281 = por %p279, %p280
    %p282 = scmp.ne.s32.totalorder %s270, %s271
    %p283 = scmp.eq.s32.totalorder %s36, 1
    %p284 = por %p282, %p283
    %p286 = scmp.ne.s32.totalorder %s271, %s285
    %p287 = scmp.eq.s32.totalorder %s36, 0
    %p288 = por %p286, %p287
    %s290 = sadd.s32 %s289, 1
    %p293 = scmp.eq.s32.totalorder %s30, 1
    %p294 = scmp.ne.s32.totalorder %s289, %s291
    %p295 = scmp.eq.s32.totalorder %s30, 0
    %p296 = por %p294, %p295
    %p297 = scmp.ne.s32.totalorder %s289, %s291
    %p298 = scmp.eq.s32.totalorder %s35, 1
    %p299 = por %p297, %p298
    %p300 = scmp.ne.s32.totalorder %s291, %s292
    %p301 = scmp.eq.s32.totalorder %s35, 0
    %p302 = por %p300, %p301
    %p303 = scmp.ne.s32.totalorder %s291, %s292
    %p304 = scmp.eq.s32.totalorder %s36, 1
    %p305 = por %p303, %p304
    %p307 = scmp.ne.s32.totalorder %s292, %s306
    %p308 = scmp.eq.s32.totalorder %s36, 0
    %p309 = por %p307, %p308
    %s311 = sadd.s32 %s310, 1
    %p314 = scmp.eq.s32.totalorder %s30, 1
    %p315 = scmp.ne.s32.totalorder %s310, %s312
    %p316 = scmp.eq.s32.totalorder %s30, 0
    %p317 = por %p315, %p316
    %p318 = scmp.ne.s32.totalorder %s310, %s312
    %p319 = scmp.eq.s32.totalorder %s35, 1
    %p320 = por %p318, %p319
    %p321 = scmp.ne.s32.totalorder %s312, %s313
    %p322 = scmp.eq.s32.totalorder %s35, 0
    %p323 = por %p321, %p322
    %p324 = scmp.ne.s32.totalorder %s312, %s313
    %p325 = scmp.eq.s32.totalorder %s36, 1
    %p326 = por %p324, %p325
    %p328 = scmp.ne.s32.totalorder %s313, %s327
    %p329 = scmp.eq.s32.totalorder %s36, 0
    %p330 = por %p328, %p329
    %s332 = sadd.s32 %s331, 1
    %p335 = scmp.eq.s32.totalorder %s30, 1
    %p336 = scmp.ne.s32.totalorder %s331, %s333
    %p337 = scmp.eq.s32.totalorder %s30, 0
    %p338 = por %p336, %p337
    %p339 = scmp.ne.s32.totalorder %s331, %s333
    %p340 = scmp.eq.s32.totalorder %s35, 1
    %p341 = por %p339, %p340
    %p342 = scmp.ne.s32.totalorder %s333, %s334
    %p343 = scmp.eq.s32.totalorder %s35, 0
    %p344 = por %p342, %p343
    %p345 = scmp.ne.s32.totalorder %s333, %s334
    %p346 = scmp.eq.s32.totalorder %s36, 1
    %p347 = por %p345, %p346
    %p349 = scmp.ne.s32.totalorder %s334, %s348
    %p350 = scmp.eq.s32.totalorder %s36, 0
    %p351 = por %p349, %p350
    %s353 = sadd.s32 %s352, 1
    %p356 = scmp.eq.s32.totalorder %s30, 1
    %p357 = scmp.ne.s32.totalorder %s352, %s354
    %p358 = scmp.eq.s32.totalorder %s30, 0
    %p359 = por %p357, %p358
    %p360 = scmp.ne.s32.totalorder %s352, %s354
    %p361 = scmp.eq.s32.totalorder %s35, 1
    %p362 = por %p360, %p361
    %p363 = scmp.ne.s32.totalorder %s354, %s355
    %p364 = scmp.eq.s32.totalorder %s35, 0
    %p365 = por %p363, %p364
    %p366 = scmp.ne.s32.totalorder %s354, %s355
    %p367 = scmp.eq.s32.totalorder %s36, 1
    %p368 = por %p366, %p367
    %p370 = scmp.ne.s32.totalorder %s355, %s369
    %p371 = scmp.eq.s32.totalorder %s36, 0
    %p372 = por %p370, %p371
    %s374 = sadd.s32 %s373, 1
    %p377 = scmp.eq.s32.totalorder %s30, 1
    %p378 = scmp.ne.s32.totalorder %s373, %s375
    %p379 = scmp.eq.s32.totalorder %s30, 0
    %p380 = por %p378, %p379
    %p381 = scmp.ne.s32.totalorder %s373, %s375
    %p382 = scmp.eq.s32.totalorder %s35, 1
    %p383 = por %p381, %p382
    %p384 = scmp.ne.s32.totalorder %s375, %s376
    %p385 = scmp.eq.s32.totalorder %s35, 0
    %p386 = por %p384, %p385
    %p387 = scmp.ne.s32.totalorder %s375, %s376
    %p388 = scmp.eq.s32.totalorder %s36, 1
    %p389 = por %p387, %p388
    %p391 = scmp.ne.s32.totalorder %s376, %s390
    %p392 = scmp.eq.s32.totalorder %s36, 0
    %p393 = por %p391, %p392
    %s395 = sadd.s32 %s394, 1
    %p398 = scmp.eq.s32.totalorder %s30, 1
    %p399 = scmp.ne.s32.totalorder %s394, %s396
    %p400 = scmp.eq.s32.totalorder %s30, 0
    %p401 = por %p399, %p400
    %p402 = scmp.ne.s32.totalorder %s394, %s396
    %p403 = scmp.eq.s32.totalorder %s35, 1
    %p404 = por %p402, %p403
    %p405 = scmp.ne.s32.totalorder %s396, %s397
    %p406 = scmp.eq.s32.totalorder %s35, 0
    %p407 = por %p405, %p406
    %p408 = scmp.ne.s32.totalorder %s396, %s397
    %p409 = scmp.eq.s32.totalorder %s36, 1
    %p410 = por %p408, %p409
    %p412 = scmp.ne.s32.totalorder %s397, %s411
    %p413 = scmp.eq.s32.totalorder %s36, 0
    %p414 = por %p412, %p413
    %s416 = sadd.s32 %s415, 1
    %p419 = scmp.eq.s32.totalorder %s30, 1
    %p420 = scmp.ne.s32.totalorder %s415, %s417
    %p421 = scmp.eq.s32.totalorder %s30, 0
    %p422 = por %p420, %p421
    %p423 = scmp.ne.s32.totalorder %s415, %s417
    %p424 = scmp.eq.s32.totalorder %s35, 1
    %p425 = por %p423, %p424
    %p426 = scmp.ne.s32.totalorder %s417, %s418
    %p427 = scmp.eq.s32.totalorder %s35, 0
    %p428 = por %p426, %p427
    %p429 = scmp.ne.s32.totalorder %s417, %s418
    %p430 = scmp.eq.s32.totalorder %s36, 1
    %p431 = por %p429, %p430
    %p433 = scmp.ne.s32.totalorder %s418, %s432
    %p434 = scmp.eq.s32.totalorder %s36, 0
    %p435 = por %p433, %p434
    %s437 = sadd.s32 %s436, 1
    %p440 = scmp.eq.s32.totalorder %s30, 1
    %p441 = scmp.ne.s32.totalorder %s436, %s438
    %p442 = scmp.eq.s32.totalorder %s30, 0
    %p443 = por %p441, %p442
    %p444 = scmp.ne.s32.totalorder %s436, %s438
    %p445 = scmp.eq.s32.totalorder %s35, 1
    %p446 = por %p444, %p445
    %p447 = scmp.ne.s32.totalorder %s438, %s439
    %p448 = scmp.eq.s32.totalorder %s35, 0
    %p449 = por %p447, %p448
    %p450 = scmp.ne.s32.totalorder %s438, %s439
    %p451 = scmp.eq.s32.totalorder %s36, 1
    %p452 = por %p450, %p451
    %p454 = scmp.ne.s32.totalorder %s439, %s453
    %p455 = scmp.eq.s32.totalorder %s36, 0
    %p456 = por %p454, %p455
    %s458 = sadd.s32 %s457, 1
    %p461 = scmp.eq.s32.totalorder %s30, 1
    %p462 = scmp.ne.s32.totalorder %s457, %s459
    %p463 = scmp.eq.s32.totalorder %s30, 0
    %p464 = por %p462, %p463
    %p465 = scmp.ne.s32.totalorder %s457, %s459
    %p466 = scmp.eq.s32.totalorder %s35, 1
    %p467 = por %p465, %p466
    %p468 = scmp.ne.s32.totalorder %s459, %s460
    %p469 = scmp.eq.s32.totalorder %s35, 0
    %p470 = por %p468, %p469
    %p471 = scmp.ne.s32.totalorder %s459, %s460
    %p472 = scmp.eq.s32.totalorder %s36, 1
    %p473 = por %p471, %p472
    %p475 = scmp.ne.s32.totalorder %s460, %s474
    %p476 = scmp.eq.s32.totalorder %s36, 0
    %p477 = por %p475, %p476
    %s479 = sadd.s32 %s478, 1
    %p482 = scmp.eq.s32.totalorder %s30, 1
    %p483 = scmp.ne.s32.totalorder %s478, %s480
    %p484 = scmp.eq.s32.totalorder %s30, 0
    %p485 = por %p483, %p484
    %p486 = scmp.ne.s32.totalorder %s478, %s480
    %p487 = scmp.eq.s32.totalorder %s35, 1
    %p488 = por %p486, %p487
    %p489 = scmp.ne.s32.totalorder %s480, %s481
    %p490 = scmp.eq.s32.totalorder %s35, 0
    %p491 = por %p489, %p490
    %p492 = scmp.ne.s32.totalorder %s480, %s481
    %p493 = scmp.eq.s32.totalorder %s36, 1
    %p494 = por %p492, %p493
    %p496 = scmp.ne.s32.totalorder %s481, %s495
    %p497 = scmp.eq.s32.totalorder %s36, 0
    %p498 = por %p496, %p497
    %s500 = sadd.s32 %s499, 1
    %p503 = scmp.eq.s32.totalorder %s30, 1
    %p504 = scmp.ne.s32.totalorder %s499, %s501
    %p505 = scmp.eq.s32.totalorder %s30, 0
    %p506 = por %p504, %p505
    %p507 = scmp.ne.s32.totalorder %s499, %s501
    %p508 = scmp.eq.s32.totalorder %s35, 1
    %p509 = por %p507, %p508
    %p510 = scmp.ne.s32.totalorder %s501, %s502
    %p511 = scmp.eq.s32.totalorder %s35, 0
    %p512 = por %p510, %p511
    %p513 = scmp.ne.s32.totalorder %s501, %s502
    %p514 = scmp.eq.s32.totalorder %s36, 1
    %p515 = por %p513, %p514
    %p517 = scmp.ne.s32.totalorder %s502, %s516
    %p518 = scmp.eq.s32.totalorder %s36, 0
    %p519 = por %p517, %p518
    %s521 = sadd.s32 %s520, 1
    %p524 = scmp.eq.s32.totalorder %s30, 1
    %p525 = scmp.ne.s32.totalorder %s520, %s522
    %p526 = scmp.eq.s32.totalorder %s30, 0
    %p527 = por %p525, %p526
    %p528 = scmp.ne.s32.totalorder %s520, %s522
    %p529 = scmp.eq.s32.totalorder %s35, 1
    %p530 = por %p528, %p529
    %p531 = scmp.ne.s32.totalorder %s522, %s523
    %p532 = scmp.eq.s32.totalorder %s35, 0
    %p533 = por %p531, %p532
    %p534 = scmp.ne.s32.totalorder %s522, %s523
    %p535 = scmp.eq.s32.totalorder %s36, 1
    %p536 = por %p534, %p535
    %p538 = scmp.ne.s32.totalorder %s523, %s537
    %p539 = scmp.eq.s32.totalorder %s36, 0
    %p540 = por %p538, %p539
    %s542 = sadd.s32 %s541, 1
    %p545 = scmp.eq.s32.totalorder %s30, 1
    %p546 = scmp.ne.s32.totalorder %s541, %s543
    %p547 = scmp.eq.s32.totalorder %s30, 0
    %p548 = por %p546, %p547
    %p549 = scmp.ne.s32.totalorder %s541, %s543
    %p550 = scmp.eq.s32.totalorder %s35, 1
    %p551 = por %p549, %p550
    %p552 = scmp.ne.s32.totalorder %s543, %s544
    %p553 = scmp.eq.s32.totalorder %s35, 0
    %p554 = por %p552, %p553
    %p555 = scmp.ne.s32.totalorder %s543, %s544
    %p556 = scmp.eq.s32.totalorder %s36, 1
    %p557 = por %p555, %p556
    %p559 = scmp.ne.s32.totalorder %s544, %s558
    %p560 = scmp.eq.s32.totalorder %s36, 0
    %p561 = por %p559, %p560
    %s563 = sadd.s32 %s562, 1
    %p566 = scmp.eq.s32.totalorder %s30, 1
    %p567 = scmp.ne.s32.totalorder %s562, %s564
    %p568 = scmp.eq.s32.totalorder %s30, 0
    %p569 = por %p567, %p568
    %p570 = scmp.ne.s32.totalorder %s562, %s564
    %p571 = scmp.eq.s32.totalorder %s35, 1
    %p572 = por %p570, %p571
    %p573 = scmp.ne.s32.totalorder %s564, %s565
    %p574 = scmp.eq.s32.totalorder %s35, 0
    %p575 = por %p573, %p574
    %p576 = scmp.ne.s32.totalorder %s564, %s565
    %p577 = scmp.eq.s32.totalorder %s36, 1
    %p578 = por %p576, %p577
    %p580 = scmp.ne.s32.totalorder %s565, %s579
    %p581 = scmp.eq.s32.totalorder %s36, 0
    %p582 = por %p580, %p581
    %s583 = ssub.s32 %s30, %s37
    %p584 = scmp.eq.s32.totalorder %s583, 0
    %s586 = sadd.s32 %s585, 1
    %s587 = scalar_select %p584, %s585, %s586
    %p590 = pneg %p584
    %p591 = scmp.eq.s32.totalorder %s30, 1
    %p592 = por %p590, %p591
    %p593 = scmp.ne.s32.totalorder %s585, %s588
    %p594 = scmp.eq.s32.totalorder %s30, 0
    %p595 = por %p593, %p594
    %p596 = scmp.ne.s32.totalorder %s585, %s588
    %p597 = scmp.eq.s32.totalorder %s35, 1
    %p598 = por %p596, %p597
    %p599 = scmp.ne.s32.totalorder %s588, %s589
    %p600 = scmp.eq.s32.totalorder %s35, 0
    %p601 = por %p599, %p600
    %p602 = scmp.ne.s32.totalorder %s588, %s589
    %p603 = scmp.eq.s32.totalorder %s36, 1
    %p604 = por %p602, %p603
    %p606 = scmp.ne.s32.totalorder %s589, %s605
    %p607 = scmp.eq.s32.totalorder %s36, 0
    %p608 = por %p606, %p607
    %p609 = scmp.le.s32.totalorder 1, %s30
    %p610 = scmp.lt.s32.totalorder %s30, 3
    %p611 = pnand %p609, %p610
    %p612 = pneg %p611
    // Predicated region
    $region9: #{forward.2} parent=5 // pred_check
      _
    $region10: #{forward.2} parent=5 // pred_check_branch
      %614 = sbr.rel (%p611) target = $region12
    $region11: #{forward.2} parent=5 // pred_region
      %s615 = ssub.s32 %s30, 1
      // Predicated region
      $region13: #{forward.2} parent=11 // pred_check
        %p616 = pneg %p239
      $region14: #{forward.2} parent=11 // pred_check_branch
        %618 = sbr.rel (%p616) target = $region16
      $region15: #{forward.2} parent=11 // pred_region
        _
      $region16: #{forward.2} parent=11 // pred_fallthru
        _
      // Predicated region
      $region17: #{forward.2} parent=11 // pred_check
        %p619 = pneg %p260
      $region18: #{forward.2} parent=11 // pred_check_branch
        %621 = sbr.rel (%p619) target = $region20
      $region19: #{forward.2} parent=11 // pred_region
        _
      $region20: #{forward.2} parent=11 // pred_fallthru
        _
      // Predicated region
      $region21: #{forward.2} parent=11 // pred_check
        %p622 = pneg %p281
      $region22: #{forward.2} parent=11 // pred_check_branch
        %624 = sbr.rel (%p622) target = $region24
      $region23: #{forward.2} parent=11 // pred_region
        _
      $region24: #{forward.2} parent=11 // pred_fallthru
        _
      // Predicated region
      $region25: #{forward.2} parent=11 // pred_check
        %p625 = pneg %p302
      $region26: #{forward.2} parent=11 // pred_check_branch
        %627 = sbr.rel (%p625) target = $region28
      $region27: #{forward.2} parent=11 // pred_region
        _
      $region28: #{forward.2} parent=11 // pred_fallthru
        _
      // Predicated region
      $region29: #{forward.2} parent=11 // pred_check
        %p628 = pneg %p323
      $region30: #{forward.2} parent=11 // pred_check_branch
        %630 = sbr.rel (%p628) target = $region32
      $region31: #{forward.2} parent=11 // pred_region
        _
      $region32: #{forward.2} parent=11 // pred_fallthru
        _
      // Predicated region
      $region33: #{forward.2} parent=11 // pred_check
        %p631 = pneg %p344
      $region34: #{forward.2} parent=11 // pred_check_branch
        %633 = sbr.rel (%p631) target = $region36
      $region35: #{forward.2} parent=11 // pred_region
        _
      $region36: #{forward.2} parent=11 // pred_fallthru
        _
      // Predicated region
      $region37: #{forward.2} parent=11 // pred_check
        %p634 = pneg %p365
      $region38: #{forward.2} parent=11 // pred_check_branch
        %636 = sbr.rel (%p634) target = $region40
      $region39: #{forward.2} parent=11 // pred_region
        _
      $region40: #{forward.2} parent=11 // pred_fallthru
        _
      // Predicated region
      $region41: #{forward.2} parent=11 // pred_check
        %p637 = pneg %p386
      $region42: #{forward.2} parent=11 // pred_check_branch
        %639 = sbr.rel (%p637) target = $region44
      $region43: #{forward.2} parent=11 // pred_region
        _
      $region44: #{forward.2} parent=11 // pred_fallthru
        _
      // Predicated region
      $region45: #{forward.2} parent=11 // pred_check
        %p640 = pneg %p407
      $region46: #{forward.2} parent=11 // pred_check_branch
        %642 = sbr.rel (%p640) target = $region48
      $region47: #{forward.2} parent=11 // pred_region
        _
      $region48: #{forward.2} parent=11 // pred_fallthru
        _
      // Predicated region
      $region49: #{forward.2} parent=11 // pred_check
        %p643 = pneg %p428
      $region50: #{forward.2} parent=11 // pred_check_branch
        %645 = sbr.rel (%p643) target = $region52
      $region51: #{forward.2} parent=11 // pred_region
        _
      $region52: #{forward.2} parent=11 // pred_fallthru
        _
      // Predicated region
      $region53: #{forward.2} parent=11 // pred_check
        %p646 = pneg %p449
      $region54: #{forward.2} parent=11 // pred_check_branch
        %648 = sbr.rel (%p646) target = $region56
      $region55: #{forward.2} parent=11 // pred_region
        _
      $region56: #{forward.2} parent=11 // pred_fallthru
        _
      // Predicated region
      $region57: #{forward.2} parent=11 // pred_check
        %p649 = pneg %p470
      $region58: #{forward.2} parent=11 // pred_check_branch
        %651 = sbr.rel (%p649) target = $region60
      $region59: #{forward.2} parent=11 // pred_region
        _
      $region60: #{forward.2} parent=11 // pred_fallthru
        _
      // Predicated region
      $region61: #{forward.2} parent=11 // pred_check
        %p652 = pneg %p491
      $region62: #{forward.2} parent=11 // pred_check_branch
        %654 = sbr.rel (%p652) target = $region64
      $region63: #{forward.2} parent=11 // pred_region
        _
      $region64: #{forward.2} parent=11 // pred_fallthru
        _
      // Predicated region
      $region65: #{forward.2} parent=11 // pred_check
        %p655 = pneg %p512
      $region66: #{forward.2} parent=11 // pred_check_branch
        %657 = sbr.rel (%p655) target = $region68
      $region67: #{forward.2} parent=11 // pred_region
        _
      $region68: #{forward.2} parent=11 // pred_fallthru
        _
      // Predicated region
      $region69: #{forward.2} parent=11 // pred_check
        %p658 = pneg %p533
      $region70: #{forward.2} parent=11 // pred_check_branch
        %660 = sbr.rel (%p658) target = $region72
      $region71: #{forward.2} parent=11 // pred_region
        _
      $region72: #{forward.2} parent=11 // pred_fallthru
        _
      // Predicated region
      $region73: #{forward.2} parent=11 // pred_check
        %p661 = pneg %p554
      $region74: #{forward.2} parent=11 // pred_check_branch
        %663 = sbr.rel (%p661) target = $region76
      $region75: #{forward.2} parent=11 // pred_region
        _
      $region76: #{forward.2} parent=11 // pred_fallthru
        _
      // Predicated region
      $region77: #{forward.2} parent=11 // pred_check
        %p664 = pneg %p575
      $region78: #{forward.2} parent=11 // pred_check_branch
        %666 = sbr.rel (%p664) target = $region80
      $region79: #{forward.2} parent=11 // pred_region
        _
      $region80: #{forward.2} parent=11 // pred_fallthru
        _
    $region12: #{forward.2} parent=5 // pred_fallthru
      _
    %p667 = scmp.lt.s32.totalorder %s30, 2
    // Predicated region
    $region81: #{forward.2} parent=5 // pred_check
      %p668 = pneg %p667
    $region82: #{forward.2} parent=5 // pred_check_branch
      %670 = sbr.rel (%p668) target = $region84
    $region83: #{forward.2} parent=5 // pred_region
      // Predicated region
      $region85: #{forward.2} parent=83 // pred_check
        %p671 = pneg %p50
      $region86: #{forward.2} parent=83 // pred_check_branch
        %673 = sbr.rel (%p671) target = $region88
      $region87: #{forward.2} parent=83 // pred_region
        %p674 = scmp.lt.s32.totalorder %s30, 1
        %s675 = scalar_select %p674, %s30, 1
        %s676 = smul.addr %s675, 2
        %s677 = smul.addr %s676, 8
        %s678 = scalar_lea.vmem %s0, %s677
      $region88: #{forward.2} parent=83 // pred_fallthru
        _
      // Predicated region
      $region89: #{forward.2} parent=83 // pred_check
        %p679 = pneg %p78
      $region90: #{forward.2} parent=83 // pred_check_branch
        %681 = sbr.rel (%p679) target = $region92
      $region91: #{forward.2} parent=83 // pred_region
        %s682 = ssub.s32 1, %s30
        %p683 = scmp.lt.s32.totalorder %s682, 1
        %s684 = scalar_select %p683, %s682, 1
        %s685 = smul.addr %s684, 2
        %s686 = smul.addr %s685, 8
        %s687 = scalar_lea.vmem %s1, %s686
        %s688 = ssub.s32 1, %s30
      $region92: #{forward.2} parent=83 // pred_fallthru
        _
      // Predicated region
      $region93: #{forward.2} parent=83 // pred_check
        %p689 = pneg %p104
      $region94: #{forward.2} parent=83 // pred_check_branch
        %691 = sbr.rel (%p689) target = $region96
      $region95: #{forward.2} parent=83 // pred_region
        %p692 = scmp.lt.s32.totalorder %s30, 1
        %s693 = scalar_select %p692, %s30, 1
        %s694 = smul.addr %s693, 2
        %s695 = smul.addr %s694, 8
        %s696 = scalar_lea.vmem %s2, %s695
      $region96: #{forward.2} parent=83 // pred_fallthru
        _
      // Predicated region
      $region97: #{forward.2} parent=83 // pred_check
        %p697 = pneg %p132
      $region98: #{forward.2} parent=83 // pred_check_branch
        %699 = sbr.rel (%p697) target = $region100
      $region99: #{forward.2} parent=83 // pred_region
        %s700 = ssub.s32 1, %s30
        %p701 = scmp.lt.s32.totalorder %s700, 1
        %s702 = scalar_select %p701, %s700, 1
        %s703 = smul.addr %s702, 2
        %s704 = smul.addr %s703, 8
        %s705 = scalar_lea.vmem %s3, %s704
        %s706 = ssub.s32 1, %s30
      $region100: #{forward.2} parent=83 // pred_fallthru
        _
      // Predicated region
      $region101: #{forward.2} parent=83 // pred_check
        %p707 = pneg %p158
      $region102: #{forward.2} parent=83 // pred_check_branch
        %709 = sbr.rel (%p707) target = $region104
      $region103: #{forward.2} parent=83 // pred_region
        %p710 = scmp.lt.s32.totalorder %s30, 1
        %s711 = scalar_select %p710, %s30, 1
        %s712 = smul.addr %s711, 2
        %s713 = scalar_lea.vmem %s4, %s712
      $region104: #{forward.2} parent=83 // pred_fallthru
        _
      // Predicated region
      $region105: #{forward.2} parent=83 // pred_check
        %p714 = pneg %p186
      $region106: #{forward.2} parent=83 // pred_check_branch
        %716 = sbr.rel (%p714) target = $region108
      $region107: #{forward.2} parent=83 // pred_region
        %s717 = ssub.s32 1, %s30
        %p718 = scmp.lt.s32.totalorder %s717, 1
        %s719 = scalar_select %p718, %s717, 1
        %s720 = smul.addr %s719, 2
        %s721 = scalar_lea.vmem %s5, %s720
        %s722 = ssub.s32 1, %s30
      $region108: #{forward.2} parent=83 // pred_fallthru
        _
      // Predicated region
      $region109: #{forward.2} parent=83 // pred_check
        %p723 = pneg %p212
      $region110: #{forward.2} parent=83 // pred_check_branch
        %725 = sbr.rel (%p723) target = $region112
      $region111: #{forward.2} parent=83 // pred_region
        %p726 = scmp.lt.s32.totalorder %s30, 1
        %s727 = scalar_select %p726, %s30, 1
        %s728 = smul.addr %s727, 2
        %s729 = smul.addr %s728, 8
        %s730 = scalar_lea.vmem %s6, %s729
      $region112: #{forward.2} parent=83 // pred_fallthru
        _
    $region84: #{forward.2} parent=5 // pred_fallthru
      _
    %p731 = scmp.le.s32.totalorder 1, %s30
    %p732 = scmp.lt.s32.totalorder %s30, 3
    %p733 = pnand %p731, %p732
    %p734 = pneg %p733
    // Predicated region
    $region113: #{forward.2} parent=5 // pred_check
      _
    $region114: #{forward.2} parent=5 // pred_check_branch
      %736 = sbr.rel (%p733) target = $region116
    $region115: #{forward.2} parent=5 // pred_region
      %s737 = ssub.s32 %s30, 1
      %p738 = scmp.lt.s32.totalorder %s35, 1
      %s739 = scalar_select %p738, %s35, 1
      %s740 = smul.addr %s739, 2
      %s741 = smul.addr %s740, 8
      %s742 = scalar_lea.vmem %s0, %s741
      %p743 = pneg %p56
      %p744 = pneg %p53
      %s745 = ssub.s32 1, %s35
      %p746 = scmp.lt.s32.totalorder %s745, 1
      %s747 = scalar_select %p746, %s745, 1
      %s748 = smul.addr %s747, 2
      %s749 = smul.addr %s748, 8
      %s750 = scalar_lea.vmem %s1, %s749
      %p751 = pneg %p84
      %p752 = pneg %p81
      %p753 = scmp.lt.s32.totalorder %s35, 1
      %s754 = scalar_select %p753, %s35, 1
      %s755 = smul.addr %s754, 2
      %s756 = smul.addr %s755, 8
      %s757 = scalar_lea.vmem %s2, %s756
      %p758 = pneg %p110
      %p759 = pneg %p107
      %s760 = ssub.s32 1, %s35
      %p761 = scmp.lt.s32.totalorder %s760, 1
      %s762 = scalar_select %p761, %s760, 1
      %s763 = smul.addr %s762, 2
      %s764 = smul.addr %s763, 8
      %s765 = scalar_lea.vmem %s3, %s764
      %p766 = pneg %p138
      %p767 = pneg %p135
      %p768 = scmp.lt.s32.totalorder %s35, 1
      %s769 = scalar_select %p768, %s35, 1
      %s770 = smul.addr %s769, 2
      %s771 = scalar_lea.vmem %s4, %s770
      %p772 = pneg %p164
      %p773 = pneg %p161
      %s774 = ssub.s32 1, %s35
      %p775 = scmp.lt.s32.totalorder %s774, 1
      %s776 = scalar_select %p775, %s774, 1
      %s777 = smul.addr %s776, 2
      %s778 = scalar_lea.vmem %s5, %s777
      %p779 = pneg %p192
      %p780 = pneg %p189
      %p781 = scmp.lt.s32.totalorder %s35, 1
      %s782 = scalar_select %p781, %s35, 1
      %s783 = smul.addr %s782, 2
      %s784 = smul.addr %s783, 8
      %s785 = scalar_lea.vmem %s6, %s784
      %p786 = pneg %p218
      %p787 = pneg %p215
      %p788 = pneg %p239
      %p789 = pneg %p236
      %p790 = pneg %p260
      %p791 = pneg %p257
      %p792 = pneg %p281
      %p793 = pneg %p278
      %p794 = pneg %p302
      %p795 = pneg %p299
      %p796 = pneg %p323
      %p797 = pneg %p320
      %p798 = pneg %p344
      %p799 = pneg %p341
      %p800 = pneg %p365
      %p801 = pneg %p362
      %p802 = pneg %p386
      %p803 = pneg %p383
      %p804 = pneg %p407
      %p805 = pneg %p404
      %p806 = pneg %p428
      %p807 = pneg %p425
      %p808 = pneg %p449
      %p809 = pneg %p446
      %p810 = pneg %p470
      %p811 = pneg %p467
      %p812 = pneg %p491
      %p813 = pneg %p488
      %p814 = pneg %p512
      %p815 = pneg %p509
      %p816 = pneg %p533
      %p817 = pneg %p530
      %p818 = pneg %p554
      %p819 = pneg %p551
      %p820 = pneg %p575
      %p821 = pneg %p572
      %p822 = pneg %p601
      %p823 = pneg %p598
      %p824 = scmp.lt.s32.totalorder %s35, 1
      %s825 = scalar_select %p824, %s35, 1
      %s826 = smul.addr %s825, 2
      %s827 = scalar_lea.vmem %s24, %s826
      %p828 = scmp.lt.s32.totalorder %s35, 1
      %s829 = scalar_select %p828, %s35, 1
      %s830 = smul.addr %s829, 2
      %s831 = smul.addr %s830, 8
      %s832 = scalar_lea.vmem %s0, %s831
      %s833 = ssub.s32 1, %s35
      %p834 = scmp.lt.s32.totalorder %s833, 1
      %s835 = scalar_select %p834, %s833, 1
      %s836 = smul.addr %s835, 2
      %s837 = smul.addr %s836, 8
      %s838 = scalar_lea.vmem %s1, %s837
      %s839 = ssub.s32 1, %s35
      %p840 = scmp.lt.s32.totalorder %s35, 1
      %s841 = scalar_select %p840, %s35, 1
      %s842 = smul.addr %s841, 2
      %s843 = smul.addr %s842, 8
      %s844 = scalar_lea.vmem %s2, %s843
      %s845 = ssub.s32 1, %s35
      %p846 = scmp.lt.s32.totalorder %s845, 1
      %s847 = scalar_select %p846, %s845, 1
      %s848 = smul.addr %s847, 2
      %s849 = smul.addr %s848, 8
      %s850 = scalar_lea.vmem %s3, %s849
      %s851 = ssub.s32 1, %s35
      %p852 = scmp.lt.s32.totalorder %s35, 1
      %s853 = scalar_select %p852, %s35, 1
      %s854 = smul.addr %s853, 2
      %s855 = scalar_lea.vmem %s4, %s854
      %s856 = ssub.s32 1, %s35
      %p857 = scmp.lt.s32.totalorder %s856, 1
      %s858 = scalar_select %p857, %s856, 1
      %s859 = smul.addr %s858, 2
      %s860 = scalar_lea.vmem %s5, %s859
      %s861 = ssub.s32 1, %s35
      %p862 = scmp.lt.s32.totalorder %s35, 1
      %s863 = scalar_select %p862, %s35, 1
      %s864 = smul.addr %s863, 2
      %s865 = smul.addr %s864, 8
      %s866 = scalar_lea.vmem %s6, %s865
      %p867 = scmp.lt.s32.totalorder %s35, 1
      %s868 = scalar_select %p867, %s35, 1
      %s869 = smul.addr %s868, 2
      %s870 = scalar_lea.vmem %s24, %s869
      %v871 = vld [vmem:[%s832] sm:$0xff]
      %v872 = vld [vmem:[%s832 + $0x8] sm:$0xff]
      %v873 = vld [vmem:[%s838] sm:$0xff]
      %v874 = vld [vmem:[%s838 + $0x8] sm:$0xff]
      %v875 = vld [vmem:[%s844] sm:$0xff]
      %v876 = vld [vmem:[%s844 + $0x8] sm:$0xff]
      %v877 = vld [vmem:[%s850] sm:$0xff]
      %v878 = vld [vmem:[%s850 + $0x8] sm:$0xff]
      %v879 = vld [vmem:[%s855] sm:$0x1]
      %v880 = vld [vmem:[%s855 + $0x1] sm:$0x1]
      %v881 = vld [vmem:[%s860] sm:$0x1]
      %v882 = vld [vmem:[%s860 + $0x1] sm:$0x1]
      %v883 = vld [vmem:[%s866] sm:$0xff]
      %v884 = vld [vmem:[%s866 + $0x8] sm:$0xff]
      %v885 = vld [vmem:[%s7] sm:$0xff]
      %v886 = vld [vmem:[%s7 + $0x8] sm:$0xff]
      %v887 = vld [vmem:[%s7 + $0x10] sm:$0xff]
      %v888 = vld [vmem:[%s7 + $0x18] sm:$0xff]
      %v889 = vld [vmem:[%s7 + $0x20] sm:$0xff]
      %v890 = vld [vmem:[%s7 + $0x28] sm:$0xff]
      %v891 = vld [vmem:[%s7 + $0x30] sm:$0xff]
      %v892 = vld [vmem:[%s7 + $0x38] sm:$0xff]
      %v893 = vld [vmem:[%s7 + $0x40] sm:$0xff]
      %v894 = vld [vmem:[%s7 + $0x48] sm:$0xff]
      %v895 = vld [vmem:[%s7 + $0x50] sm:$0xff]
      %v896 = vld [vmem:[%s7 + $0x58] sm:$0xff]
      %v897 = vld [vmem:[%s7 + $0x60] sm:$0xff]
      %v898 = vld [vmem:[%s7 + $0x68] sm:$0xff]
      %v899 = vld [vmem:[%s7 + $0x70] sm:$0xff]
      %v900 = vld [vmem:[%s7 + $0x78] sm:$0xff]
      %v901 = vld [vmem:[%s8] sm:$0xff]
      %v902 = vld [vmem:[%s8 + $0x8] sm:$0xff]
      %v903 = vld [vmem:[%s8 + $0x10] sm:$0xff]
      %v904 = vld [vmem:[%s8 + $0x18] sm:$0xff]
      %v905 = vld [vmem:[%s8 + $0x20] sm:$0xff]
      %v906 = vld [vmem:[%s8 + $0x28] sm:$0xff]
      %v907 = vld [vmem:[%s8 + $0x30] sm:$0xff]
      %v908 = vld [vmem:[%s8 + $0x38] sm:$0xff]
      %v909 = vld [vmem:[%s8 + $0x40] sm:$0xff]
      %v910 = vld [vmem:[%s8 + $0x48] sm:$0xff]
      %v911 = vld [vmem:[%s8 + $0x50] sm:$0xff]
      %v912 = vld [vmem:[%s8 + $0x58] sm:$0xff]
      %v913 = vld [vmem:[%s8 + $0x60] sm:$0xff]
      %v914 = vld [vmem:[%s8 + $0x68] sm:$0xff]
      %v915 = vld [vmem:[%s8 + $0x70] sm:$0xff]
      %v916 = vld [vmem:[%s8 + $0x78] sm:$0xff]
      %v917 = vld [vmem:[%s9] sm:$0x1]
      %v918 = vlaneseq
      %v919 = vand.u32 %v918, 127
      %920 = vset.pattern.permute.xlu0 0
      %921 = vperm.xlu0 %920, %v871
      %v922 = vpop.permute.xlu0 %921
      %923 = vset.pattern.permute.xlu0 0
      %924 = vperm.xlu0 %923, %v872
      %v925 = vpop.permute.xlu0 %924
      %vm926 = vcmp.eq.s32.totalorder %v922, %v919
      %vm927 = vcmp.eq.s32.totalorder %v925, %v919
      %v928 = vsel %vm926, 1, 0
      %v929 = vsel %vm927, 1, 0
      %v930 = vcvt.s32.f32 %v928
      %v931 = vcvt.s32.f32 %v929
      %932 = vmatprep.subr.mxu0 0.0
      %933 = vmatpush1.msra.mxu0 %v885
      %934 = vmatprep.subr.mxu0 0.0
      %935 = vmatpush1.msra.mxu0 %v886
      %936 = vmatprep.subr.mxu0 0.0
      %937 = vmatpush1.msra.mxu0 %v887
      %938 = vmatprep.subr.mxu0 0.0
      %939 = vmatpush1.msra.mxu0 %v888
      %940 = vmatprep.subr.mxu0 0.0
      %941 = vmatpush1.msra.mxu0 %v889
      %942 = vmatprep.subr.mxu0 0.0
      %943 = vmatpush1.msra.mxu0 %v890
      %944 = vmatprep.subr.mxu0 0.0
      %945 = vmatpush1.msra.mxu0 %v891
      %946 = vmatprep.subr.mxu0 0.0
      %947 = vmatpush1.msra.mxu0 %v892
      %948 = vmatprep.subr.mxu0 0.0
      %949 = vmatpush1.msra.mxu0 %v893
      %950 = vmatprep.subr.mxu0 0.0
      %951 = vmatpush1.msra.mxu0 %v894
      %952 = vmatprep.subr.mxu0 0.0
      %953 = vmatpush1.msra.mxu0 %v895
      %954 = vmatprep.subr.mxu0 0.0
      %955 = vmatpush1.msra.mxu0 %v896
      %956 = vmatprep.subr.mxu0 0.0
      %957 = vmatpush1.msra.mxu0 %v897
      %958 = vmatprep.subr.mxu0 0.0
      %959 = vmatpush1.msra.mxu0 %v898
      %960 = vmatprep.subr.mxu0 0.0
      %961 = vmatpush1.msra.mxu0 %v899
      %962 = vmatprep.subr.mxu0 0.0
      %963 = vmatpush1.msra.mxu0 %v900
      %964 = vmatprep.subr.mxu0 0.0
      %965 = vmatpush1.msra.mxu0 0.0
      %966 = vmatprep.subr.mxu0 0.0
      %967 = vmatpush1.msra.mxu0 0.0
      %968 = vmatprep.subr.mxu0 0.0
      %969 = vmatpush1.msra.mxu0 0.0
      %970 = vmatprep.subr.mxu0 0.0
      %971 = vmatpush1.msra.mxu0 0.0
      %972 = vmatprep.subr.mxu0 0.0
      %973 = vmatpush1.msra.mxu0 0.0
      %974 = vmatprep.subr.mxu0 0.0
      %975 = vmatpush1.msra.mxu0 0.0
      %976 = vmatprep.subr.mxu0 0.0
      %977 = vmatpush1.msra.mxu0 0.0
      %978 = vmatprep.subr.mxu0 0.0
      %979 = vmatpush1.msra.mxu0 0.0
      %980 = vmatprep.subr.mxu0 0.0
      %981 = vmatpush1.msra.mxu0 0.0
      %982 = vmatprep.subr.mxu0 0.0
      %983 = vmatpush1.msra.mxu0 0.0
      %984 = vmatprep.subr.mxu0 0.0
      %985 = vmatpush1.msra.mxu0 0.0
      %986 = vmatprep.subr.mxu0 0.0
      %987 = vmatpush1.msra.mxu0 0.0
      %988 = vmatprep.subr.mxu0 0.0
      %989 = vmatpush1.msra.mxu0 0.0
      %990 = vmatprep.subr.mxu0 0.0
      %991 = vmatpush1.msra.mxu0 0.0
      %992 = vmatprep.subr.mxu0 0.0
      %993 = vmatpush1.msra.mxu0 0.0
      %994 = vmatprep.subr.mxu0 0.0
      %995 = vmatpush1.msra.mxu0 0.0
      %996 = vmatprep.mubr.f32.mxu0 0.0
      %997 = vmatmul.mubr.f32.gmra.mrb[0].mxu0 %v930
      %v998 = vpop.f32.mrb[0].mxu0
      %v999 = vadd.f32 0.0, %v998
      %v1000 = vpop.f32.mrb[0].mxu0
      %1001 = vmatprep.mubr.f32.mxu0 0.0
      %1002 = vmatmul.mubr.f32.gmra.mrb[0].mxu0 %v931
      %v1003 = vpop.f32.mrb[0].mxu0
      %v1004 = vadd.f32 0.0, %v1003
      %v1005 = vpop.f32.mrb[0].mxu0
      %1006 = vdwg.mxu0
      %v1008 = vlaneseq
      %v1009 = vshrl.u32 %v1008, 7
      %v1010 = vsub.s32 0, %v1009
      %v1011 = vrot.slane %v917, %v1010
      %1013 = vmatprep.subr.mxu0 0.0
      %1014 = vmatpush1.msra.mxu0 %v901
      %1015 = vmatprep.subr.mxu0 0.0
      %1016 = vmatpush1.msra.mxu0 %v902
      %1017 = vmatprep.subr.mxu0 0.0
      %1018 = vmatpush1.msra.mxu0 %v903
      %1019 = vmatprep.subr.mxu0 0.0
      %1020 = vmatpush1.msra.mxu0 %v904
      %1021 = vmatprep.subr.mxu0 0.0
      %1022 = vmatpush1.msra.mxu0 %v905
      %1023 = vmatprep.subr.mxu0 0.0
      %1024 = vmatpush1.msra.mxu0 %v906
      %1025 = vmatprep.subr.mxu0 0.0
      %1026 = vmatpush1.msra.mxu0 %v907
      %1027 = vmatprep.subr.mxu0 0.0
      %1028 = vmatpush1.msra.mxu0 %v908
      %1029 = vmatprep.subr.mxu0 0.0
      %1030 = vmatpush1.msra.mxu0 %v909
      %1031 = vmatprep.subr.mxu0 0.0
      %1032 = vmatpush1.msra.mxu0 %v910
      %1033 = vmatprep.subr.mxu0 0.0
      %1034 = vmatpush1.msra.mxu0 %v911
      %1035 = vmatprep.subr.mxu0 0.0
      %1036 = vmatpush1.msra.mxu0 %v912
      %1037 = vmatprep.subr.mxu0 0.0
      %1038 = vmatpush1.msra.mxu0 %v913
      %1039 = vmatprep.subr.mxu0 0.0
      %1040 = vmatpush1.msra.mxu0 %v914
      %1041 = vmatprep.subr.mxu0 0.0
      %1042 = vmatpush1.msra.mxu0 %v915
      %1043 = vmatprep.subr.mxu0 0.0
      %1044 = vmatpush1.msra.mxu0 %v916
      %1045 = vmatprep.subr.mxu0 0.0
      %1046 = vmatpush1.msra.mxu0 0.0
      %1047 = vmatprep.subr.mxu0 0.0
      %1048 = vmatpush1.msra.mxu0 0.0
      %1049 = vmatprep.subr.mxu0 0.0
      %1050 = vmatpush1.msra.mxu0 0.0
      %1051 = vmatprep.subr.mxu0 0.0
      %1052 = vmatpush1.msra.mxu0 0.0
      %1053 = vmatprep.subr.mxu0 0.0
      %1054 = vmatpush1.msra.mxu0 0.0
      %1055 = vmatprep.subr.mxu0 0.0
      %1056 = vmatpush1.msra.mxu0 0.0
      %1057 = vmatprep.subr.mxu0 0.0
      %1058 = vmatpush1.msra.mxu0 0.0
      %1059 = vmatprep.subr.mxu0 0.0
      %1060 = vmatpush1.msra.mxu0 0.0
      %1061 = vmatprep.subr.mxu0 0.0
      %1062 = vmatpush1.msra.mxu0 0.0
      %1063 = vmatprep.subr.mxu0 0.0
      %1064 = vmatpush1.msra.mxu0 0.0
      %1065 = vmatprep.subr.mxu0 0.0
      %1066 = vmatpush1.msra.mxu0 0.0
      %1067 = vmatprep.subr.mxu0 0.0
      %1068 = vmatpush1.msra.mxu0 0.0
      %1069 = vmatprep.subr.mxu0 0.0
      %1070 = vmatpush1.msra.mxu0 0.0
      %1071 = vmatprep.subr.mxu0 0.0
      %1072 = vmatpush1.msra.mxu0 0.0
      %1073 = vmatprep.subr.mxu0 0.0
      %1074 = vmatpush1.msra.mxu0 0.0
      %1075 = vmatprep.subr.mxu0 0.0
      %1076 = vmatpush1.msra.mxu0 0.0
      %1077 = vmatprep.mubr.f32.mxu0 0.0
      %1078 = vmatmul.mubr.f32.gmra.mrb[0].mxu0 %v999
      %v1079 = vpop.f32.mrb[0].mxu0
      %v1080 = vadd.f32 %v1011, %v1079
      %v1081 = vpop.f32.mrb[0].mxu0
      %1082 = vmatprep.mubr.f32.mxu0 0.0
      %1083 = vmatmul.mubr.f32.gmra.mrb[0].mxu0 %v1004
      %v1084 = vpop.f32.mrb[0].mxu0
      %v1085 = vadd.f32 %v1011, %v1084
      %v1086 = vpop.f32.mrb[0].mxu0
      %1087 = vdwg.mxu0
      %v1088 = vmax.f32 %v1080, 0.0
      %v1089 = vmax.f32 %v1085, 0.0
      %1090 = vset.pattern.permute.xlu0 0
      %1091 = vperm.xlu0 %1090, %v873
      %v1092 = vpop.permute.xlu0 %1091
      %1093 = vset.pattern.permute.xlu0 0
      %1094 = vperm.xlu0 %1093, %v874
      %v1095 = vpop.permute.xlu0 %1094
      %vm1096 = vcmp.eq.s32.totalorder %v1092, %v919
      %vm1097 = vcmp.eq.s32.totalorder %v1095, %v919
      %v1098 = vsel %vm1096, 1, 0
      %v1099 = vsel %vm1097, 1, 0
      %v1100 = vcvt.s32.f32 %v1098
      %v1101 = vcvt.s32.f32 %v1099
      %1102 = vmatprep.subr.mxu0 0.0
      %1103 = vmatpush1.msra.mxu0 %v885
      %1104 = vmatprep.subr.mxu0 0.0
      %1105 = vmatpush1.msra.mxu0 %v886
      %1106 = vmatprep.subr.mxu0 0.0
      %1107 = vmatpush1.msra.mxu0 %v887
      %1108 = vmatprep.subr.mxu0 0.0
      %1109 = vmatpush1.msra.mxu0 %v888
      %1110 = vmatprep.subr.mxu0 0.0
      %1111 = vmatpush1.msra.mxu0 %v889
      %1112 = vmatprep.subr.mxu0 0.0
      %1113 = vmatpush1.msra.mxu0 %v890
      %1114 = vmatprep.subr.mxu0 0.0
      %1115 = vmatpush1.msra.mxu0 %v891
      %1116 = vmatprep.subr.mxu0 0.0
      %1117 = vmatpush1.msra.mxu0 %v892
      %1118 = vmatprep.subr.mxu0 0.0
      %1119 = vmatpush1.msra.mxu0 %v893
      %1120 = vmatprep.subr.mxu0 0.0
      %1121 = vmatpush1.msra.mxu0 %v894
      %1122 = vmatprep.subr.mxu0 0.0
      %1123 = vmatpush1.msra.mxu0 %v895
      %1124 = vmatprep.subr.mxu0 0.0
      %1125 = vmatpush1.msra.mxu0 %v896
      %1126 = vmatprep.subr.mxu0 0.0
      %1127 = vmatpush1.msra.mxu0 %v897
      %1128 = vmatprep.subr.mxu0 0.0
      %1129 = vmatpush1.msra.mxu0 %v898
      %1130 = vmatprep.subr.mxu0 0.0
      %1131 = vmatpush1.msra.mxu0 %v899
      %1132 = vmatprep.subr.mxu0 0.0
      %1133 = vmatpush1.msra.mxu0 %v900
      %1134 = vmatprep.subr.mxu0 0.0
      %1135 = vmatpush1.msra.mxu0 0.0
      %1136 = vmatprep.subr.mxu0 0.0
      %1137 = vmatpush1.msra.mxu0 0.0
      %1138 = vmatprep.subr.mxu0 0.0
      %1139 = vmatpush1.msra.mxu0 0.0
      %1140 = vmatprep.subr.mxu0 0.0
      %1141 = vmatpush1.msra.mxu0 0.0
      %1142 = vmatprep.subr.mxu0 0.0
      %1143 = vmatpush1.msra.mxu0 0.0
      %1144 = vmatprep.subr.mxu0 0.0
      %1145 = vmatpush1.msra.mxu0 0.0
      %1146 = vmatprep.subr.mxu0 0.0
      %1147 = vmatpush1.msra.mxu0 0.0
      %1148 = vmatprep.subr.mxu0 0.0
      %1149 = vmatpush1.msra.mxu0 0.0
      %1150 = vmatprep.subr.mxu0 0.0
      %1151 = vmatpush1.msra.mxu0 0.0
      %1152 = vmatprep.subr.mxu0 0.0
      %1153 = vmatpush1.msra.mxu0 0.0
      %1154 = vmatprep.subr.mxu0 0.0
      %1155 = vmatpush1.msra.mxu0 0.0
      %1156 = vmatprep.subr.mxu0 0.0
      %1157 = vmatpush1.msra.mxu0 0.0
      %1158 = vmatprep.subr.mxu0 0.0
      %1159 = vmatpush1.msra.mxu0 0.0
      %1160 = vmatprep.subr.mxu0 0.0
      %1161 = vmatpush1.msra.mxu0 0.0
      %1162 = vmatprep.subr.mxu0 0.0
      %1163 = vmatpush1.msra.mxu0 0.0
      %1164 = vmatprep.subr.mxu0 0.0
      %1165 = vmatpush1.msra.mxu0 0.0
      %1166 = vmatprep.mubr.f32.mxu0 0.0
      %1167 = vmatmul.mubr.f32.gmra.mrb[0].mxu0 %v1100
      %v1168 = vpop.f32.mrb[0].mxu0
      %v1169 = vadd.f32 0.0, %v1168
      %v1170 = vpop.f32.mrb[0].mxu0
      %1171 = vmatprep.mubr.f32.mxu0 0.0
      %1172 = vmatmul.mubr.f32.gmra.mrb[0].mxu0 %v1101
      %v1173 = vpop.f32.mrb[0].mxu0
      %v1174 = vadd.f32 0.0, %v1173
      %v1175 = vpop.f32.mrb[0].mxu0
      %1176 = vdwg.mxu0
      %1177 = vmatprep.subr.mxu0 0.0
      %1178 = vmatpush1.msra.mxu0 %v901
      %1179 = vmatprep.subr.mxu0 0.0
      %1180 = vmatpush1.msra.mxu0 %v902
      %1181 = vmatprep.subr.mxu0 0.0
      %1182 = vmatpush1.msra.mxu0 %v903
      %1183 = vmatprep.subr.mxu0 0.0
      %1184 = vmatpush1.msra.mxu0 %v904
      %1185 = vmatprep.subr.mxu0 0.0
      %1186 = vmatpush1.msra.mxu0 %v905
      %1187 = vmatprep.subr.mxu0 0.0
      %1188 = vmatpush1.msra.mxu0 %v906
      %1189 = vmatprep.subr.mxu0 0.0
      %1190 = vmatpush1.msra.mxu0 %v907
      %1191 = vmatprep.subr.mxu0 0.0
      %1192 = vmatpush1.msra.mxu0 %v908
      %1193 = vmatprep.subr.mxu0 0.0
      %1194 = vmatpush1.msra.mxu0 %v909
      %1195 = vmatprep.subr.mxu0 0.0
      %1196 = vmatpush1.msra.mxu0 %v910
      %1197 = vmatprep.subr.mxu0 0.0
      %1198 = vmatpush1.msra.mxu0 %v911
      %1199 = vmatprep.subr.mxu0 0.0
      %1200 = vmatpush1.msra.mxu0 %v912
      %1201 = vmatprep.subr.mxu0 0.0
      %1202 = vmatpush1.msra.mxu0 %v913
      %1203 = vmatprep.subr.mxu0 0.0
      %1204 = vmatpush1.msra.mxu0 %v914
      %1205 = vmatprep.subr.mxu0 0.0
      %1206 = vmatpush1.msra.mxu0 %v915
      %1207 = vmatprep.subr.mxu0 0.0
      %1208 = vmatpush1.msra.mxu0 %v916
      %1209 = vmatprep.subr.mxu0 0.0
      %1210 = vmatpush1.msra.mxu0 0.0
      %1211 = vmatprep.subr.mxu0 0.0
      %1212 = vmatpush1.msra.mxu0 0.0
      %1213 = vmatprep.subr.mxu0 0.0
      %1214 = vmatpush1.msra.mxu0 0.0
      %1215 = vmatprep.subr.mxu0 0.0
      %1216 = vmatpush1.msra.mxu0 0.0
      %1217 = vmatprep.subr.mxu0 0.0
      %1218 = vmatpush1.msra.mxu0 0.0
      %1219 = vmatprep.subr.mxu0 0.0
      %1220 = vmatpush1.msra.mxu0 0.0
      %1221 = vmatprep.subr.mxu0 0.0
      %1222 = vmatpush1.msra.mxu0 0.0
      %1223 = vmatprep.subr.mxu0 0.0
      %1224 = vmatpush1.msra.mxu0 0.0
      %1225 = vmatprep.subr.mxu0 0.0
      %1226 = vmatpush1.msra.mxu0 0.0
      %1227 = vmatprep.subr.mxu0 0.0
      %1228 = vmatpush1.msra.mxu0 0.0
      %1229 = vmatprep.subr.mxu0 0.0
      %1230 = vmatpush1.msra.mxu0 0.0
      %1231 = vmatprep.subr.mxu0 0.0
      %1232 = vmatpush1.msra.mxu0 0.0
      %1233 = vmatprep.subr.mxu0 0.0
      %1234 = vmatpush1.msra.mxu0 0.0
      %1235 = vmatprep.subr.mxu0 0.0
      %1236 = vmatpush1.msra.mxu0 0.0
      %1237 = vmatprep.subr.mxu0 0.0
      %1238 = vmatpush1.msra.mxu0 0.0
      %1239 = vmatprep.subr.mxu0 0.0
      %1240 = vmatpush1.msra.mxu0 0.0
      %1241 = vmatprep.mubr.f32.mxu0 0.0
      %1242 = vmatmul.mubr.f32.gmra.mrb[0].mxu0 %v1169
      %v1243 = vpop.f32.mrb[0].mxu0
      %v1244 = vadd.f32 %v1011, %v1243
      %v1245 = vpop.f32.mrb[0].mxu0
      %1246 = vmatprep.mubr.f32.mxu0 0.0
      %1247 = vmatmul.mubr.f32.gmra.mrb[0].mxu0 %v1174
      %v1248 = vpop.f32.mrb[0].mxu0
      %v1249 = vadd.f32 %v1011, %v1248
      %v1250 = vpop.f32.mrb[0].mxu0
      %1251 = vdwg.mxu0
      %v1252 = vmax.f32 %v1244, 0.0
      %v1253 = vmax.f32 %v1249, 0.0
      %1255 = vset.pattern.permute.xlu0 0
      %1256 = vperm.xlu0 %1255, %v875
      %v1257 = vpop.permute.xlu0 %1256
      %1260 = vset.pattern.permute.xlu0 0
      %1261 = vperm.xlu0 %1260, %v876
      %v1262 = vpop.permute.xlu0 %1261
      %v1264 = vmul.f32 %v1088, %v1257
      %v1265 = vmul.f32 %v1089, %v1262
      %1267 = vset.pattern.permute.xlu0 0
      %1268 = vperm.xlu0 %1267, %v877
      %v1269 = vpop.permute.xlu0 %1268
      %1272 = vset.pattern.permute.xlu0 0
      %1273 = vperm.xlu0 %1272, %v878
      %v1274 = vpop.permute.xlu0 %1273
      %v1276 = vmul.f32 %v1252, %v1269
      %v1277 = vmul.f32 %v1253, %v1274
      %vm1278 = vcmask 7168
      %v1279 = vsel %vm1278, %v877, 0.0
      %v1280 = vrot.slane %v1279, 4
      %v1281 = vadd.f32 %v1279, %v1280
      %v1282 = vrot.slane %v1281, 2
      %v1283 = vadd.f32 %v1281, %v1282
      %v1284 = vrot.slane %v1283, 1
      %v1285 = vadd.f32 %v1283, %v1284
      %v1286 = vsel %vm1278, %v878, 0.0
      %v1287 = vrot.slane %v1286, 4
      %v1288 = vadd.f32 %v1286, %v1287
      %v1289 = vrot.slane %v1288, 2
      %v1290 = vadd.f32 %v1288, %v1289
      %v1291 = vrot.slane %v1290, 1
      %v1292 = vadd.f32 %v1290, %v1291
      %v1293 = vmax.f32 %v1285, 1.0
      %v1294 = vmax.f32 %v1292, 1.0
      %vm1295 = vcmp.gt.f32.partialorder %v1285, 0.0
      %vm1296 = vcmp.gt.f32.partialorder %v1292, 0.0
      %v1297 = vmul.f32 %v1264, %v1264
      %v1298 = vmul.f32 %v1265, %v1265
      %1299 = vadd.xlane.f32.xlu0 %v1297
      %v1300 = vpop.xlane.xlu0 %1299
      %1301 = vadd.xlane.f32.xlu0 %v1298
      %v1302 = vpop.xlane.xlu0 %1301
      %v1303 = vrsqrt.pop %v1300
      %v1304 = vmul.f32 %v1300, %v1303
      %vm1305 = vcmp.eq.f32.partialorder %v1300, inf
      %v1306 = vsel %vm1305, %v1300, %v1304
      %vm1307 = vcmp.eq.f32.partialorder %v1300, 0.0
      %v1308 = vand.u32 %v1300, 2147483648
      %v1309 = vsel %vm1307, %v1308, %v1306
      %v1310 = vrsqrt.pop %v1302
      %v1311 = vmul.f32 %v1302, %v1310
      %vm1312 = vcmp.eq.f32.partialorder %v1302, inf
      %v1313 = vsel %vm1312, %v1302, %v1311
      %vm1314 = vcmp.eq.f32.partialorder %v1302, 0.0
      %v1315 = vand.u32 %v1302, 2147483648
      %v1316 = vsel %vm1314, %v1315, %v1313
      %v1317 = vmax.f32 %v1309, 1e-08
      %v1318 = vmax.f32 %v1316, 1e-08
      %v1319 = vrcp.pop %v1317
      %v1320 = vmul.f32 %v1264, %v1319
      %v1321 = vrcp.pop %v1318
      %v1322 = vmul.f32 %v1265, %v1321
      %v1323 = vmul.f32 %v1276, %v1276
      %v1324 = vmul.f32 %v1277, %v1277
      %1325 = vadd.xlane.f32.xlu0 %v1323
      %v1326 = vpop.xlane.xlu0 %1325
      %1327 = vadd.xlane.f32.xlu0 %v1324
      %v1328 = vpop.xlane.xlu0 %1327
      %v1329 = vrsqrt.pop %v1326
      %v1330 = vmul.f32 %v1326, %v1329
      %vm1331 = vcmp.eq.f32.partialorder %v1326, inf
      %v1332 = vsel %vm1331, %v1326, %v1330
      %vm1333 = vcmp.eq.f32.partialorder %v1326, 0.0
      %v1334 = vand.u32 %v1326, 2147483648
      %v1335 = vsel %vm1333, %v1334, %v1332
      %v1336 = vrsqrt.pop %v1328
      %v1337 = vmul.f32 %v1328, %v1336
      %vm1338 = vcmp.eq.f32.partialorder %v1328, inf
      %v1339 = vsel %vm1338, %v1328, %v1337
      %vm1340 = vcmp.eq.f32.partialorder %v1328, 0.0
      %v1341 = vand.u32 %v1328, 2147483648
      %v1342 = vsel %vm1340, %v1341, %v1339
      %v1343 = vmax.f32 %v1335, 1e-08
      %v1344 = vmax.f32 %v1342, 1e-08
      %v1345 = vrcp.pop %v1343
      %v1346 = vmul.f32 %v1276, %v1345
      %v1347 = vrcp.pop %v1344
      %v1348 = vmul.f32 %v1277, %v1347
      %1349 = vmatprep.subr.mxu0 0.0
      %1350 = vmatpush1.xpose.msra.mxu0 %v1346
      %1351 = vmatprep.subr.mxu0 0.0
      %1352 = vmatpush1.xpose.msra.mxu0 0.0
      %1353 = vmatprep.subr.mxu0 0.0
      %1354 = vmatpush1.xpose.msra.mxu0 0.0
      %1355 = vmatprep.subr.mxu0 0.0
      %1356 = vmatpush1.xpose.msra.mxu0 0.0
      %1357 = vmatprep.subr.mxu0 0.0
      %1358 = vmatpush1.xpose.msra.mxu0 0.0
      %1359 = vmatprep.subr.mxu0 0.0
      %1360 = vmatpush1.xpose.msra.mxu0 0.0
      %1361 = vmatprep.subr.mxu0 0.0
      %1362 = vmatpush1.xpose.msra.mxu0 0.0
      %1363 = vmatprep.subr.mxu0 0.0
      %1364 = vmatpush1.xpose.msra.mxu0 0.0
      %1365 = vmatprep.subr.mxu0 0.0
      %1366 = vmatpush1.xpose.msra.mxu0 0.0
      %1367 = vmatprep.subr.mxu0 0.0
      %1368 = vmatpush1.xpose.msra.mxu0 0.0
      %1369 = vmatprep.subr.mxu0 0.0
      %1370 = vmatpush1.xpose.msra.mxu0 0.0
      %1371 = vmatprep.subr.mxu0 0.0
      %1372 = vmatpush1.xpose.msra.mxu0 0.0
      %1373 = vmatprep.subr.mxu0 0.0
      %1374 = vmatpush1.xpose.msra.mxu0 0.0
      %1375 = vmatprep.subr.mxu0 0.0
      %1376 = vmatpush1.xpose.msra.mxu0 0.0
      %1377 = vmatprep.subr.mxu0 0.0
      %1378 = vmatpush1.xpose.msra.mxu0 0.0
      %1379 = vmatprep.subr.mxu0 0.0
      %1380 = vmatpush1.xpose.msra.mxu0 0.0
      %1381 = vmatprep.subr.mxu0 0.0
      %1382 = vmatpush1.xpose.msra.mxu0 0.0
      %1383 = vmatprep.subr.mxu0 0.0
      %1384 = vmatpush1.xpose.msra.mxu0 0.0
      %1385 = vmatprep.subr.mxu0 0.0
      %1386 = vmatpush1.xpose.msra.mxu0 0.0
      %1387 = vmatprep.subr.mxu0 0.0
      %1388 = vmatpush1.xpose.msra.mxu0 0.0
      %1389 = vmatprep.subr.mxu0 0.0
      %1390 = vmatpush1.xpose.msra.mxu0 0.0
      %1391 = vmatprep.subr.mxu0 0.0
      %1392 = vmatpush1.xpose.msra.mxu0 0.0
      %1393 = vmatprep.subr.mxu0 0.0
      %1394 = vmatpush1.xpose.msra.mxu0 0.0
      %1395 = vmatprep.subr.mxu0 0.0
      %1396 = vmatpush1.xpose.msra.mxu0 0.0
      %1397 = vmatprep.subr.mxu0 0.0
      %1398 = vmatpush1.xpose.msra.mxu0 0.0
      %1399 = vmatprep.subr.mxu0 0.0
      %1400 = vmatpush1.xpose.msra.mxu0 0.0
      %1401 = vmatprep.subr.mxu0 0.0
      %1402 = vmatpush1.xpose.msra.mxu0 0.0
      %1403 = vmatprep.subr.mxu0 0.0
      %1404 = vmatpush1.xpose.msra.mxu0 0.0
      %1405 = vmatprep.subr.mxu0 0.0
      %1406 = vmatpush1.xpose.msra.mxu0 0.0
      %1407 = vmatprep.subr.mxu0 0.0
      %1408 = vmatpush1.xpose.msra.mxu0 0.0
      %1409 = vmatprep.subr.mxu0 0.0
      %1410 = vmatpush1.xpose.msra.mxu0 0.0
      %1411 = vmatprep.subr.mxu0 0.0
      %1412 = vmatpush1.xpose.msra.mxu0 0.0
      %1413 = vmatprep.mubr.f32.mxu0 0.0
      %1414 = vmatmul.mubr.f32.gmra.mrb[0].mxu0 %v1320
      %v1415 = vpop.f32.mrb[0].mxu0
      %v1416 = vadd.f32 0.0, %v1415
      %v1417 = vpop.f32.mrb[0].mxu0
      %1418 = vdwg.mxu0
      %1419 = vmatprep.subr.mxu0 0.0
      %1420 = vmatpush1.xpose.msra.mxu0 %v1348
      %1421 = vmatprep.subr.mxu0 0.0
      %1422 = vmatpush1.xpose.msra.mxu0 0.0
      %1423 = vmatprep.subr.mxu0 0.0
      %1424 = vmatpush1.xpose.msra.mxu0 0.0
      %1425 = vmatprep.subr.mxu0 0.0
      %1426 = vmatpush1.xpose.msra.mxu0 0.0
      %1427 = vmatprep.subr.mxu0 0.0
      %1428 = vmatpush1.xpose.msra.mxu0 0.0
      %1429 = vmatprep.subr.mxu0 0.0
      %1430 = vmatpush1.xpose.msra.mxu0 0.0
      %1431 = vmatprep.subr.mxu0 0.0
      %1432 = vmatpush1.xpose.msra.mxu0 0.0
      %1433 = vmatprep.subr.mxu0 0.0
      %1434 = vmatpush1.xpose.msra.mxu0 0.0
      %1435 = vmatprep.subr.mxu0 0.0
      %1436 = vmatpush1.xpose.msra.mxu0 0.0
      %1437 = vmatprep.subr.mxu0 0.0
      %1438 = vmatpush1.xpose.msra.mxu0 0.0
      %1439 = vmatprep.subr.mxu0 0.0
      %1440 = vmatpush1.xpose.msra.mxu0 0.0
      %1441 = vmatprep.subr.mxu0 0.0
      %1442 = vmatpush1.xpose.msra.mxu0 0.0
      %1443 = vmatprep.subr.mxu0 0.0
      %1444 = vmatpush1.xpose.msra.mxu0 0.0
      %1445 = vmatprep.subr.mxu0 0.0
      %1446 = vmatpush1.xpose.msra.mxu0 0.0
      %1447 = vmatprep.subr.mxu0 0.0
      %1448 = vmatpush1.xpose.msra.mxu0 0.0
      %1449 = vmatprep.subr.mxu0 0.0
      %1450 = vmatpush1.xpose.msra.mxu0 0.0
      %1451 = vmatprep.subr.mxu0 0.0
      %1452 = vmatpush1.xpose.msra.mxu0 0.0
      %1453 = vmatprep.subr.mxu0 0.0
      %1454 = vmatpush1.xpose.msra.mxu0 0.0
      %1455 = vmatprep.subr.mxu0 0.0
      %1456 = vmatpush1.xpose.msra.mxu0 0.0
      %1457 = vmatprep.subr.mxu0 0.0
      %1458 = vmatpush1.xpose.msra.mxu0 0.0
      %1459 = vmatprep.subr.mxu0 0.0
      %1460 = vmatpush1.xpose.msra.mxu0 0.0
      %1461 = vmatprep.subr.mxu0 0.0
      %1462 = vmatpush1.xpose.msra.mxu0 0.0
      %1463 = vmatprep.subr.mxu0 0.0
      %1464 = vmatpush1.xpose.msra.mxu0 0.0
      %1465 = vmatprep.subr.mxu0 0.0
      %1466 = vmatpush1.xpose.msra.mxu0 0.0
      %1467 = vmatprep.subr.mxu0 0.0
      %1468 = vmatpush1.xpose.msra.mxu0 0.0
      %1469 = vmatprep.subr.mxu0 0.0
      %1470 = vmatpush1.xpose.msra.mxu0 0.0
      %1471 = vmatprep.subr.mxu0 0.0
      %1472 = vmatpush1.xpose.msra.mxu0 0.0
      %1473 = vmatprep.subr.mxu0 0.0
      %1474 = vmatpush1.xpose.msra.mxu0 0.0
      %1475 = vmatprep.subr.mxu0 0.0
      %1476 = vmatpush1.xpose.msra.mxu0 0.0
      %1477 = vmatprep.subr.mxu0 0.0
      %1478 = vmatpush1.xpose.msra.mxu0 0.0
      %1479 = vmatprep.subr.mxu0 0.0
      %1480 = vmatpush1.xpose.msra.mxu0 0.0
      %1481 = vmatprep.subr.mxu0 0.0
      %1482 = vmatpush1.xpose.msra.mxu0 0.0
      %1483 = vmatprep.mubr.f32.mxu0 0.0
      %1484 = vmatmul.mubr.f32.gmra.mrb[0].mxu0 %v1322
      %v1485 = vpop.f32.mrb[0].mxu0
      %v1486 = vadd.f32 0.0, %v1485
      %v1487 = vpop.f32.mrb[0].mxu0
      %1488 = vdwg.mxu0
      %vm1489 = vcmp.gt.f32.partialorder %v881, 0.0
      %vm1490 = vcmp.gt.f32.partialorder %v882, 0.0
      %v1491 = vsel %vm1489, 1, 0
      %v1492 = vsel %vm1490, 1, 0
      %v1493 = vlaneseq
      %v1494 = vshrl.u32 %v1493, 7
      %v1495 = vsub.s32 0, %v1494
      %v1496 = vrot.slane %v1491, %v1495
      %v1497 = vlaneseq
      %v1498 = vshrl.u32 %v1497, 7
      %v1499 = vsub.s32 0, %v1498
      %v1500 = vrot.slane %v1492, %v1499
      %vm1501 = vcmp.eq.s32.totalorder %v1496, 1
      %vm1502 = vcmp.eq.s32.totalorder %v1500, 1
      %v1503 = vsel %vm1501, %v1416, -1e+30
      %v1504 = vsel %vm1502, %v1486, -1e+30
      %vm1505 = vcmask 64512
      %v1506 = vsel %vm1505, %v1503, -inf
      %1507 = vmax.xlane.f32.xlu0 %v1506
      %v1508 = vpop.xlane.xlu0 %1507
      %v1509 = vsel %vm1505, %v1504, -inf
      %1510 = vmax.xlane.f32.xlu0 %v1509
      %v1511 = vpop.xlane.xlu0 %1510
      %v1512 = vsel %vm1295, 1, 0
      %v1513 = vsel %vm1296, 1, 0
      %vm1514 = vcmp.eq.s32.totalorder %v1512, 1
      %vm1515 = vcmp.eq.s32.totalorder %v1513, 1
      %v1516 = vsel %vm1514, %v1508, 0.0
      %v1517 = vsel %vm1515, %v1511, 0.0
      %v1520 = vlaneseq
      %v1521 = vshrl.u32 %v1520, 7
      %v1522 = vsub.s32 0, %v1521
      %v1523 = vrot.slane %v881, %v1522
      %v1524 = vlaneseq
      %v1525 = vshrl.u32 %v1524, 7
      %v1526 = vsub.s32 0, %v1525
      %v1527 = vrot.slane %v882, %v1526
      %v1530 = vmul.f32 %v1416, %v1523
      %v1531 = vmul.f32 %v1486, %v1527
      %v1532 = vsel %vm1505, %v1530, 0.0
      %1533 = vadd.xlane.f32.xlu0 %v1532
      %v1534 = vpop.xlane.xlu0 %1533
      %v1535 = vsel %vm1505, %v1531, 0.0
      %1536 = vadd.xlane.f32.xlu0 %v1535
      %v1537 = vpop.xlane.xlu0 %1536
      %v1538 = vrcp.pop %v1293
      %v1539 = vmul.f32 %v1534, %v1538
      %v1540 = vrcp.pop %v1294
      %v1541 = vmul.f32 %v1537, %v1540
      %v1542 = vld [vmem:[%s10] sm:$0xf]
      %v1545 = vunpack.c.l.s4 1966171168
      %v1546 = vunpack.c.0.s8 %v1545
      %v1547 = vlaneseq
      %v1548 = vshrl.u32 %v1547, 7
      %v1549 = vsub.s32 %v1546, %v1548
      %v1550 = vrot.slane %v1542, %v1549
      %v1551 = vcombine.high %v1550, %v1550
      %v1553 = vunpack.c.l.s4 1966171168
      %v1554 = vunpack.c.0.s8 %v1553
      %v1555 = vlaneseq
      %v1556 = vshrl.u32 %v1555, 7
      %v1557 = vsub.s32 %v1554, %v1556
      %v1558 = vrot.slane %v1550, %v1557
      %v1560 = vunpack.c.l.s4 1966171168
      %v1561 = vunpack.c.0.s8 %v1560
      %v1562 = vlaneseq
      %v1563 = vshrl.u32 %v1562, 7
      %v1564 = vsub.s32 %v1561, %v1563
      %v1565 = vrot.slane %v1551, %v1564
      %v1566 = vcombine.high %v1558, %v1558
      %v1567 = vcombine.high %v1565, %v1565
      %v1568 = vlaneseq
      %v1569 = vshrl.u32 %v1568, 7
      %v1570 = vsub.s32 0, %v1569
      %v1571 = vrot.slane %v1558, %v1570
      %v1572 = vlaneseq
      %v1573 = vshrl.u32 %v1572, 7
      %v1574 = vsub.s32 0, %v1573
      %v1575 = vrot.slane %v1565, %v1574
      %v1576 = vlaneseq
      %v1577 = vshrl.u32 %v1576, 7
      %v1578 = vsub.s32 0, %v1577
      %v1579 = vrot.slane %v1566, %v1578
      %v1580 = vlaneseq
      %v1581 = vshrl.u32 %v1580, 7
      %v1582 = vsub.s32 0, %v1581
      %v1583 = vrot.slane %v1567, %v1582
      %v1588 = vmul.f32 %v1264, %v1571
      %v1589 = vmul.f32 %v1264, %v1575
      %v1590 = vmul.f32 %v1264, %v1579
      %v1591 = vmul.f32 %v1264, %v1583
      %v1592 = vmul.f32 %v1265, %v1571
      %v1593 = vmul.f32 %v1265, %v1575
      %v1594 = vmul.f32 %v1265, %v1579
      %v1595 = vmul.f32 %v1265, %v1583
      %v1596 = vmul.f32 %v1588, %v1588
      %v1597 = vmul.f32 %v1589, %v1589
      %v1598 = vmul.f32 %v1590, %v1590
      %v1599 = vmul.f32 %v1591, %v1591
      %v1600 = vmul.f32 %v1592, %v1592
      %v1601 = vmul.f32 %v1593, %v1593
      %v1602 = vmul.f32 %v1594, %v1594
      %v1603 = vmul.f32 %v1595, %v1595
      %1604 = vadd.xlane.f32.xlu0 %v1596
      %v1605 = vpop.xlane.xlu0 %1604
      %1606 = vadd.xlane.f32.xlu0 %v1597
      %v1607 = vpop.xlane.xlu0 %1606
      %1608 = vadd.xlane.f32.xlu0 %v1598
      %v1609 = vpop.xlane.xlu0 %1608
      %1610 = vadd.xlane.f32.xlu0 %v1599
      %v1611 = vpop.xlane.xlu0 %1610
      %1612 = vadd.xlane.f32.xlu0 %v1600
      %v1613 = vpop.xlane.xlu0 %1612
      %1614 = vadd.xlane.f32.xlu0 %v1601
      %v1615 = vpop.xlane.xlu0 %1614
      %1616 = vadd.xlane.f32.xlu0 %v1602
      %v1617 = vpop.xlane.xlu0 %1616
      %1618 = vadd.xlane.f32.xlu0 %v1603
      %v1619 = vpop.xlane.xlu0 %1618
      %v1620 = vrsqrt.pop %v1605
      %v1621 = vmul.f32 %v1605, %v1620
      %vm1622 = vcmp.eq.f32.partialorder %v1605, inf
      %v1623 = vsel %vm1622, %v1605, %v1621
      %vm1624 = vcmp.eq.f32.partialorder %v1605, 0.0
      %v1625 = vand.u32 %v1605, 2147483648
      %v1626 = vsel %vm1624, %v1625, %v1623
      %v1627 = vrsqrt.pop %v1607
      %v1628 = vmul.f32 %v1607, %v1627
      %vm1629 = vcmp.eq.f32.partialorder %v1607, inf
      %v1630 = vsel %vm1629, %v1607, %v1628
      %vm1631 = vcmp.eq.f32.partialorder %v1607, 0.0
      %v1632 = vand.u32 %v1607, 2147483648
      %v1633 = vsel %vm1631, %v1632, %v1630
      %v1634 = vrsqrt.pop %v1609
      %v1635 = vmul.f32 %v1609, %v1634
      %vm1636 = vcmp.eq.f32.partialorder %v1609, inf
      %v1637 = vsel %vm1636, %v1609, %v1635
      %vm1638 = vcmp.eq.f32.partialorder %v1609, 0.0
      %v1639 = vand.u32 %v1609, 2147483648
      %v1640 = vsel %vm1638, %v1639, %v1637
      %v1641 = vrsqrt.pop %v1611
      %v1642 = vmul.f32 %v1611, %v1641
      %vm1643 = vcmp.eq.f32.partialorder %v1611, inf
      %v1644 = vsel %vm1643, %v1611, %v1642
      %vm1645 = vcmp.eq.f32.partialorder %v1611, 0.0
      %v1646 = vand.u32 %v1611, 2147483648
      %v1647 = vsel %vm1645, %v1646, %v1644
      %v1648 = vrsqrt.pop %v1613
      %v1649 = vmul.f32 %v1613, %v1648
      %vm1650 = vcmp.eq.f32.partialorder %v1613, inf
      %v1651 = vsel %vm1650, %v1613, %v1649
      %vm1652 = vcmp.eq.f32.partialorder %v1613, 0.0
      %v1653 = vand.u32 %v1613, 2147483648
      %v1654 = vsel %vm1652, %v1653, %v1651
      %v1655 = vrsqrt.pop %v1615
      %v1656 = vmul.f32 %v1615, %v1655
      %vm1657 = vcmp.eq.f32.partialorder %v1615, inf
      %v1658 = vsel %vm1657, %v1615, %v1656
      %vm1659 = vcmp.eq.f32.partialorder %v1615, 0.0
      %v1660 = vand.u32 %v1615, 2147483648
      %v1661 = vsel %vm1659, %v1660, %v1658
      %v1662 = vrsqrt.pop %v1617
      %v1663 = vmul.f32 %v1617, %v1662
      %vm1664 = vcmp.eq.f32.partialorder %v1617, inf
      %v1665 = vsel %vm1664, %v1617, %v1663
      %vm1666 = vcmp.eq.f32.partialorder %v1617, 0.0
      %v1667 = vand.u32 %v1617, 2147483648
      %v1668 = vsel %vm1666, %v1667, %v1665
      %v1669 = vrsqrt.pop %v1619
      %v1670 = vmul.f32 %v1619, %v1669
      %vm1671 = vcmp.eq.f32.partialorder %v1619, inf
      %v1672 = vsel %vm1671, %v1619, %v1670
      %vm1673 = vcmp.eq.f32.partialorder %v1619, 0.0
      %v1674 = vand.u32 %v1619, 2147483648
      %v1675 = vsel %vm1673, %v1674, %v1672
      %v1676 = vmax.f32 %v1626, 1e-08
      %v1677 = vmax.f32 %v1633, 1e-08
      %v1678 = vmax.f32 %v1640, 1e-08
      %v1679 = vmax.f32 %v1647, 1e-08
      %v1680 = vmax.f32 %v1654, 1e-08
      %v1681 = vmax.f32 %v1661, 1e-08
      %v1682 = vmax.f32 %v1668, 1e-08
      %v1683 = vmax.f32 %v1675, 1e-08
      %v1684 = vrcp.pop %v1676
      %v1685 = vmul.f32 %v1588, %v1684
      %v1686 = vrcp.pop %v1677
      %v1687 = vmul.f32 %v1589, %v1686
      %v1688 = vrcp.pop %v1678
      %v1689 = vmul.f32 %v1590, %v1688
      %v1690 = vrcp.pop %v1679
      %v1691 = vmul.f32 %v1591, %v1690
      %v1692 = vrcp.pop %v1680
      %v1693 = vmul.f32 %v1592, %v1692
      %v1694 = vrcp.pop %v1681
      %v1695 = vmul.f32 %v1593, %v1694
      %v1696 = vrcp.pop %v1682
      %v1697 = vmul.f32 %v1594, %v1696
      %v1698 = vrcp.pop %v1683
      %v1699 = vmul.f32 %v1595, %v1698
      %v1700 = vmul.f32 %v1276, %v1571
      %v1701 = vmul.f32 %v1276, %v1575
      %v1702 = vmul.f32 %v1276, %v1579
      %v1703 = vmul.f32 %v1276, %v1583
      %v1704 = vmul.f32 %v1277, %v1571
      %v1705 = vmul.f32 %v1277, %v1575
      %v1706 = vmul.f32 %v1277, %v1579
      %v1707 = vmul.f32 %v1277, %v1583
      %v1708 = vmul.f32 %v1700, %v1700
      %v1709 = vmul.f32 %v1701, %v1701
      %v1710 = vmul.f32 %v1702, %v1702
      %v1711 = vmul.f32 %v1703, %v1703
      %v1712 = vmul.f32 %v1704, %v1704
      %v1713 = vmul.f32 %v1705, %v1705
      %v1714 = vmul.f32 %v1706, %v1706
      %v1715 = vmul.f32 %v1707, %v1707
      %1716 = vadd.xlane.f32.xlu0 %v1708
      %v1717 = vpop.xlane.xlu0 %1716
      %1718 = vadd.xlane.f32.xlu0 %v1709
      %v1719 = vpop.xlane.xlu0 %1718
      %1720 = vadd.xlane.f32.xlu0 %v1710
      %v1721 = vpop.xlane.xlu0 %1720
      %1722 = vadd.xlane.f32.xlu0 %v1711
      %v1723 = vpop.xlane.xlu0 %1722
      %1724 = vadd.xlane.f32.xlu0 %v1712
      %v1725 = vpop.xlane.xlu0 %1724
      %1726 = vadd.xlane.f32.xlu0 %v1713
      %v1727 = vpop.xlane.xlu0 %1726
      %1728 = vadd.xlane.f32.xlu0 %v1714
      %v1729 = vpop.xlane.xlu0 %1728
      %1730 = vadd.xlane.f32.xlu0 %v1715
      %v1731 = vpop.xlane.xlu0 %1730
      %v1732 = vrsqrt.pop %v1717
      %v1733 = vmul.f32 %v1717, %v1732
      %vm1734 = vcmp.eq.f32.partialorder %v1717, inf
      %v1735 = vsel %vm1734, %v1717, %v1733
      %vm1736 = vcmp.eq.f32.partialorder %v1717, 0.0
      %v1737 = vand.u32 %v1717, 2147483648
      %v1738 = vsel %vm1736, %v1737, %v1735
      %v1739 = vrsqrt.pop %v1719
      %v1740 = vmul.f32 %v1719, %v1739
      %vm1741 = vcmp.eq.f32.partialorder %v1719, inf
      %v1742 = vsel %vm1741, %v1719, %v1740
      %vm1743 = vcmp.eq.f32.partialorder %v1719, 0.0
      %v1744 = vand.u32 %v1719, 2147483648
      %v1745 = vsel %vm1743, %v1744, %v1742
      %v1746 = vrsqrt.pop %v1721
      %v1747 = vmul.f32 %v1721, %v1746
      %vm1748 = vcmp.eq.f32.partialorder %v1721, inf
      %v1749 = vsel %vm1748, %v1721, %v1747
      %vm1750 = vcmp.eq.f32.partialorder %v1721, 0.0
      %v1751 = vand.u32 %v1721, 2147483648
      %v1752 = vsel %vm1750, %v1751, %v1749
      %v1753 = vrsqrt.pop %v1723
      %v1754 = vmul.f32 %v1723, %v1753
      %vm1755 = vcmp.eq.f32.partialorder %v1723, inf
      %v1756 = vsel %vm1755, %v1723, %v1754
      %vm1757 = vcmp.eq.f32.partialorder %v1723, 0.0
      %v1758 = vand.u32 %v1723, 2147483648
      %v1759 = vsel %vm1757, %v1758, %v1756
      %v1760 = vrsqrt.pop %v1725
      %v1761 = vmul.f32 %v1725, %v1760
      %vm1762 = vcmp.eq.f32.partialorder %v1725, inf
      %v1763 = vsel %vm1762, %v1725, %v1761
      %vm1764 = vcmp.eq.f32.partialorder %v1725, 0.0
      %v1765 = vand.u32 %v1725, 2147483648
      %v1766 = vsel %vm1764, %v1765, %v1763
      %v1767 = vrsqrt.pop %v1727
      %v1768 = vmul.f32 %v1727, %v1767
      %vm1769 = vcmp.eq.f32.partialorder %v1727, inf
      %v1770 = vsel %vm1769, %v1727, %v1768
      %vm1771 = vcmp.eq.f32.partialorder %v1727, 0.0
      %v1772 = vand.u32 %v1727, 2147483648
      %v1773 = vsel %vm1771, %v1772, %v1770
      %v1774 = vrsqrt.pop %v1729
      %v1775 = vmul.f32 %v1729, %v1774
      %vm1776 = vcmp.eq.f32.partialorder %v1729, inf
      %v1777 = vsel %vm1776, %v1729, %v1775
      %vm1778 = vcmp.eq.f32.partialorder %v1729, 0.0
      %v1779 = vand.u32 %v1729, 2147483648
      %v1780 = vsel %vm1778, %v1779, %v1777
      %v1781 = vrsqrt.pop %v1731
      %v1782 = vmul.f32 %v1731, %v1781
      %vm1783 = vcmp.eq.f32.partialorder %v1731, inf
      %v1784 = vsel %vm1783, %v1731, %v1782
      %vm1785 = vcmp.eq.f32.partialorder %v1731, 0.0
      %v1786 = vand.u32 %v1731, 2147483648
      %v1787 = vsel %vm1785, %v1786, %v1784
      %v1788 = vmax.f32 %v1738, 1e-08
      %v1789 = vmax.f32 %v1745, 1e-08
      %v1790 = vmax.f32 %v1752, 1e-08
      %v1791 = vmax.f32 %v1759, 1e-08
      %v1792 = vmax.f32 %v1766, 1e-08
      %v1793 = vmax.f32 %v1773, 1e-08
      %v1794 = vmax.f32 %v1780, 1e-08
      %v1795 = vmax.f32 %v1787, 1e-08
      %v1796 = vrcp.pop %v1788
      %v1797 = vmul.f32 %v1700, %v1796
      %v1798 = vrcp.pop %v1789
      %v1799 = vmul.f32 %v1701, %v1798
      %v1800 = vrcp.pop %v1790
      %v1801 = vmul.f32 %v1702, %v1800
      %v1802 = vrcp.pop %v1791
      %v1803 = vmul.f32 %v1703, %v1802
      %v1804 = vrcp.pop %v1792
      %v1805 = vmul.f32 %v1704, %v1804
      %v1806 = vrcp.pop %v1793
      %v1807 = vmul.f32 %v1705, %v1806
      %v1808 = vrcp.pop %v1794
      %v1809 = vmul.f32 %v1706, %v1808
      %v1810 = vrcp.pop %v1795
      %v1811 = vmul.f32 %v1707, %v1810
      %1812 = vmatprep.subr.mxu0 0.0
      %1813 = vmatpush1.xpose.msra.mxu0 %v1797
      %1814 = vmatprep.subr.mxu0 0.0
      %1815 = vmatpush1.xpose.msra.mxu0 0.0
      %1816 = vmatprep.subr.mxu0 0.0
      %1817 = vmatpush1.xpose.msra.mxu0 0.0
      %1818 = vmatprep.subr.mxu0 0.0
      %1819 = vmatpush1.xpose.msra.mxu0 0.0
      %1820 = vmatprep.subr.mxu0 0.0
      %1821 = vmatpush1.xpose.msra.mxu0 0.0
      %1822 = vmatprep.subr.mxu0 0.0
      %1823 = vmatpush1.xpose.msra.mxu0 0.0
      %1824 = vmatprep.subr.mxu0 0.0
      %1825 = vmatpush1.xpose.msra.mxu0 0.0
      %1826 = vmatprep.subr.mxu0 0.0
      %1827 = vmatpush1.xpose.msra.mxu0 0.0
      %1828 = vmatprep.subr.mxu0 0.0
      %1829 = vmatpush1.xpose.msra.mxu0 0.0
      %1830 = vmatprep.subr.mxu0 0.0
      %1831 = vmatpush1.xpose.msra.mxu0 0.0
      %1832 = vmatprep.subr.mxu0 0.0
      %1833 = vmatpush1.xpose.msra.mxu0 0.0
      %1834 = vmatprep.subr.mxu0 0.0
      %1835 = vmatpush1.xpose.msra.mxu0 0.0
      %1836 = vmatprep.subr.mxu0 0.0
      %1837 = vmatpush1.xpose.msra.mxu0 0.0
      %1838 = vmatprep.subr.mxu0 0.0
      %1839 = vmatpush1.xpose.msra.mxu0 0.0
      %1840 = vmatprep.subr.mxu0 0.0
      %1841 = vmatpush1.xpose.msra.mxu0 0.0
      %1842 = vmatprep.subr.mxu0 0.0
      %1843 = vmatpush1.xpose.msra.mxu0 0.0
      %1844 = vmatprep.subr.mxu0 0.0
      %1845 = vmatpush1.xpose.msra.mxu0 0.0
      %1846 = vmatprep.subr.mxu0 0.0
      %1847 = vmatpush1.xpose.msra.mxu0 0.0
      %1848 = vmatprep.subr.mxu0 0.0
      %1849 = vmatpush1.xpose.msra.mxu0 0.0
      %1850 = vmatprep.subr.mxu0 0.0
      %1851 = vmatpush1.xpose.msra.mxu0 0.0
      %1852 = vmatprep.subr.mxu0 0.0
      %1853 = vmatpush1.xpose.msra.mxu0 0.0
      %1854 = vmatprep.subr.mxu0 0.0
      %1855 = vmatpush1.xpose.msra.mxu0 0.0
      %1856 = vmatprep.subr.mxu0 0.0
      %1857 = vmatpush1.xpose.msra.mxu0 0.0
      %1858 = vmatprep.subr.mxu0 0.0
      %1859 = vmatpush1.xpose.msra.mxu0 0.0
      %1860 = vmatprep.subr.mxu0 0.0
      %1861 = vmatpush1.xpose.msra.mxu0 0.0
      %1862 = vmatprep.subr.mxu0 0.0
      %1863 = vmatpush1.xpose.msra.mxu0 0.0
      %1864 = vmatprep.subr.mxu0 0.0
      %1865 = vmatpush1.xpose.msra.mxu0 0.0
      %1866 = vmatprep.subr.mxu0 0.0
      %1867 = vmatpush1.xpose.msra.mxu0 0.0
      %1868 = vmatprep.subr.mxu0 0.0
      %1869 = vmatpush1.xpose.msra.mxu0 0.0
      %1870 = vmatprep.subr.mxu0 0.0
      %1871 = vmatpush1.xpose.msra.mxu0 0.0
      %1872 = vmatprep.subr.mxu0 0.0
      %1873 = vmatpush1.xpose.msra.mxu0 0.0
      %1874 = vmatprep.subr.mxu0 0.0
      %1875 = vmatpush1.xpose.msra.mxu0 0.0
      %1876 = vmatprep.mubr.f32.mxu0 0.0
      %1877 = vmatmul.mubr.f32.gmra.mrb[0].mxu0 %v1685
      %v1878 = vpop.f32.mrb[0].mxu0
      %v1879 = vadd.f32 0.0, %v1878
      %v1880 = vpop.f32.mrb[0].mxu0
      %1881 = vdwg.mxu0
      %1882 = vmatprep.subr.mxu0 0.0
      %1883 = vmatpush1.xpose.msra.mxu0 %v1799
      %1884 = vmatprep.subr.mxu0 0.0
      %1885 = vmatpush1.xpose.msra.mxu0 0.0
      %1886 = vmatprep.subr.mxu0 0.0
      %1887 = vmatpush1.xpose.msra.mxu0 0.0
      %1888 = vmatprep.subr.mxu0 0.0
      %1889 = vmatpush1.xpose.msra.mxu0 0.0
      %1890 = vmatprep.subr.mxu0 0.0
      %1891 = vmatpush1.xpose.msra.mxu0 0.0
      %1892 = vmatprep.subr.mxu0 0.0
      %1893 = vmatpush1.xpose.msra.mxu0 0.0
      %1894 = vmatprep.subr.mxu0 0.0
      %1895 = vmatpush1.xpose.msra.mxu0 0.0
      %1896 = vmatprep.subr.mxu0 0.0
      %1897 = vmatpush1.xpose.msra.mxu0 0.0
      %1898 = vmatprep.subr.mxu0 0.0
      %1899 = vmatpush1.xpose.msra.mxu0 0.0
      %1900 = vmatprep.subr.mxu0 0.0
      %1901 = vmatpush1.xpose.msra.mxu0 0.0
      %1902 = vmatprep.subr.mxu0 0.0
      %1903 = vmatpush1.xpose.msra.mxu0 0.0
      %1904 = vmatprep.subr.mxu0 0.0
      %1905 = vmatpush1.xpose.msra.mxu0 0.0
      %1906 = vmatprep.subr.mxu0 0.0
      %1907 = vmatpush1.xpose.msra.mxu0 0.0
      %1908 = vmatprep.subr.mxu0 0.0
      %1909 = vmatpush1.xpose.msra.mxu0 0.0
      %1910 = vmatprep.subr.mxu0 0.0
      %1911 = vmatpush1.xpose.msra.mxu0 0.0
      %1912 = vmatprep.subr.mxu0 0.0
      %1913 = vmatpush1.xpose.msra.mxu0 0.0
      %1914 = vmatprep.subr.mxu0 0.0
      %1915 = vmatpush1.xpose.msra.mxu0 0.0
      %1916 = vmatprep.subr.mxu0 0.0
      %1917 = vmatpush1.xpose.msra.mxu0 0.0
      %1918 = vmatprep.subr.mxu0 0.0
      %1919 = vmatpush1.xpose.msra.mxu0 0.0
      %1920 = vmatprep.subr.mxu0 0.0
      %1921 = vmatpush1.xpose.msra.mxu0 0.0
      %1922 = vmatprep.subr.mxu0 0.0
      %1923 = vmatpush1.xpose.msra.mxu0 0.0
      %1924 = vmatprep.subr.mxu0 0.0
      %1925 = vmatpush1.xpose.msra.mxu0 0.0
      %1926 = vmatprep.subr.mxu0 0.0
      %1927 = vmatpush1.xpose.msra.mxu0 0.0
      %1928 = vmatprep.subr.mxu0 0.0
      %1929 = vmatpush1.xpose.msra.mxu0 0.0
      %1930 = vmatprep.subr.mxu0 0.0
      %1931 = vmatpush1.xpose.msra.mxu0 0.0
      %1932 = vmatprep.subr.mxu0 0.0
      %1933 = vmatpush1.xpose.msra.mxu0 0.0
      %1934 = vmatprep.subr.mxu0 0.0
      %1935 = vmatpush1.xpose.msra.mxu0 0.0
      %1936 = vmatprep.subr.mxu0 0.0
      %1937 = vmatpush1.xpose.msra.mxu0 0.0
      %1938 = vmatprep.subr.mxu0 0.0
      %1939 = vmatpush1.xpose.msra.mxu0 0.0
      %1940 = vmatprep.subr.mxu0 0.0
      %1941 = vmatpush1.xpose.msra.mxu0 0.0
      %1942 = vmatprep.subr.mxu0 0.0
      %1943 = vmatpush1.xpose.msra.mxu0 0.0
      %1944 = vmatprep.subr.mxu0 0.0
      %1945 = vmatpush1.xpose.msra.mxu0 0.0
      %1946 = vmatprep.mubr.f32.mxu0 0.0
      %1947 = vmatmul.mubr.f32.gmra.mrb[0].mxu0 %v1687
      %v1948 = vpop.f32.mrb[0].mxu0
      %v1949 = vadd.f32 0.0, %v1948
      %v1950 = vpop.f32.mrb[0].mxu0
      %1951 = vdwg.mxu0
      %1952 = vmatprep.subr.mxu0 0.0
      %1953 = vmatpush1.xpose.msra.mxu0 %v1801
      %1954 = vmatprep.subr.mxu0 0.0
      %1955 = vmatpush1.xpose.msra.mxu0 0.0
      %1956 = vmatprep.subr.mxu0 0.0
      %1957 = vmatpush1.xpose.msra.mxu0 0.0
      %1958 = vmatprep.subr.mxu0 0.0
      %1959 = vmatpush1.xpose.msra.mxu0 0.0
      %1960 = vmatprep.subr.mxu0 0.0
      %1961 = vmatpush1.xpose.msra.mxu0 0.0
      %1962 = vmatprep.subr.mxu0 0.0
      %1963 = vmatpush1.xpose.msra.mxu0 0.0
      %1964 = vmatprep.subr.mxu0 0.0
      %1965 = vmatpush1.xpose.msra.mxu0 0.0
      %1966 = vmatprep.subr.mxu0 0.0
      %1967 = vmatpush1.xpose.msra.mxu0 0.0
      %1968 = vmatprep.subr.mxu0 0.0
      %1969 = vmatpush1.xpose.msra.mxu0 0.0
      %1970 = vmatprep.subr.mxu0 0.0
      %1971 = vmatpush1.xpose.msra.mxu0 0.0
      %1972 = vmatprep.subr.mxu0 0.0
      %1973 = vmatpush1.xpose.msra.mxu0 0.0
      %1974 = vmatprep.subr.mxu0 0.0
      %1975 = vmatpush1.xpose.msra.mxu0 0.0
      %1976 = vmatprep.subr.mxu0 0.0
      %1977 = vmatpush1.xpose.msra.mxu0 0.0
      %1978 = vmatprep.subr.mxu0 0.0
      %1979 = vmatpush1.xpose.msra.mxu0 0.0
      %1980 = vmatprep.subr.mxu0 0.0
      %1981 = vmatpush1.xpose.msra.mxu0 0.0
      %1982 = vmatprep.subr.mxu0 0.0
      %1983 = vmatpush1.xpose.msra.mxu0 0.0
      %1984 = vmatprep.subr.mxu0 0.0
      %1985 = vmatpush1.xpose.msra.mxu0 0.0
      %1986 = vmatprep.subr.mxu0 0.0
      %1987 = vmatpush1.xpose.msra.mxu0 0.0
      %1988 = vmatprep.subr.mxu0 0.0
      %1989 = vmatpush1.xpose.msra.mxu0 0.0
      %1990 = vmatprep.subr.mxu0 0.0
      %1991 = vmatpush1.xpose.msra.mxu0 0.0
      %1992 = vmatprep.subr.mxu0 0.0
      %1993 = vmatpush1.xpose.msra.mxu0 0.0
      %1994 = vmatprep.subr.mxu0 0.0
      %1995 = vmatpush1.xpose.msra.mxu0 0.0
      %1996 = vmatprep.subr.mxu0 0.0
      %1997 = vmatpush1.xpose.msra.mxu0 0.0
      %1998 = vmatprep.subr.mxu0 0.0
      %1999 = vmatpush1.xpose.msra.mxu0 0.0
      %2000 = vmatprep.subr.mxu0 0.0
      %2001 = vmatpush1.xpose.msra.mxu0 0.0
      %2002 = vmatprep.subr.mxu0 0.0
      %2003 = vmatpush1.xpose.msra.mxu0 0.0
      %2004 = vmatprep.subr.mxu0 0.0
      %2005 = vmatpush1.xpose.msra.mxu0 0.0
      %2006 = vmatprep.subr.mxu0 0.0
      %2007 = vmatpush1.xpose.msra.mxu0 0.0
      %2008 = vmatprep.subr.mxu0 0.0
      %2009 = vmatpush1.xpose.msra.mxu0 0.0
      %2010 = vmatprep.subr.mxu0 0.0
      %2011 = vmatpush1.xpose.msra.mxu0 0.0
      %2012 = vmatprep.subr.mxu0 0.0
      %2013 = vmatpush1.xpose.msra.mxu0 0.0
      %2014 = vmatprep.subr.mxu0 0.0
      %2015 = vmatpush1.xpose.msra.mxu0 0.0
      %2016 = vmatprep.mubr.f32.mxu0 0.0
      %2017 = vmatmul.mubr.f32.gmra.mrb[0].mxu0 %v1689
      %v2018 = vpop.f32.mrb[0].mxu0
      %v2019 = vadd.f32 0.0, %v2018
      %v2020 = vpop.f32.mrb[0].mxu0
      %2021 = vdwg.mxu0
      %2022 = vmatprep.subr.mxu0 0.0
      %2023 = vmatpush1.xpose.msra.mxu0 %v1803
      %2024 = vmatprep.subr.mxu0 0.0
      %2025 = vmatpush1.xpose.msra.mxu0 0.0
      %2026 = vmatprep.subr.mxu0 0.0
      %2027 = vmatpush1.xpose.msra.mxu0 0.0
      %2028 = vmatprep.subr.mxu0 0.0
      %2029 = vmatpush1.xpose.msra.mxu0 0.0
      %2030 = vmatprep.subr.mxu0 0.0
      %2031 = vmatpush1.xpose.msra.mxu0 0.0
      %2032 = vmatprep.subr.mxu0 0.0
      %2033 = vmatpush1.xpose.msra.mxu0 0.0
      %2034 = vmatprep.subr.mxu0 0.0
      %2035 = vmatpush1.xpose.msra.mxu0 0.0
      %2036 = vmatprep.subr.mxu0 0.0
      %2037 = vmatpush1.xpose.msra.mxu0 0.0
      %2038 = vmatprep.subr.mxu0 0.0
      %2039 = vmatpush1.xpose.msra.mxu0 0.0
      %2040 = vmatprep.subr.mxu0 0.0
      %2041 = vmatpush1.xpose.msra.mxu0 0.0
      %2042 = vmatprep.subr.mxu0 0.0
      %2043 = vmatpush1.xpose.msra.mxu0 0.0
      %2044 = vmatprep.subr.mxu0 0.0
      %2045 = vmatpush1.xpose.msra.mxu0 0.0
      %2046 = vmatprep.subr.mxu0 0.0
      %2047 = vmatpush1.xpose.msra.mxu0 0.0
      %2048 = vmatprep.subr.mxu0 0.0
      %2049 = vmatpush1.xpose.msra.mxu0 0.0
      %2050 = vmatprep.subr.mxu0 0.0
      %2051 = vmatpush1.xpose.msra.mxu0 0.0
      %2052 = vmatprep.subr.mxu0 0.0
      %2053 = vmatpush1.xpose.msra.mxu0 0.0
      %2054 = vmatprep.subr.mxu0 0.0
      %2055 = vmatpush1.xpose.msra.mxu0 0.0
      %2056 = vmatprep.subr.mxu0 0.0
      %2057 = vmatpush1.xpose.msra.mxu0 0.0
      %2058 = vmatprep.subr.mxu0 0.0
      %2059 = vmatpush1.xpose.msra.mxu0 0.0
      %2060 = vmatprep.subr.mxu0 0.0
      %2061 = vmatpush1.xpose.msra.mxu0 0.0
      %2062 = vmatprep.subr.mxu0 0.0
      %2063 = vmatpush1.xpose.msra.mxu0 0.0
      %2064 = vmatprep.subr.mxu0 0.0
      %2065 = vmatpush1.xpose.msra.mxu0 0.0
      %2066 = vmatprep.subr.mxu0 0.0
      %2067 = vmatpush1.xpose.msra.mxu0 0.0
      %2068 = vmatprep.subr.mxu0 0.0
      %2069 = vmatpush1.xpose.msra.mxu0 0.0
      %2070 = vmatprep.subr.mxu0 0.0
      %2071 = vmatpush1.xpose.msra.mxu0 0.0
      %2072 = vmatprep.subr.mxu0 0.0
      %2073 = vmatpush1.xpose.msra.mxu0 0.0
      %2074 = vmatprep.subr.mxu0 0.0
      %2075 = vmatpush1.xpose.msra.mxu0 0.0
      %2076 = vmatprep.subr.mxu0 0.0
      %2077 = vmatpush1.xpose.msra.mxu0 0.0
      %2078 = vmatprep.subr.mxu0 0.0
      %2079 = vmatpush1.xpose.msra.mxu0 0.0
      %2080 = vmatprep.subr.mxu0 0.0
      %2081 = vmatpush1.xpose.msra.mxu0 0.0
      %2082 = vmatprep.subr.mxu0 0.0
      %2083 = vmatpush1.xpose.msra.mxu0 0.0
      %2084 = vmatprep.subr.mxu0 0.0
      %2085 = vmatpush1.xpose.msra.mxu0 0.0
      %2086 = vmatprep.mubr.f32.mxu0 0.0
      %2087 = vmatmul.mubr.f32.gmra.mrb[0].mxu0 %v1691
      %v2088 = vpop.f32.mrb[0].mxu0
      %v2089 = vadd.f32 0.0, %v2088
      %v2090 = vpop.f32.mrb[0].mxu0
      %2091 = vdwg.mxu0
      %2092 = vmatprep.subr.mxu0 0.0
      %2093 = vmatpush1.xpose.msra.mxu0 %v1805
      %2094 = vmatprep.subr.mxu0 0.0
      %2095 = vmatpush1.xpose.msra.mxu0 0.0
      %2096 = vmatprep.subr.mxu0 0.0
      %2097 = vmatpush1.xpose.msra.mxu0 0.0
      %2098 = vmatprep.subr.mxu0 0.0
      %2099 = vmatpush1.xpose.msra.mxu0 0.0
      %2100 = vmatprep.subr.mxu0 0.0
      %2101 = vmatpush1.xpose.msra.mxu0 0.0
      %2102 = vmatprep.subr.mxu0 0.0
      %2103 = vmatpush1.xpose.msra.mxu0 0.0
      %2104 = vmatprep.subr.mxu0 0.0
      %2105 = vmatpush1.xpose.msra.mxu0 0.0
      %2106 = vmatprep.subr.mxu0 0.0
      %2107 = vmatpush1.xpose.msra.mxu0 0.0
      %2108 = vmatprep.subr.mxu0 0.0
      %2109 = vmatpush1.xpose.msra.mxu0 0.0
      %2110 = vmatprep.subr.mxu0 0.0
      %2111 = vmatpush1.xpose.msra.mxu0 0.0
      %2112 = vmatprep.subr.mxu0 0.0
      %2113 = vmatpush1.xpose.msra.mxu0 0.0
      %2114 = vmatprep.subr.mxu0 0.0
      %2115 = vmatpush1.xpose.msra.mxu0 0.0
      %2116 = vmatprep.subr.mxu0 0.0
      %2117 = vmatpush1.xpose.msra.mxu0 0.0
      %2118 = vmatprep.subr.mxu0 0.0
      %2119 = vmatpush1.xpose.msra.mxu0 0.0
      %2120 = vmatprep.subr.mxu0 0.0
      %2121 = vmatpush1.xpose.msra.mxu0 0.0
      %2122 = vmatprep.subr.mxu0 0.0
      %2123 = vmatpush1.xpose.msra.mxu0 0.0
      %2124 = vmatprep.subr.mxu0 0.0
      %2125 = vmatpush1.xpose.msra.mxu0 0.0
      %2126 = vmatprep.subr.mxu0 0.0
      %2127 = vmatpush1.xpose.msra.mxu0 0.0
      %2128 = vmatprep.subr.mxu0 0.0
      %2129 = vmatpush1.xpose.msra.mxu0 0.0
      %2130 = vmatprep.subr.mxu0 0.0
      %2131 = vmatpush1.xpose.msra.mxu0 0.0
      %2132 = vmatprep.subr.mxu0 0.0
      %2133 = vmatpush1.xpose.msra.mxu0 0.0
      %2134 = vmatprep.subr.mxu0 0.0
      %2135 = vmatpush1.xpose.msra.mxu0 0.0
      %2136 = vmatprep.subr.mxu0 0.0
      %2137 = vmatpush1.xpose.msra.mxu0 0.0
      %2138 = vmatprep.subr.mxu0 0.0
      %2139 = vmatpush1.xpose.msra.mxu0 0.0
      %2140 = vmatprep.subr.mxu0 0.0
      %2141 = vmatpush1.xpose.msra.mxu0 0.0
      %2142 = vmatprep.subr.mxu0 0.0
      %2143 = vmatpush1.xpose.msra.mxu0 0.0
      %2144 = vmatprep.subr.mxu0 0.0
      %2145 = vmatpush1.xpose.msra.mxu0 0.0
      %2146 = vmatprep.subr.mxu0 0.0
      %2147 = vmatpush1.xpose.msra.mxu0 0.0
      %2148 = vmatprep.subr.mxu0 0.0
      %2149 = vmatpush1.xpose.msra.mxu0 0.0
      %2150 = vmatprep.subr.mxu0 0.0
      %2151 = vmatpush1.xpose.msra.mxu0 0.0
      %2152 = vmatprep.subr.mxu0 0.0
      %2153 = vmatpush1.xpose.msra.mxu0 0.0
      %2154 = vmatprep.subr.mxu0 0.0
      %2155 = vmatpush1.xpose.msra.mxu0 0.0
      %2156 = vmatprep.mubr.f32.mxu0 0.0
      %2157 = vmatmul.mubr.f32.gmra.mrb[0].mxu0 %v1693
      %v2158 = vpop.f32.mrb[0].mxu0
      %v2159 = vadd.f32 0.0, %v2158
      %v2160 = vpop.f32.mrb[0].mxu0
      %2161 = vdwg.mxu0
      %2162 = vmatprep.subr.mxu0 0.0
      %2163 = vmatpush1.xpose.msra.mxu0 %v1807
      %2164 = vmatprep.subr.mxu0 0.0
      %2165 = vmatpush1.xpose.msra.mxu0 0.0
      %2166 = vmatprep.subr.mxu0 0.0
      %2167 = vmatpush1.xpose.msra.mxu0 0.0
      %2168 = vmatprep.subr.mxu0 0.0
      %2169 = vmatpush1.xpose.msra.mxu0 0.0
      %2170 = vmatprep.subr.mxu0 0.0
      %2171 = vmatpush1.xpose.msra.mxu0 0.0
      %2172 = vmatprep.subr.mxu0 0.0
      %2173 = vmatpush1.xpose.msra.mxu0 0.0
      %2174 = vmatprep.subr.mxu0 0.0
      %2175 = vmatpush1.xpose.msra.mxu0 0.0
      %2176 = vmatprep.subr.mxu0 0.0
      %2177 = vmatpush1.xpose.msra.mxu0 0.0
      %2178 = vmatprep.subr.mxu0 0.0
      %2179 = vmatpush1.xpose.msra.mxu0 0.0
      %2180 = vmatprep.subr.mxu0 0.0
      %2181 = vmatpush1.xpose.msra.mxu0 0.0
      %2182 = vmatprep.subr.mxu0 0.0
      %2183 = vmatpush1.xpose.msra.mxu0 0.0
      %2184 = vmatprep.subr.mxu0 0.0
      %2185 = vmatpush1.xpose.msra.mxu0 0.0
      %2186 = vmatprep.subr.mxu0 0.0
      %2187 = vmatpush1.xpose.msra.mxu0 0.0
      %2188 = vmatprep.subr.mxu0 0.0
      %2189 = vmatpush1.xpose.msra.mxu0 0.0
      %2190 = vmatprep.subr.mxu0 0.0
      %2191 = vmatpush1.xpose.msra.mxu0 0.0
      %2192 = vmatprep.subr.mxu0 0.0
      %2193 = vmatpush1.xpose.msra.mxu0 0.0
      %2194 = vmatprep.subr.mxu0 0.0
      %2195 = vmatpush1.xpose.msra.mxu0 0.0
      %2196 = vmatprep.subr.mxu0 0.0
      %2197 = vmatpush1.xpose.msra.mxu0 0.0
      %2198 = vmatprep.subr.mxu0 0.0
      %2199 = vmatpush1.xpose.msra.mxu0 0.0
      %2200 = vmatprep.subr.mxu0 0.0
      %2201 = vmatpush1.xpose.msra.mxu0 0.0
      %2202 = vmatprep.subr.mxu0 0.0
      %2203 = vmatpush1.xpose.msra.mxu0 0.0
      %2204 = vmatprep.subr.mxu0 0.0
      %2205 = vmatpush1.xpose.msra.mxu0 0.0
      %2206 = vmatprep.subr.mxu0 0.0
      %2207 = vmatpush1.xpose.msra.mxu0 0.0
      %2208 = vmatprep.subr.mxu0 0.0
      %2209 = vmatpush1.xpose.msra.mxu0 0.0
      %2210 = vmatprep.subr.mxu0 0.0
      %2211 = vmatpush1.xpose.msra.mxu0 0.0
      %2212 = vmatprep.subr.mxu0 0.0
      %2213 = vmatpush1.xpose.msra.mxu0 0.0
      %2214 = vmatprep.subr.mxu0 0.0
      %2215 = vmatpush1.xpose.msra.mxu0 0.0
      %2216 = vmatprep.subr.mxu0 0.0
      %2217 = vmatpush1.xpose.msra.mxu0 0.0
      %2218 = vmatprep.subr.mxu0 0.0
      %2219 = vmatpush1.xpose.msra.mxu0 0.0
      %2220 = vmatprep.subr.mxu0 0.0
      %2221 = vmatpush1.xpose.msra.mxu0 0.0
      %2222 = vmatprep.subr.mxu0 0.0
      %2223 = vmatpush1.xpose.msra.mxu0 0.0
      %2224 = vmatprep.subr.mxu0 0.0
      %2225 = vmatpush1.xpose.msra.mxu0 0.0
      %2226 = vmatprep.mubr.f32.mxu0 0.0
      %2227 = vmatmul.mubr.f32.gmra.mrb[0].mxu0 %v1695
      %v2228 = vpop.f32.mrb[0].mxu0
      %v2229 = vadd.f32 0.0, %v2228
      %v2230 = vpop.f32.mrb[0].mxu0
      %2231 = vdwg.mxu0
      %2232 = vmatprep.subr.mxu0 0.0
      %2233 = vmatpush1.xpose.msra.mxu0 %v1809
      %2234 = vmatprep.subr.mxu0 0.0
      %2235 = vmatpush1.xpose.msra.mxu0 0.0
      %2236 = vmatprep.subr.mxu0 0.0
      %2237 = vmatpush1.xpose.msra.mxu0 0.0
      %2238 = vmatprep.subr.mxu0 0.0
      %2239 = vmatpush1.xpose.msra.mxu0 0.0
      %2240 = vmatprep.subr.mxu0 0.0
      %2241 = vmatpush1.xpose.msra.mxu0 0.0
      %2242 = vmatprep.subr.mxu0 0.0
      %2243 = vmatpush1.xpose.msra.mxu0 0.0
      %2244 = vmatprep.subr.mxu0 0.0
      %2245 = vmatpush1.xpose.msra.mxu0 0.0
      %2246 = vmatprep.subr.mxu0 0.0
      %2247 = vmatpush1.xpose.msra.mxu0 0.0
      %2248 = vmatprep.subr.mxu0 0.0
      %2249 = vmatpush1.xpose.msra.mxu0 0.0
      %2250 = vmatprep.subr.mxu0 0.0
      %2251 = vmatpush1.xpose.msra.mxu0 0.0
      %2252 = vmatprep.subr.mxu0 0.0
      %2253 = vmatpush1.xpose.msra.mxu0 0.0
      %2254 = vmatprep.subr.mxu0 0.0
      %2255 = vmatpush1.xpose.msra.mxu0 0.0
      %2256 = vmatprep.subr.mxu0 0.0
      %2257 = vmatpush1.xpose.msra.mxu0 0.0
      %2258 = vmatprep.subr.mxu0 0.0
      %2259 = vmatpush1.xpose.msra.mxu0 0.0
      %2260 = vmatprep.subr.mxu0 0.0
      %2261 = vmatpush1.xpose.msra.mxu0 0.0
      %2262 = vmatprep.subr.mxu0 0.0
      %2263 = vmatpush1.xpose.msra.mxu0 0.0
      %2264 = vmatprep.subr.mxu0 0.0
      %2265 = vmatpush1.xpose.msra.mxu0 0.0
      %2266 = vmatprep.subr.mxu0 0.0
      %2267 = vmatpush1.xpose.msra.mxu0 0.0
      %2268 = vmatprep.subr.mxu0 0.0
      %2269 = vmatpush1.xpose.msra.mxu0 0.0
      %2270 = vmatprep.subr.mxu0 0.0
      %2271 = vmatpush1.xpose.msra.mxu0 0.0
      %2272 = vmatprep.subr.mxu0 0.0
      %2273 = vmatpush1.xpose.msra.mxu0 0.0
      %2274 = vmatprep.subr.mxu0 0.0
      %2275 = vmatpush1.xpose.msra.mxu0 0.0
      %2276 = vmatprep.subr.mxu0 0.0
      %2277 = vmatpush1.xpose.msra.mxu0 0.0
      %2278 = vmatprep.subr.mxu0 0.0
      %2279 = vmatpush1.xpose.msra.mxu0 0.0
      %2280 = vmatprep.subr.mxu0 0.0
      %2281 = vmatpush1.xpose.msra.mxu0 0.0
      %2282 = vmatprep.subr.mxu0 0.0
      %2283 = vmatpush1.xpose.msra.mxu0 0.0
      %2284 = vmatprep.subr.mxu0 0.0
      %2285 = vmatpush1.xpose.msra.mxu0 0.0
      %2286 = vmatprep.subr.mxu0 0.0
      %2287 = vmatpush1.xpose.msra.mxu0 0.0
      %2288 = vmatprep.subr.mxu0 0.0
      %2289 = vmatpush1.xpose.msra.mxu0 0.0
      %2290 = vmatprep.subr.mxu0 0.0
      %2291 = vmatpush1.xpose.msra.mxu0 0.0
      %2292 = vmatprep.subr.mxu0 0.0
      %2293 = vmatpush1.xpose.msra.mxu0 0.0
      %2294 = vmatprep.subr.mxu0 0.0
      %2295 = vmatpush1.xpose.msra.mxu0 0.0
      %2296 = vmatprep.mubr.f32.mxu0 0.0
      %2297 = vmatmul.mubr.f32.gmra.mrb[0].mxu0 %v1697
      %v2298 = vpop.f32.mrb[0].mxu0
      %v2299 = vadd.f32 0.0, %v2298
      %v2300 = vpop.f32.mrb[0].mxu0
      %2301 = vdwg.mxu0
      %2302 = vmatprep.subr.mxu0 0.0
      %2303 = vmatpush1.xpose.msra.mxu0 %v1811
      %2304 = vmatprep.subr.mxu0 0.0
      %2305 = vmatpush1.xpose.msra.mxu0 0.0
      %2306 = vmatprep.subr.mxu0 0.0
      %2307 = vmatpush1.xpose.msra.mxu0 0.0
      %2308 = vmatprep.subr.mxu0 0.0
      %2309 = vmatpush1.xpose.msra.mxu0 0.0
      %2310 = vmatprep.subr.mxu0 0.0
      %2311 = vmatpush1.xpose.msra.mxu0 0.0
      %2312 = vmatprep.subr.mxu0 0.0
      %2313 = vmatpush1.xpose.msra.mxu0 0.0
      %2314 = vmatprep.subr.mxu0 0.0
      %2315 = vmatpush1.xpose.msra.mxu0 0.0
      %2316 = vmatprep.subr.mxu0 0.0
      %2317 = vmatpush1.xpose.msra.mxu0 0.0
      %2318 = vmatprep.subr.mxu0 0.0
      %2319 = vmatpush1.xpose.msra.mxu0 0.0
      %2320 = vmatprep.subr.mxu0 0.0
      %2321 = vmatpush1.xpose.msra.mxu0 0.0
      %2322 = vmatprep.subr.mxu0 0.0
      %2323 = vmatpush1.xpose.msra.mxu0 0.0
      %2324 = vmatprep.subr.mxu0 0.0
      %2325 = vmatpush1.xpose.msra.mxu0 0.0
      %2326 = vmatprep.subr.mxu0 0.0
      %2327 = vmatpush1.xpose.msra.mxu0 0.0
      %2328 = vmatprep.subr.mxu0 0.0
      %2329 = vmatpush1.xpose.msra.mxu0 0.0
      %2330 = vmatprep.subr.mxu0 0.0
      %2331 = vmatpush1.xpose.msra.mxu0 0.0
      %2332 = vmatprep.subr.mxu0 0.0
      %2333 = vmatpush1.xpose.msra.mxu0 0.0
      %2334 = vmatprep.subr.mxu0 0.0
      %2335 = vmatpush1.xpose.msra.mxu0 0.0
      %2336 = vmatprep.subr.mxu0 0.0
      %2337 = vmatpush1.xpose.msra.mxu0 0.0
      %2338 = vmatprep.subr.mxu0 0.0
      %2339 = vmatpush1.xpose.msra.mxu0 0.0
      %2340 = vmatprep.subr.mxu0 0.0
      %2341 = vmatpush1.xpose.msra.mxu0 0.0
      %2342 = vmatprep.subr.mxu0 0.0
      %2343 = vmatpush1.xpose.msra.mxu0 0.0
      %2344 = vmatprep.subr.mxu0 0.0
      %2345 = vmatpush1.xpose.msra.mxu0 0.0
      %2346 = vmatprep.subr.mxu0 0.0
      %2347 = vmatpush1.xpose.msra.mxu0 0.0
      %2348 = vmatprep.subr.mxu0 0.0
      %2349 = vmatpush1.xpose.msra.mxu0 0.0
      %2350 = vmatprep.subr.mxu0 0.0
      %2351 = vmatpush1.xpose.msra.mxu0 0.0
      %2352 = vmatprep.subr.mxu0 0.0
      %2353 = vmatpush1.xpose.msra.mxu0 0.0
      %2354 = vmatprep.subr.mxu0 0.0
      %2355 = vmatpush1.xpose.msra.mxu0 0.0
      %2356 = vmatprep.subr.mxu0 0.0
      %2357 = vmatpush1.xpose.msra.mxu0 0.0
      %2358 = vmatprep.subr.mxu0 0.0
      %2359 = vmatpush1.xpose.msra.mxu0 0.0
      %2360 = vmatprep.subr.mxu0 0.0
      %2361 = vmatpush1.xpose.msra.mxu0 0.0
      %2362 = vmatprep.subr.mxu0 0.0
      %2363 = vmatpush1.xpose.msra.mxu0 0.0
      %2364 = vmatprep.subr.mxu0 0.0
      %2365 = vmatpush1.xpose.msra.mxu0 0.0
      %2366 = vmatprep.mubr.f32.mxu0 0.0
      %2367 = vmatmul.mubr.f32.gmra.mrb[0].mxu0 %v1699
      %v2368 = vpop.f32.mrb[0].mxu0
      %v2369 = vadd.f32 0.0, %v2368
      %v2370 = vpop.f32.mrb[0].mxu0
      %2371 = vdwg.mxu0
      %v2372 = vsel %vm1501, %v1879, -1e+30
      %v2373 = vsel %vm1502, %v2159, -1e+30
      %v2374 = vsel %vm1505, %v2372, -inf
      %2375 = vmax.xlane.f32.xlu0 %v2374
      %v2376 = vpop.xlane.xlu0 %2375
      %v2377 = vsel %vm1505, %v2373, -inf
      %2378 = vmax.xlane.f32.xlu0 %v2377
      %v2379 = vpop.xlane.xlu0 %2378
      %v2380 = vsel %vm1514, %v2376, 0.0
      %v2381 = vsel %vm1515, %v2379, 0.0
      %v2382 = vmul.f32 %v1879, %v1523
      %v2383 = vmul.f32 %v2159, %v1527
      %v2384 = vsel %vm1505, %v2382, 0.0
      %2385 = vadd.xlane.f32.xlu0 %v2384
      %v2386 = vpop.xlane.xlu0 %2385
      %v2387 = vsel %vm1505, %v2383, 0.0
      %2388 = vadd.xlane.f32.xlu0 %v2387
      %v2389 = vpop.xlane.xlu0 %2388
      %v2390 = vmul.f32 %v2386, %v1538
      %v2391 = vmul.f32 %v2389, %v1540
      %v2392 = vsel %vm1501, %v1949, -1e+30
      %v2393 = vsel %vm1502, %v2229, -1e+30
      %v2394 = vsel %vm1505, %v2392, -inf
      %2395 = vmax.xlane.f32.xlu0 %v2394
      %v2396 = vpop.xlane.xlu0 %2395
      %v2397 = vsel %vm1505, %v2393, -inf
      %2398 = vmax.xlane.f32.xlu0 %v2397
      %v2399 = vpop.xlane.xlu0 %2398
      %v2400 = vsel %vm1514, %v2396, 0.0
      %v2401 = vsel %vm1515, %v2399, 0.0
      %v2402 = vmul.f32 %v1949, %v1523
      %v2403 = vmul.f32 %v2229, %v1527
      %v2404 = vsel %vm1505, %v2402, 0.0
      %2405 = vadd.xlane.f32.xlu0 %v2404
      %v2406 = vpop.xlane.xlu0 %2405
      %v2407 = vsel %vm1505, %v2403, 0.0
      %2408 = vadd.xlane.f32.xlu0 %v2407
      %v2409 = vpop.xlane.xlu0 %2408
      %v2410 = vmul.f32 %v2406, %v1538
      %v2411 = vmul.f32 %v2409, %v1540
      %v2412 = vsel %vm1501, %v2019, -1e+30
      %v2413 = vsel %vm1502, %v2299, -1e+30
      %v2414 = vsel %vm1505, %v2412, -inf
      %2415 = vmax.xlane.f32.xlu0 %v2414
      %v2416 = vpop.xlane.xlu0 %2415
      %v2417 = vsel %vm1505, %v2413, -inf
      %2418 = vmax.xlane.f32.xlu0 %v2417
      %v2419 = vpop.xlane.xlu0 %2418
      %v2420 = vsel %vm1514, %v2416, 0.0
      %v2421 = vsel %vm1515, %v2419, 0.0
      %v2422 = vmul.f32 %v2019, %v1523
      %v2423 = vmul.f32 %v2299, %v1527
      %v2424 = vsel %vm1505, %v2422, 0.0
      %2425 = vadd.xlane.f32.xlu0 %v2424
      %v2426 = vpop.xlane.xlu0 %2425
      %v2427 = vsel %vm1505, %v2423, 0.0
      %2428 = vadd.xlane.f32.xlu0 %v2427
      %v2429 = vpop.xlane.xlu0 %2428
      %v2430 = vmul.f32 %v2426, %v1538
      %v2431 = vmul.f32 %v2429, %v1540
      %v2432 = vsel %vm1501, %v2089, -1e+30
      %v2433 = vsel %vm1502, %v2369, -1e+30
      %v2434 = vsel %vm1505, %v2432, -inf
      %2435 = vmax.xlane.f32.xlu0 %v2434
      %v2436 = vpop.xlane.xlu0 %2435
      %v2437 = vsel %vm1505, %v2433, -inf
      %2438 = vmax.xlane.f32.xlu0 %v2437
      %v2439 = vpop.xlane.xlu0 %2438
      %v2440 = vsel %vm1514, %v2436, 0.0
      %v2441 = vsel %vm1515, %v2439, 0.0
      %v2442 = vmul.f32 %v2089, %v1523
      %v2443 = vmul.f32 %v2369, %v1527
      %v2444 = vsel %vm1505, %v2442, 0.0
      %2445 = vadd.xlane.f32.xlu0 %v2444
      %v2446 = vpop.xlane.xlu0 %2445
      %v2447 = vsel %vm1505, %v2443, 0.0
      %2448 = vadd.xlane.f32.xlu0 %v2447
      %v2449 = vpop.xlane.xlu0 %2448
      %v2450 = vmul.f32 %v2446, %v1538
      %v2451 = vmul.f32 %v2449, %v1540
      %2454 = vrot.lane.b32.xlu0 %v1539, 1
      %v2455 = vpop.permute.xlu0 %2454
      %2456 = vrot.lane.b32.xlu0 %v1541, 1
      %v2457 = vpop.permute.xlu0 %2456
      %2462 = vrot.lane.b32.xlu0 %v2380, 2
      %v2463 = vpop.permute.xlu0 %2462
      %2464 = vrot.lane.b32.xlu0 %v2381, 2
      %v2465 = vpop.permute.xlu0 %2464
      %2470 = vrot.lane.b32.xlu0 %v2400, 3
      %v2471 = vpop.permute.xlu0 %2470
      %2472 = vrot.lane.b32.xlu0 %v2401, 3
      %v2473 = vpop.permute.xlu0 %2472
      %2478 = vrot.lane.b32.xlu0 %v2420, 4
      %v2479 = vpop.permute.xlu0 %2478
      %2480 = vrot.lane.b32.xlu0 %v2421, 4
      %v2481 = vpop.permute.xlu0 %2480
      %2486 = vrot.lane.b32.xlu0 %v2440, 5
      %v2487 = vpop.permute.xlu0 %2486
      %2488 = vrot.lane.b32.xlu0 %v2441, 5
      %v2489 = vpop.permute.xlu0 %2488
      %2494 = vrot.lane.b32.xlu0 %v2390, 6
      %v2495 = vpop.permute.xlu0 %2494
      %2496 = vrot.lane.b32.xlu0 %v2391, 6
      %v2497 = vpop.permute.xlu0 %2496
      %2502 = vrot.lane.b32.xlu0 %v2410, 7
      %v2503 = vpop.permute.xlu0 %2502
      %2504 = vrot.lane.b32.xlu0 %v2411, 7
      %v2505 = vpop.permute.xlu0 %2504
      %2510 = vrot.lane.b32.xlu0 %v2430, 8
      %v2511 = vpop.permute.xlu0 %2510
      %2512 = vrot.lane.b32.xlu0 %v2431, 8
      %v2513 = vpop.permute.xlu0 %2512
      %2518 = vrot.lane.b32.xlu0 %v2450, 9
      %v2519 = vpop.permute.xlu0 %2518
      %2520 = vrot.lane.b32.xlu0 %v2451, 9
      %v2521 = vpop.permute.xlu0 %2520
      %v2524 = vsel %vm1278, %v1516, %v2455
      %v2525 = vsel %vm1278, %v1517, %v2457
      %vm2526 = vcmask 15360
      %v2527 = vsel %vm2526, %v2524, %v2463
      %v2528 = vsel %vm2526, %v2525, %v2465
      %vm2529 = vcmask 23552
      %v2530 = vsel %vm2529, %v2527, %v2471
      %v2531 = vsel %vm2529, %v2528, %v2473
      %vm2532 = vcmask 31744
      %v2533 = vsel %vm2532, %v2530, %v2479
      %v2534 = vsel %vm2532, %v2531, %v2481
      %vm2535 = vcmask 39936
      %v2536 = vsel %vm2535, %v2533, %v2487
      %v2537 = vsel %vm2535, %v2534, %v2489
      %vm2538 = vcmask 48128
      %v2539 = vsel %vm2538, %v2536, %v2495
      %v2540 = vsel %vm2538, %v2537, %v2497
      %vm2541 = vcmask 56320
      %v2542 = vsel %vm2541, %v2539, %v2503
      %v2543 = vsel %vm2541, %v2540, %v2505
      %v2544 = vsel %vm1505, %v2542, %v2511
      %v2545 = vsel %vm1505, %v2543, %v2513
      %vm2546 = vcmask 72704
      %v2547 = vsel %vm2546, %v2544, %v2519
      %v2548 = vsel %vm2546, %v2545, %v2521
      %vm2549 = vcmask 80896
      %v2550 = vsel %vm2549, %v2547, 0.0
      %v2551 = vsel %vm2549, %v2548, 0.0
      %v2552 = vld [vmem:[%s11] sm:$0xff]
      %v2553 = vld [vmem:[%s11 + $0x8] sm:$0xff]
      %v2554 = vld [vmem:[%s11 + $0x10] sm:$0xff]
      %v2555 = vld [vmem:[%s11 + $0x18] sm:$0xff]
      %v2556 = vld [vmem:[%s11 + $0x20] sm:$0xff]
      %v2557 = vld [vmem:[%s11 + $0x28] sm:$0xff]
      %v2558 = vld [vmem:[%s11 + $0x30] sm:$0xff]
      %v2559 = vld [vmem:[%s11 + $0x38] sm:$0xff]
      %v2560 = vld [vmem:[%s11 + $0x40] sm:$0xff]
      %v2561 = vld [vmem:[%s11 + $0x48] sm:$0xff]
      %v2562 = vld [vmem:[%s11 + $0x50] sm:$0xff]
      %v2563 = vld [vmem:[%s11 + $0x58] sm:$0xff]
      %v2564 = vld [vmem:[%s11 + $0x60] sm:$0xff]
      %v2565 = vld [vmem:[%s11 + $0x68] sm:$0xff]
      %v2566 = vld [vmem:[%s11 + $0x70] sm:$0xff]
      %v2567 = vld [vmem:[%s11 + $0x78] sm:$0xff]
      %v2568 = vld [vmem:[%s11 + $0x80] sm:$0xff]
      %v2569 = vld [vmem:[%s11 + $0x88] sm:$0xff]
      %v2570 = vld [vmem:[%s11 + $0x90] sm:$0xff]
      %v2571 = vld [vmem:[%s11 + $0x98] sm:$0xff]
      %v2572 = vld [vmem:[%s11 + $0xa0] sm:$0xff]
      %v2573 = vld [vmem:[%s11 + $0xa8] sm:$0xff]
      %v2574 = vld [vmem:[%s11 + $0xb0] sm:$0xff]
      %v2575 = vld [vmem:[%s11 + $0xb8] sm:$0xff]
      %v2576 = vld [vmem:[%s11 + $0xc0] sm:$0xff]
      %v2577 = vld [vmem:[%s11 + $0xc8] sm:$0xff]
      %v2578 = vld [vmem:[%s11 + $0xd0] sm:$0xff]
      %v2579 = vld [vmem:[%s11 + $0xd8] sm:$0xff]
      %v2580 = vld [vmem:[%s11 + $0xe0] sm:$0xff]
      %v2581 = vld [vmem:[%s11 + $0xe8] sm:$0xff]
      %v2582 = vld [vmem:[%s11 + $0xf0] sm:$0xff]
      %v2583 = vld [vmem:[%s11 + $0xf8] sm:$0xff]
      %v2584 = vld [vmem:[%s11 + $0x100] sm:$0xff]
      %v2585 = vld [vmem:[%s11 + $0x108] sm:$0xff]
      %v2586 = vld [vmem:[%s11 + $0x110] sm:$0xff]
      %v2587 = vld [vmem:[%s11 + $0x118] sm:$0xff]
      %v2588 = vld [vmem:[%s11 + $0x120] sm:$0xff]
      %v2589 = vld [vmem:[%s11 + $0x128] sm:$0xff]
      %v2590 = vld [vmem:[%s11 + $0x130] sm:$0xff]
      %v2591 = vld [vmem:[%s11 + $0x138] sm:$0xff]
      %v2592 = vld [vmem:[%s11 + $0x140] sm:$0xff]
      %v2593 = vld [vmem:[%s11 + $0x148] sm:$0xff]
      %v2594 = vld [vmem:[%s11 + $0x150] sm:$0xff]
      %v2595 = vld [vmem:[%s11 + $0x158] sm:$0xff]
      %v2596 = vld [vmem:[%s11 + $0x160] sm:$0xff]
      %v2597 = vld [vmem:[%s11 + $0x168] sm:$0xff]
      %v2598 = vld [vmem:[%s11 + $0x170] sm:$0xff]
      %v2599 = vld [vmem:[%s11 + $0x178] sm:$0xff]
      %v2600 = vld [vmem:[%s11 + $0x180] sm:$0xff]
      %v2601 = vld [vmem:[%s11 + $0x188] sm:$0xff]
      %v2602 = vld [vmem:[%s11 + $0x190] sm:$0xff]
      %v2603 = vld [vmem:[%s11 + $0x198] sm:$0xff]
      %v2604 = vld [vmem:[%s11 + $0x1a0] sm:$0xff]
      %v2605 = vld [vmem:[%s11 + $0x1a8] sm:$0xff]
      %v2606 = vld [vmem:[%s11 + $0x1b0] sm:$0xff]
      %v2607 = vld [vmem:[%s11 + $0x1b8] sm:$0xff]
      %v2608 = vld [vmem:[%s11 + $0x1c0] sm:$0xff]
      %v2609 = vld [vmem:[%s11 + $0x1c8] sm:$0xff]
      %v2610 = vld [vmem:[%s11 + $0x1d0] sm:$0xff]
      %v2611 = vld [vmem:[%s11 + $0x1d8] sm:$0xff]
      %v2612 = vld [vmem:[%s11 + $0x1e0] sm:$0xff]
      %v2613 = vld [vmem:[%s11 + $0x1e8] sm:$0xff]
      %v2614 = vld [vmem:[%s11 + $0x1f0] sm:$0xff]
      %v2615 = vld [vmem:[%s11 + $0x1f8] sm:$0xff]
      %2616 = vmatprep.subr.mxu0 %v2553
      %2617 = vmatpush1.msra.mxu0 %v2552
      %2618 = vmatprep.subr.mxu0 %v2555
      %2619 = vmatpush1.msra.mxu0 %v2554
      %2620 = vmatprep.subr.mxu0 %v2557
      %2621 = vmatpush1.msra.mxu0 %v2556
      %2622 = vmatprep.subr.mxu0 %v2559
      %2623 = vmatpush1.msra.mxu0 %v2558
      %2624 = vmatprep.subr.mxu0 %v2561
      %2625 = vmatpush1.msra.mxu0 %v2560
      %2626 = vmatprep.subr.mxu0 %v2563
      %2627 = vmatpush1.msra.mxu0 %v2562
      %2628 = vmatprep.subr.mxu0 %v2565
      %2629 = vmatpush1.msra.mxu0 %v2564
      %2630 = vmatprep.subr.mxu0 %v2567
      %2631 = vmatpush1.msra.mxu0 %v2566
      %2632 = vmatprep.subr.mxu0 %v2569
      %2633 = vmatpush1.msra.mxu0 %v2568
      %2634 = vmatprep.subr.mxu0 %v2571
      %2635 = vmatpush1.msra.mxu0 %v2570
      %2636 = vmatprep.subr.mxu0 %v2573
      %2637 = vmatpush1.msra.mxu0 %v2572
      %2638 = vmatprep.subr.mxu0 %v2575
      %2639 = vmatpush1.msra.mxu0 %v2574
      %2640 = vmatprep.subr.mxu0 %v2577
      %2641 = vmatpush1.msra.mxu0 %v2576
      %2642 = vmatprep.subr.mxu0 %v2579
      %2643 = vmatpush1.msra.mxu0 %v2578
      %2644 = vmatprep.subr.mxu0 %v2581
      %2645 = vmatpush1.msra.mxu0 %v2580
      %2646 = vmatprep.subr.mxu0 %v2583
      %2647 = vmatpush1.msra.mxu0 %v2582
      %2648 = vmatprep.subr.mxu0 %v2585
      %2649 = vmatpush1.msra.mxu0 %v2584
      %2650 = vmatprep.subr.mxu0 %v2587
      %2651 = vmatpush1.msra.mxu0 %v2586
      %2652 = vmatprep.subr.mxu0 %v2589
      %2653 = vmatpush1.msra.mxu0 %v2588
      %2654 = vmatprep.subr.mxu0 %v2591
      %2655 = vmatpush1.msra.mxu0 %v2590
      %2656 = vmatprep.subr.mxu0 %v2593
      %2657 = vmatpush1.msra.mxu0 %v2592
      %2658 = vmatprep.subr.mxu0 %v2595
      %2659 = vmatpush1.msra.mxu0 %v2594
      %2660 = vmatprep.subr.mxu0 %v2597
      %2661 = vmatpush1.msra.mxu0 %v2596
      %2662 = vmatprep.subr.mxu0 %v2599
      %2663 = vmatpush1.msra.mxu0 %v2598
      %2664 = vmatprep.subr.mxu0 %v2601
      %2665 = vmatpush1.msra.mxu0 %v2600
      %2666 = vmatprep.subr.mxu0 %v2603
      %2667 = vmatpush1.msra.mxu0 %v2602
      %2668 = vmatprep.subr.mxu0 %v2605
      %2669 = vmatpush1.msra.mxu0 %v2604
      %2670 = vmatprep.subr.mxu0 %v2607
      %2671 = vmatpush1.msra.mxu0 %v2606
      %2672 = vmatprep.subr.mxu0 %v2609
      %2673 = vmatpush1.msra.mxu0 %v2608
      %2674 = vmatprep.subr.mxu0 %v2611
      %2675 = vmatpush1.msra.mxu0 %v2610
      %2676 = vmatprep.subr.mxu0 %v2613
      %2677 = vmatpush1.msra.mxu0 %v2612
      %2678 = vmatprep.subr.mxu0 %v2615
      %2679 = vmatpush1.msra.mxu0 %v2614
      %2680 = vmatprep.mubr.f32.mxu0 %v2550
      %2681 = vmatmul.mubr.f32.gmra.mrb[0].mxu0 %v1088
      %v2682 = vpop.f32.mrb[0].mxu0
      %v2683 = vadd.f32 0.0, %v2682
      %v2684 = vpop.f32.mrb[0].mxu0
      %v2685 = vadd.f32 0.0, %v2684
      %2686 = vmatprep.mubr.f32.mxu0 %v2551
      %2687 = vmatmul.mubr.f32.gmra.mrb[0].mxu0 %v1089
      %v2688 = vpop.f32.mrb[0].mxu0
      %v2689 = vadd.f32 0.0, %v2688
      %v2690 = vpop.f32.mrb[0].mxu0
      %v2691 = vadd.f32 0.0, %v2690
      %2692 = vdwg.mxu0
      %2694 = vrot.lane.b32.xlu0 %v2683, 64
      %v2695 = vpop.permute.xlu0 %2694
      %vm2696 = vcmask 130048
      %v2697 = vsel %vm2696, %v2683, 0
      %v2699 = vsel %vm2696, %v2695, 0
      %2701 = vmatprep.subr.mxu0 0.0
      %2702 = vmatpush1.xpose.msra.mxu0 %v2699
      %2703 = vmatprep.subr.mxu0 0.0
      %2704 = vmatpush1.xpose.msra.mxu0 0.0
      %2705 = vmatprep.subr.mxu0 0.0
      %2706 = vmatpush1.xpose.msra.mxu0 0.0
      %2707 = vmatprep.subr.mxu0 0.0
      %2708 = vmatpush1.xpose.msra.mxu0 0.0
      %2709 = vmatprep.subr.mxu0 0.0
      %2710 = vmatpush1.xpose.msra.mxu0 0.0
      %2711 = vmatprep.subr.mxu0 0.0
      %2712 = vmatpush1.xpose.msra.mxu0 0.0
      %2713 = vmatprep.subr.mxu0 0.0
      %2714 = vmatpush1.xpose.msra.mxu0 0.0
      %2715 = vmatprep.subr.mxu0 0.0
      %2716 = vmatpush1.xpose.msra.mxu0 0.0
      %2717 = vmatprep.subr.mxu0 0.0
      %2718 = vmatpush1.xpose.msra.mxu0 0.0
      %2719 = vmatprep.subr.mxu0 0.0
      %2720 = vmatpush1.xpose.msra.mxu0 0.0
      %2721 = vmatprep.subr.mxu0 0.0
      %2722 = vmatpush1.xpose.msra.mxu0 0.0
      %2723 = vmatprep.subr.mxu0 0.0
      %2724 = vmatpush1.xpose.msra.mxu0 0.0
      %2725 = vmatprep.subr.mxu0 0.0
      %2726 = vmatpush1.xpose.msra.mxu0 0.0
      %2727 = vmatprep.subr.mxu0 0.0
      %2728 = vmatpush1.xpose.msra.mxu0 0.0
      %2729 = vmatprep.subr.mxu0 0.0
      %2730 = vmatpush1.xpose.msra.mxu0 0.0
      %2731 = vmatprep.subr.mxu0 0.0
      %2732 = vmatpush1.xpose.msra.mxu0 0.0
      %2733 = vmatprep.subr.mxu0 0.0
      %2734 = vmatpush1.xpose.msra.mxu0 0.0
      %2735 = vmatprep.subr.mxu0 0.0
      %2736 = vmatpush1.xpose.msra.mxu0 0.0
      %2737 = vmatprep.subr.mxu0 0.0
      %2738 = vmatpush1.xpose.msra.mxu0 0.0
      %2739 = vmatprep.subr.mxu0 0.0
      %2740 = vmatpush1.xpose.msra.mxu0 0.0
      %2741 = vmatprep.subr.mxu0 0.0
      %2742 = vmatpush1.xpose.msra.mxu0 0.0
      %2743 = vmatprep.subr.mxu0 0.0
      %2744 = vmatpush1.xpose.msra.mxu0 0.0
      %2745 = vmatprep.subr.mxu0 0.0
      %2746 = vmatpush1.xpose.msra.mxu0 0.0
      %2747 = vmatprep.subr.mxu0 0.0
      %2748 = vmatpush1.xpose.msra.mxu0 0.0
      %2749 = vmatprep.subr.mxu0 0.0
      %2750 = vmatpush1.xpose.msra.mxu0 0.0
      %2751 = vmatprep.subr.mxu0 0.0
      %2752 = vmatpush1.xpose.msra.mxu0 0.0
      %2753 = vmatprep.subr.mxu0 0.0
      %2754 = vmatpush1.xpose.msra.mxu0 0.0
      %2755 = vmatprep.subr.mxu0 0.0
      %2756 = vmatpush1.xpose.msra.mxu0 0.0
      %2757 = vmatprep.subr.mxu0 0.0
      %2758 = vmatpush1.xpose.msra.mxu0 0.0
      %2759 = vmatprep.subr.mxu0 0.0
      %2760 = vmatpush1.xpose.msra.mxu0 0.0
      %2761 = vmatprep.subr.mxu0 0.0
      %2762 = vmatpush1.xpose.msra.mxu0 0.0
      %2763 = vmatprep.subr.mxu0 0.0
      %2764 = vmatpush1.xpose.msra.mxu0 0.0
      %2765 = vmatprep.mubr.f32.mxu0 0.0
      %2766 = vmatmul.mubr.f32.gmra.mrb[0].mxu0 %v2697
      %v2767 = vpop.f32.mrb[0].mxu0
      %v2768 = vadd.f32 0.0, %v2767
      %v2769 = vpop.f32.mrb[0].mxu0
      %2770 = vdwg.mxu0
      %2772 = vrot.lane.b32.xlu0 %v2689, 64
      %v2773 = vpop.permute.xlu0 %2772
      %v2774 = vsel %vm2696, %v2689, 0
      %v2776 = vsel %vm2696, %v2773, 0
      %2778 = vmatprep.subr.mxu0 0.0
      %2779 = vmatpush1.xpose.msra.mxu0 %v2776
      %2780 = vmatprep.subr.mxu0 0.0
      %2781 = vmatpush1.xpose.msra.mxu0 0.0
      %2782 = vmatprep.subr.mxu0 0.0
      %2783 = vmatpush1.xpose.msra.mxu0 0.0
      %2784 = vmatprep.subr.mxu0 0.0
      %2785 = vmatpush1.xpose.msra.mxu0 0.0
      %2786 = vmatprep.subr.mxu0 0.0
      %2787 = vmatpush1.xpose.msra.mxu0 0.0
      %2788 = vmatprep.subr.mxu0 0.0
      %2789 = vmatpush1.xpose.msra.mxu0 0.0
      %2790 = vmatprep.subr.mxu0 0.0
      %2791 = vmatpush1.xpose.msra.mxu0 0.0
      %2792 = vmatprep.subr.mxu0 0.0
      %2793 = vmatpush1.xpose.msra.mxu0 0.0
      %2794 = vmatprep.subr.mxu0 0.0
      %2795 = vmatpush1.xpose.msra.mxu0 0.0
      %2796 = vmatprep.subr.mxu0 0.0
      %2797 = vmatpush1.xpose.msra.mxu0 0.0
      %2798 = vmatprep.subr.mxu0 0.0
      %2799 = vmatpush1.xpose.msra.mxu0 0.0
      %2800 = vmatprep.subr.mxu0 0.0
      %2801 = vmatpush1.xpose.msra.mxu0 0.0
      %2802 = vmatprep.subr.mxu0 0.0
      %2803 = vmatpush1.xpose.msra.mxu0 0.0
      %2804 = vmatprep.subr.mxu0 0.0
      %2805 = vmatpush1.xpose.msra.mxu0 0.0
      %2806 = vmatprep.subr.mxu0 0.0
      %2807 = vmatpush1.xpose.msra.mxu0 0.0
      %2808 = vmatprep.subr.mxu0 0.0
      %2809 = vmatpush1.xpose.msra.mxu0 0.0
      %2810 = vmatprep.subr.mxu0 0.0
      %2811 = vmatpush1.xpose.msra.mxu0 0.0
      %2812 = vmatprep.subr.mxu0 0.0
      %2813 = vmatpush1.xpose.msra.mxu0 0.0
      %2814 = vmatprep.subr.mxu0 0.0
      %2815 = vmatpush1.xpose.msra.mxu0 0.0
      %2816 = vmatprep.subr.mxu0 0.0
      %2817 = vmatpush1.xpose.msra.mxu0 0.0
      %2818 = vmatprep.subr.mxu0 0.0
      %2819 = vmatpush1.xpose.msra.mxu0 0.0
      %2820 = vmatprep.subr.mxu0 0.0
      %2821 = vmatpush1.xpose.msra.mxu0 0.0
      %2822 = vmatprep.subr.mxu0 0.0
      %2823 = vmatpush1.xpose.msra.mxu0 0.0
      %2824 = vmatprep.subr.mxu0 0.0
      %2825 = vmatpush1.xpose.msra.mxu0 0.0
      %2826 = vmatprep.subr.mxu0 0.0
      %2827 = vmatpush1.xpose.msra.mxu0 0.0
      %2828 = vmatprep.subr.mxu0 0.0
      %2829 = vmatpush1.xpose.msra.mxu0 0.0
      %2830 = vmatprep.subr.mxu0 0.0
      %2831 = vmatpush1.xpose.msra.mxu0 0.0
      %2832 = vmatprep.subr.mxu0 0.0
      %2833 = vmatpush1.xpose.msra.mxu0 0.0
      %2834 = vmatprep.subr.mxu0 0.0
      %2835 = vmatpush1.xpose.msra.mxu0 0.0
      %2836 = vmatprep.subr.mxu0 0.0
      %2837 = vmatpush1.xpose.msra.mxu0 0.0
      %2838 = vmatprep.subr.mxu0 0.0
      %2839 = vmatpush1.xpose.msra.mxu0 0.0
      %2840 = vmatprep.subr.mxu0 0.0
      %2841 = vmatpush1.xpose.msra.mxu0 0.0
      %2842 = vmatprep.mubr.f32.mxu0 0.0
      %2843 = vmatmul.mubr.f32.gmra.mrb[0].mxu0 %v2774
      %v2844 = vpop.f32.mrb[0].mxu0
      %v2845 = vadd.f32 0.0, %v2844
      %v2846 = vpop.f32.mrb[0].mxu0
      %2847 = vdwg.mxu0
      %v2848 = vmul.f32 %v2768, 0.25
      %v2849 = vmul.f32 %v2845, 0.25
      %vm2850 = vcmp.gt.f32.partialorder %v879, 0.0
      %vm2851 = vcmp.gt.f32.partialorder %v880, 0.0
      %v2852 = vsel %vm2850, 1, 0
      %v2853 = vsel %vm2851, 1, 0
      %v2854 = vlaneseq
      %v2855 = vshrl.u32 %v2854, 7
      %v2856 = vsub.s32 0, %v2855
      %v2857 = vrot.slane %v2852, %v2856
      %v2858 = vlaneseq
      %v2859 = vshrl.u32 %v2858, 7
      %v2860 = vsub.s32 0, %v2859
      %v2861 = vrot.slane %v2853, %v2860
      %vm2862 = vcmp.eq.s32.totalorder %v2857, 1
      %vm2863 = vcmp.eq.s32.totalorder %v2861, 1
      %v2864 = vsel %vm2862, %v2848, -1e+30
      %v2865 = vsel %vm2863, %v2849, -1e+30
      %v2866 = vsel %vm1505, %v2864, -inf
      %2867 = vmax.xlane.f32.xlu0 %v2866
      %v2868 = vpop.xlane.xlu0 %2867
      %v2869 = vsel %vm1505, %v2865, -inf
      %2870 = vmax.xlane.f32.xlu0 %v2869
      %v2871 = vpop.xlane.xlu0 %2870
      %v2872 = vsub.f32 %v2864, %v2868
      %v2873 = vsub.f32 %v2865, %v2871
      %v2874 = vmul.f32 %v2872, 1.442695
      %v2875 = vpow.pop %v2874
      %v2876 = vmul.f32 %v2873, 1.442695
      %v2877 = vpow.pop %v2876
      %v2878 = vsel %vm1505, %v2875, 0.0
      %2879 = vadd.xlane.f32.xlu0 %v2878
      %v2880 = vpop.xlane.xlu0 %2879
      %v2881 = vsel %vm1505, %v2877, 0.0
      %2882 = vadd.xlane.f32.xlu0 %v2881
      %v2883 = vpop.xlane.xlu0 %2882
      %v2884 = vrcp.pop %v2880
      %v2885 = vrcp.pop %v2883
      %v2886 = vmul.f32 %v2875, %v2884
      %v2887 = vmul.f32 %v2877, %v2885
      %v2889 = vsel %vm1505, %v2886, 0
      %2891 = vmatprep.subr.mxu0 0.0
      %2892 = vmatpush1.msra.mxu0 %v2685
      %2893 = vmatprep.subr.mxu0 0.0
      %2894 = vmatpush1.msra.mxu0 0.0
      %2895 = vmatprep.subr.mxu0 0.0
      %2896 = vmatpush1.msra.mxu0 0.0
      %2897 = vmatprep.subr.mxu0 0.0
      %2898 = vmatpush1.msra.mxu0 0.0
      %2899 = vmatprep.subr.mxu0 0.0
      %2900 = vmatpush1.msra.mxu0 0.0
      %2901 = vmatprep.subr.mxu0 0.0
      %2902 = vmatpush1.msra.mxu0 0.0
      %2903 = vmatprep.subr.mxu0 0.0
      %2904 = vmatpush1.msra.mxu0 0.0
      %2905 = vmatprep.subr.mxu0 0.0
      %2906 = vmatpush1.msra.mxu0 0.0
      %2907 = vmatprep.subr.mxu0 0.0
      %2908 = vmatpush1.msra.mxu0 0.0
      %2909 = vmatprep.subr.mxu0 0.0
      %2910 = vmatpush1.msra.mxu0 0.0
      %2911 = vmatprep.subr.mxu0 0.0
      %2912 = vmatpush1.msra.mxu0 0.0
      %2913 = vmatprep.subr.mxu0 0.0
      %2914 = vmatpush1.msra.mxu0 0.0
      %2915 = vmatprep.subr.mxu0 0.0
      %2916 = vmatpush1.msra.mxu0 0.0
      %2917 = vmatprep.subr.mxu0 0.0
      %2918 = vmatpush1.msra.mxu0 0.0
      %2919 = vmatprep.subr.mxu0 0.0
      %2920 = vmatpush1.msra.mxu0 0.0
      %2921 = vmatprep.subr.mxu0 0.0
      %2922 = vmatpush1.msra.mxu0 0.0
      %2923 = vmatprep.subr.mxu0 0.0
      %2924 = vmatpush1.msra.mxu0 0.0
      %2925 = vmatprep.subr.mxu0 0.0
      %2926 = vmatpush1.msra.mxu0 0.0
      %2927 = vmatprep.subr.mxu0 0.0
      %2928 = vmatpush1.msra.mxu0 0.0
      %2929 = vmatprep.subr.mxu0 0.0
      %2930 = vmatpush1.msra.mxu0 0.0
      %2931 = vmatprep.subr.mxu0 0.0
      %2932 = vmatpush1.msra.mxu0 0.0
      %2933 = vmatprep.subr.mxu0 0.0
      %2934 = vmatpush1.msra.mxu0 0.0
      %2935 = vmatprep.subr.mxu0 0.0
      %2936 = vmatpush1.msra.mxu0 0.0
      %2937 = vmatprep.subr.mxu0 0.0
      %2938 = vmatpush1.msra.mxu0 0.0
      %2939 = vmatprep.subr.mxu0 0.0
      %2940 = vmatpush1.msra.mxu0 0.0
      %2941 = vmatprep.subr.mxu0 0.0
      %2942 = vmatpush1.msra.mxu0 0.0
      %2943 = vmatprep.subr.mxu0 0.0
      %2944 = vmatpush1.msra.mxu0 0.0
      %2945 = vmatprep.subr.mxu0 0.0
      %2946 = vmatpush1.msra.mxu0 0.0
      %2947 = vmatprep.subr.mxu0 0.0
      %2948 = vmatpush1.msra.mxu0 0.0
      %2949 = vmatprep.subr.mxu0 0.0
      %2950 = vmatpush1.msra.mxu0 0.0
      %2951 = vmatprep.subr.mxu0 0.0
      %2952 = vmatpush1.msra.mxu0 0.0
      %2953 = vmatprep.subr.mxu0 0.0
      %2954 = vmatpush1.msra.mxu0 0.0
      %2955 = vmatprep.mubr.f32.mxu0 0.0
      %2956 = vmatmul.mubr.f32.gmra.mrb[0].mxu0 %v2889
      %v2957 = vpop.f32.mrb[0].mxu0
      %v2958 = vadd.f32 0.0, %v2957
      %v2959 = vpop.f32.mrb[0].mxu0
      %2960 = vdwg.mxu0
      %v2962 = vsel %vm1505, %v2887, 0
      %2964 = vmatprep.subr.mxu0 0.0
      %2965 = vmatpush1.msra.mxu0 %v2691
      %2966 = vmatprep.subr.mxu0 0.0
      %2967 = vmatpush1.msra.mxu0 0.0
      %2968 = vmatprep.subr.mxu0 0.0
      %2969 = vmatpush1.msra.mxu0 0.0
      %2970 = vmatprep.subr.mxu0 0.0
      %2971 = vmatpush1.msra.mxu0 0.0
      %2972 = vmatprep.subr.mxu0 0.0
      %2973 = vmatpush1.msra.mxu0 0.0
      %2974 = vmatprep.subr.mxu0 0.0
      %2975 = vmatpush1.msra.mxu0 0.0
      %2976 = vmatprep.subr.mxu0 0.0
      %2977 = vmatpush1.msra.mxu0 0.0
      %2978 = vmatprep.subr.mxu0 0.0
      %2979 = vmatpush1.msra.mxu0 0.0
      %2980 = vmatprep.subr.mxu0 0.0
      %2981 = vmatpush1.msra.mxu0 0.0
      %2982 = vmatprep.subr.mxu0 0.0
      %2983 = vmatpush1.msra.mxu0 0.0
      %2984 = vmatprep.subr.mxu0 0.0
      %2985 = vmatpush1.msra.mxu0 0.0
      %2986 = vmatprep.subr.mxu0 0.0
      %2987 = vmatpush1.msra.mxu0 0.0
      %2988 = vmatprep.subr.mxu0 0.0
      %2989 = vmatpush1.msra.mxu0 0.0
      %2990 = vmatprep.subr.mxu0 0.0
      %2991 = vmatpush1.msra.mxu0 0.0
      %2992 = vmatprep.subr.mxu0 0.0
      %2993 = vmatpush1.msra.mxu0 0.0
      %2994 = vmatprep.subr.mxu0 0.0
      %2995 = vmatpush1.msra.mxu0 0.0
      %2996 = vmatprep.subr.mxu0 0.0
      %2997 = vmatpush1.msra.mxu0 0.0
      %2998 = vmatprep.subr.mxu0 0.0
      %2999 = vmatpush1.msra.mxu0 0.0
      %3000 = vmatprep.subr.mxu0 0.0
      %3001 = vmatpush1.msra.mxu0 0.0
      %3002 = vmatprep.subr.mxu0 0.0
      %3003 = vmatpush1.msra.mxu0 0.0
      %3004 = vmatprep.subr.mxu0 0.0
      %3005 = vmatpush1.msra.mxu0 0.0
      %3006 = vmatprep.subr.mxu0 0.0
      %3007 = vmatpush1.msra.mxu0 0.0
      %3008 = vmatprep.subr.mxu0 0.0
      %3009 = vmatpush1.msra.mxu0 0.0
      %3010 = vmatprep.subr.mxu0 0.0
      %3011 = vmatpush1.msra.mxu0 0.0
      %3012 = vmatprep.subr.mxu0 0.0
      %3013 = vmatpush1.msra.mxu0 0.0
      %3014 = vmatprep.subr.mxu0 0.0
      %3015 = vmatpush1.msra.mxu0 0.0
      %3016 = vmatprep.subr.mxu0 0.0
      %3017 = vmatpush1.msra.mxu0 0.0
      %3018 = vmatprep.subr.mxu0 0.0
      %3019 = vmatpush1.msra.mxu0 0.0
      %3020 = vmatprep.subr.mxu0 0.0
      %3021 = vmatpush1.msra.mxu0 0.0
      %3022 = vmatprep.subr.mxu0 0.0
      %3023 = vmatpush1.msra.mxu0 0.0
      %3024 = vmatprep.subr.mxu0 0.0
      %3025 = vmatpush1.msra.mxu0 0.0
      %3026 = vmatprep.subr.mxu0 0.0
      %3027 = vmatpush1.msra.mxu0 0.0
      %3028 = vmatprep.mubr.f32.mxu0 0.0
      %3029 = vmatmul.mubr.f32.gmra.mrb[0].mxu0 %v2962
      %v3030 = vpop.f32.mrb[0].mxu0
      %v3031 = vadd.f32 0.0, %v3030
      %v3032 = vpop.f32.mrb[0].mxu0
      %3033 = vdwg.mxu0
      %3034 = vrot.lane.b32.xlu0 %v2683, 112
      %v3035 = vpop.permute.xlu0 %3034
      %3036 = vrot.lane.b32.xlu0 %v2683, 48
      %v3037 = vpop.permute.xlu0 %3036
      %v3038 = vsel %vm2696, %v3035, 0
      %v3040 = vsel %vm2696, %v3037, 0
      %3042 = vmatprep.subr.mxu0 0.0
      %3043 = vmatpush1.xpose.msra.mxu0 %v3040
      %3044 = vmatprep.subr.mxu0 0.0
      %3045 = vmatpush1.xpose.msra.mxu0 0.0
      %3046 = vmatprep.subr.mxu0 0.0
      %3047 = vmatpush1.xpose.msra.mxu0 0.0
      %3048 = vmatprep.subr.mxu0 0.0
      %3049 = vmatpush1.xpose.msra.mxu0 0.0
      %3050 = vmatprep.subr.mxu0 0.0
      %3051 = vmatpush1.xpose.msra.mxu0 0.0
      %3052 = vmatprep.subr.mxu0 0.0
      %3053 = vmatpush1.xpose.msra.mxu0 0.0
      %3054 = vmatprep.subr.mxu0 0.0
      %3055 = vmatpush1.xpose.msra.mxu0 0.0
      %3056 = vmatprep.subr.mxu0 0.0
      %3057 = vmatpush1.xpose.msra.mxu0 0.0
      %3058 = vmatprep.subr.mxu0 0.0
      %3059 = vmatpush1.xpose.msra.mxu0 0.0
      %3060 = vmatprep.subr.mxu0 0.0
      %3061 = vmatpush1.xpose.msra.mxu0 0.0
      %3062 = vmatprep.subr.mxu0 0.0
      %3063 = vmatpush1.xpose.msra.mxu0 0.0
      %3064 = vmatprep.subr.mxu0 0.0
      %3065 = vmatpush1.xpose.msra.mxu0 0.0
      %3066 = vmatprep.subr.mxu0 0.0
      %3067 = vmatpush1.xpose.msra.mxu0 0.0
      %3068 = vmatprep.subr.mxu0 0.0
      %3069 = vmatpush1.xpose.msra.mxu0 0.0
      %3070 = vmatprep.subr.mxu0 0.0
      %3071 = vmatpush1.xpose.msra.mxu0 0.0
      %3072 = vmatprep.subr.mxu0 0.0
      %3073 = vmatpush1.xpose.msra.mxu0 0.0
      %3074 = vmatprep.subr.mxu0 0.0
      %3075 = vmatpush1.xpose.msra.mxu0 0.0
      %3076 = vmatprep.subr.mxu0 0.0
      %3077 = vmatpush1.xpose.msra.mxu0 0.0
      %3078 = vmatprep.subr.mxu0 0.0
      %3079 = vmatpush1.xpose.msra.mxu0 0.0
      %3080 = vmatprep.subr.mxu0 0.0
      %3081 = vmatpush1.xpose.msra.mxu0 0.0
      %3082 = vmatprep.subr.mxu0 0.0
      %3083 = vmatpush1.xpose.msra.mxu0 0.0
      %3084 = vmatprep.subr.mxu0 0.0
      %3085 = vmatpush1.xpose.msra.mxu0 0.0
      %3086 = vmatprep.subr.mxu0 0.0
      %3087 = vmatpush1.xpose.msra.mxu0 0.0
      %3088 = vmatprep.subr.mxu0 0.0
      %3089 = vmatpush1.xpose.msra.mxu0 0.0
      %3090 = vmatprep.subr.mxu0 0.0
      %3091 = vmatpush1.xpose.msra.mxu0 0.0
      %3092 = vmatprep.subr.mxu0 0.0
      %3093 = vmatpush1.xpose.msra.mxu0 0.0
      %3094 = vmatprep.subr.mxu0 0.0
      %3095 = vmatpush1.xpose.msra.mxu0 0.0
      %3096 = vmatprep.subr.mxu0 0.0
      %3097 = vmatpush1.xpose.msra.mxu0 0.0
      %3098 = vmatprep.subr.mxu0 0.0
      %3099 = vmatpush1.xpose.msra.mxu0 0.0
      %3100 = vmatprep.subr.mxu0 0.0
      %3101 = vmatpush1.xpose.msra.mxu0 0.0
      %3102 = vmatprep.subr.mxu0 0.0
      %3103 = vmatpush1.xpose.msra.mxu0 0.0
      %3104 = vmatprep.subr.mxu0 0.0
      %3105 = vmatpush1.xpose.msra.mxu0 0.0
      %3106 = vmatprep.mubr.f32.mxu0 0.0
      %3107 = vmatmul.mubr.f32.gmra.mrb[0].mxu0 %v3038
      %v3108 = vpop.f32.mrb[0].mxu0
      %v3109 = vadd.f32 0.0, %v3108
      %v3110 = vpop.f32.mrb[0].mxu0
      %3111 = vdwg.mxu0
      %3112 = vrot.lane.b32.xlu0 %v2689, 112
      %v3113 = vpop.permute.xlu0 %3112
      %3114 = vrot.lane.b32.xlu0 %v2689, 48
      %v3115 = vpop.permute.xlu0 %3114
      %v3116 = vsel %vm2696, %v3113, 0
      %v3118 = vsel %vm2696, %v3115, 0
      %3120 = vmatprep.subr.mxu0 0.0
      %3121 = vmatpush1.xpose.msra.mxu0 %v3118
      %3122 = vmatprep.subr.mxu0 0.0
      %3123 = vmatpush1.xpose.msra.mxu0 0.0
      %3124 = vmatprep.subr.mxu0 0.0
      %3125 = vmatpush1.xpose.msra.mxu0 0.0
      %3126 = vmatprep.subr.mxu0 0.0
      %3127 = vmatpush1.xpose.msra.mxu0 0.0
      %3128 = vmatprep.subr.mxu0 0.0
      %3129 = vmatpush1.xpose.msra.mxu0 0.0
      %3130 = vmatprep.subr.mxu0 0.0
      %3131 = vmatpush1.xpose.msra.mxu0 0.0
      %3132 = vmatprep.subr.mxu0 0.0
      %3133 = vmatpush1.xpose.msra.mxu0 0.0
      %3134 = vmatprep.subr.mxu0 0.0
      %3135 = vmatpush1.xpose.msra.mxu0 0.0
      %3136 = vmatprep.subr.mxu0 0.0
      %3137 = vmatpush1.xpose.msra.mxu0 0.0
      %3138 = vmatprep.subr.mxu0 0.0
      %3139 = vmatpush1.xpose.msra.mxu0 0.0
      %3140 = vmatprep.subr.mxu0 0.0
      %3141 = vmatpush1.xpose.msra.mxu0 0.0
      %3142 = vmatprep.subr.mxu0 0.0
      %3143 = vmatpush1.xpose.msra.mxu0 0.0
      %3144 = vmatprep.subr.mxu0 0.0
      %3145 = vmatpush1.xpose.msra.mxu0 0.0
      %3146 = vmatprep.subr.mxu0 0.0
      %3147 = vmatpush1.xpose.msra.mxu0 0.0
      %3148 = vmatprep.subr.mxu0 0.0
      %3149 = vmatpush1.xpose.msra.mxu0 0.0
      %3150 = vmatprep.subr.mxu0 0.0
      %3151 = vmatpush1.xpose.msra.mxu0 0.0
      %3152 = vmatprep.subr.mxu0 0.0
      %3153 = vmatpush1.xpose.msra.mxu0 0.0
      %3154 = vmatprep.subr.mxu0 0.0
      %3155 = vmatpush1.xpose.msra.mxu0 0.0
      %3156 = vmatprep.subr.mxu0 0.0
      %3157 = vmatpush1.xpose.msra.mxu0 0.0
      %3158 = vmatprep.subr.mxu0 0.0
      %3159 = vmatpush1.xpose.msra.mxu0 0.0
      %3160 = vmatprep.subr.mxu0 0.0
      %3161 = vmatpush1.xpose.msra.mxu0 0.0
      %3162 = vmatprep.subr.mxu0 0.0
      %3163 = vmatpush1.xpose.msra.mxu0 0.0
      %3164 = vmatprep.subr.mxu0 0.0
      %3165 = vmatpush1.xpose.msra.mxu0 0.0
      %3166 = vmatprep.subr.mxu0 0.0
      %3167 = vmatpush1.xpose.msra.mxu0 0.0
      %3168 = vmatprep.subr.mxu0 0.0
      %3169 = vmatpush1.xpose.msra.mxu0 0.0
      %3170 = vmatprep.subr.mxu0 0.0
      %3171 = vmatpush1.xpose.msra.mxu0 0.0
      %3172 = vmatprep.subr.mxu0 0.0
      %3173 = vmatpush1.xpose.msra.mxu0 0.0
      %3174 = vmatprep.subr.mxu0 0.0
      %3175 = vmatpush1.xpose.msra.mxu0 0.0
      %3176 = vmatprep.subr.mxu0 0.0
      %3177 = vmatpush1.xpose.msra.mxu0 0.0
      %3178 = vmatprep.subr.mxu0 0.0
      %3179 = vmatpush1.xpose.msra.mxu0 0.0
      %3180 = vmatprep.subr.mxu0 0.0
      %3181 = vmatpush1.xpose.msra.mxu0 0.0
      %3182 = vmatprep.subr.mxu0 0.0
      %3183 = vmatpush1.xpose.msra.mxu0 0.0
      %3184 = vmatprep.mubr.f32.mxu0 0.0
      %3185 = vmatmul.mubr.f32.gmra.mrb[0].mxu0 %v3116
      %v3186 = vpop.f32.mrb[0].mxu0
      %v3187 = vadd.f32 0.0, %v3186
      %v3188 = vpop.f32.mrb[0].mxu0
      %3189 = vdwg.mxu0
      %v3190 = vmul.f32 %v3109, 0.25
      %v3191 = vmul.f32 %v3187, 0.25
      %v3192 = vsel %vm2862, %v3190, -1e+30
      %v3193 = vsel %vm2863, %v3191, -1e+30
      %v3194 = vsel %vm1505, %v3192, -inf
      %3195 = vmax.xlane.f32.xlu0 %v3194
      %v3196 = vpop.xlane.xlu0 %3195
      %v3197 = vsel %vm1505, %v3193, -inf
      %3198 = vmax.xlane.f32.xlu0 %v3197
      %v3199 = vpop.xlane.xlu0 %3198
      %v3200 = vsub.f32 %v3192, %v3196
      %v3201 = vsub.f32 %v3193, %v3199
      %v3202 = vmul.f32 %v3200, 1.442695
      %v3203 = vpow.pop %v3202
      %v3204 = vmul.f32 %v3201, 1.442695
      %v3205 = vpow.pop %v3204
      %v3206 = vsel %vm1505, %v3203, 0.0
      %3207 = vadd.xlane.f32.xlu0 %v3206
      %v3208 = vpop.xlane.xlu0 %3207
      %v3209 = vsel %vm1505, %v3205, 0.0
      %3210 = vadd.xlane.f32.xlu0 %v3209
      %v3211 = vpop.xlane.xlu0 %3210
      %v3212 = vrcp.pop %v3208
      %v3213 = vrcp.pop %v3211
      %v3214 = vmul.f32 %v3203, %v3212
      %v3215 = vmul.f32 %v3205, %v3213
      %3217 = vrot.lane.b32.xlu0 %v2685, 112
      %v3218 = vpop.permute.xlu0 %3217
      %v3221 = vsel %vm1505, %v3214, 0
      %3223 = vmatprep.subr.mxu0 0.0
      %3224 = vmatpush1.msra.mxu0 %v3218
      %3225 = vmatprep.subr.mxu0 0.0
      %3226 = vmatpush1.msra.mxu0 0.0
      %3227 = vmatprep.subr.mxu0 0.0
      %3228 = vmatpush1.msra.mxu0 0.0
      %3229 = vmatprep.subr.mxu0 0.0
      %3230 = vmatpush1.msra.mxu0 0.0
      %3231 = vmatprep.subr.mxu0 0.0
      %3232 = vmatpush1.msra.mxu0 0.0
      %3233 = vmatprep.subr.mxu0 0.0
      %3234 = vmatpush1.msra.mxu0 0.0
      %3235 = vmatprep.subr.mxu0 0.0
      %3236 = vmatpush1.msra.mxu0 0.0
      %3237 = vmatprep.subr.mxu0 0.0
      %3238 = vmatpush1.msra.mxu0 0.0
      %3239 = vmatprep.subr.mxu0 0.0
      %3240 = vmatpush1.msra.mxu0 0.0
      %3241 = vmatprep.subr.mxu0 0.0
      %3242 = vmatpush1.msra.mxu0 0.0
      %3243 = vmatprep.subr.mxu0 0.0
      %3244 = vmatpush1.msra.mxu0 0.0
      %3245 = vmatprep.subr.mxu0 0.0
      %3246 = vmatpush1.msra.mxu0 0.0
      %3247 = vmatprep.subr.mxu0 0.0
      %3248 = vmatpush1.msra.mxu0 0.0
      %3249 = vmatprep.subr.mxu0 0.0
      %3250 = vmatpush1.msra.mxu0 0.0
      %3251 = vmatprep.subr.mxu0 0.0
      %3252 = vmatpush1.msra.mxu0 0.0
      %3253 = vmatprep.subr.mxu0 0.0
      %3254 = vmatpush1.msra.mxu0 0.0
      %3255 = vmatprep.subr.mxu0 0.0
      %3256 = vmatpush1.msra.mxu0 0.0
      %3257 = vmatprep.subr.mxu0 0.0
      %3258 = vmatpush1.msra.mxu0 0.0
      %3259 = vmatprep.subr.mxu0 0.0
      %3260 = vmatpush1.msra.mxu0 0.0
      %3261 = vmatprep.subr.mxu0 0.0
      %3262 = vmatpush1.msra.mxu0 0.0
      %3263 = vmatprep.subr.mxu0 0.0
      %3264 = vmatpush1.msra.mxu0 0.0
      %3265 = vmatprep.subr.mxu0 0.0
      %3266 = vmatpush1.msra.mxu0 0.0
      %3267 = vmatprep.subr.mxu0 0.0
      %3268 = vmatpush1.msra.mxu0 0.0
      %3269 = vmatprep.subr.mxu0 0.0
      %3270 = vmatpush1.msra.mxu0 0.0
      %3271 = vmatprep.subr.mxu0 0.0
      %3272 = vmatpush1.msra.mxu0 0.0
      %3273 = vmatprep.subr.mxu0 0.0
      %3274 = vmatpush1.msra.mxu0 0.0
      %3275 = vmatprep.subr.mxu0 0.0
      %3276 = vmatpush1.msra.mxu0 0.0
      %3277 = vmatprep.subr.mxu0 0.0
      %3278 = vmatpush1.msra.mxu0 0.0
      %3279 = vmatprep.subr.mxu0 0.0
      %3280 = vmatpush1.msra.mxu0 0.0
      %3281 = vmatprep.subr.mxu0 0.0
      %3282 = vmatpush1.msra.mxu0 0.0
      %3283 = vmatprep.subr.mxu0 0.0
      %3284 = vmatpush1.msra.mxu0 0.0
      %3285 = vmatprep.subr.mxu0 0.0
      %3286 = vmatpush1.msra.mxu0 0.0
      %3287 = vmatprep.mubr.f32.mxu0 0.0
      %3288 = vmatmul.mubr.f32.gmra.mrb[0].mxu0 %v3221
      %v3289 = vpop.f32.mrb[0].mxu0
      %v3290 = vadd.f32 0.0, %v3289
      %v3291 = vpop.f32.mrb[0].mxu0
      %3292 = vdwg.mxu0
      %3294 = vrot.lane.b32.xlu0 %v2691, 112
      %v3295 = vpop.permute.xlu0 %3294
      %v3298 = vsel %vm1505, %v3215, 0
      %3300 = vmatprep.subr.mxu0 0.0
      %3301 = vmatpush1.msra.mxu0 %v3295
      %3302 = vmatprep.subr.mxu0 0.0
      %3303 = vmatpush1.msra.mxu0 0.0
      %3304 = vmatprep.subr.mxu0 0.0
      %3305 = vmatpush1.msra.mxu0 0.0
      %3306 = vmatprep.subr.mxu0 0.0
      %3307 = vmatpush1.msra.mxu0 0.0
      %3308 = vmatprep.subr.mxu0 0.0
      %3309 = vmatpush1.msra.mxu0 0.0
      %3310 = vmatprep.subr.mxu0 0.0
      %3311 = vmatpush1.msra.mxu0 0.0
      %3312 = vmatprep.subr.mxu0 0.0
      %3313 = vmatpush1.msra.mxu0 0.0
      %3314 = vmatprep.subr.mxu0 0.0
      %3315 = vmatpush1.msra.mxu0 0.0
      %3316 = vmatprep.subr.mxu0 0.0
      %3317 = vmatpush1.msra.mxu0 0.0
      %3318 = vmatprep.subr.mxu0 0.0
      %3319 = vmatpush1.msra.mxu0 0.0
      %3320 = vmatprep.subr.mxu0 0.0
      %3321 = vmatpush1.msra.mxu0 0.0
      %3322 = vmatprep.subr.mxu0 0.0
      %3323 = vmatpush1.msra.mxu0 0.0
      %3324 = vmatprep.subr.mxu0 0.0
      %3325 = vmatpush1.msra.mxu0 0.0
      %3326 = vmatprep.subr.mxu0 0.0
      %3327 = vmatpush1.msra.mxu0 0.0
      %3328 = vmatprep.subr.mxu0 0.0
      %3329 = vmatpush1.msra.mxu0 0.0
      %3330 = vmatprep.subr.mxu0 0.0
      %3331 = vmatpush1.msra.mxu0 0.0
      %3332 = vmatprep.subr.mxu0 0.0
      %3333 = vmatpush1.msra.mxu0 0.0
      %3334 = vmatprep.subr.mxu0 0.0
      %3335 = vmatpush1.msra.mxu0 0.0
      %3336 = vmatprep.subr.mxu0 0.0
      %3337 = vmatpush1.msra.mxu0 0.0
      %3338 = vmatprep.subr.mxu0 0.0
      %3339 = vmatpush1.msra.mxu0 0.0
      %3340 = vmatprep.subr.mxu0 0.0
      %3341 = vmatpush1.msra.mxu0 0.0
      %3342 = vmatprep.subr.mxu0 0.0
      %3343 = vmatpush1.msra.mxu0 0.0
      %3344 = vmatprep.subr.mxu0 0.0
      %3345 = vmatpush1.msra.mxu0 0.0
      %3346 = vmatprep.subr.mxu0 0.0
      %3347 = vmatpush1.msra.mxu0 0.0
      %3348 = vmatprep.subr.mxu0 0.0
      %3349 = vmatpush1.msra.mxu0 0.0
      %3350 = vmatprep.subr.mxu0 0.0
      %3351 = vmatpush1.msra.mxu0 0.0
      %3352 = vmatprep.subr.mxu0 0.0
      %3353 = vmatpush1.msra.mxu0 0.0
      %3354 = vmatprep.subr.mxu0 0.0
      %3355 = vmatpush1.msra.mxu0 0.0
      %3356 = vmatprep.subr.mxu0 0.0
      %3357 = vmatpush1.msra.mxu0 0.0
      %3358 = vmatprep.subr.mxu0 0.0
      %3359 = vmatpush1.msra.mxu0 0.0
      %3360 = vmatprep.subr.mxu0 0.0
      %3361 = vmatpush1.msra.mxu0 0.0
      %3362 = vmatprep.subr.mxu0 0.0
      %3363 = vmatpush1.msra.mxu0 0.0
      %3364 = vmatprep.mubr.f32.mxu0 0.0
      %3365 = vmatmul.mubr.f32.gmra.mrb[0].mxu0 %v3298
      %v3366 = vpop.f32.mrb[0].mxu0
      %v3367 = vadd.f32 0.0, %v3366
      %v3368 = vpop.f32.mrb[0].mxu0
      %3369 = vdwg.mxu0
      %3370 = vrot.lane.b32.xlu0 %v2683, 96
      %v3371 = vpop.permute.xlu0 %3370
      %3372 = vrot.lane.b32.xlu0 %v2683, 32
      %v3373 = vpop.permute.xlu0 %3372
      %v3374 = vsel %vm2696, %v3371, 0
      %v3376 = vsel %vm2696, %v3373, 0
      %3378 = vmatprep.subr.mxu0 0.0
      %3379 = vmatpush1.xpose.msra.mxu0 %v3376
      %3380 = vmatprep.subr.mxu0 0.0
      %3381 = vmatpush1.xpose.msra.mxu0 0.0
      %3382 = vmatprep.subr.mxu0 0.0
      %3383 = vmatpush1.xpose.msra.mxu0 0.0
      %3384 = vmatprep.subr.mxu0 0.0
      %3385 = vmatpush1.xpose.msra.mxu0 0.0
      %3386 = vmatprep.subr.mxu0 0.0
      %3387 = vmatpush1.xpose.msra.mxu0 0.0
      %3388 = vmatprep.subr.mxu0 0.0
      %3389 = vmatpush1.xpose.msra.mxu0 0.0
      %3390 = vmatprep.subr.mxu0 0.0
      %3391 = vmatpush1.xpose.msra.mxu0 0.0
      %3392 = vmatprep.subr.mxu0 0.0
      %3393 = vmatpush1.xpose.msra.mxu0 0.0
      %3394 = vmatprep.subr.mxu0 0.0
      %3395 = vmatpush1.xpose.msra.mxu0 0.0
      %3396 = vmatprep.subr.mxu0 0.0
      %3397 = vmatpush1.xpose.msra.mxu0 0.0
      %3398 = vmatprep.subr.mxu0 0.0
      %3399 = vmatpush1.xpose.msra.mxu0 0.0
      %3400 = vmatprep.subr.mxu0 0.0
      %3401 = vmatpush1.xpose.msra.mxu0 0.0
      %3402 = vmatprep.subr.mxu0 0.0
      %3403 = vmatpush1.xpose.msra.mxu0 0.0
      %3404 = vmatprep.subr.mxu0 0.0
      %3405 = vmatpush1.xpose.msra.mxu0 0.0
      %3406 = vmatprep.subr.mxu0 0.0
      %3407 = vmatpush1.xpose.msra.mxu0 0.0
      %3408 = vmatprep.subr.mxu0 0.0
      %3409 = vmatpush1.xpose.msra.mxu0 0.0
      %3410 = vmatprep.subr.mxu0 0.0
      %3411 = vmatpush1.xpose.msra.mxu0 0.0
      %3412 = vmatprep.subr.mxu0 0.0
      %3413 = vmatpush1.xpose.msra.mxu0 0.0
      %3414 = vmatprep.subr.mxu0 0.0
      %3415 = vmatpush1.xpose.msra.mxu0 0.0
      %3416 = vmatprep.subr.mxu0 0.0
      %3417 = vmatpush1.xpose.msra.mxu0 0.0
      %3418 = vmatprep.subr.mxu0 0.0
      %3419 = vmatpush1.xpose.msra.mxu0 0.0
      %3420 = vmatprep.subr.mxu0 0.0
      %3421 = vmatpush1.xpose.msra.mxu0 0.0
      %3422 = vmatprep.subr.mxu0 0.0
      %3423 = vmatpush1.xpose.msra.mxu0 0.0
      %3424 = vmatprep.subr.mxu0 0.0
      %3425 = vmatpush1.xpose.msra.mxu0 0.0
      %3426 = vmatprep.subr.mxu0 0.0
      %3427 = vmatpush1.xpose.msra.mxu0 0.0
      %3428 = vmatprep.subr.mxu0 0.0
      %3429 = vmatpush1.xpose.msra.mxu0 0.0
      %3430 = vmatprep.subr.mxu0 0.0
      %3431 = vmatpush1.xpose.msra.mxu0 0.0
      %3432 = vmatprep.subr.mxu0 0.0
      %3433 = vmatpush1.xpose.msra.mxu0 0.0
      %3434 = vmatprep.subr.mxu0 0.0
      %3435 = vmatpush1.xpose.msra.mxu0 0.0
      %3436 = vmatprep.subr.mxu0 0.0
      %3437 = vmatpush1.xpose.msra.mxu0 0.0
      %3438 = vmatprep.subr.mxu0 0.0
      %3439 = vmatpush1.xpose.msra.mxu0 0.0
      %3440 = vmatprep.subr.mxu0 0.0
      %3441 = vmatpush1.xpose.msra.mxu0 0.0
      %3442 = vmatprep.mubr.f32.mxu0 0.0
      %3443 = vmatmul.mubr.f32.gmra.mrb[0].mxu0 %v3374
      %v3444 = vpop.f32.mrb[0].mxu0
      %v3445 = vadd.f32 0.0, %v3444
      %v3446 = vpop.f32.mrb[0].mxu0
      %3447 = vdwg.mxu0
      %3448 = vrot.lane.b32.xlu0 %v2689, 96
      %v3449 = vpop.permute.xlu0 %3448
      %3450 = vrot.lane.b32.xlu0 %v2689, 32
      %v3451 = vpop.permute.xlu0 %3450
      %v3452 = vsel %vm2696, %v3449, 0
      %v3454 = vsel %vm2696, %v3451, 0
      %3456 = vmatprep.subr.mxu0 0.0
      %3457 = vmatpush1.xpose.msra.mxu0 %v3454
      %3458 = vmatprep.subr.mxu0 0.0
      %3459 = vmatpush1.xpose.msra.mxu0 0.0
      %3460 = vmatprep.subr.mxu0 0.0
      %3461 = vmatpush1.xpose.msra.mxu0 0.0
      %3462 = vmatprep.subr.mxu0 0.0
      %3463 = vmatpush1.xpose.msra.mxu0 0.0
      %3464 = vmatprep.subr.mxu0 0.0
      %3465 = vmatpush1.xpose.msra.mxu0 0.0
      %3466 = vmatprep.subr.mxu0 0.0
      %3467 = vmatpush1.xpose.msra.mxu0 0.0
      %3468 = vmatprep.subr.mxu0 0.0
      %3469 = vmatpush1.xpose.msra.mxu0 0.0
      %3470 = vmatprep.subr.mxu0 0.0
      %3471 = vmatpush1.xpose.msra.mxu0 0.0
      %3472 = vmatprep.subr.mxu0 0.0
      %3473 = vmatpush1.xpose.msra.mxu0 0.0
      %3474 = vmatprep.subr.mxu0 0.0
      %3475 = vmatpush1.xpose.msra.mxu0 0.0
      %3476 = vmatprep.subr.mxu0 0.0
      %3477 = vmatpush1.xpose.msra.mxu0 0.0
      %3478 = vmatprep.subr.mxu0 0.0
      %3479 = vmatpush1.xpose.msra.mxu0 0.0
      %3480 = vmatprep.subr.mxu0 0.0
      %3481 = vmatpush1.xpose.msra.mxu0 0.0
      %3482 = vmatprep.subr.mxu0 0.0
      %3483 = vmatpush1.xpose.msra.mxu0 0.0
      %3484 = vmatprep.subr.mxu0 0.0
      %3485 = vmatpush1.xpose.msra.mxu0 0.0
      %3486 = vmatprep.subr.mxu0 0.0
      %3487 = vmatpush1.xpose.msra.mxu0 0.0
      %3488 = vmatprep.subr.mxu0 0.0
      %3489 = vmatpush1.xpose.msra.mxu0 0.0
      %3490 = vmatprep.subr.mxu0 0.0
      %3491 = vmatpush1.xpose.msra.mxu0 0.0
      %3492 = vmatprep.subr.mxu0 0.0
      %3493 = vmatpush1.xpose.msra.mxu0 0.0
      %3494 = vmatprep.subr.mxu0 0.0
      %3495 = vmatpush1.xpose.msra.mxu0 0.0
      %3496 = vmatprep.subr.mxu0 0.0
      %3497 = vmatpush1.xpose.msra.mxu0 0.0
      %3498 = vmatprep.subr.mxu0 0.0
      %3499 = vmatpush1.xpose.msra.mxu0 0.0
      %3500 = vmatprep.subr.mxu0 0.0
      %3501 = vmatpush1.xpose.msra.mxu0 0.0
      %3502 = vmatprep.subr.mxu0 0.0
      %3503 = vmatpush1.xpose.msra.mxu0 0.0
      %3504 = vmatprep.subr.mxu0 0.0
      %3505 = vmatpush1.xpose.msra.mxu0 0.0
      %3506 = vmatprep.subr.mxu0 0.0
      %3507 = vmatpush1.xpose.msra.mxu0 0.0
      %3508 = vmatprep.subr.mxu0 0.0
      %3509 = vmatpush1.xpose.msra.mxu0 0.0
      %3510 = vmatprep.subr.mxu0 0.0
      %3511 = vmatpush1.xpose.msra.mxu0 0.0
      %3512 = vmatprep.subr.mxu0 0.0
      %3513 = vmatpush1.xpose.msra.mxu0 0.0
      %3514 = vmatprep.subr.mxu0 0.0
      %3515 = vmatpush1.xpose.msra.mxu0 0.0
      %3516 = vmatprep.subr.mxu0 0.0
      %3517 = vmatpush1.xpose.msra.mxu0 0.0
      %3518 = vmatprep.subr.mxu0 0.0
      %3519 = vmatpush1.xpose.msra.mxu0 0.0
      %3520 = vmatprep.mubr.f32.mxu0 0.0
      %3521 = vmatmul.mubr.f32.gmra.mrb[0].mxu0 %v3452
      %v3522 = vpop.f32.mrb[0].mxu0
      %v3523 = vadd.f32 0.0, %v3522
      %v3524 = vpop.f32.mrb[0].mxu0
      %3525 = vdwg.mxu0
      %v3526 = vmul.f32 %v3445, 0.25
      %v3527 = vmul.f32 %v3523, 0.25
      %v3528 = vsel %vm2862, %v3526, -1e+30
      %v3529 = vsel %vm2863, %v3527, -1e+30
      %v3530 = vsel %vm1505, %v3528, -inf
      %3531 = vmax.xlane.f32.xlu0 %v3530
      %v3532 = vpop.xlane.xlu0 %3531
      %v3533 = vsel %vm1505, %v3529, -inf
      %3534 = vmax.xlane.f32.xlu0 %v3533
      %v3535 = vpop.xlane.xlu0 %3534
      %v3536 = vsub.f32 %v3528, %v3532
      %v3537 = vsub.f32 %v3529, %v3535
      %v3538 = vmul.f32 %v3536, 1.442695
      %v3539 = vpow.pop %v3538
      %v3540 = vmul.f32 %v3537, 1.442695
      %v3541 = vpow.pop %v3540
      %v3542 = vsel %vm1505, %v3539, 0.0
      %3543 = vadd.xlane.f32.xlu0 %v3542
      %v3544 = vpop.xlane.xlu0 %3543
      %v3545 = vsel %vm1505, %v3541, 0.0
      %3546 = vadd.xlane.f32.xlu0 %v3545
      %v3547 = vpop.xlane.xlu0 %3546
      %v3548 = vrcp.pop %v3544
      %v3549 = vrcp.pop %v3547
      %v3550 = vmul.f32 %v3539, %v3548
      %v3551 = vmul.f32 %v3541, %v3549
      %3552 = vrot.lane.b32.xlu0 %v2685, 96
      %v3553 = vpop.permute.xlu0 %3552
      %v3556 = vsel %vm1505, %v3550, 0
      %3558 = vmatprep.subr.mxu0 0.0
      %3559 = vmatpush1.msra.mxu0 %v3553
      %3560 = vmatprep.subr.mxu0 0.0
      %3561 = vmatpush1.msra.mxu0 0.0
      %3562 = vmatprep.subr.mxu0 0.0
      %3563 = vmatpush1.msra.mxu0 0.0
      %3564 = vmatprep.subr.mxu0 0.0
      %3565 = vmatpush1.msra.mxu0 0.0
      %3566 = vmatprep.subr.mxu0 0.0
      %3567 = vmatpush1.msra.mxu0 0.0
      %3568 = vmatprep.subr.mxu0 0.0
      %3569 = vmatpush1.msra.mxu0 0.0
      %3570 = vmatprep.subr.mxu0 0.0
      %3571 = vmatpush1.msra.mxu0 0.0
      %3572 = vmatprep.subr.mxu0 0.0
      %3573 = vmatpush1.msra.mxu0 0.0
      %3574 = vmatprep.subr.mxu0 0.0
      %3575 = vmatpush1.msra.mxu0 0.0
      %3576 = vmatprep.subr.mxu0 0.0
      %3577 = vmatpush1.msra.mxu0 0.0
      %3578 = vmatprep.subr.mxu0 0.0
      %3579 = vmatpush1.msra.mxu0 0.0
      %3580 = vmatprep.subr.mxu0 0.0
      %3581 = vmatpush1.msra.mxu0 0.0
      %3582 = vmatprep.subr.mxu0 0.0
      %3583 = vmatpush1.msra.mxu0 0.0
      %3584 = vmatprep.subr.mxu0 0.0
      %3585 = vmatpush1.msra.mxu0 0.0
      %3586 = vmatprep.subr.mxu0 0.0
      %3587 = vmatpush1.msra.mxu0 0.0
      %3588 = vmatprep.subr.mxu0 0.0
      %3589 = vmatpush1.msra.mxu0 0.0
      %3590 = vmatprep.subr.mxu0 0.0
      %3591 = vmatpush1.msra.mxu0 0.0
      %3592 = vmatprep.subr.mxu0 0.0
      %3593 = vmatpush1.msra.mxu0 0.0
      %3594 = vmatprep.subr.mxu0 0.0
      %3595 = vmatpush1.msra.mxu0 0.0
      %3596 = vmatprep.subr.mxu0 0.0
      %3597 = vmatpush1.msra.mxu0 0.0
      %3598 = vmatprep.subr.mxu0 0.0
      %3599 = vmatpush1.msra.mxu0 0.0
      %3600 = vmatprep.subr.mxu0 0.0
      %3601 = vmatpush1.msra.mxu0 0.0
      %3602 = vmatprep.subr.mxu0 0.0
      %3603 = vmatpush1.msra.mxu0 0.0
      %3604 = vmatprep.subr.mxu0 0.0
      %3605 = vmatpush1.msra.mxu0 0.0
      %3606 = vmatprep.subr.mxu0 0.0
      %3607 = vmatpush1.msra.mxu0 0.0
      %3608 = vmatprep.subr.mxu0 0.0
      %3609 = vmatpush1.msra.mxu0 0.0
      %3610 = vmatprep.subr.mxu0 0.0
      %3611 = vmatpush1.msra.mxu0 0.0
      %3612 = vmatprep.subr.mxu0 0.0
      %3613 = vmatpush1.msra.mxu0 0.0
      %3614 = vmatprep.subr.mxu0 0.0
      %3615 = vmatpush1.msra.mxu0 0.0
      %3616 = vmatprep.subr.mxu0 0.0
      %3617 = vmatpush1.msra.mxu0 0.0
      %3618 = vmatprep.subr.mxu0 0.0
      %3619 = vmatpush1.msra.mxu0 0.0
      %3620 = vmatprep.subr.mxu0 0.0
      %3621 = vmatpush1.msra.mxu0 0.0
      %3622 = vmatprep.mubr.f32.mxu0 0.0
      %3623 = vmatmul.mubr.f32.gmra.mrb[0].mxu0 %v3556
      %v3624 = vpop.f32.mrb[0].mxu0
      %v3625 = vadd.f32 0.0, %v3624
      %v3626 = vpop.f32.mrb[0].mxu0
      %3627 = vdwg.mxu0
      %3628 = vrot.lane.b32.xlu0 %v2691, 96
      %v3629 = vpop.permute.xlu0 %3628
      %v3632 = vsel %vm1505, %v3551, 0
      %3634 = vmatprep.subr.mxu0 0.0
      %3635 = vmatpush1.msra.mxu0 %v3629
      %3636 = vmatprep.subr.mxu0 0.0
      %3637 = vmatpush1.msra.mxu0 0.0
      %3638 = vmatprep.subr.mxu0 0.0
      %3639 = vmatpush1.msra.mxu0 0.0
      %3640 = vmatprep.subr.mxu0 0.0
      %3641 = vmatpush1.msra.mxu0 0.0
      %3642 = vmatprep.subr.mxu0 0.0
      %3643 = vmatpush1.msra.mxu0 0.0
      %3644 = vmatprep.subr.mxu0 0.0
      %3645 = vmatpush1.msra.mxu0 0.0
      %3646 = vmatprep.subr.mxu0 0.0
      %3647 = vmatpush1.msra.mxu0 0.0
      %3648 = vmatprep.subr.mxu0 0.0
      %3649 = vmatpush1.msra.mxu0 0.0
      %3650 = vmatprep.subr.mxu0 0.0
      %3651 = vmatpush1.msra.mxu0 0.0
      %3652 = vmatprep.subr.mxu0 0.0
      %3653 = vmatpush1.msra.mxu0 0.0
      %3654 = vmatprep.subr.mxu0 0.0
      %3655 = vmatpush1.msra.mxu0 0.0
      %3656 = vmatprep.subr.mxu0 0.0
      %3657 = vmatpush1.msra.mxu0 0.0
      %3658 = vmatprep.subr.mxu0 0.0
      %3659 = vmatpush1.msra.mxu0 0.0
      %3660 = vmatprep.subr.mxu0 0.0
      %3661 = vmatpush1.msra.mxu0 0.0
      %3662 = vmatprep.subr.mxu0 0.0
      %3663 = vmatpush1.msra.mxu0 0.0
      %3664 = vmatprep.subr.mxu0 0.0
      %3665 = vmatpush1.msra.mxu0 0.0
      %3666 = vmatprep.subr.mxu0 0.0
      %3667 = vmatpush1.msra.mxu0 0.0
      %3668 = vmatprep.subr.mxu0 0.0
      %3669 = vmatpush1.msra.mxu0 0.0
      %3670 = vmatprep.subr.mxu0 0.0
      %3671 = vmatpush1.msra.mxu0 0.0
      %3672 = vmatprep.subr.mxu0 0.0
      %3673 = vmatpush1.msra.mxu0 0.0
      %3674 = vmatprep.subr.mxu0 0.0
      %3675 = vmatpush1.msra.mxu0 0.0
      %3676 = vmatprep.subr.mxu0 0.0
      %3677 = vmatpush1.msra.mxu0 0.0
      %3678 = vmatprep.subr.mxu0 0.0
      %3679 = vmatpush1.msra.mxu0 0.0
      %3680 = vmatprep.subr.mxu0 0.0
      %3681 = vmatpush1.msra.mxu0 0.0
      %3682 = vmatprep.subr.mxu0 0.0
      %3683 = vmatpush1.msra.mxu0 0.0
      %3684 = vmatprep.subr.mxu0 0.0
      %3685 = vmatpush1.msra.mxu0 0.0
      %3686 = vmatprep.subr.mxu0 0.0
      %3687 = vmatpush1.msra.mxu0 0.0
      %3688 = vmatprep.subr.mxu0 0.0
      %3689 = vmatpush1.msra.mxu0 0.0
      %3690 = vmatprep.subr.mxu0 0.0
      %3691 = vmatpush1.msra.mxu0 0.0
      %3692 = vmatprep.subr.mxu0 0.0
      %3693 = vmatpush1.msra.mxu0 0.0
      %3694 = vmatprep.subr.mxu0 0.0
      %3695 = vmatpush1.msra.mxu0 0.0
      %3696 = vmatprep.subr.mxu0 0.0
      %3697 = vmatpush1.msra.mxu0 0.0
      %3698 = vmatprep.mubr.f32.mxu0 0.0
      %3699 = vmatmul.mubr.f32.gmra.mrb[0].mxu0 %v3632
      %v3700 = vpop.f32.mrb[0].mxu0
      %v3701 = vadd.f32 0.0, %v3700
      %v3702 = vpop.f32.mrb[0].mxu0
      %3703 = vdwg.mxu0
      %3704 = vrot.lane.b32.xlu0 %v2683, 80
      %v3705 = vpop.permute.xlu0 %3704
      %3706 = vrot.lane.b32.xlu0 %v2683, 16
      %v3707 = vpop.permute.xlu0 %3706
      %v3708 = vsel %vm2696, %v3705, 0
      %v3710 = vsel %vm2696, %v3707, 0
      %3712 = vmatprep.subr.mxu0 0.0
      %3713 = vmatpush1.xpose.msra.mxu0 %v3710
      %3714 = vmatprep.subr.mxu0 0.0
      %3715 = vmatpush1.xpose.msra.mxu0 0.0
      %3716 = vmatprep.subr.mxu0 0.0
      %3717 = vmatpush1.xpose.msra.mxu0 0.0
      %3718 = vmatprep.subr.mxu0 0.0
      %3719 = vmatpush1.xpose.msra.mxu0 0.0
      %3720 = vmatprep.subr.mxu0 0.0
      %3721 = vmatpush1.xpose.msra.mxu0 0.0
      %3722 = vmatprep.subr.mxu0 0.0
      %3723 = vmatpush1.xpose.msra.mxu0 0.0
      %3724 = vmatprep.subr.mxu0 0.0
      %3725 = vmatpush1.xpose.msra.mxu0 0.0
      %3726 = vmatprep.subr.mxu0 0.0
      %3727 = vmatpush1.xpose.msra.mxu0 0.0
      %3728 = vmatprep.subr.mxu0 0.0
      %3729 = vmatpush1.xpose.msra.mxu0 0.0
      %3730 = vmatprep.subr.mxu0 0.0
      %3731 = vmatpush1.xpose.msra.mxu0 0.0
      %3732 = vmatprep.subr.mxu0 0.0
      %3733 = vmatpush1.xpose.msra.mxu0 0.0
      %3734 = vmatprep.subr.mxu0 0.0
      %3735 = vmatpush1.xpose.msra.mxu0 0.0
      %3736 = vmatprep.subr.mxu0 0.0
      %3737 = vmatpush1.xpose.msra.mxu0 0.0
      %3738 = vmatprep.subr.mxu0 0.0
      %3739 = vmatpush1.xpose.msra.mxu0 0.0
      %3740 = vmatprep.subr.mxu0 0.0
      %3741 = vmatpush1.xpose.msra.mxu0 0.0
      %3742 = vmatprep.subr.mxu0 0.0
      %3743 = vmatpush1.xpose.msra.mxu0 0.0
      %3744 = vmatprep.subr.mxu0 0.0
      %3745 = vmatpush1.xpose.msra.mxu0 0.0
      %3746 = vmatprep.subr.mxu0 0.0
      %3747 = vmatpush1.xpose.msra.mxu0 0.0
      %3748 = vmatprep.subr.mxu0 0.0
      %3749 = vmatpush1.xpose.msra.mxu0 0.0
      %3750 = vmatprep.subr.mxu0 0.0
      %3751 = vmatpush1.xpose.msra.mxu0 0.0
      %3752 = vmatprep.subr.mxu0 0.0
      %3753 = vmatpush1.xpose.msra.mxu0 0.0
      %3754 = vmatprep.subr.mxu0 0.0
      %3755 = vmatpush1.xpose.msra.mxu0 0.0
      %3756 = vmatprep.subr.mxu0 0.0
      %3757 = vmatpush1.xpose.msra.mxu0 0.0
      %3758 = vmatprep.subr.mxu0 0.0
      %3759 = vmatpush1.xpose.msra.mxu0 0.0
      %3760 = vmatprep.subr.mxu0 0.0
      %3761 = vmatpush1.xpose.msra.mxu0 0.0
      %3762 = vmatprep.subr.mxu0 0.0
      %3763 = vmatpush1.xpose.msra.mxu0 0.0
      %3764 = vmatprep.subr.mxu0 0.0
      %3765 = vmatpush1.xpose.msra.mxu0 0.0
      %3766 = vmatprep.subr.mxu0 0.0
      %3767 = vmatpush1.xpose.msra.mxu0 0.0
      %3768 = vmatprep.subr.mxu0 0.0
      %3769 = vmatpush1.xpose.msra.mxu0 0.0
      %3770 = vmatprep.subr.mxu0 0.0
      %3771 = vmatpush1.xpose.msra.mxu0 0.0
      %3772 = vmatprep.subr.mxu0 0.0
      %3773 = vmatpush1.xpose.msra.mxu0 0.0
      %3774 = vmatprep.subr.mxu0 0.0
      %3775 = vmatpush1.xpose.msra.mxu0 0.0
      %3776 = vmatprep.mubr.f32.mxu0 0.0
      %3777 = vmatmul.mubr.f32.gmra.mrb[0].mxu0 %v3708
      %v3778 = vpop.f32.mrb[0].mxu0
      %v3779 = vadd.f32 0.0, %v3778
      %v3780 = vpop.f32.mrb[0].mxu0
      %3781 = vdwg.mxu0
      %3782 = vrot.lane.b32.xlu0 %v2689, 80
      %v3783 = vpop.permute.xlu0 %3782
      %3784 = vrot.lane.b32.xlu0 %v2689, 16
      %v3785 = vpop.permute.xlu0 %3784
      %v3786 = vsel %vm2696, %v3783, 0
      %v3788 = vsel %vm2696, %v3785, 0
      %3790 = vmatprep.subr.mxu0 0.0
      %3791 = vmatpush1.xpose.msra.mxu0 %v3788
      %3792 = vmatprep.subr.mxu0 0.0
      %3793 = vmatpush1.xpose.msra.mxu0 0.0
      %3794 = vmatprep.subr.mxu0 0.0
      %3795 = vmatpush1.xpose.msra.mxu0 0.0
      %3796 = vmatprep.subr.mxu0 0.0
      %3797 = vmatpush1.xpose.msra.mxu0 0.0
      %3798 = vmatprep.subr.mxu0 0.0
      %3799 = vmatpush1.xpose.msra.mxu0 0.0
      %3800 = vmatprep.subr.mxu0 0.0
      %3801 = vmatpush1.xpose.msra.mxu0 0.0
      %3802 = vmatprep.subr.mxu0 0.0
      %3803 = vmatpush1.xpose.msra.mxu0 0.0
      %3804 = vmatprep.subr.mxu0 0.0
      %3805 = vmatpush1.xpose.msra.mxu0 0.0
      %3806 = vmatprep.subr.mxu0 0.0
      %3807 = vmatpush1.xpose.msra.mxu0 0.0
      %3808 = vmatprep.subr.mxu0 0.0
      %3809 = vmatpush1.xpose.msra.mxu0 0.0
      %3810 = vmatprep.subr.mxu0 0.0
      %3811 = vmatpush1.xpose.msra.mxu0 0.0
      %3812 = vmatprep.subr.mxu0 0.0
      %3813 = vmatpush1.xpose.msra.mxu0 0.0
      %3814 = vmatprep.subr.mxu0 0.0
      %3815 = vmatpush1.xpose.msra.mxu0 0.0
      %3816 = vmatprep.subr.mxu0 0.0
      %3817 = vmatpush1.xpose.msra.mxu0 0.0
      %3818 = vmatprep.subr.mxu0 0.0
      %3819 = vmatpush1.xpose.msra.mxu0 0.0
      %3820 = vmatprep.subr.mxu0 0.0
      %3821 = vmatpush1.xpose.msra.mxu0 0.0
      %3822 = vmatprep.subr.mxu0 0.0
      %3823 = vmatpush1.xpose.msra.mxu0 0.0
      %3824 = vmatprep.subr.mxu0 0.0
      %3825 = vmatpush1.xpose.msra.mxu0 0.0
      %3826 = vmatprep.subr.mxu0 0.0
      %3827 = vmatpush1.xpose.msra.mxu0 0.0
      %3828 = vmatprep.subr.mxu0 0.0
      %3829 = vmatpush1.xpose.msra.mxu0 0.0
      %3830 = vmatprep.subr.mxu0 0.0
      %3831 = vmatpush1.xpose.msra.mxu0 0.0
      %3832 = vmatprep.subr.mxu0 0.0
      %3833 = vmatpush1.xpose.msra.mxu0 0.0
      %3834 = vmatprep.subr.mxu0 0.0
      %3835 = vmatpush1.xpose.msra.mxu0 0.0
      %3836 = vmatprep.subr.mxu0 0.0
      %3837 = vmatpush1.xpose.msra.mxu0 0.0
      %3838 = vmatprep.subr.mxu0 0.0
      %3839 = vmatpush1.xpose.msra.mxu0 0.0
      %3840 = vmatprep.subr.mxu0 0.0
      %3841 = vmatpush1.xpose.msra.mxu0 0.0
      %3842 = vmatprep.subr.mxu0 0.0
      %3843 = vmatpush1.xpose.msra.mxu0 0.0
      %3844 = vmatprep.subr.mxu0 0.0
      %3845 = vmatpush1.xpose.msra.mxu0 0.0
      %3846 = vmatprep.subr.mxu0 0.0
      %3847 = vmatpush1.xpose.msra.mxu0 0.0
      %3848 = vmatprep.subr.mxu0 0.0
      %3849 = vmatpush1.xpose.msra.mxu0 0.0
      %3850 = vmatprep.subr.mxu0 0.0
      %3851 = vmatpush1.xpose.msra.mxu0 0.0
      %3852 = vmatprep.subr.mxu0 0.0
      %3853 = vmatpush1.xpose.msra.mxu0 0.0
      %3854 = vmatprep.mubr.f32.mxu0 0.0
      %3855 = vmatmul.mubr.f32.gmra.mrb[0].mxu0 %v3786
      %v3856 = vpop.f32.mrb[0].mxu0
      %v3857 = vadd.f32 0.0, %v3856
      %v3858 = vpop.f32.mrb[0].mxu0
      %3859 = vdwg.mxu0
      %v3860 = vmul.f32 %v3779, 0.25
      %v3861 = vmul.f32 %v3857, 0.25
      %v3862 = vsel %vm2862, %v3860, -1e+30
      %v3863 = vsel %vm2863, %v3861, -1e+30
      %v3864 = vsel %vm1505, %v3862, -inf
      %3865 = vmax.xlane.f32.xlu0 %v3864
      %v3866 = vpop.xlane.xlu0 %3865
      %v3867 = vsel %vm1505, %v3863, -inf
      %3868 = vmax.xlane.f32.xlu0 %v3867
      %v3869 = vpop.xlane.xlu0 %3868
      %v3870 = vsub.f32 %v3862, %v3866
      %v3871 = vsub.f32 %v3863, %v3869
      %v3872 = vmul.f32 %v3870, 1.442695
      %v3873 = vpow.pop %v3872
      %v3874 = vmul.f32 %v3871, 1.442695
      %v3875 = vpow.pop %v3874
      %v3876 = vsel %vm1505, %v3873, 0.0
      %3877 = vadd.xlane.f32.xlu0 %v3876
      %v3878 = vpop.xlane.xlu0 %3877
      %v3879 = vsel %vm1505, %v3875, 0.0
      %3880 = vadd.xlane.f32.xlu0 %v3879
      %v3881 = vpop.xlane.xlu0 %3880
      %v3882 = vrcp.pop %v3878
      %v3883 = vrcp.pop %v3881
      %v3884 = vmul.f32 %v3873, %v3882
      %v3885 = vmul.f32 %v3875, %v3883
      %3886 = vrot.lane.b32.xlu0 %v2685, 80
      %v3887 = vpop.permute.xlu0 %3886
      %v3890 = vsel %vm1505, %v3884, 0
      %3892 = vmatprep.subr.mxu0 0.0
      %3893 = vmatpush1.msra.mxu0 %v3887
      %3894 = vmatprep.subr.mxu0 0.0
      %3895 = vmatpush1.msra.mxu0 0.0
      %3896 = vmatprep.subr.mxu0 0.0
      %3897 = vmatpush1.msra.mxu0 0.0
      %3898 = vmatprep.subr.mxu0 0.0
      %3899 = vmatpush1.msra.mxu0 0.0
      %3900 = vmatprep.subr.mxu0 0.0
      %3901 = vmatpush1.msra.mxu0 0.0
      %3902 = vmatprep.subr.mxu0 0.0
      %3903 = vmatpush1.msra.mxu0 0.0
      %3904 = vmatprep.subr.mxu0 0.0
      %3905 = vmatpush1.msra.mxu0 0.0
      %3906 = vmatprep.subr.mxu0 0.0
      %3907 = vmatpush1.msra.mxu0 0.0
      %3908 = vmatprep.subr.mxu0 0.0
      %3909 = vmatpush1.msra.mxu0 0.0
      %3910 = vmatprep.subr.mxu0 0.0
      %3911 = vmatpush1.msra.mxu0 0.0
      %3912 = vmatprep.subr.mxu0 0.0
      %3913 = vmatpush1.msra.mxu0 0.0
      %3914 = vmatprep.subr.mxu0 0.0
      %3915 = vmatpush1.msra.mxu0 0.0
      %3916 = vmatprep.subr.mxu0 0.0
      %3917 = vmatpush1.msra.mxu0 0.0
      %3918 = vmatprep.subr.mxu0 0.0
      %3919 = vmatpush1.msra.mxu0 0.0
      %3920 = vmatprep.subr.mxu0 0.0
      %3921 = vmatpush1.msra.mxu0 0.0
      %3922 = vmatprep.subr.mxu0 0.0
      %3923 = vmatpush1.msra.mxu0 0.0
      %3924 = vmatprep.subr.mxu0 0.0
      %3925 = vmatpush1.msra.mxu0 0.0
      %3926 = vmatprep.subr.mxu0 0.0
      %3927 = vmatpush1.msra.mxu0 0.0
      %3928 = vmatprep.subr.mxu0 0.0
      %3929 = vmatpush1.msra.mxu0 0.0
      %3930 = vmatprep.subr.mxu0 0.0
      %3931 = vmatpush1.msra.mxu0 0.0
      %3932 = vmatprep.subr.mxu0 0.0
      %3933 = vmatpush1.msra.mxu0 0.0
      %3934 = vmatprep.subr.mxu0 0.0
      %3935 = vmatpush1.msra.mxu0 0.0
      %3936 = vmatprep.subr.mxu0 0.0
      %3937 = vmatpush1.msra.mxu0 0.0
      %3938 = vmatprep.subr.mxu0 0.0
      %3939 = vmatpush1.msra.mxu0 0.0
      %3940 = vmatprep.subr.mxu0 0.0
      %3941 = vmatpush1.msra.mxu0 0.0
      %3942 = vmatprep.subr.mxu0 0.0
      %3943 = vmatpush1.msra.mxu0 0.0
      %3944 = vmatprep.subr.mxu0 0.0
      %3945 = vmatpush1.msra.mxu0 0.0
      %3946 = vmatprep.subr.mxu0 0.0
      %3947 = vmatpush1.msra.mxu0 0.0
      %3948 = vmatprep.subr.mxu0 0.0
      %3949 = vmatpush1.msra.mxu0 0.0
      %3950 = vmatprep.subr.mxu0 0.0
      %3951 = vmatpush1.msra.mxu0 0.0
      %3952 = vmatprep.subr.mxu0 0.0
      %3953 = vmatpush1.msra.mxu0 0.0
      %3954 = vmatprep.subr.mxu0 0.0
      %3955 = vmatpush1.msra.mxu0 0.0
      %3956 = vmatprep.mubr.f32.mxu0 0.0
      %3957 = vmatmul.mubr.f32.gmra.mrb[0].mxu0 %v3890
      %v3958 = vpop.f32.mrb[0].mxu0
      %v3959 = vadd.f32 0.0, %v3958
      %v3960 = vpop.f32.mrb[0].mxu0
      %3961 = vdwg.mxu0
      %3962 = vrot.lane.b32.xlu0 %v2691, 80
      %v3963 = vpop.permute.xlu0 %3962
      %v3966 = vsel %vm1505, %v3885, 0
      %3968 = vmatprep.subr.mxu0 0.0
      %3969 = vmatpush1.msra.mxu0 %v3963
      %3970 = vmatprep.subr.mxu0 0.0
      %3971 = vmatpush1.msra.mxu0 0.0
      %3972 = vmatprep.subr.mxu0 0.0
      %3973 = vmatpush1.msra.mxu0 0.0
      %3974 = vmatprep.subr.mxu0 0.0
      %3975 = vmatpush1.msra.mxu0 0.0
      %3976 = vmatprep.subr.mxu0 0.0
      %3977 = vmatpush1.msra.mxu0 0.0
      %3978 = vmatprep.subr.mxu0 0.0
      %3979 = vmatpush1.msra.mxu0 0.0
      %3980 = vmatprep.subr.mxu0 0.0
      %3981 = vmatpush1.msra.mxu0 0.0
      %3982 = vmatprep.subr.mxu0 0.0
      %3983 = vmatpush1.msra.mxu0 0.0
      %3984 = vmatprep.subr.mxu0 0.0
      %3985 = vmatpush1.msra.mxu0 0.0
      %3986 = vmatprep.subr.mxu0 0.0
      %3987 = vmatpush1.msra.mxu0 0.0
      %3988 = vmatprep.subr.mxu0 0.0
      %3989 = vmatpush1.msra.mxu0 0.0
      %3990 = vmatprep.subr.mxu0 0.0
      %3991 = vmatpush1.msra.mxu0 0.0
      %3992 = vmatprep.subr.mxu0 0.0
      %3993 = vmatpush1.msra.mxu0 0.0
      %3994 = vmatprep.subr.mxu0 0.0
      %3995 = vmatpush1.msra.mxu0 0.0
      %3996 = vmatprep.subr.mxu0 0.0
      %3997 = vmatpush1.msra.mxu0 0.0
      %3998 = vmatprep.subr.mxu0 0.0
      %3999 = vmatpush1.msra.mxu0 0.0
      %4000 = vmatprep.subr.mxu0 0.0
      %4001 = vmatpush1.msra.mxu0 0.0
      %4002 = vmatprep.subr.mxu0 0.0
      %4003 = vmatpush1.msra.mxu0 0.0
      %4004 = vmatprep.subr.mxu0 0.0
      %4005 = vmatpush1.msra.mxu0 0.0
      %4006 = vmatprep.subr.mxu0 0.0
      %4007 = vmatpush1.msra.mxu0 0.0
      %4008 = vmatprep.subr.mxu0 0.0
      %4009 = vmatpush1.msra.mxu0 0.0
      %4010 = vmatprep.subr.mxu0 0.0
      %4011 = vmatpush1.msra.mxu0 0.0
      %4012 = vmatprep.subr.mxu0 0.0
      %4013 = vmatpush1.msra.mxu0 0.0
      %4014 = vmatprep.subr.mxu0 0.0
      %4015 = vmatpush1.msra.mxu0 0.0
      %4016 = vmatprep.subr.mxu0 0.0
      %4017 = vmatpush1.msra.mxu0 0.0
      %4018 = vmatprep.subr.mxu0 0.0
      %4019 = vmatpush1.msra.mxu0 0.0
      %4020 = vmatprep.subr.mxu0 0.0
      %4021 = vmatpush1.msra.mxu0 0.0
      %4022 = vmatprep.subr.mxu0 0.0
      %4023 = vmatpush1.msra.mxu0 0.0
      %4024 = vmatprep.subr.mxu0 0.0
      %4025 = vmatpush1.msra.mxu0 0.0
      %4026 = vmatprep.subr.mxu0 0.0
      %4027 = vmatpush1.msra.mxu0 0.0
      %4028 = vmatprep.subr.mxu0 0.0
      %4029 = vmatpush1.msra.mxu0 0.0
      %4030 = vmatprep.subr.mxu0 0.0
      %4031 = vmatpush1.msra.mxu0 0.0
      %4032 = vmatprep.mubr.f32.mxu0 0.0
      %4033 = vmatmul.mubr.f32.gmra.mrb[0].mxu0 %v3966
      %v4034 = vpop.f32.mrb[0].mxu0
      %v4035 = vadd.f32 0.0, %v4034
      %v4036 = vpop.f32.mrb[0].mxu0
      %4037 = vdwg.mxu0
      %4040 = vrot.lane.b32.xlu0 %v3290, 16
      %v4041 = vpop.permute.xlu0 %4040
      %4042 = vrot.lane.b32.xlu0 %v3367, 16
      %v4043 = vpop.permute.xlu0 %4042
      %4048 = vrot.lane.b32.xlu0 %v3625, 32
      %v4049 = vpop.permute.xlu0 %4048
      %4050 = vrot.lane.b32.xlu0 %v3701, 32
      %v4051 = vpop.permute.xlu0 %4050
      %4056 = vrot.lane.b32.xlu0 %v3959, 48
      %v4057 = vpop.permute.xlu0 %4056
      %4058 = vrot.lane.b32.xlu0 %v4035, 48
      %v4059 = vpop.permute.xlu0 %4058
      %v4062 = vsel %vm2696, %v2958, %v4041
      %v4063 = vsel %vm2696, %v3031, %v4043
      %vm4064 = vcmask 261120
      %v4065 = vsel %vm4064, %v4062, %v4049
      %v4066 = vsel %vm4064, %v4063, %v4051
      %vm4067 = vcmask 392192
      %v4068 = vsel %vm4067, %v4065, %v4057
      %v4069 = vsel %vm4067, %v4066, %v4059
      %v4070 = vld [vmem:[%s12] sm:$0xff]
      %v4071 = vld [vmem:[%s12 + $0x8] sm:$0xff]
      %v4072 = vld [vmem:[%s12 + $0x10] sm:$0xff]
      %v4073 = vld [vmem:[%s12 + $0x18] sm:$0xff]
      %v4074 = vld [vmem:[%s12 + $0x20] sm:$0xff]
      %v4075 = vld [vmem:[%s12 + $0x28] sm:$0xff]
      %v4076 = vld [vmem:[%s12 + $0x30] sm:$0xff]
      %v4077 = vld [vmem:[%s12 + $0x38] sm:$0xff]
      %v4078 = vld [vmem:[%s12 + $0x40] sm:$0xff]
      %v4079 = vld [vmem:[%s12 + $0x48] sm:$0xff]
      %v4080 = vld [vmem:[%s12 + $0x50] sm:$0xff]
      %v4081 = vld [vmem:[%s12 + $0x58] sm:$0xff]
      %v4082 = vld [vmem:[%s12 + $0x60] sm:$0xff]
      %v4083 = vld [vmem:[%s12 + $0x68] sm:$0xff]
      %v4084 = vld [vmem:[%s12 + $0x70] sm:$0xff]
      %v4085 = vld [vmem:[%s12 + $0x78] sm:$0xff]
      %vm4086 = vcmask 523264
      %v4088 = vsel %vm4086, %v4068, 0
      %v4091 = vsel %vm4086, %v4069, 0
      %4093 = vmatprep.subr.mxu0 %v4071
      %4094 = vmatpush1.msra.mxu0 %v4070
      %4095 = vmatprep.subr.mxu0 %v4073
      %4096 = vmatpush1.msra.mxu0 %v4072
      %4097 = vmatprep.subr.mxu0 %v4075
      %4098 = vmatpush1.msra.mxu0 %v4074
      %4099 = vmatprep.subr.mxu0 %v4077
      %4100 = vmatpush1.msra.mxu0 %v4076
      %4101 = vmatprep.subr.mxu0 %v4079
      %4102 = vmatpush1.msra.mxu0 %v4078
      %4103 = vmatprep.subr.mxu0 %v4081
      %4104 = vmatpush1.msra.mxu0 %v4080
      %4105 = vmatprep.subr.mxu0 %v4083
      %4106 = vmatpush1.msra.mxu0 %v4082
      %4107 = vmatprep.subr.mxu0 %v4085
      %4108 = vmatpush1.msra.mxu0 %v4084
      %4109 = vmatprep.subr.mxu0 0.0
      %4110 = vmatpush1.msra.mxu0 0.0
      %4111 = vmatprep.subr.mxu0 0.0
      %4112 = vmatpush1.msra.mxu0 0.0
      %4113 = vmatprep.subr.mxu0 0.0
      %4114 = vmatpush1.msra.mxu0 0.0
      %4115 = vmatprep.subr.mxu0 0.0
      %4116 = vmatpush1.msra.mxu0 0.0
      %4117 = vmatprep.subr.mxu0 0.0
      %4118 = vmatpush1.msra.mxu0 0.0
      %4119 = vmatprep.subr.mxu0 0.0
      %4120 = vmatpush1.msra.mxu0 0.0
      %4121 = vmatprep.subr.mxu0 0.0
      %4122 = vmatpush1.msra.mxu0 0.0
      %4123 = vmatprep.subr.mxu0 0.0
      %4124 = vmatpush1.msra.mxu0 0.0
      %4125 = vmatprep.subr.mxu0 0.0
      %4126 = vmatpush1.msra.mxu0 0.0
      %4127 = vmatprep.subr.mxu0 0.0
      %4128 = vmatpush1.msra.mxu0 0.0
      %4129 = vmatprep.subr.mxu0 0.0
      %4130 = vmatpush1.msra.mxu0 0.0
      %4131 = vmatprep.subr.mxu0 0.0
      %4132 = vmatpush1.msra.mxu0 0.0
      %4133 = vmatprep.subr.mxu0 0.0
      %4134 = vmatpush1.msra.mxu0 0.0
      %4135 = vmatprep.subr.mxu0 0.0
      %4136 = vmatpush1.msra.mxu0 0.0
      %4137 = vmatprep.subr.mxu0 0.0
      %4138 = vmatpush1.msra.mxu0 0.0
      %4139 = vmatprep.subr.mxu0 0.0
      %4140 = vmatpush1.msra.mxu0 0.0
      %4141 = vmatprep.subr.mxu0 0.0
      %4142 = vmatpush1.msra.mxu0 0.0
      %4143 = vmatprep.subr.mxu0 0.0
      %4144 = vmatpush1.msra.mxu0 0.0
      %4145 = vmatprep.subr.mxu0 0.0
      %4146 = vmatpush1.msra.mxu0 0.0
      %4147 = vmatprep.subr.mxu0 0.0
      %4148 = vmatpush1.msra.mxu0 0.0
      %4149 = vmatprep.subr.mxu0 0.0
      %4150 = vmatpush1.msra.mxu0 0.0
      %4151 = vmatprep.subr.mxu0 0.0
      %4152 = vmatpush1.msra.mxu0 0.0
      %4153 = vmatprep.subr.mxu0 0.0
      %4154 = vmatpush1.msra.mxu0 0.0
      %4155 = vmatprep.subr.mxu0 0.0
      %4156 = vmatpush1.msra.mxu0 0.0
      %4157 = vmatprep.mubr.f32.mxu0 0.0
      %4158 = vmatmul.mubr.f32.gmra.mrb[0].mxu0 %v4088
      %v4159 = vpop.f32.mrb[0].mxu0
      %v4160 = vadd.f32 0.0, %v4159
      %v4161 = vpop.f32.mrb[0].mxu0
      %v4162 = vadd.f32 0.0, %v4161
      %4163 = vmatprep.mubr.f32.mxu0 0.0
      %4164 = vmatmul.mubr.f32.gmra.mrb[0].mxu0 %v4091
      %v4165 = vpop.f32.mrb[0].mxu0
      %v4166 = vadd.f32 0.0, %v4165
      %v4167 = vpop.f32.mrb[0].mxu0
      %v4168 = vadd.f32 0.0, %v4167
      %4169 = vdwg.mxu0
      %v4170 = vld [vmem:[%s13] sm:$0xff]
      %v4171 = vld [vmem:[%s13 + $0x8] sm:$0xff]
      %v4172 = vld [vmem:[%s13 + $0x10] sm:$0xff]
      %v4173 = vld [vmem:[%s13 + $0x18] sm:$0xff]
      %v4174 = vld [vmem:[%s13 + $0x20] sm:$0xff]
      %v4175 = vld [vmem:[%s13 + $0x28] sm:$0xff]
      %v4176 = vld [vmem:[%s13 + $0x30] sm:$0xff]
      %v4177 = vld [vmem:[%s13 + $0x38] sm:$0xff]
      %v4178 = vld [vmem:[%s13 + $0x40] sm:$0xff]
      %v4179 = vld [vmem:[%s13 + $0x48] sm:$0xff]
      %v4180 = vld [vmem:[%s13 + $0x50] sm:$0xff]
      %v4181 = vld [vmem:[%s13 + $0x58] sm:$0xff]
      %v4182 = vld [vmem:[%s13 + $0x60] sm:$0xff]
      %v4183 = vld [vmem:[%s13 + $0x68] sm:$0xff]
      %v4184 = vld [vmem:[%s13 + $0x70] sm:$0xff]
      %v4185 = vld [vmem:[%s13 + $0x78] sm:$0xff]
      %v4186 = vld [vmem:[%s13 + $0x80] sm:$0xff]
      %v4187 = vld [vmem:[%s13 + $0x88] sm:$0xff]
      %v4188 = vld [vmem:[%s13 + $0x90] sm:$0xff]
      %v4189 = vld [vmem:[%s13 + $0x98] sm:$0xff]
      %v4190 = vld [vmem:[%s13 + $0xa0] sm:$0xff]
      %v4191 = vld [vmem:[%s13 + $0xa8] sm:$0xff]
      %v4192 = vld [vmem:[%s13 + $0xb0] sm:$0xff]
      %v4193 = vld [vmem:[%s13 + $0xb8] sm:$0xff]
      %v4194 = vld [vmem:[%s13 + $0xc0] sm:$0xff]
      %v4195 = vld [vmem:[%s13 + $0xc8] sm:$0xff]
      %v4196 = vld [vmem:[%s13 + $0xd0] sm:$0xff]
      %v4197 = vld [vmem:[%s13 + $0xd8] sm:$0xff]
      %v4198 = vld [vmem:[%s13 + $0xe0] sm:$0xff]
      %v4199 = vld [vmem:[%s13 + $0xe8] sm:$0xff]
      %v4200 = vld [vmem:[%s13 + $0xf0] sm:$0xff]
      %v4201 = vld [vmem:[%s13 + $0xf8] sm:$0xff]
      %v4202 = vld [vmem:[%s13 + $0x100] sm:$0xff]
      %v4203 = vld [vmem:[%s13 + $0x108] sm:$0xff]
      %v4204 = vld [vmem:[%s13 + $0x110] sm:$0xff]
      %v4205 = vld [vmem:[%s13 + $0x118] sm:$0xff]
      %v4206 = vld [vmem:[%s13 + $0x120] sm:$0xff]
      %v4207 = vld [vmem:[%s13 + $0x128] sm:$0xff]
      %v4208 = vld [vmem:[%s13 + $0x130] sm:$0xff]
      %v4209 = vld [vmem:[%s13 + $0x138] sm:$0xff]
      %v4210 = vld [vmem:[%s13 + $0x140] sm:$0xff]
      %v4211 = vld [vmem:[%s13 + $0x148] sm:$0xff]
      %v4212 = vld [vmem:[%s13 + $0x150] sm:$0xff]
      %v4213 = vld [vmem:[%s13 + $0x158] sm:$0xff]
      %v4214 = vld [vmem:[%s13 + $0x160] sm:$0xff]
      %v4215 = vld [vmem:[%s13 + $0x168] sm:$0xff]
      %v4216 = vld [vmem:[%s13 + $0x170] sm:$0xff]
      %v4217 = vld [vmem:[%s13 + $0x178] sm:$0xff]
      %v4218 = vld [vmem:[%s13 + $0x180] sm:$0xff]
      %v4219 = vld [vmem:[%s13 + $0x188] sm:$0xff]
      %v4220 = vld [vmem:[%s13 + $0x190] sm:$0xff]
      %v4221 = vld [vmem:[%s13 + $0x198] sm:$0xff]
      %v4222 = vld [vmem:[%s13 + $0x1a0] sm:$0xff]
      %v4223 = vld [vmem:[%s13 + $0x1a8] sm:$0xff]
      %v4224 = vld [vmem:[%s13 + $0x1b0] sm:$0xff]
      %v4225 = vld [vmem:[%s13 + $0x1b8] sm:$0xff]
      %v4226 = vld [vmem:[%s13 + $0x1c0] sm:$0xff]
      %v4227 = vld [vmem:[%s13 + $0x1c8] sm:$0xff]
      %v4228 = vld [vmem:[%s13 + $0x1d0] sm:$0xff]
      %v4229 = vld [vmem:[%s13 + $0x1d8] sm:$0xff]
      %v4230 = vld [vmem:[%s13 + $0x1e0] sm:$0xff]
      %v4231 = vld [vmem:[%s13 + $0x1e8] sm:$0xff]
      %v4232 = vld [vmem:[%s13 + $0x1f0] sm:$0xff]
      %v4233 = vld [vmem:[%s13 + $0x1f8] sm:$0xff]
      %v4234 = vld [vmem:[%s14] sm:$0xff]
      %v4235 = vld [vmem:[%s14 + $0x8] sm:$0xff]
      %v4236 = vld [vmem:[%s14 + $0x10] sm:$0xff]
      %v4237 = vld [vmem:[%s14 + $0x18] sm:$0xff]
      %v4238 = vld [vmem:[%s14 + $0x20] sm:$0xff]
      %v4239 = vld [vmem:[%s14 + $0x28] sm:$0xff]
      %v4240 = vld [vmem:[%s14 + $0x30] sm:$0xff]
      %v4241 = vld [vmem:[%s14 + $0x38] sm:$0xff]
      %v4242 = vld [vmem:[%s14 + $0x40] sm:$0xff]
      %v4243 = vld [vmem:[%s14 + $0x48] sm:$0xff]
      %v4244 = vld [vmem:[%s14 + $0x50] sm:$0xff]
      %v4245 = vld [vmem:[%s14 + $0x58] sm:$0xff]
      %v4246 = vld [vmem:[%s14 + $0x60] sm:$0xff]
      %v4247 = vld [vmem:[%s14 + $0x68] sm:$0xff]
      %v4248 = vld [vmem:[%s14 + $0x70] sm:$0xff]
      %v4249 = vld [vmem:[%s14 + $0x78] sm:$0xff]
      %v4250 = vld [vmem:[%s14 + $0x80] sm:$0xff]
      %v4251 = vld [vmem:[%s14 + $0x88] sm:$0xff]
      %v4252 = vld [vmem:[%s14 + $0x90] sm:$0xff]
      %v4253 = vld [vmem:[%s14 + $0x98] sm:$0xff]
      %v4254 = vld [vmem:[%s14 + $0xa0] sm:$0xff]
      %v4255 = vld [vmem:[%s14 + $0xa8] sm:$0xff]
      %v4256 = vld [vmem:[%s14 + $0xb0] sm:$0xff]
      %v4257 = vld [vmem:[%s14 + $0xb8] sm:$0xff]
      %v4258 = vld [vmem:[%s14 + $0xc0] sm:$0xff]
      %v4259 = vld [vmem:[%s14 + $0xc8] sm:$0xff]
      %v4260 = vld [vmem:[%s14 + $0xd0] sm:$0xff]
      %v4261 = vld [vmem:[%s14 + $0xd8] sm:$0xff]
      %v4262 = vld [vmem:[%s14 + $0xe0] sm:$0xff]
      %v4263 = vld [vmem:[%s14 + $0xe8] sm:$0xff]
      %v4264 = vld [vmem:[%s14 + $0xf0] sm:$0xff]
      %v4265 = vld [vmem:[%s14 + $0xf8] sm:$0xff]
      %v4266 = vld [vmem:[%s14 + $0x100] sm:$0xff]
      %v4267 = vld [vmem:[%s14 + $0x108] sm:$0xff]
      %v4268 = vld [vmem:[%s14 + $0x110] sm:$0xff]
      %v4269 = vld [vmem:[%s14 + $0x118] sm:$0xff]
      %v4270 = vld [vmem:[%s14 + $0x120] sm:$0xff]
      %v4271 = vld [vmem:[%s14 + $0x128] sm:$0xff]
      %v4272 = vld [vmem:[%s14 + $0x130] sm:$0xff]
      %v4273 = vld [vmem:[%s14 + $0x138] sm:$0xff]
      %v4274 = vld [vmem:[%s14 + $0x140] sm:$0xff]
      %v4275 = vld [vmem:[%s14 + $0x148] sm:$0xff]
      %v4276 = vld [vmem:[%s14 + $0x150] sm:$0xff]
      %v4277 = vld [vmem:[%s14 + $0x158] sm:$0xff]
      %v4278 = vld [vmem:[%s14 + $0x160] sm:$0xff]
      %v4279 = vld [vmem:[%s14 + $0x168] sm:$0xff]
      %v4280 = vld [vmem:[%s14 + $0x170] sm:$0xff]
      %v4281 = vld [vmem:[%s14 + $0x178] sm:$0xff]
      %v4282 = vld [vmem:[%s14 + $0x180] sm:$0xff]
      %v4283 = vld [vmem:[%s14 + $0x188] sm:$0xff]
      %v4284 = vld [vmem:[%s14 + $0x190] sm:$0xff]
      %v4285 = vld [vmem:[%s14 + $0x198] sm:$0xff]
      %v4286 = vld [vmem:[%s14 + $0x1a0] sm:$0xff]
      %v4287 = vld [vmem:[%s14 + $0x1a8] sm:$0xff]
      %v4288 = vld [vmem:[%s14 + $0x1b0] sm:$0xff]
      %v4289 = vld [vmem:[%s14 + $0x1b8] sm:$0xff]
      %v4290 = vld [vmem:[%s14 + $0x1c0] sm:$0xff]
      %v4291 = vld [vmem:[%s14 + $0x1c8] sm:$0xff]
      %v4292 = vld [vmem:[%s14 + $0x1d0] sm:$0xff]
      %v4293 = vld [vmem:[%s14 + $0x1d8] sm:$0xff]
      %v4294 = vld [vmem:[%s14 + $0x1e0] sm:$0xff]
      %v4295 = vld [vmem:[%s14 + $0x1e8] sm:$0xff]
      %v4296 = vld [vmem:[%s14 + $0x1f0] sm:$0xff]
      %v4297 = vld [vmem:[%s14 + $0x1f8] sm:$0xff]
      %4298 = vmatprep.subr.mxu0 %v4235
      %4299 = vmatpush1.msra.mxu0 %v4234
      %4300 = vmatprep.subr.mxu0 %v4237
      %4301 = vmatpush1.msra.mxu0 %v4236
      %4302 = vmatprep.subr.mxu0 %v4239
      %4303 = vmatpush1.msra.mxu0 %v4238
      %4304 = vmatprep.subr.mxu0 %v4241
      %4305 = vmatpush1.msra.mxu0 %v4240
      %4306 = vmatprep.subr.mxu0 %v4243
      %4307 = vmatpush1.msra.mxu0 %v4242
      %4308 = vmatprep.subr.mxu0 %v4245
      %4309 = vmatpush1.msra.mxu0 %v4244
      %4310 = vmatprep.subr.mxu0 %v4247
      %4311 = vmatpush1.msra.mxu0 %v4246
      %4312 = vmatprep.subr.mxu0 %v4249
      %4313 = vmatpush1.msra.mxu0 %v4248
      %4314 = vmatprep.subr.mxu0 %v4251
      %4315 = vmatpush1.msra.mxu0 %v4250
      %4316 = vmatprep.subr.mxu0 %v4253
      %4317 = vmatpush1.msra.mxu0 %v4252
      %4318 = vmatprep.subr.mxu0 %v4255
      %4319 = vmatpush1.msra.mxu0 %v4254
      %4320 = vmatprep.subr.mxu0 %v4257
      %4321 = vmatpush1.msra.mxu0 %v4256
      %4322 = vmatprep.subr.mxu0 %v4259
      %4323 = vmatpush1.msra.mxu0 %v4258
      %4324 = vmatprep.subr.mxu0 %v4261
      %4325 = vmatpush1.msra.mxu0 %v4260
      %4326 = vmatprep.subr.mxu0 %v4263
      %4327 = vmatpush1.msra.mxu0 %v4262
      %4328 = vmatprep.subr.mxu0 %v4265
      %4329 = vmatpush1.msra.mxu0 %v4264
      %4330 = vmatprep.subr.mxu0 %v4267
      %4331 = vmatpush1.msra.mxu0 %v4266
      %4332 = vmatprep.subr.mxu0 %v4269
      %4333 = vmatpush1.msra.mxu0 %v4268
      %4334 = vmatprep.subr.mxu0 %v4271
      %4335 = vmatpush1.msra.mxu0 %v4270
      %4336 = vmatprep.subr.mxu0 %v4273
      %4337 = vmatpush1.msra.mxu0 %v4272
      %4338 = vmatprep.subr.mxu0 %v4275
      %4339 = vmatpush1.msra.mxu0 %v4274
      %4340 = vmatprep.subr.mxu0 %v4277
      %4341 = vmatpush1.msra.mxu0 %v4276
      %4342 = vmatprep.subr.mxu0 %v4279
      %4343 = vmatpush1.msra.mxu0 %v4278
      %4344 = vmatprep.subr.mxu0 %v4281
      %4345 = vmatpush1.msra.mxu0 %v4280
      %4346 = vmatprep.subr.mxu0 %v4283
      %4347 = vmatpush1.msra.mxu0 %v4282
      %4348 = vmatprep.subr.mxu0 %v4285
      %4349 = vmatpush1.msra.mxu0 %v4284
      %4350 = vmatprep.subr.mxu0 %v4287
      %4351 = vmatpush1.msra.mxu0 %v4286
      %4352 = vmatprep.subr.mxu0 %v4289
      %4353 = vmatpush1.msra.mxu0 %v4288
      %4354 = vmatprep.subr.mxu0 %v4291
      %4355 = vmatpush1.msra.mxu0 %v4290
      %4356 = vmatprep.subr.mxu0 %v4293
      %4357 = vmatpush1.msra.mxu0 %v4292
      %4358 = vmatprep.subr.mxu0 %v4295
      %4359 = vmatpush1.msra.mxu0 %v4294
      %4360 = vmatprep.subr.mxu0 %v4297
      %4361 = vmatpush1.msra.mxu0 %v4296
      %4362 = vmatprep.mubr.f32.mxu0 %v4162
      %4363 = vmatmul.mubr.f32.gmra.mrb[0].mxu0 %v4160
      %v4364 = vpop.f32.mrb[0].mxu0
      %v4365 = vadd.f32 0.0, %v4364
      %v4366 = vpop.f32.mrb[0].mxu0
      %v4367 = vadd.f32 0.0, %v4366
      %4368 = vmatprep.mubr.f32.mxu0 %v4168
      %4369 = vmatmul.mubr.f32.gmra.mrb[0].mxu0 %v4166
      %v4370 = vpop.f32.mrb[0].mxu0
      %v4371 = vadd.f32 0.0, %v4370
      %v4372 = vpop.f32.mrb[0].mxu0
      %v4373 = vadd.f32 0.0, %v4372
      %4374 = vdwg.mxu0
      %4375 = vmatprep.subr.mxu0 %v4171
      %4376 = vmatpush1.msra.mxu0 %v4170
      %4377 = vmatprep.subr.mxu0 %v4173
      %4378 = vmatpush1.msra.mxu0 %v4172
      %4379 = vmatprep.subr.mxu0 %v4175
      %4380 = vmatpush1.msra.mxu0 %v4174
      %4381 = vmatprep.subr.mxu0 %v4177
      %4382 = vmatpush1.msra.mxu0 %v4176
      %4383 = vmatprep.subr.mxu0 %v4179
      %4384 = vmatpush1.msra.mxu0 %v4178
      %4385 = vmatprep.subr.mxu0 %v4181
      %4386 = vmatpush1.msra.mxu0 %v4180
      %4387 = vmatprep.subr.mxu0 %v4183
      %4388 = vmatpush1.msra.mxu0 %v4182
      %4389 = vmatprep.subr.mxu0 %v4185
      %4390 = vmatpush1.msra.mxu0 %v4184
      %4391 = vmatprep.subr.mxu0 %v4187
      %4392 = vmatpush1.msra.mxu0 %v4186
      %4393 = vmatprep.subr.mxu0 %v4189
      %4394 = vmatpush1.msra.mxu0 %v4188
      %4395 = vmatprep.subr.mxu0 %v4191
      %4396 = vmatpush1.msra.mxu0 %v4190
      %4397 = vmatprep.subr.mxu0 %v4193
      %4398 = vmatpush1.msra.mxu0 %v4192
      %4399 = vmatprep.subr.mxu0 %v4195
      %4400 = vmatpush1.msra.mxu0 %v4194
      %4401 = vmatprep.subr.mxu0 %v4197
      %4402 = vmatpush1.msra.mxu0 %v4196
      %4403 = vmatprep.subr.mxu0 %v4199
      %4404 = vmatpush1.msra.mxu0 %v4198
      %4405 = vmatprep.subr.mxu0 %v4201
      %4406 = vmatpush1.msra.mxu0 %v4200
      %4407 = vmatprep.subr.mxu0 %v4203
      %4408 = vmatpush1.msra.mxu0 %v4202
      %4409 = vmatprep.subr.mxu0 %v4205
      %4410 = vmatpush1.msra.mxu0 %v4204
      %4411 = vmatprep.subr.mxu0 %v4207
      %4412 = vmatpush1.msra.mxu0 %v4206
      %4413 = vmatprep.subr.mxu0 %v4209
      %4414 = vmatpush1.msra.mxu0 %v4208
      %4415 = vmatprep.subr.mxu0 %v4211
      %4416 = vmatpush1.msra.mxu0 %v4210
      %4417 = vmatprep.subr.mxu0 %v4213
      %4418 = vmatpush1.msra.mxu0 %v4212
      %4419 = vmatprep.subr.mxu0 %v4215
      %4420 = vmatpush1.msra.mxu0 %v4214
      %4421 = vmatprep.subr.mxu0 %v4217
      %4422 = vmatpush1.msra.mxu0 %v4216
      %4423 = vmatprep.subr.mxu0 %v4219
      %4424 = vmatpush1.msra.mxu0 %v4218
      %4425 = vmatprep.subr.mxu0 %v4221
      %4426 = vmatpush1.msra.mxu0 %v4220
      %4427 = vmatprep.subr.mxu0 %v4223
      %4428 = vmatpush1.msra.mxu0 %v4222
      %4429 = vmatprep.subr.mxu0 %v4225
      %4430 = vmatpush1.msra.mxu0 %v4224
      %4431 = vmatprep.subr.mxu0 %v4227
      %4432 = vmatpush1.msra.mxu0 %v4226
      %4433 = vmatprep.subr.mxu0 %v4229
      %4434 = vmatpush1.msra.mxu0 %v4228
      %4435 = vmatprep.subr.mxu0 %v4231
      %4436 = vmatpush1.msra.mxu0 %v4230
      %4437 = vmatprep.subr.mxu0 %v4233
      %4438 = vmatpush1.msra.mxu0 %v4232
      %4439 = vmatprep.mubr.f32.mxu0 %v2550
      %4440 = vmatmul.mubr.f32.gmra.mrb[0].mxu0 %v1088
      %v4441 = vpop.f32.mrb[0].mxu0
      %v4442 = vadd.f32 %v4365, %v4441
      %v4443 = vpop.f32.mrb[0].mxu0
      %v4444 = vadd.f32 %v4367, %v4443
      %4445 = vmatprep.mubr.f32.mxu0 %v2551
      %4446 = vmatmul.mubr.f32.gmra.mrb[0].mxu0 %v1089
      %v4447 = vpop.f32.mrb[0].mxu0
      %v4448 = vadd.f32 %v4371, %v4447
      %v4449 = vpop.f32.mrb[0].mxu0
      %v4450 = vadd.f32 %v4373, %v4449
      %4451 = vdwg.mxu0
      %v4452 = vxor.u32 %v4442, 2147483648
      %v4453 = vxor.u32 %v4444, 2147483648
      %v4454 = vxor.u32 %v4448, 2147483648
      %v4455 = vxor.u32 %v4450, 2147483648
      %v4456 = vmul.f32 %v4452, 1.442695
      %v4457 = vpow.pop %v4456
      %v4458 = vmul.f32 %v4453, 1.442695
      %v4459 = vpow.pop %v4458
      %v4460 = vmul.f32 %v4454, 1.442695
      %v4461 = vpow.pop %v4460
      %v4462 = vmul.f32 %v4455, 1.442695
      %v4463 = vpow.pop %v4462
      %v4464 = vadd.f32 %v4457, 1.0
      %v4465 = vadd.f32 %v4459, 1.0
      %v4466 = vadd.f32 %v4461, 1.0
      %v4467 = vadd.f32 %v4463, 1.0
      %v4468 = vrcp.pop %v4464
      %v4469 = vmul.f32 1.0, %v4468
      %v4470 = vrcp.pop %v4465
      %v4471 = vmul.f32 1.0, %v4470
      %v4472 = vrcp.pop %v4466
      %v4473 = vmul.f32 1.0, %v4472
      %v4474 = vrcp.pop %v4467
      %v4475 = vmul.f32 1.0, %v4474
      %v4476 = vmul.f32 %v4469, %v1088
      %v4477 = vmul.f32 %v4471, %v2550
      %v4478 = vmul.f32 %v4473, %v1089
      %v4479 = vmul.f32 %v4475, %v2551
      %v4480 = vsub.f32 1.0, %v4469
      %v4481 = vsub.f32 1.0, %v4471
      %v4482 = vsub.f32 1.0, %v4473
      %v4483 = vsub.f32 1.0, %v4475
      %v4484 = vmul.f32 %v4480, %v4160
      %v4485 = vmul.f32 %v4481, %v4162
      %v4486 = vmul.f32 %v4482, %v4166
      %v4487 = vmul.f32 %v4483, %v4168
      %v4488 = vadd.f32 %v4476, %v4484
      %v4489 = vadd.f32 %v4477, %v4485
      %v4490 = vadd.f32 %v4478, %v4486
      %v4491 = vadd.f32 %v4479, %v4487
      %v4492 = vmul.f32 %v4488, %v1257
      %v4493 = vmul.f32 %v4489, %v1257
      %v4494 = vmul.f32 %v4490, %v1262
      %v4495 = vmul.f32 %v4491, %v1262
      %v4496 = vsel %vm1278, %v875, 0.0
      %v4497 = vrot.slane %v4496, 4
      %v4498 = vadd.f32 %v4496, %v4497
      %v4499 = vrot.slane %v4498, 2
      %v4500 = vadd.f32 %v4498, %v4499
      %v4501 = vrot.slane %v4500, 1
      %v4502 = vadd.f32 %v4500, %v4501
      %v4503 = vsel %vm1278, %v876, 0.0
      %v4504 = vrot.slane %v4503, 4
      %v4505 = vadd.f32 %v4503, %v4504
      %v4506 = vrot.slane %v4505, 2
      %v4507 = vadd.f32 %v4505, %v4506
      %v4508 = vrot.slane %v4507, 1
      %v4509 = vadd.f32 %v4507, %v4508
      %vm4510 = vcmp.gt.f32.partialorder %v4502, 0.0
      %vm4511 = vcmp.gt.f32.partialorder %v4509, 0.0
      %v4512 = vsel %vm1278, %v883, 0.0
      %v4513 = vrot.slane %v4512, 4
      %v4514 = vadd.f32 %v4512, %v4513
      %v4515 = vrot.slane %v4514, 2
      %v4516 = vadd.f32 %v4514, %v4515
      %v4517 = vrot.slane %v4516, 1
      %v4518 = vadd.f32 %v4516, %v4517
      %v4519 = vsel %vm1278, %v884, 0.0
      %v4520 = vrot.slane %v4519, 4
      %v4521 = vadd.f32 %v4519, %v4520
      %v4522 = vrot.slane %v4521, 2
      %v4523 = vadd.f32 %v4521, %v4522
      %v4524 = vrot.slane %v4523, 1
      %v4525 = vadd.f32 %v4523, %v4524
      %vm4526 = vcmp.gt.f32.partialorder %v4518, 0.0
      %vm4527 = vcmp.gt.f32.partialorder %v4525, 0.0
      %v4528 = vld [vmem:[%s15] sm:$0xff]
      %v4529 = vld [vmem:[%s15 + $0x8] sm:$0xff]
      %v4530 = vld [vmem:[%s15 + $0x10] sm:$0xff]
      %v4531 = vld [vmem:[%s15 + $0x18] sm:$0xff]
      %v4532 = vld [vmem:[%s15 + $0x20] sm:$0xff]
      %v4533 = vld [vmem:[%s15 + $0x28] sm:$0xff]
      %v4534 = vld [vmem:[%s15 + $0x30] sm:$0xff]
      %v4535 = vld [vmem:[%s15 + $0x38] sm:$0xff]
      %v4536 = vld [vmem:[%s15 + $0x40] sm:$0xff]
      %v4537 = vld [vmem:[%s15 + $0x48] sm:$0xff]
      %v4538 = vld [vmem:[%s15 + $0x50] sm:$0xff]
      %v4539 = vld [vmem:[%s15 + $0x58] sm:$0xff]
      %v4540 = vld [vmem:[%s15 + $0x60] sm:$0xff]
      %v4541 = vld [vmem:[%s15 + $0x68] sm:$0xff]
      %v4542 = vld [vmem:[%s15 + $0x70] sm:$0xff]
      %v4543 = vld [vmem:[%s15 + $0x78] sm:$0xff]
      %v4544 = vld [vmem:[%s15 + $0x80] sm:$0xff]
      %v4545 = vld [vmem:[%s15 + $0x88] sm:$0xff]
      %v4546 = vld [vmem:[%s15 + $0x90] sm:$0xff]
      %v4547 = vld [vmem:[%s15 + $0x98] sm:$0xff]
      %v4548 = vld [vmem:[%s15 + $0xa0] sm:$0xff]
      %v4549 = vld [vmem:[%s15 + $0xa8] sm:$0xff]
      %v4550 = vld [vmem:[%s15 + $0xb0] sm:$0xff]
      %v4551 = vld [vmem:[%s15 + $0xb8] sm:$0xff]
      %v4552 = vld [vmem:[%s15 + $0xc0] sm:$0xff]
      %v4553 = vld [vmem:[%s15 + $0xc8] sm:$0xff]
      %v4554 = vld [vmem:[%s15 + $0xd0] sm:$0xff]
      %v4555 = vld [vmem:[%s15 + $0xd8] sm:$0xff]
      %v4556 = vld [vmem:[%s15 + $0xe0] sm:$0xff]
      %v4557 = vld [vmem:[%s15 + $0xe8] sm:$0xff]
      %v4558 = vld [vmem:[%s15 + $0xf0] sm:$0xff]
      %v4559 = vld [vmem:[%s15 + $0xf8] sm:$0xff]
      %v4560 = vld [vmem:[%s16] sm:$0x1]
      %v4562 = vlaneseq
      %v4563 = vshrl.u32 %v4562, 7
      %v4564 = vsub.s32 0, %v4563
      %v4565 = vrot.slane %v4560, %v4564
      %4567 = vmatprep.subr.mxu0 0.0
      %4568 = vmatpush1.msra.mxu0 %v4528
      %4569 = vmatprep.subr.mxu0 0.0
      %4570 = vmatpush1.msra.mxu0 %v4529
      %4571 = vmatprep.subr.mxu0 0.0
      %4572 = vmatpush1.msra.mxu0 %v4530
      %4573 = vmatprep.subr.mxu0 0.0
      %4574 = vmatpush1.msra.mxu0 %v4531
      %4575 = vmatprep.subr.mxu0 0.0
      %4576 = vmatpush1.msra.mxu0 %v4532
      %4577 = vmatprep.subr.mxu0 0.0
      %4578 = vmatpush1.msra.mxu0 %v4533
      %4579 = vmatprep.subr.mxu0 0.0
      %4580 = vmatpush1.msra.mxu0 %v4534
      %4581 = vmatprep.subr.mxu0 0.0
      %4582 = vmatpush1.msra.mxu0 %v4535
      %4583 = vmatprep.subr.mxu0 0.0
      %4584 = vmatpush1.msra.mxu0 %v4536
      %4585 = vmatprep.subr.mxu0 0.0
      %4586 = vmatpush1.msra.mxu0 %v4537
      %4587 = vmatprep.subr.mxu0 0.0
      %4588 = vmatpush1.msra.mxu0 %v4538
      %4589 = vmatprep.subr.mxu0 0.0
      %4590 = vmatpush1.msra.mxu0 %v4539
      %4591 = vmatprep.subr.mxu0 0.0
      %4592 = vmatpush1.msra.mxu0 %v4540
      %4593 = vmatprep.subr.mxu0 0.0
      %4594 = vmatpush1.msra.mxu0 %v4541
      %4595 = vmatprep.subr.mxu0 0.0
      %4596 = vmatpush1.msra.mxu0 %v4542
      %4597 = vmatprep.subr.mxu0 0.0
      %4598 = vmatpush1.msra.mxu0 %v4543
      %4599 = vmatprep.subr.mxu0 0.0
      %4600 = vmatpush1.msra.mxu0 %v4544
      %4601 = vmatprep.subr.mxu0 0.0
      %4602 = vmatpush1.msra.mxu0 %v4545
      %4603 = vmatprep.subr.mxu0 0.0
      %4604 = vmatpush1.msra.mxu0 %v4546
      %4605 = vmatprep.subr.mxu0 0.0
      %4606 = vmatpush1.msra.mxu0 %v4547
      %4607 = vmatprep.subr.mxu0 0.0
      %4608 = vmatpush1.msra.mxu0 %v4548
      %4609 = vmatprep.subr.mxu0 0.0
      %4610 = vmatpush1.msra.mxu0 %v4549
      %4611 = vmatprep.subr.mxu0 0.0
      %4612 = vmatpush1.msra.mxu0 %v4550
      %4613 = vmatprep.subr.mxu0 0.0
      %4614 = vmatpush1.msra.mxu0 %v4551
      %4615 = vmatprep.subr.mxu0 0.0
      %4616 = vmatpush1.msra.mxu0 %v4552
      %4617 = vmatprep.subr.mxu0 0.0
      %4618 = vmatpush1.msra.mxu0 %v4553
      %4619 = vmatprep.subr.mxu0 0.0
      %4620 = vmatpush1.msra.mxu0 %v4554
      %4621 = vmatprep.subr.mxu0 0.0
      %4622 = vmatpush1.msra.mxu0 %v4555
      %4623 = vmatprep.subr.mxu0 0.0
      %4624 = vmatpush1.msra.mxu0 %v4556
      %4625 = vmatprep.subr.mxu0 0.0
      %4626 = vmatpush1.msra.mxu0 %v4557
      %4627 = vmatprep.subr.mxu0 0.0
      %4628 = vmatpush1.msra.mxu0 %v4558
      %4629 = vmatprep.subr.mxu0 0.0
      %4630 = vmatpush1.msra.mxu0 %v4559
      %4631 = vmatprep.mubr.f32.mxu0 %v4493
      %4632 = vmatmul.mubr.f32.gmra.mrb[0].mxu0 %v4492
      %v4633 = vpop.f32.mrb[0].mxu0
      %v4634 = vadd.f32 %v4565, %v4633
      %v4635 = vpop.f32.mrb[0].mxu0
      %4636 = vmatprep.mubr.f32.mxu0 %v4495
      %4637 = vmatmul.mubr.f32.gmra.mrb[0].mxu0 %v4494
      %v4638 = vpop.f32.mrb[0].mxu0
      %v4639 = vadd.f32 %v4565, %v4638
      %v4640 = vpop.f32.mrb[0].mxu0
      %4641 = vdwg.mxu0
      %v4642 = vmax.f32 %v4634, 0.0
      %v4643 = vmax.f32 %v4639, 0.0
      %vm4644 = vcmp.gt.f32.partialorder %v875, 0.0
      %vm4645 = vcmp.gt.f32.partialorder %v876, 0.0
      %v4646 = vsel %vm4644, 1, 0
      %v4647 = vsel %vm4645, 1, 0
      %4648 = vset.pattern.permute.xlu0 0
      %4649 = vperm.xlu0 %4648, %v4646
      %v4650 = vpop.permute.xlu0 %4649
      %4651 = vset.pattern.permute.xlu0 0
      %4652 = vperm.xlu0 %4651, %v4647
      %v4653 = vpop.permute.xlu0 %4652
      %vm4654 = vcmp.eq.s32.totalorder %v4650, 1
      %vm4655 = vcmp.eq.s32.totalorder %v4653, 1
      %v4656 = vsel %vm4654, %v4642, -1e+30
      %v4657 = vsel %vm4655, %v4643, -1e+30
      %v4658 = vsel %vm1505, %v4656, -inf
      %v4659 = vrot.slane %v4658, 4
      %v4660 = vmax.f32 %v4658, %v4659
      %v4661 = vrot.slane %v4660, 2
      %v4662 = vmax.f32 %v4660, %v4661
      %v4663 = vrot.slane %v4662, 1
      %v4664 = vmax.f32 %v4662, %v4663
      %v4665 = vsel %vm1505, %v4657, -inf
      %v4666 = vrot.slane %v4665, 4
      %v4667 = vmax.f32 %v4665, %v4666
      %v4668 = vrot.slane %v4667, 2
      %v4669 = vmax.f32 %v4667, %v4668
      %v4670 = vrot.slane %v4669, 1
      %v4671 = vmax.f32 %v4669, %v4670
      %v4672 = vsel %vm4510, 1, 0
      %v4673 = vsel %vm4511, 1, 0
      %4674 = vset.pattern.permute.xlu0 0
      %4675 = vperm.xlu0 %4674, %v4672
      %v4676 = vpop.permute.xlu0 %4675
      %4677 = vset.pattern.permute.xlu0 0
      %4678 = vperm.xlu0 %4677, %v4673
      %v4679 = vpop.permute.xlu0 %4678
      %vm4680 = vcmp.eq.s32.totalorder %v4676, 1
      %vm4681 = vcmp.eq.s32.totalorder %v4679, 1
      %v4682 = vsel %vm4680, %v4664, 0.0
      %v4683 = vsel %vm4681, %v4671, 0.0
      %v4684 = vrot.slane %v4492, 1
      %v4685 = vrot.slane %v4493, 1
      %v4686 = vrot.slane %v4494, 1
      %v4687 = vrot.slane %v4495, 1
      %v4688 = vlaneseq
      %v4689 = vshrl.u32 %v4688, 7
      %vm4690 = vcmp.lt.s32.totalorder %v4689, 7
      %v4691 = vsel %vm4690, %v4684, %v4686
      %v4692 = vsel %vm4690, %v4685, %v4687
      %v4693 = vsel %vm4690, %v4686, %v4684
      %v4694 = vsel %vm4690, %v4687, %v4685
      %v4695 = vld [vmem:[%s17] sm:$0xff]
      %v4696 = vld [vmem:[%s17 + $0x8] sm:$0xff]
      %v4697 = vld [vmem:[%s17 + $0x10] sm:$0xff]
      %v4698 = vld [vmem:[%s17 + $0x18] sm:$0xff]
      %v4699 = vld [vmem:[%s17 + $0x20] sm:$0xff]
      %v4700 = vld [vmem:[%s17 + $0x28] sm:$0xff]
      %v4701 = vld [vmem:[%s17 + $0x30] sm:$0xff]
      %v4702 = vld [vmem:[%s17 + $0x38] sm:$0xff]
      %v4703 = vld [vmem:[%s17 + $0x40] sm:$0xff]
      %v4704 = vld [vmem:[%s17 + $0x48] sm:$0xff]
      %v4705 = vld [vmem:[%s17 + $0x50] sm:$0xff]
      %v4706 = vld [vmem:[%s17 + $0x58] sm:$0xff]
      %v4707 = vld [vmem:[%s17 + $0x60] sm:$0xff]
      %v4708 = vld [vmem:[%s17 + $0x68] sm:$0xff]
      %v4709 = vld [vmem:[%s17 + $0x70] sm:$0xff]
      %v4710 = vld [vmem:[%s17 + $0x78] sm:$0xff]
      %v4711 = vld [vmem:[%s17 + $0x80] sm:$0xff]
      %v4712 = vld [vmem:[%s17 + $0x88] sm:$0xff]
      %v4713 = vld [vmem:[%s17 + $0x90] sm:$0xff]
      %v4714 = vld [vmem:[%s17 + $0x98] sm:$0xff]
      %v4715 = vld [vmem:[%s17 + $0xa0] sm:$0xff]
      %v4716 = vld [vmem:[%s17 + $0xa8] sm:$0xff]
      %v4717 = vld [vmem:[%s17 + $0xb0] sm:$0xff]
      %v4718 = vld [vmem:[%s17 + $0xb8] sm:$0xff]
      %v4719 = vld [vmem:[%s17 + $0xc0] sm:$0xff]
      %v4720 = vld [vmem:[%s17 + $0xc8] sm:$0xff]
      %v4721 = vld [vmem:[%s17 + $0xd0] sm:$0xff]
      %v4722 = vld [vmem:[%s17 + $0xd8] sm:$0xff]
      %v4723 = vld [vmem:[%s17 + $0xe0] sm:$0xff]
      %v4724 = vld [vmem:[%s17 + $0xe8] sm:$0xff]
      %v4725 = vld [vmem:[%s17 + $0xf0] sm:$0xff]
      %v4726 = vld [vmem:[%s17 + $0xf8] sm:$0xff]
      %v4727 = vld [vmem:[%s18] sm:$0xff]
      %v4728 = vld [vmem:[%s18 + $0x8] sm:$0xff]
      %v4729 = vld [vmem:[%s18 + $0x10] sm:$0xff]
      %v4730 = vld [vmem:[%s18 + $0x18] sm:$0xff]
      %v4731 = vld [vmem:[%s18 + $0x20] sm:$0xff]
      %v4732 = vld [vmem:[%s18 + $0x28] sm:$0xff]
      %v4733 = vld [vmem:[%s18 + $0x30] sm:$0xff]
      %v4734 = vld [vmem:[%s18 + $0x38] sm:$0xff]
      %v4735 = vld [vmem:[%s18 + $0x40] sm:$0xff]
      %v4736 = vld [vmem:[%s18 + $0x48] sm:$0xff]
      %v4737 = vld [vmem:[%s18 + $0x50] sm:$0xff]
      %v4738 = vld [vmem:[%s18 + $0x58] sm:$0xff]
      %v4739 = vld [vmem:[%s18 + $0x60] sm:$0xff]
      %v4740 = vld [vmem:[%s18 + $0x68] sm:$0xff]
      %v4741 = vld [vmem:[%s18 + $0x70] sm:$0xff]
      %v4742 = vld [vmem:[%s18 + $0x78] sm:$0xff]
      %v4743 = vld [vmem:[%s18 + $0x80] sm:$0xff]
      %v4744 = vld [vmem:[%s18 + $0x88] sm:$0xff]
      %v4745 = vld [vmem:[%s18 + $0x90] sm:$0xff]
      %v4746 = vld [vmem:[%s18 + $0x98] sm:$0xff]
      %v4747 = vld [vmem:[%s18 + $0xa0] sm:$0xff]
      %v4748 = vld [vmem:[%s18 + $0xa8] sm:$0xff]
      %v4749 = vld [vmem:[%s18 + $0xb0] sm:$0xff]
      %v4750 = vld [vmem:[%s18 + $0xb8] sm:$0xff]
      %v4751 = vld [vmem:[%s18 + $0xc0] sm:$0xff]
      %v4752 = vld [vmem:[%s18 + $0xc8] sm:$0xff]
      %v4753 = vld [vmem:[%s18 + $0xd0] sm:$0xff]
      %v4754 = vld [vmem:[%s18 + $0xd8] sm:$0xff]
      %v4755 = vld [vmem:[%s18 + $0xe0] sm:$0xff]
      %v4756 = vld [vmem:[%s18 + $0xe8] sm:$0xff]
      %v4757 = vld [vmem:[%s18 + $0xf0] sm:$0xff]
      %v4758 = vld [vmem:[%s18 + $0xf8] sm:$0xff]
      %4759 = vmatprep.subr.mxu0 0.0
      %4760 = vmatpush1.msra.mxu0 %v4727
      %4761 = vmatprep.subr.mxu0 0.0
      %4762 = vmatpush1.msra.mxu0 %v4728
      %4763 = vmatprep.subr.mxu0 0.0
      %4764 = vmatpush1.msra.mxu0 %v4729
      %4765 = vmatprep.subr.mxu0 0.0
      %4766 = vmatpush1.msra.mxu0 %v4730
      %4767 = vmatprep.subr.mxu0 0.0
      %4768 = vmatpush1.msra.mxu0 %v4731
      %4769 = vmatprep.subr.mxu0 0.0
      %4770 = vmatpush1.msra.mxu0 %v4732
      %4771 = vmatprep.subr.mxu0 0.0
      %4772 = vmatpush1.msra.mxu0 %v4733
      %4773 = vmatprep.subr.mxu0 0.0
      %4774 = vmatpush1.msra.mxu0 %v4734
      %4775 = vmatprep.subr.mxu0 0.0
      %4776 = vmatpush1.msra.mxu0 %v4735
      %4777 = vmatprep.subr.mxu0 0.0
      %4778 = vmatpush1.msra.mxu0 %v4736
      %4779 = vmatprep.subr.mxu0 0.0
      %4780 = vmatpush1.msra.mxu0 %v4737
      %4781 = vmatprep.subr.mxu0 0.0
      %4782 = vmatpush1.msra.mxu0 %v4738
      %4783 = vmatprep.subr.mxu0 0.0
      %4784 = vmatpush1.msra.mxu0 %v4739
      %4785 = vmatprep.subr.mxu0 0.0
      %4786 = vmatpush1.msra.mxu0 %v4740
      %4787 = vmatprep.subr.mxu0 0.0
      %4788 = vmatpush1.msra.mxu0 %v4741
      %4789 = vmatprep.subr.mxu0 0.0
      %4790 = vmatpush1.msra.mxu0 %v4742
      %4791 = vmatprep.subr.mxu0 0.0
      %4792 = vmatpush1.msra.mxu0 %v4743
      %4793 = vmatprep.subr.mxu0 0.0
      %4794 = vmatpush1.msra.mxu0 %v4744
      %4795 = vmatprep.subr.mxu0 0.0
      %4796 = vmatpush1.msra.mxu0 %v4745
      %4797 = vmatprep.subr.mxu0 0.0
      %4798 = vmatpush1.msra.mxu0 %v4746
      %4799 = vmatprep.subr.mxu0 0.0
      %4800 = vmatpush1.msra.mxu0 %v4747
      %4801 = vmatprep.subr.mxu0 0.0
      %4802 = vmatpush1.msra.mxu0 %v4748
      %4803 = vmatprep.subr.mxu0 0.0
      %4804 = vmatpush1.msra.mxu0 %v4749
      %4805 = vmatprep.subr.mxu0 0.0
      %4806 = vmatpush1.msra.mxu0 %v4750
      %4807 = vmatprep.subr.mxu0 0.0
      %4808 = vmatpush1.msra.mxu0 %v4751
      %4809 = vmatprep.subr.mxu0 0.0
      %4810 = vmatpush1.msra.mxu0 %v4752
      %4811 = vmatprep.subr.mxu0 0.0
      %4812 = vmatpush1.msra.mxu0 %v4753
      %4813 = vmatprep.subr.mxu0 0.0
      %4814 = vmatpush1.msra.mxu0 %v4754
      %4815 = vmatprep.subr.mxu0 0.0
      %4816 = vmatpush1.msra.mxu0 %v4755
      %4817 = vmatprep.subr.mxu0 0.0
      %4818 = vmatpush1.msra.mxu0 %v4756
      %4819 = vmatprep.subr.mxu0 0.0
      %4820 = vmatpush1.msra.mxu0 %v4757
      %4821 = vmatprep.subr.mxu0 0.0
      %4822 = vmatpush1.msra.mxu0 %v4758
      %4823 = vmatprep.mubr.f32.mxu0 %v4692
      %4824 = vmatmul.mubr.f32.gmra.mrb[0].mxu0 %v4691
      %v4825 = vpop.f32.mrb[0].mxu0
      %v4826 = vadd.f32 0.0, %v4825
      %v4827 = vpop.f32.mrb[0].mxu0
      %4828 = vmatprep.mubr.f32.mxu0 %v4694
      %4829 = vmatmul.mubr.f32.gmra.mrb[0].mxu0 %v4693
      %v4830 = vpop.f32.mrb[0].mxu0
      %v4831 = vadd.f32 0.0, %v4830
      %v4832 = vpop.f32.mrb[0].mxu0
      %4833 = vdwg.mxu0
      %4834 = vmatprep.subr.mxu0 0.0
      %4835 = vmatpush1.msra.mxu0 %v4695
      %4836 = vmatprep.subr.mxu0 0.0
      %4837 = vmatpush1.msra.mxu0 %v4696
      %4838 = vmatprep.subr.mxu0 0.0
      %4839 = vmatpush1.msra.mxu0 %v4697
      %4840 = vmatprep.subr.mxu0 0.0
      %4841 = vmatpush1.msra.mxu0 %v4698
      %4842 = vmatprep.subr.mxu0 0.0
      %4843 = vmatpush1.msra.mxu0 %v4699
      %4844 = vmatprep.subr.mxu0 0.0
      %4845 = vmatpush1.msra.mxu0 %v4700
      %4846 = vmatprep.subr.mxu0 0.0
      %4847 = vmatpush1.msra.mxu0 %v4701
      %4848 = vmatprep.subr.mxu0 0.0
      %4849 = vmatpush1.msra.mxu0 %v4702
      %4850 = vmatprep.subr.mxu0 0.0
      %4851 = vmatpush1.msra.mxu0 %v4703
      %4852 = vmatprep.subr.mxu0 0.0
      %4853 = vmatpush1.msra.mxu0 %v4704
      %4854 = vmatprep.subr.mxu0 0.0
      %4855 = vmatpush1.msra.mxu0 %v4705
      %4856 = vmatprep.subr.mxu0 0.0
      %4857 = vmatpush1.msra.mxu0 %v4706
      %4858 = vmatprep.subr.mxu0 0.0
      %4859 = vmatpush1.msra.mxu0 %v4707
      %4860 = vmatprep.subr.mxu0 0.0
      %4861 = vmatpush1.msra.mxu0 %v4708
      %4862 = vmatprep.subr.mxu0 0.0
      %4863 = vmatpush1.msra.mxu0 %v4709
      %4864 = vmatprep.subr.mxu0 0.0
      %4865 = vmatpush1.msra.mxu0 %v4710
      %4866 = vmatprep.subr.mxu0 0.0
      %4867 = vmatpush1.msra.mxu0 %v4711
      %4868 = vmatprep.subr.mxu0 0.0
      %4869 = vmatpush1.msra.mxu0 %v4712
      %4870 = vmatprep.subr.mxu0 0.0
      %4871 = vmatpush1.msra.mxu0 %v4713
      %4872 = vmatprep.subr.mxu0 0.0
      %4873 = vmatpush1.msra.mxu0 %v4714
      %4874 = vmatprep.subr.mxu0 0.0
      %4875 = vmatpush1.msra.mxu0 %v4715
      %4876 = vmatprep.subr.mxu0 0.0
      %4877 = vmatpush1.msra.mxu0 %v4716
      %4878 = vmatprep.subr.mxu0 0.0
      %4879 = vmatpush1.msra.mxu0 %v4717
      %4880 = vmatprep.subr.mxu0 0.0
      %4881 = vmatpush1.msra.mxu0 %v4718
      %4882 = vmatprep.subr.mxu0 0.0
      %4883 = vmatpush1.msra.mxu0 %v4719
      %4884 = vmatprep.subr.mxu0 0.0
      %4885 = vmatpush1.msra.mxu0 %v4720
      %4886 = vmatprep.subr.mxu0 0.0
      %4887 = vmatpush1.msra.mxu0 %v4721
      %4888 = vmatprep.subr.mxu0 0.0
      %4889 = vmatpush1.msra.mxu0 %v4722
      %4890 = vmatprep.subr.mxu0 0.0
      %4891 = vmatpush1.msra.mxu0 %v4723
      %4892 = vmatprep.subr.mxu0 0.0
      %4893 = vmatpush1.msra.mxu0 %v4724
      %4894 = vmatprep.subr.mxu0 0.0
      %4895 = vmatpush1.msra.mxu0 %v4725
      %4896 = vmatprep.subr.mxu0 0.0
      %4897 = vmatpush1.msra.mxu0 %v4726
      %4898 = vmatprep.mubr.f32.mxu0 %v4493
      %4899 = vmatmul.mubr.f32.gmra.mrb[0].mxu0 %v4492
      %v4900 = vpop.f32.mrb[0].mxu0
      %v4901 = vadd.f32 %v4826, %v4900
      %v4902 = vpop.f32.mrb[0].mxu0
      %4903 = vmatprep.mubr.f32.mxu0 %v4495
      %4904 = vmatmul.mubr.f32.gmra.mrb[0].mxu0 %v4494
      %v4905 = vpop.f32.mrb[0].mxu0
      %v4906 = vadd.f32 %v4831, %v4905
      %v4907 = vpop.f32.mrb[0].mxu0
      %4908 = vdwg.mxu0
      %v4909 = vld [vmem:[%s19] sm:$0x1]
      %v4911 = vlaneseq
      %v4912 = vshrl.u32 %v4911, 7
      %v4913 = vsub.s32 0, %v4912
      %v4914 = vrot.slane %v4909, %v4913
      %v4916 = vadd.f32 %v4901, %v4914
      %v4917 = vadd.f32 %v4906, %v4914
      %v4918 = vmax.f32 %v4916, 0.0
      %v4919 = vmax.f32 %v4917, 0.0
      %vm4920 = vcmp.gt.f32.partialorder %v883, 0.0
      %vm4921 = vcmp.gt.f32.partialorder %v884, 0.0
      %v4922 = vsel %vm4920, 1, 0
      %v4923 = vsel %vm4921, 1, 0
      %4924 = vset.pattern.permute.xlu0 0
      %4925 = vperm.xlu0 %4924, %v4922
      %v4926 = vpop.permute.xlu0 %4925
      %4927 = vset.pattern.permute.xlu0 0
      %4928 = vperm.xlu0 %4927, %v4923
      %v4929 = vpop.permute.xlu0 %4928
      %vm4930 = vcmp.eq.s32.totalorder %v4926, 1
      %vm4931 = vcmp.eq.s32.totalorder %v4929, 1
      %v4932 = vsel %vm4930, %v4918, -1e+30
      %v4933 = vsel %vm4931, %v4919, -1e+30
      %v4934 = vsel %vm1505, %v4932, -inf
      %v4935 = vrot.slane %v4934, 4
      %v4936 = vmax.f32 %v4934, %v4935
      %v4937 = vrot.slane %v4936, 2
      %v4938 = vmax.f32 %v4936, %v4937
      %v4939 = vrot.slane %v4938, 1
      %v4940 = vmax.f32 %v4938, %v4939
      %v4941 = vsel %vm1505, %v4933, -inf
      %v4942 = vrot.slane %v4941, 4
      %v4943 = vmax.f32 %v4941, %v4942
      %v4944 = vrot.slane %v4943, 2
      %v4945 = vmax.f32 %v4943, %v4944
      %v4946 = vrot.slane %v4945, 1
      %v4947 = vmax.f32 %v4945, %v4946
      %v4948 = vsel %vm4526, 1, 0
      %v4949 = vsel %vm4527, 1, 0
      %4950 = vset.pattern.permute.xlu0 0
      %4951 = vperm.xlu0 %4950, %v4948
      %v4952 = vpop.permute.xlu0 %4951
      %4953 = vset.pattern.permute.xlu0 0
      %4954 = vperm.xlu0 %4953, %v4949
      %v4955 = vpop.permute.xlu0 %4954
      %vm4956 = vcmp.eq.s32.totalorder %v4952, 1
      %vm4957 = vcmp.eq.s32.totalorder %v4955, 1
      %v4958 = vsel %vm4956, %v4940, 0.0
      %v4959 = vsel %vm4957, %v4947, 0.0
      %vm4962 = vcmask 1041409
      %v4963 = vsel %vm4962, %v4683, %v4682
      %v4967 = vsel %vm4962, %v4959, %v4958
      %4968 = vrot.lane.b32.xlu0 %v4967, 8
      %v4969 = vpop.permute.xlu0 %4968
      %v4971 = vsel %vm1505, %v4963, %v4969
      %v4972 = vld [vmem:[%s20] sm:$0xff]
      %v4973 = vld [vmem:[%s20 + $0x8] sm:$0xff]
      %v4974 = vld [vmem:[%s21] sm:$0x1]
      %v4976 = vlaneseq
      %v4977 = vshrl.u32 %v4976, 7
      %v4978 = vsub.s32 0, %v4977
      %v4979 = vrot.slane %v4974, %v4978
      %v4982 = vsel %vm2696, %v4971, 0
      %4984 = vmatprep.subr.mxu0 0.0
      %4985 = vmatpush1.msra.mxu0 %v4972
      %4986 = vmatprep.subr.mxu0 0.0
      %4987 = vmatpush1.msra.mxu0 %v4973
      %4988 = vmatprep.subr.mxu0 0.0
      %4989 = vmatpush1.msra.mxu0 0.0
      %4990 = vmatprep.subr.mxu0 0.0
      %4991 = vmatpush1.msra.mxu0 0.0
      %4992 = vmatprep.subr.mxu0 0.0
      %4993 = vmatpush1.msra.mxu0 0.0
      %4994 = vmatprep.subr.mxu0 0.0
      %4995 = vmatpush1.msra.mxu0 0.0
      %4996 = vmatprep.subr.mxu0 0.0
      %4997 = vmatpush1.msra.mxu0 0.0
      %4998 = vmatprep.subr.mxu0 0.0
      %4999 = vmatpush1.msra.mxu0 0.0
      %5000 = vmatprep.subr.mxu0 0.0
      %5001 = vmatpush1.msra.mxu0 0.0
      %5002 = vmatprep.subr.mxu0 0.0
      %5003 = vmatpush1.msra.mxu0 0.0
      %5004 = vmatprep.subr.mxu0 0.0
      %5005 = vmatpush1.msra.mxu0 0.0
      %5006 = vmatprep.subr.mxu0 0.0
      %5007 = vmatpush1.msra.mxu0 0.0
      %5008 = vmatprep.subr.mxu0 0.0
      %5009 = vmatpush1.msra.mxu0 0.0
      %5010 = vmatprep.subr.mxu0 0.0
      %5011 = vmatpush1.msra.mxu0 0.0
      %5012 = vmatprep.subr.mxu0 0.0
      %5013 = vmatpush1.msra.mxu0 0.0
      %5014 = vmatprep.subr.mxu0 0.0
      %5015 = vmatpush1.msra.mxu0 0.0
      %5016 = vmatprep.subr.mxu0 0.0
      %5017 = vmatpush1.msra.mxu0 0.0
      %5018 = vmatprep.subr.mxu0 0.0
      %5019 = vmatpush1.msra.mxu0 0.0
      %5020 = vmatprep.subr.mxu0 0.0
      %5021 = vmatpush1.msra.mxu0 0.0
      %5022 = vmatprep.subr.mxu0 0.0
      %5023 = vmatpush1.msra.mxu0 0.0
      %5024 = vmatprep.subr.mxu0 0.0
      %5025 = vmatpush1.msra.mxu0 0.0
      %5026 = vmatprep.subr.mxu0 0.0
      %5027 = vmatpush1.msra.mxu0 0.0
      %5028 = vmatprep.subr.mxu0 0.0
      %5029 = vmatpush1.msra.mxu0 0.0
      %5030 = vmatprep.subr.mxu0 0.0
      %5031 = vmatpush1.msra.mxu0 0.0
      %5032 = vmatprep.subr.mxu0 0.0
      %5033 = vmatpush1.msra.mxu0 0.0
      %5034 = vmatprep.subr.mxu0 0.0
      %5035 = vmatpush1.msra.mxu0 0.0
      %5036 = vmatprep.subr.mxu0 0.0
      %5037 = vmatpush1.msra.mxu0 0.0
      %5038 = vmatprep.subr.mxu0 0.0
      %5039 = vmatpush1.msra.mxu0 0.0
      %5040 = vmatprep.subr.mxu0 0.0
      %5041 = vmatpush1.msra.mxu0 0.0
      %5042 = vmatprep.subr.mxu0 0.0
      %5043 = vmatpush1.msra.mxu0 0.0
      %5044 = vmatprep.subr.mxu0 0.0
      %5045 = vmatpush1.msra.mxu0 0.0
      %5046 = vmatprep.subr.mxu0 0.0
      %5047 = vmatpush1.msra.mxu0 0.0
      %5048 = vmatprep.mubr.f32.mxu0 0.0
      %5049 = vmatmul.mubr.f32.gmra.mrb[0].mxu0 %v4982
      %v5050 = vpop.f32.mrb[0].mxu0
      %v5051 = vadd.f32 %v4979, %v5050
      %v5052 = vpop.f32.mrb[0].mxu0
      %5053 = vdwg.mxu0
      %v5054 = vmax.f32 %v5051, 0.0
      %v5055 = vxor.u32 %v5051, 2147483648
      %v5056 = vmul.f32 %v5055, 1.442695
      %v5057 = vpow.pop %v5056
      %v5058 = vadd.f32 %v5057, 1.0
      %v5059 = vrcp.pop %v5058
      %v5060 = vmul.f32 1.0, %v5059
      %5061 = vrot.lane.b32.xlu0 %v4971, 16
      %v5062 = vpop.permute.xlu0 %5061
      %v5064 = vmul.f32 %v5060, %v5062
      %v5065 = vsub.f32 1.0, %v5060
      %5067 = vrot.lane.b32.xlu0 %v5054, 16
      %v5068 = vpop.permute.xlu0 %5067
      %v5070 = vmul.f32 %v5065, %v5068
      %v5071 = vadd.f32 %v5064, %v5070
      %v5072 = vld [vmem:[%s22] sm:$0xff]
      %v5073 = vld [vmem:[%s22 + $0x8] sm:$0xff]
      %v5074 = vld [vmem:[%s23] sm:$0x1]
      %v5076 = vlaneseq
      %v5077 = vshrl.u32 %v5076, 7
      %v5078 = vsub.s32 0, %v5077
      %v5079 = vrot.slane %v5074, %v5078
      %5082 = vrot.lane.b32.xlu0 %v5071, 112
      %v5083 = vpop.permute.xlu0 %5082
      %v5084 = vsel %vm2696, %v5083, 0
      %5086 = vmatprep.subr.mxu0 0.0
      %5087 = vmatpush1.msra.mxu0 %v5072
      %5088 = vmatprep.subr.mxu0 0.0
      %5089 = vmatpush1.msra.mxu0 %v5073
      %5090 = vmatprep.subr.mxu0 0.0
      %5091 = vmatpush1.msra.mxu0 0.0
      %5092 = vmatprep.subr.mxu0 0.0
      %5093 = vmatpush1.msra.mxu0 0.0
      %5094 = vmatprep.subr.mxu0 0.0
      %5095 = vmatpush1.msra.mxu0 0.0
      %5096 = vmatprep.subr.mxu0 0.0
      %5097 = vmatpush1.msra.mxu0 0.0
      %5098 = vmatprep.subr.mxu0 0.0
      %5099 = vmatpush1.msra.mxu0 0.0
      %5100 = vmatprep.subr.mxu0 0.0
      %5101 = vmatpush1.msra.mxu0 0.0
      %5102 = vmatprep.subr.mxu0 0.0
      %5103 = vmatpush1.msra.mxu0 0.0
      %5104 = vmatprep.subr.mxu0 0.0
      %5105 = vmatpush1.msra.mxu0 0.0
      %5106 = vmatprep.subr.mxu0 0.0
      %5107 = vmatpush1.msra.mxu0 0.0
      %5108 = vmatprep.subr.mxu0 0.0
      %5109 = vmatpush1.msra.mxu0 0.0
      %5110 = vmatprep.subr.mxu0 0.0
      %5111 = vmatpush1.msra.mxu0 0.0
      %5112 = vmatprep.subr.mxu0 0.0
      %5113 = vmatpush1.msra.mxu0 0.0
      %5114 = vmatprep.subr.mxu0 0.0
      %5115 = vmatpush1.msra.mxu0 0.0
      %5116 = vmatprep.subr.mxu0 0.0
      %5117 = vmatpush1.msra.mxu0 0.0
      %5118 = vmatprep.subr.mxu0 0.0
      %5119 = vmatpush1.msra.mxu0 0.0
      %5120 = vmatprep.subr.mxu0 0.0
      %5121 = vmatpush1.msra.mxu0 0.0
      %5122 = vmatprep.subr.mxu0 0.0
      %5123 = vmatpush1.msra.mxu0 0.0
      %5124 = vmatprep.subr.mxu0 0.0
      %5125 = vmatpush1.msra.mxu0 0.0
      %5126 = vmatprep.subr.mxu0 0.0
      %5127 = vmatpush1.msra.mxu0 0.0
      %5128 = vmatprep.subr.mxu0 0.0
      %5129 = vmatpush1.msra.mxu0 0.0
      %5130 = vmatprep.subr.mxu0 0.0
      %5131 = vmatpush1.msra.mxu0 0.0
      %5132 = vmatprep.subr.mxu0 0.0
      %5133 = vmatpush1.msra.mxu0 0.0
      %5134 = vmatprep.subr.mxu0 0.0
      %5135 = vmatpush1.msra.mxu0 0.0
      %5136 = vmatprep.subr.mxu0 0.0
      %5137 = vmatpush1.msra.mxu0 0.0
      %5138 = vmatprep.subr.mxu0 0.0
      %5139 = vmatpush1.msra.mxu0 0.0
      %5140 = vmatprep.subr.mxu0 0.0
      %5141 = vmatpush1.msra.mxu0 0.0
      %5142 = vmatprep.subr.mxu0 0.0
      %5143 = vmatpush1.msra.mxu0 0.0
      %5144 = vmatprep.subr.mxu0 0.0
      %5145 = vmatpush1.msra.mxu0 0.0
      %5146 = vmatprep.subr.mxu0 0.0
      %5147 = vmatpush1.msra.mxu0 0.0
      %5148 = vmatprep.subr.mxu0 0.0
      %5149 = vmatpush1.msra.mxu0 0.0
      %5150 = vmatprep.mubr.f32.mxu0 0.0
      %5151 = vmatmul.mubr.f32.gmra.mrb[0].mxu0 %v5084
      %v5152 = vpop.f32.mrb[0].mxu0
      %v5153 = vadd.f32 %v5079, %v5152
      %v5154 = vpop.f32.mrb[0].mxu0
      %5155 = vdwg.mxu0
      %v5156 = vsel %vm2696, %v5153, 0.0
      %5157 = vst [vmem:[%s870] sm:$0x3] %v5156
      %p5158 = scmp.lt.s32.totalorder %s35, 1
      %s5159 = scalar_select %p5158, %s35, 1
      %s5160 = smul.addr %s5159, 2
      %s5161 = scalar_lea.vmem %s24, %s5160
      // Predicated region
      $region117: #{forward.2} parent=115 // pred_check
        %p5162 = pneg %p598
      $region118: #{forward.2} parent=115 // pred_check_branch
        %5164 = sbr.rel (%p5162) target = $region120
      $region119: #{forward.2} parent=115 // pred_region
        _
      $region120: #{forward.2} parent=115 // pred_fallthru
        _
    $region116: #{forward.2} parent=5 // pred_fallthru
      _
    %p5165 = scmp.le.s32.totalorder 2, %s30
    // Predicated region
    $region121: #{forward.2} parent=5 // pred_check
      %p5166 = pneg %p5165
    $region122: #{forward.2} parent=5 // pred_check_branch
      %5168 = sbr.rel (%p5166) target = $region124
    $region123: #{forward.2} parent=5 // pred_region
      %s5169 = ssub.s32 %s30, 2
      // Predicated region
      $region125: #{forward.2} parent=123 // pred_check
        %p5170 = pneg %p604
      $region126: #{forward.2} parent=123 // pred_check_branch
        %5172 = sbr.rel (%p5170) target = $region128
      $region127: #{forward.2} parent=123 // pred_region
        %p5173 = scmp.lt.s32.totalorder %s36, 1
        %s5174 = scalar_select %p5173, %s36, 1
        %s5175 = smul.addr %s5174, 2
        %s5176 = scalar_lea.vmem %s24, %s5175
      $region128: #{forward.2} parent=123 // pred_fallthru
        _
    $region124: #{forward.2} parent=5 // pred_fallthru
      _
  $region6: #{forward.2} parent=0 // loop_footer
    %s34 = sadd.s32 1, %s30
  $region7: #{forward.2} parent=0 // loop_footer_branch
    %29 = sbr.rel target = $region3
  $region8: #{forward.2} parent=0 // loop_exit
    _

</llo_original>
